<compile_context>
chip_gen: v6e
topology: v6e:2x2x1
jax: 0.10.0
libtpu: 0.0.40
codegen_flags: <defaults>
</compile_context>

<pallas_src>
import functools

import jax
import jax.numpy as jnp
from jax.experimental import pallas as pl
from jax.experimental.pallas import tpu as pltpu

HID = 100                        # hid_dim fixed by the module
HID_PAD = 128                    # lane-padded hidden width
LN_EPS = 1e-5                    # torch.nn.LayerNorm default eps
TILE_M_DEFAULT = 512             # propagation row tile ("parallel" axis)
TILE_K_DEFAULT = 2048            # adjacency-column / reduction tile ("arbitrary", last)
FUSED_MAX_N = 1024               # n_pad up to which the whole net runs in ONE call
                                 # (sized for v7x's 64 MiB physical VMEM)
VMEM_LIMIT = 32 * 1024 * 1024    # safe on all generations; tiles use only ~5 MiB


def _round_up(n, m):
    return ((n + m - 1) // m) * m


def _pad2(a, rows, cols, dtype=None):
    a = jnp.pad(a, ((0, rows - a.shape[0]), (0, cols - a.shape[1])))
    return a.astype(dtype) if dtype is not None else a


# --------------------------------------------------------------------------
# Shared in-kernel helpers
# --------------------------------------------------------------------------
def _masked_layernorm(h, g, b, mask):
    # INVARIANT: padded lanes (100..127) of h are exactly zero because w1/w2
    # columns, biases AND gamma/beta are zero-padded.  Do not pad gamma with 1.
    mu = jnp.sum(h, axis=-1, keepdims=True) * (1.0 / HID)
    c = (h - mu) * mask
    var = jnp.sum(c * c, axis=-1, keepdims=True) * (1.0 / HID)
    return c * jax.lax.rsqrt(var + LN_EPS) * g + b


def _node_transform(x, w1_ref, b1_ref, g1_ref, be1_ref,
                    w2_ref, b2_ref, g2_ref, be2_ref, wrs_ref):
    # mask built ONCE per kernel body, reused by both LayerNorms (no re-broadcast)
    lane = jax.lax.broadcasted_iota(jnp.int32, (1, HID_PAD), 1)
    mask = (lane < HID).astype(jnp.float32)

    h = jnp.dot(x.astype(jnp.bfloat16), w1_ref[...],
                preferred_element_type=jnp.float32) + b1_ref[...]
    h = jnp.maximum(_masked_layernorm(h, g1_ref[...], be1_ref[...], mask), 0.0)
    h = jnp.dot(h.astype(jnp.bfloat16), w2_ref[...],
                preferred_element_type=jnp.float32) + b2_ref[...]
    h = jnp.maximum(_masked_layernorm(h, g2_ref[...], be2_ref[...], mask), 0.0)

    # fused [W_rel | W_self]: one wide MXU matmul, sliced at the 128-lane boundary
    hm = jnp.dot(h.astype(jnp.bfloat16), wrs_ref[...],
                 preferred_element_type=jnp.float32)
    return hm[:, :HID_PAD], hm[:, HID_PAD:]          # (msg, hself) both f32


def _masked_log_softmax(logits, out_dim):
    lane = jax.lax.broadcasted_iota(jnp.int32, logits.shape, 1)
    logits = jnp.where(lane < out_dim, logits, -1e30)
    m = jnp.max(logits, axis=-1, keepdims=True)
    z = logits - m
    lse = jnp.log(jnp.sum(jnp.exp(z), axis=-1, keepdims=True))
    return z - lse


# --------------------------------------------------------------------------
# Fused single-call kernel (small graphs: A resident in VMEM, read once)
# --------------------------------------------------------------------------
def _fused_gcn_kernel(x_ref, a_ref, invdeg_ref, dinv_ref,
                      w1_ref, b1_ref, g1_ref, be1_ref,
                      w2_ref, b2_ref, g2_ref, be2_ref,
                      wrs_ref, brg_ref, wc1_ref, bc1_ref, wc2_ref, bc2_ref,
                      out_ref, *, out_dim):
    msg, hself = _node_transform(x_ref[...], w1_ref, b1_ref, g1_ref, be1_ref,
                                 w2_ref, b2_ref, g2_ref, be2_ref, wrs_ref)

    a_bf = a_ref[...].astype(jnp.bfloat16)   # int8 -> bf16 once, reused for 3 matmuls
    invdeg = invdeg_ref[...]
    dinv = dinv_ref[...]

    # RGCN (single relation): relu(W_self h + mean_{j->i} W_rel h_j + b)
    agg = jnp.dot(a_bf, msg.astype(jnp.bfloat16), preferred_element_type=jnp.float32)
    h1 = jnp.maximum(invdeg * agg + hself + brg_ref[...], 0.0)

    # GCNConv1: relu(D^-1/2 (A+I) D^-1/2 (h1 Wc1) + b); self-loop term stays f32
    y1 = jnp.dot(h1.astype(jnp.bfloat16), wc1_ref[...],
                 preferred_element_type=jnp.float32)
    t1 = dinv * y1
    h2 = jnp.maximum(
        dinv * jnp.dot(a_bf, t1.astype(jnp.bfloat16),
                       preferred_element_type=jnp.float32)
        + dinv * t1 + bc1_ref[...], 0.0)

    # GCNConv2 + masked log_softmax
    y2 = jnp.dot(h2.astype(jnp.bfloat16), wc2_ref[...],
                 preferred_element_type=jnp.float32)
    t2 = dinv * y2
    logits = (dinv * jnp.dot(a_bf, t2.astype(jnp.bfloat16),
                             preferred_element_type=jnp.float32)
              + dinv * t2 + bc2_ref[...])
    out_ref[...] = _masked_log_softmax(logits, out_dim).astype(out_ref.dtype)


# --------------------------------------------------------------------------
# Tiled path kernel 1: row-parallel transform (Linear->LN->ReLU x2) + RGCN wts
# --------------------------------------------------------------------------
def _transform_kernel(x_ref, w1_ref, b1_ref, g1_ref, be1_ref,
                      w2_ref, b2_ref, g2_ref, be2_ref, wrs_ref,
                      msg_ref, hself_ref):
    msg, hself = _node_transform(x_ref[...], w1_ref, b1_ref, g1_ref, be1_ref,
                                 w2_ref, b2_ref, g2_ref, be2_ref, wrs_ref)
    msg_ref[...] = msg.astype(msg_ref.dtype)     # bf16 stream for the aggregation
    hself_ref[...] = hself                       # f32 skip term


# --------------------------------------------------------------------------
# Tiled path kernel 2: RGCN mean aggregation + ReLU, fused conv1 feature matmul
# --------------------------------------------------------------------------
def _rgcn_prop_kernel(a_ref, msg_ref, invdeg_ref, hself_ref, brg_ref,
                      dinv_ref, wc1_ref, y1s_ref, y1self_ref, acc_ref):
    k = pl.program_id(1)

    @pl.when(k == 0)
    def _():
        acc_ref[...] = jnp.zeros_like(acc_ref)

    acc_ref[...] += jnp.dot(a_ref[...].astype(jnp.bfloat16), msg_ref[...],
                            preferred_element_type=jnp.float32)

    @pl.when(k == pl.num_programs(1) - 1)
    def _():
        h1 = jnp.maximum(
            invdeg_ref[...] * acc_ref[...] + hself_ref[...] + brg_ref[...], 0.0)
        y1 = jnp.dot(h1.astype(jnp.bfloat16), wc1_ref[...],
                     preferred_element_type=jnp.float32)
        d = dinv_ref[...]
        y1s_ref[...] = (d * y1).astype(y1s_ref.dtype)   # bf16, aggregated by conv1
        y1self_ref[...] = (d * d) * y1                  # f32 self-loop term


# --------------------------------------------------------------------------
# Tiled path kernel 3: GCNConv1 aggregation + ReLU, fused conv2 feature matmul
# --------------------------------------------------------------------------
def _conv_prop_kernel(a_ref, yk_ref, dinv_ref, yself_ref, b_ref, w_next_ref,
                      y_next_ref, ynself_ref, acc_ref):
    k = pl.program_id(1)

    @pl.when(k == 0)
    def _():
        acc_ref[...] = jnp.zeros_like(acc_ref)

    acc_ref[...] += jnp.dot(a_ref[...].astype(jnp.bfloat16), yk_ref[...],
                            preferred_element_type=jnp.float32)

    @pl.when(k == pl.num_programs(1) - 1)
    def _():
        d = dinv_ref[...]
        h = jnp.maximum(d * acc_ref[...] + yself_ref[...] + b_ref[...], 0.0)
        y = jnp.dot(h.astype(jnp.bfloat16), w_next_ref[...],
                    preferred_element_type=jnp.float32)
        y_next_ref[...] = (d * y).astype(y_next_ref.dtype)
        ynself_ref[...] = (d * d) * y


# --------------------------------------------------------------------------
# Tiled path kernel 4: GCNConv2 aggregation + masked log_softmax
# --------------------------------------------------------------------------
def _final_prop_kernel(a_ref, yk_ref, dinv_ref, yself_ref, b_ref, out_ref,
                       acc_ref, *, out_dim):
    k = pl.program_id(1)

    @pl.when(k == 0)
    def _():
        acc_ref[...] = jnp.zeros_like(acc_ref)

    acc_ref[...] += jnp.dot(a_ref[...].astype(jnp.bfloat16), yk_ref[...],
                            preferred_element_type=jnp.float32)

    @pl.when(k == pl.num_programs(1) - 1)
    def _():
        d = dinv_ref[...]
        logits = d * acc_ref[...] + yself_ref[...] + b_ref[...]
        out_ref[...] = _masked_log_softmax(logits, out_dim).astype(out_ref.dtype)


# --------------------------------------------------------------------------
# Parameters (synthetic init; shapes match the PyTorch module)
# --------------------------------------------------------------------------
def make_params(key, input_dim, output_dim):
    ks = jax.random.split(key, 8)

    def lin(k, fan_in, fan_out):
        return (jax.random.normal(k, (fan_in, fan_out), jnp.float32)
                * (1.0 / jnp.sqrt(fan_in)))

    return {
        "w1": lin(ks[0], input_dim, HID), "b1": jnp.zeros((1, HID), jnp.float32),
        "g1": jnp.ones((1, HID), jnp.float32), "be1": jnp.zeros((1, HID), jnp.float32),
        "w2": lin(ks[1], HID, HID), "b2": jnp.zeros((1, HID), jnp.float32),
        "g2": jnp.ones((1, HID), jnp.float32), "be2": jnp.zeros((1, HID), jnp.float32),
        "w_self": lin(ks[2], HID, HID),
        "w_rel": lin(ks[3], HID, HID),
        "b_rgcn": jnp.zeros((1, HID), jnp.float32),
        "wc1": lin(ks[4], HID, HID), "bc1": jnp.zeros((1, HID), jnp.float32),
        "wc2": lin(ks[5], HID, output_dim),
        "bc2": jnp.zeros((1, output_dim), jnp.float32),
    }


# --------------------------------------------------------------------------
# Forward wrapper
# --------------------------------------------------------------------------
def gcn_forward(data_x, data_edge_index, data_edge_attr, params, *,
                force_tiled=False, tile_m=TILE_M_DEFAULT, tile_k=TILE_K_DEFAULT):
    del data_edge_attr  # single relation -> unused
    N, d_in = data_x.shape
    out_dim = params["wc2"].shape[1]
    assert out_dim <= HID_PAD, "output_dim > 128 not supported by this kernel"

    use_fused = (not force_tiled) and (_round_up(N, 128) <= FUSED_MAX_N)

    if use_fused:
        n_pad = _round_up(N, 128)
        tm = tk = n_pad
    else:
        n_pad0 = _round_up(N, 128)
        tm = min(tile_m, n_pad0)
        n_pad = _round_up(n_pad0, tm)
        tk = tm
        for cand in range(min(tile_k, n_pad), tm - 1, -128):
            if n_pad % cand == 0:   # largest K-tile <= request that divides n_pad
                tk = cand
                break

    f32, bf16 = jnp.float32, jnp.bfloat16

    # ---- graph tensors: no dense f32 temporary; degrees via 1-D scatter-add ----
    src = data_edge_index[0].astype(jnp.int32)
    dst = data_edge_index[1].astype(jnp.int32)
    deg_in = jnp.zeros((n_pad,), f32).at[dst].add(1.0)           # segment-sum
    inv_deg = (1.0 / jnp.maximum(deg_in, 1.0)).reshape(n_pad, 1)  # RGCN mean
    dinv = jax.lax.rsqrt(deg_in + 1.0).reshape(n_pad, 1)          # GCN D^-1/2 (+I)
    # A[i, j] = #edges j->i, stored int8; cast to bf16 on the VPU inside kernels.
    # TODO(synk): multi-edge multiplicities > 127 would overflow int8.
    a = jnp.zeros((n_pad, n_pad), jnp.int8).at[dst, src].add(
        jnp.ones_like(dst, dtype=jnp.int8))

    # x keeps its native feature dim (block last dim == full array dim is legal)
    x_p = jnp.pad(data_x.astype(f32), ((0, n_pad - N), (0, 0)))
    w1 = _pad2(params["w1"], d_in, HID_PAD, bf16)
    w2 = _pad2(params["w2"], HID_PAD, HID_PAD, bf16)
    wrs = jnp.concatenate(
        [_pad2(params["w_rel"], HID_PAD, HID_PAD, bf16),
         _pad2(params["w_self"], HID_PAD, HID_PAD, bf16)], axis=1)
    wc1 = _pad2(params["wc1"], HID_PAD, HID_PAD, bf16)
    wc2 = _pad2(params["wc2"], HID_PAD, HID_PAD, bf16)

    def vec(p):
        # ZERO padding (also for gamma) is required by the masked LayerNorm.
        return _pad2(p, 1, HID_PAD, f32)

    b1, g1, be1 = vec(params["b1"]), vec(params["g1"]), vec(params["be1"])
    b2, g2, be2 = vec(params["b2"]), vec(params["g2"]), vec(params["be2"])
    brg, bc1, bc2 = vec(params["b_rgcn"]), vec(params["bc1"]), vec(params["bc2"])

    # ======================= fused single-call path ==========================
    if use_fused:
        full = lambda arr: pl.BlockSpec(arr.shape, lambda i: (0, 0))
        logp = pl.pallas_call(
            functools.partial(_fused_gcn_kernel, out_dim=out_dim),
            grid=(1,),
            in_specs=[full(x_p), full(a), full(inv_deg), full(dinv),
                      full(w1), full(b1), full(g1), full(be1),
                      full(w2), full(b2), full(g2), full(be2),
                      full(wrs), full(brg), full(wc1), full(bc1),
                      full(wc2), full(bc2)],
            out_specs=pl.BlockSpec((n_pad, HID_PAD), lambda i: (0, 0)),
            out_shape=jax.ShapeDtypeStruct((n_pad, HID_PAD), f32),
            compiler_params=pltpu.CompilerParams(
                dimension_semantics=("arbitrary",), vmem_limit_bytes=VMEM_LIMIT),
        )(x_p, a, inv_deg, dinv, w1, b1, g1, be1, w2, b2, g2, be2,
          wrs, brg, wc1, bc1, wc2, bc2)
        return logp[:N, :out_dim]

    # ========================== tiled multi-call path ========================
    r_tiles = n_pad // tm
    k_tiles = n_pad // tk

    # ---- call 1: row-parallel transform ------------------------------------
    full1 = lambda arr: pl.BlockSpec(arr.shape, lambda i: (0, 0))
    msg, hself = pl.pallas_call(
        _transform_kernel,
        grid=(r_tiles,),
        in_specs=[pl.BlockSpec((tm, d_in), lambda i: (i, 0)),
                  full1(w1), full1(b1), full1(g1), full1(be1),
                  full1(w2), full1(b2), full1(g2), full1(be2), full1(wrs)],
        out_specs=[pl.BlockSpec((tm, HID_PAD), lambda i: (i, 0)),
                   pl.BlockSpec((tm, HID_PAD), lambda i: (i, 0))],
        out_shape=[jax.ShapeDtypeStruct((n_pad, HID_PAD), bf16),
                   jax.ShapeDtypeStruct((n_pad, HID_PAD), f32)],
        compiler_params=pltpu.CompilerParams(
            dimension_semantics=("parallel",), vmem_limit_bytes=VMEM_LIMIT),
    )(x_p, w1, b1, g1, be1, w2, b2, g2, be2, wrs)

    # ---- shared specs for the tiled propagation calls ----------------------
    grid = (r_tiles, k_tiles)
    cparams = pltpu.CompilerParams(
        dimension_semantics=("parallel", "arbitrary"),
        vmem_limit_bytes=VMEM_LIMIT)
    a_spec = pl.BlockSpec((tm, tk), lambda i, k: (i, k))          # int8 A stream
    featk_spec = pl.BlockSpec((tk, HID_PAD), lambda i, k: (k, 0))  # bf16 feature stream
    rowi = lambda w: pl.BlockSpec((tm, w), lambda i, k: (i, 0))    # fetched once per row tile
    const = lambda arr: pl.BlockSpec(arr.shape, lambda i, k: (0, 0))
    out_spec = pl.BlockSpec((tm, HID_PAD), lambda i, k: (i, 0))
    acc = [pltpu.VMEM((tm, HID_PAD), jnp.float32)]

    # ---- call 2: RGCN aggregation + ReLU + conv1 feature matmul ------------
    y1s, y1self = pl.pallas_call(
        _rgcn_prop_kernel,
        grid=grid,
        in_specs=[a_spec, featk_spec, rowi(1), rowi(HID_PAD), const(brg),
                  rowi(1), const(wc1)],
        out_specs=[out_spec, out_spec],
        out_shape=[jax.ShapeDtypeStruct((n_pad, HID_PAD), bf16),
                   jax.ShapeDtypeStruct((n_pad, HID_PAD), f32)],
        scratch_shapes=acc,
        compiler_params=cparams,
    )(a, msg, inv_deg, hself, brg, dinv, wc1)

    # ---- call 3: GCNConv1 aggregation + ReLU + conv2 feature matmul --------
    y2s, y2self = pl.pallas_call(
        _conv_prop_kernel,
        grid=grid,
        in_specs=[a_spec, featk_spec, rowi(1), rowi(HID_PAD), const(bc1),
                  const(wc2)],
        out_specs=[out_spec, out_spec],
        out_shape=[jax.ShapeDtypeStruct((n_pad, HID_PAD), bf16),
                   jax.ShapeDtypeStruct((n_pad, HID_PAD), f32)],
        scratch_shapes=acc,
        compiler_params=cparams,
    )(a, y1s, dinv, y1self, bc1, wc2)

    # ---- call 4: GCNConv2 aggregation + log_softmax ------------------------
    logp = pl.pallas_call(
        functools.partial(_final_prop_kernel, out_dim=out_dim),
        grid=grid,
        in_specs=[a_spec, featk_spec, rowi(1), rowi(HID_PAD), const(bc2)],
        out_specs=out_spec,
        out_shape=jax.ShapeDtypeStruct((n_pad, HID_PAD), f32),
        scratch_shapes=acc,
        compiler_params=cparams,
    )(a, y2s, dinv, y2self, bc2)

    return logp[:N, :out_dim]


# --------------------------------------------------------------------------
# Pure-JAX f32 reference (unpadded) for correctness checking
# --------------------------------------------------------------------------
def _reference_forward(x, edge_index, params):
    N = x.shape[0]
    src, dst = edge_index[0], edge_index[1]
    a = jnp.zeros((N, N), jnp.float32).at[dst, src].add(1.0)
    deg_in = jnp.sum(a, axis=1, keepdims=True)
    a_rgcn = a / jnp.maximum(deg_in, 1.0)
    a_hat = a + jnp.eye(N, dtype=jnp.float32)
    dinv = jax.lax.rsqrt(jnp.sum(a_hat, axis=1))
    a_gcn = a_hat * dinv[:, None] * dinv[None, :]

    def ln(h, g, b):
        mu = jnp.mean(h, axis=-1, keepdims=True)
        var = jnp.mean((h - mu) ** 2, axis=-1, keepdims=True)
        return (h - mu) * jax.lax.rsqrt(var + LN_EPS) * g + b

    h = jnp.maximum(ln(x @ params["w1"] + params["b1"], params["g1"], params["be1"]), 0.0)
    h = jnp.maximum(ln(h @ params["w2"] + params["b2"], params["g2"], params["be2"]), 0.0)
    h = jnp.maximum(h @ params["w_self"] + a_rgcn @ (h @ params["w_rel"])
                    + params["b_rgcn"], 0.0)
    h = jnp.maximum(a_gcn @ (h @ params["wc1"]) + params["bc1"], 0.0)
    h = a_gcn @ (h @ params["wc2"]) + params["bc2"]
    return jax.nn.log_softmax(h, axis=1)


if __name__ == "__main__":
    key = jax.random.PRNGKey(0)
    k_x, k_p = jax.random.split(key)

    N, INPUT_DIM, OUTPUT_DIM = 300, 16, 4
    x = jax.random.normal(k_x, (N, INPUT_DIM), jnp.float32)

    # bidirectional ring (Tree-cycle style toy graph), deterministic
    idx = jnp.arange(N, dtype=jnp.int32)
    nxt = (idx + 1) % N
    src = jnp.concatenate([idx, nxt])
    dst = jnp.concatenate([nxt, idx])
    edge_index = jnp.stack([src, dst], axis=0)
    edge_attr = jnp.zeros((edge_index.shape[1],), jnp.int32)  # single relation

    params = make_params(k_p, INPUT_DIM, OUTPUT_DIM)

    # Fused single-kernel path (A resident in VMEM) -- used at this graph size.
    out = gcn_forward(x, edge_index, edge_attr, params)
    # Also exercise the tiled large-graph path with small forced tiles so the
    # accumulate-over-k grid is actually tested at this toy size.
    out_tiled = gcn_forward(x, edge_index, edge_attr, params,
                            force_tiled=True, tile_m=128, tile_k=128)
    out, out_tiled = jax.block_until_ready((out, out_tiled))

    ref = _reference_forward(x, edge_index, params)

    for o in (out, out_tiled):
        assert o.shape == (N, OUTPUT_DIM)
        assert bool(jnp.all(jnp.isfinite(o)))
        # rows of log_softmax must (log-)sum to ~0
        assert jnp.allclose(jnp.sum(jnp.exp(o), axis=1), 1.0, atol=1e-3)
        # compare against the full-precision reference (bf16 matmuls -> loose tol)
        assert jnp.allclose(o, ref, atol=1e-1, rtol=1e-1), \
            float(jnp.max(jnp.abs(o - ref)))
    # fused and tiled paths compute the same thing up to accumulation order
    assert jnp.allclose(out, out_tiled, atol=5e-2), \
        float(jnp.max(jnp.abs(out - out_tiled)))

    print("KERNEL_OK")
</pallas_src>

<mosaic_0001>
module attributes {stable_mosaic.version = 11 : i64} {
  func.func @_fused_gcn_kernel(%arg0: i32, %arg1: memref<384x16xf32, #tpu.memory_space<vmem>>, %arg2: memref<384x384xi8, #tpu.memory_space<vmem>>, %arg3: memref<384x1xf32, #tpu.memory_space<vmem>>, %arg4: memref<384x1xf32, #tpu.memory_space<vmem>>, %arg5: memref<16x128xbf16, #tpu.memory_space<vmem>>, %arg6: memref<1x128xf32, #tpu.memory_space<vmem>>, %arg7: memref<1x128xf32, #tpu.memory_space<vmem>>, %arg8: memref<1x128xf32, #tpu.memory_space<vmem>>, %arg9: memref<128x128xbf16, #tpu.memory_space<vmem>>, %arg10: memref<1x128xf32, #tpu.memory_space<vmem>>, %arg11: memref<1x128xf32, #tpu.memory_space<vmem>>, %arg12: memref<1x128xf32, #tpu.memory_space<vmem>>, %arg13: memref<128x256xbf16, #tpu.memory_space<vmem>>, %arg14: memref<1x128xf32, #tpu.memory_space<vmem>>, %arg15: memref<128x128xbf16, #tpu.memory_space<vmem>>, %arg16: memref<1x128xf32, #tpu.memory_space<vmem>>, %arg17: memref<128x128xbf16, #tpu.memory_space<vmem>>, %arg18: memref<1x128xf32, #tpu.memory_space<vmem>>, %arg19: memref<384x128xf32, #tpu.memory_space<vmem>>) attributes {dimension_semantics = [#tpu.dimension_semantics<arbitrary>], iteration_bounds = array<i64: 1>, scalar_prefetch = 0 : i64, scratch_operands = 0 : i64, tpu.core_type = #tpu.core_type<tc>, window_params = [{pipeline_mode = #tpu.pipeline_mode<synchronous>, transform_indices = @transform_0, window_bounds = array<i64: 384, 16>}, {pipeline_mode = #tpu.pipeline_mode<synchronous>, transform_indices = @transform_1, window_bounds = array<i64: 384, 384>}, {pipeline_mode = #tpu.pipeline_mode<synchronous>, transform_indices = @transform_2, window_bounds = array<i64: 384, 1>}, {pipeline_mode = #tpu.pipeline_mode<synchronous>, transform_indices = @transform_3, window_bounds = array<i64: 384, 1>}, {pipeline_mode = #tpu.pipeline_mode<synchronous>, transform_indices = @transform_4, window_bounds = array<i64: 16, 128>}, {pipeline_mode = #tpu.pipeline_mode<synchronous>, transform_indices = @transform_5, window_bounds = array<i64: 1, 128>}, {pipeline_mode = #tpu.pipeline_mode<synchronous>, transform_indices = @transform_6, window_bounds = array<i64: 1, 128>}, {pipeline_mode = #tpu.pipeline_mode<synchronous>, transform_indices = @transform_7, window_bounds = array<i64: 1, 128>}, {pipeline_mode = #tpu.pipeline_mode<synchronous>, transform_indices = @transform_8, window_bounds = array<i64: 128, 128>}, {pipeline_mode = #tpu.pipeline_mode<synchronous>, transform_indices = @transform_9, window_bounds = array<i64: 1, 128>}, {pipeline_mode = #tpu.pipeline_mode<synchronous>, transform_indices = @transform_10, window_bounds = array<i64: 1, 128>}, {pipeline_mode = #tpu.pipeline_mode<synchronous>, transform_indices = @transform_11, window_bounds = array<i64: 1, 128>}, {pipeline_mode = #tpu.pipeline_mode<synchronous>, transform_indices = @transform_12, window_bounds = array<i64: 128, 256>}, {pipeline_mode = #tpu.pipeline_mode<synchronous>, transform_indices = @transform_13, window_bounds = array<i64: 1, 128>}, {pipeline_mode = #tpu.pipeline_mode<synchronous>, transform_indices = @transform_14, window_bounds = array<i64: 128, 128>}, {pipeline_mode = #tpu.pipeline_mode<synchronous>, transform_indices = @transform_15, window_bounds = array<i64: 1, 128>}, {pipeline_mode = #tpu.pipeline_mode<synchronous>, transform_indices = @transform_16, window_bounds = array<i64: 128, 128>}, {pipeline_mode = #tpu.pipeline_mode<synchronous>, transform_indices = @transform_17, window_bounds = array<i64: 1, 128>}, {pipeline_mode = #tpu.pipeline_mode<synchronous>, transform_indices = @transform_18, window_bounds = array<i64: 384, 128>}]} {
    %c0 = arith.constant 0 : index
    %c0_0 = arith.constant 0 : index
    %0 = vector.load %arg1[%c0, %c0_0] : memref<384x16xf32, #tpu.memory_space<vmem>>, vector<384x16xf32>
    %1 = tpu.iota {dimensions = array<i32: 1>} : vector<1x128xi32>
    %c100_i32 = arith.constant 100 : i32
    %2 = vector.broadcast %c100_i32 : i32 to vector<1x128xi32>
    %3 = arith.cmpi slt, %1, %2 : vector<1x128xi32>
    %4 = arith.extui %3 : vector<1x128xi1> to vector<1x128xi32>
    %5 = arith.sitofp %4 : vector<1x128xi32> to vector<1x128xf32>
    %6 = arith.truncf %0 : vector<384x16xf32> to vector<384x16xbf16>
    %c0_1 = arith.constant 0 : index
    %c0_2 = arith.constant 0 : index
    %7 = vector.load %arg5[%c0_1, %c0_2] : memref<16x128xbf16, #tpu.memory_space<vmem>>, vector<16x128xbf16>
    %cst = arith.constant dense<0.000000e+00> : vector<384x128xf32>
    %8 = tpu.matmul %6, %7, %cst {dimension_numbers = #tpu.dot_dimension_numbers<[1], [0], [0], [1], [0, 0, 1, 1], [], []>} : vector<384x16xbf16>, vector<16x128xbf16>, vector<384x128xf32> -> vector<384x128xf32>
    %c0_3 = arith.constant 0 : index
    %c0_4 = arith.constant 0 : index
    %9 = vector.load %arg6[%c0_3, %c0_4] : memref<1x128xf32, #tpu.memory_space<vmem>>, vector<1x128xf32>
    %10 = vector.broadcast %9 : vector<1x128xf32> to vector<384x128xf32>
    %11 = arith.addf %8, %10 : vector<384x128xf32>
    %c0_5 = arith.constant 0 : index
    %c0_6 = arith.constant 0 : index
    %12 = vector.load %arg7[%c0_5, %c0_6] : memref<1x128xf32, #tpu.memory_space<vmem>>, vector<1x128xf32>
    %c0_7 = arith.constant 0 : index
    %c0_8 = arith.constant 0 : index
    %13 = vector.load %arg8[%c0_7, %c0_8] : memref<1x128xf32, #tpu.memory_space<vmem>>, vector<1x128xf32>
    %cst_9 = arith.constant dense<0.000000e+00> : vector<384xf32>
    %14 = vector.multi_reduction <add>, %11, %cst_9 [1] : vector<384x128xf32> to vector<384xf32>
    %15 = vector.shape_cast %14 : vector<384xf32> to vector<384x1xf32>
    %cst_10 = arith.constant 0.00999999977 : f32
    %16 = vector.broadcast %cst_10 : f32 to vector<384x1xf32>
    %17 = arith.mulf %15, %16 : vector<384x1xf32>
    %18 = vector.broadcast %17 : vector<384x1xf32> to vector<384x128xf32>
    %19 = arith.subf %11, %18 : vector<384x128xf32>
    %20 = vector.broadcast %5 : vector<1x128xf32> to vector<384x128xf32>
    %21 = arith.mulf %19, %20 : vector<384x128xf32>
    %22 = arith.mulf %21, %21 : vector<384x128xf32>
    %cst_11 = arith.constant dense<0.000000e+00> : vector<384xf32>
    %23 = vector.multi_reduction <add>, %22, %cst_11 [1] : vector<384x128xf32> to vector<384xf32>
    %24 = vector.shape_cast %23 : vector<384xf32> to vector<384x1xf32>
    %cst_12 = arith.constant 0.00999999977 : f32
    %25 = vector.broadcast %cst_12 : f32 to vector<384x1xf32>
    %26 = arith.mulf %24, %25 : vector<384x1xf32>
    %cst_13 = arith.constant 9.99999974E-6 : f32
    %27 = vector.broadcast %cst_13 : f32 to vector<384x1xf32>
    %28 = arith.addf %26, %27 : vector<384x1xf32>
    %29 = math.rsqrt %28 : vector<384x1xf32>
    %30 = vector.broadcast %29 : vector<384x1xf32> to vector<384x128xf32>
    %31 = arith.mulf %21, %30 : vector<384x128xf32>
    %32 = vector.broadcast %12 : vector<1x128xf32> to vector<384x128xf32>
    %33 = arith.mulf %31, %32 : vector<384x128xf32>
    %34 = vector.broadcast %13 : vector<1x128xf32> to vector<384x128xf32>
    %35 = arith.addf %33, %34 : vector<384x128xf32>
    %cst_14 = arith.constant 0.000000e+00 : f32
    %36 = vector.broadcast %cst_14 : f32 to vector<384x128xf32>
    %37 = arith.maximumf %35, %36 : vector<384x128xf32>
    %38 = arith.truncf %37 : vector<384x128xf32> to vector<384x128xbf16>
    %c0_15 = arith.constant 0 : index
    %c0_16 = arith.constant 0 : index
    %39 = vector.load %arg9[%c0_15, %c0_16] : memref<128x128xbf16, #tpu.memory_space<vmem>>, vector<128x128xbf16>
    %cst_17 = arith.constant dense<0.000000e+00> : vector<384x128xf32>
    %40 = tpu.matmul %38, %39, %cst_17 {dimension_numbers = #tpu.dot_dimension_numbers<[1], [0], [0], [1], [0, 0, 1, 1], [], []>} : vector<384x128xbf16>, vector<128x128xbf16>, vector<384x128xf32> -> vector<384x128xf32>
    %c0_18 = arith.constant 0 : index
    %c0_19 = arith.constant 0 : index
    %41 = vector.load %arg10[%c0_18, %c0_19] : memref<1x128xf32, #tpu.memory_space<vmem>>, vector<1x128xf32>
    %42 = vector.broadcast %41 : vector<1x128xf32> to vector<384x128xf32>
    %43 = arith.addf %40, %42 : vector<384x128xf32>
    %c0_20 = arith.constant 0 : index
    %c0_21 = arith.constant 0 : index
    %44 = vector.load %arg11[%c0_20, %c0_21] : memref<1x128xf32, #tpu.memory_space<vmem>>, vector<1x128xf32>
    %c0_22 = arith.constant 0 : index
    %c0_23 = arith.constant 0 : index
    %45 = vector.load %arg12[%c0_22, %c0_23] : memref<1x128xf32, #tpu.memory_space<vmem>>, vector<1x128xf32>
    %cst_24 = arith.constant dense<0.000000e+00> : vector<384xf32>
    %46 = vector.multi_reduction <add>, %43, %cst_24 [1] : vector<384x128xf32> to vector<384xf32>
    %47 = vector.shape_cast %46 : vector<384xf32> to vector<384x1xf32>
    %cst_25 = arith.constant 0.00999999977 : f32
    %48 = vector.broadcast %cst_25 : f32 to vector<384x1xf32>
    %49 = arith.mulf %47, %48 : vector<384x1xf32>
    %50 = vector.broadcast %49 : vector<384x1xf32> to vector<384x128xf32>
    %51 = arith.subf %43, %50 : vector<384x128xf32>
    %52 = vector.broadcast %5 : vector<1x128xf32> to vector<384x128xf32>
    %53 = arith.mulf %51, %52 : vector<384x128xf32>
    %54 = arith.mulf %53, %53 : vector<384x128xf32>
    %cst_26 = arith.constant dense<0.000000e+00> : vector<384xf32>
    %55 = vector.multi_reduction <add>, %54, %cst_26 [1] : vector<384x128xf32> to vector<384xf32>
    %56 = vector.shape_cast %55 : vector<384xf32> to vector<384x1xf32>
    %cst_27 = arith.constant 0.00999999977 : f32
    %57 = vector.broadcast %cst_27 : f32 to vector<384x1xf32>
    %58 = arith.mulf %56, %57 : vector<384x1xf32>
    %cst_28 = arith.constant 9.99999974E-6 : f32
    %59 = vector.broadcast %cst_28 : f32 to vector<384x1xf32>
    %60 = arith.addf %58, %59 : vector<384x1xf32>
    %61 = math.rsqrt %60 : vector<384x1xf32>
    %62 = vector.broadcast %61 : vector<384x1xf32> to vector<384x128xf32>
    %63 = arith.mulf %53, %62 : vector<384x128xf32>
    %64 = vector.broadcast %44 : vector<1x128xf32> to vector<384x128xf32>
    %65 = arith.mulf %63, %64 : vector<384x128xf32>
    %66 = vector.broadcast %45 : vector<1x128xf32> to vector<384x128xf32>
    %67 = arith.addf %65, %66 : vector<384x128xf32>
    %cst_29 = arith.constant 0.000000e+00 : f32
    %68 = vector.broadcast %cst_29 : f32 to vector<384x128xf32>
    %69 = arith.maximumf %67, %68 : vector<384x128xf32>
    %70 = arith.truncf %69 : vector<384x128xf32> to vector<384x128xbf16>
    %c0_30 = arith.constant 0 : index
    %c0_31 = arith.constant 0 : index
    %71 = vector.load %arg13[%c0_30, %c0_31] : memref<128x256xbf16, #tpu.memory_space<vmem>>, vector<128x256xbf16>
    %cst_32 = arith.constant dense<0.000000e+00> : vector<384x256xf32>
    %72 = tpu.matmul %70, %71, %cst_32 {dimension_numbers = #tpu.dot_dimension_numbers<[1], [0], [0], [1], [0, 0, 1, 1], [], []>} : vector<384x128xbf16>, vector<128x256xbf16>, vector<384x256xf32> -> vector<384x256xf32>
    %73 = vector.extract_strided_slice %72 {offsets = [0, 0], sizes = [384, 128], strides = [1, 1]} : vector<384x256xf32> to vector<384x128xf32>
    %74 = vector.extract_strided_slice %72 {offsets = [0, 128], sizes = [384, 128], strides = [1, 1]} : vector<384x256xf32> to vector<384x128xf32>
    %c0_33 = arith.constant 0 : index
    %c0_34 = arith.constant 0 : index
    %75 = vector.load %arg2[%c0_33, %c0_34] : memref<384x384xi8, #tpu.memory_space<vmem>>, vector<384x384xi8>
    %76 = arith.sitofp %75 : vector<384x384xi8> to vector<384x384xbf16>
    %c0_35 = arith.constant 0 : index
    %c0_36 = arith.constant 0 : index
    %77 = vector.load %arg3[%c0_35, %c0_36] : memref<384x1xf32, #tpu.memory_space<vmem>>, vector<384x1xf32>
    %c0_37 = arith.constant 0 : index
    %c0_38 = arith.constant 0 : index
    %78 = vector.load %arg4[%c0_37, %c0_38] : memref<384x1xf32, #tpu.memory_space<vmem>>, vector<384x1xf32>
    %79 = arith.truncf %73 : vector<384x128xf32> to vector<384x128xbf16>
    %cst_39 = arith.constant dense<0.000000e+00> : vector<384x128xf32>
    %80 = tpu.matmul %76, %79, %cst_39 {dimension_numbers = #tpu.dot_dimension_numbers<[1], [0], [0], [1], [0, 0, 1, 1], [], []>} : vector<384x384xbf16>, vector<384x128xbf16>, vector<384x128xf32> -> vector<384x128xf32>
    %81 = vector.broadcast %77 : vector<384x1xf32> to vector<384x128xf32>
    %82 = arith.mulf %81, %80 : vector<384x128xf32>
    %83 = arith.addf %82, %74 : vector<384x128xf32>
    %c0_40 = arith.constant 0 : index
    %c0_41 = arith.constant 0 : index
    %84 = vector.load %arg14[%c0_40, %c0_41] : memref<1x128xf32, #tpu.memory_space<vmem>>, vector<1x128xf32>
    %85 = vector.broadcast %84 : vector<1x128xf32> to vector<384x128xf32>
    %86 = arith.addf %83, %85 : vector<384x128xf32>
    %cst_42 = arith.constant 0.000000e+00 : f32
    %87 = vector.broadcast %cst_42 : f32 to vector<384x128xf32>
    %88 = arith.maximumf %86, %87 : vector<384x128xf32>
    %89 = arith.truncf %88 : vector<384x128xf32> to vector<384x128xbf16>
    %c0_43 = arith.constant 0 : index
    %c0_44 = arith.constant 0 : index
    %90 = vector.load %arg15[%c0_43, %c0_44] : memref<128x128xbf16, #tpu.memory_space<vmem>>, vector<128x128xbf16>
    %cst_45 = arith.constant dense<0.000000e+00> : vector<384x128xf32>
    %91 = tpu.matmul %89, %90, %cst_45 {dimension_numbers = #tpu.dot_dimension_numbers<[1], [0], [0], [1], [0, 0, 1, 1], [], []>} : vector<384x128xbf16>, vector<128x128xbf16>, vector<384x128xf32> -> vector<384x128xf32>
    %92 = vector.broadcast %78 : vector<384x1xf32> to vector<384x128xf32>
    %93 = arith.mulf %92, %91 : vector<384x128xf32>
    %94 = arith.truncf %93 : vector<384x128xf32> to vector<384x128xbf16>
    %cst_46 = arith.constant dense<0.000000e+00> : vector<384x128xf32>
    %95 = tpu.matmul %76, %94, %cst_46 {dimension_numbers = #tpu.dot_dimension_numbers<[1], [0], [0], [1], [0, 0, 1, 1], [], []>} : vector<384x384xbf16>, vector<384x128xbf16>, vector<384x128xf32> -> vector<384x128xf32>
    %96 = vector.broadcast %78 : vector<384x1xf32> to vector<384x128xf32>
    %97 = arith.mulf %96, %95 : vector<384x128xf32>
    %98 = vector.broadcast %78 : vector<384x1xf32> to vector<384x128xf32>
    %99 = arith.mulf %98, %93 : vector<384x128xf32>
    %100 = arith.addf %97, %99 : vector<384x128xf32>
    %c0_47 = arith.constant 0 : index
    %c0_48 = arith.constant 0 : index
    %101 = vector.load %arg16[%c0_47, %c0_48] : memref<1x128xf32, #tpu.memory_space<vmem>>, vector<1x128xf32>
    %102 = vector.broadcast %101 : vector<1x128xf32> to vector<384x128xf32>
    %103 = arith.addf %100, %102 : vector<384x128xf32>
    %cst_49 = arith.constant 0.000000e+00 : f32
    %104 = vector.broadcast %cst_49 : f32 to vector<384x128xf32>
    %105 = arith.maximumf %103, %104 : vector<384x128xf32>
    %106 = arith.truncf %105 : vector<384x128xf32> to vector<384x128xbf16>
    %c0_50 = arith.constant 0 : index
    %c0_51 = arith.constant 0 : index
    %107 = vector.load %arg17[%c0_50, %c0_51] : memref<128x128xbf16, #tpu.memory_space<vmem>>, vector<128x128xbf16>
    %cst_52 = arith.constant dense<0.000000e+00> : vector<384x128xf32>
    %108 = tpu.matmul %106, %107, %cst_52 {dimension_numbers = #tpu.dot_dimension_numbers<[1], [0], [0], [1], [0, 0, 1, 1], [], []>} : vector<384x128xbf16>, vector<128x128xbf16>, vector<384x128xf32> -> vector<384x128xf32>
    %109 = vector.broadcast %78 : vector<384x1xf32> to vector<384x128xf32>
    %110 = arith.mulf %109, %108 : vector<384x128xf32>
    %111 = arith.truncf %110 : vector<384x128xf32> to vector<384x128xbf16>
    %cst_53 = arith.constant dense<0.000000e+00> : vector<384x128xf32>
    %112 = tpu.matmul %76, %111, %cst_53 {dimension_numbers = #tpu.dot_dimension_numbers<[1], [0], [0], [1], [0, 0, 1, 1], [], []>} : vector<384x384xbf16>, vector<384x128xbf16>, vector<384x128xf32> -> vector<384x128xf32>
    %113 = vector.broadcast %78 : vector<384x1xf32> to vector<384x128xf32>
    %114 = arith.mulf %113, %112 : vector<384x128xf32>
    %115 = vector.broadcast %78 : vector<384x1xf32> to vector<384x128xf32>
    %116 = arith.mulf %115, %110 : vector<384x128xf32>
    %117 = arith.addf %114, %116 : vector<384x128xf32>
    %c0_54 = arith.constant 0 : index
    %c0_55 = arith.constant 0 : index
    %118 = vector.load %arg18[%c0_54, %c0_55] : memref<1x128xf32, #tpu.memory_space<vmem>>, vector<1x128xf32>
    %119 = vector.broadcast %118 : vector<1x128xf32> to vector<384x128xf32>
    %120 = arith.addf %117, %119 : vector<384x128xf32>
    %121 = tpu.iota {dimensions = array<i32: 1>} : vector<384x128xi32>
    %c4_i32 = arith.constant 4 : i32
    %122 = vector.broadcast %c4_i32 : i32 to vector<384x128xi32>
    %123 = arith.cmpi slt, %121, %122 : vector<384x128xi32>
    %cst_56 = arith.constant -1.000000e+30 : f32
    %124 = vector.broadcast %cst_56 : f32 to vector<384x128xf32>
    %125 = arith.select %123, %120, %124 : vector<384x128xi1>, vector<384x128xf32>
    %cst_57 = arith.constant dense<0xFF800000> : vector<384xf32>
    %126 = vector.multi_reduction <maximumf>, %125, %cst_57 [1] : vector<384x128xf32> to vector<384xf32>
    %127 = vector.shape_cast %126 : vector<384xf32> to vector<384x1xf32>
    %128 = vector.broadcast %127 : vector<384x1xf32> to vector<384x128xf32>
    %129 = arith.subf %125, %128 : vector<384x128xf32>
    %130 = math.exp %129 : vector<384x128xf32>
    %cst_58 = arith.constant dense<0.000000e+00> : vector<384xf32>
    %131 = vector.multi_reduction <add>, %130, %cst_58 [1] : vector<384x128xf32> to vector<384xf32>
    %132 = vector.shape_cast %131 : vector<384xf32> to vector<384x1xf32>
    %133 = math.log %132 : vector<384x1xf32>
    %134 = vector.broadcast %133 : vector<384x1xf32> to vector<384x128xf32>
    %135 = arith.subf %129, %134 : vector<384x128xf32>
    %c0_59 = arith.constant 0 : index
    %c0_60 = arith.constant 0 : index
    %136 = vector.load %arg19[%c0_59, %c0_60] : memref<384x128xf32, #tpu.memory_space<vmem>>, vector<384x128xf32>
    tpu.vector_store %arg19[%c0_59, %c0_60], %135 {strides = array<i32>} : memref<384x128xf32, #tpu.memory_space<vmem>>, vector<384x128xf32>,
    return
  }
  func.func @transform_0(%arg0: i32) -> (i32, i32) {
    %c0_i32 = arith.constant 0 : i32
    %c0_i32_0 = arith.constant 0 : i32
    %c0_i32_1 = arith.constant 0 : i32
    return %c0_i32, %c0_i32_0 : i32, i32
  }
  func.func @transform_1(%arg0: i32) -> (i32, i32) {
    %c0_i32 = arith.constant 0 : i32
    %c0_i32_0 = arith.constant 0 : i32
    %c0_i32_1 = arith.constant 0 : i32
    return %c0_i32, %c0_i32_0 : i32, i32
  }
  func.func @transform_2(%arg0: i32) -> (i32, i32) {
    %c0_i32 = arith.constant 0 : i32
    %c0_i32_0 = arith.constant 0 : i32
    %c0_i32_1 = arith.constant 0 : i32
    return %c0_i32, %c0_i32_0 : i32, i32
  }
  func.func @transform_3(%arg0: i32) -> (i32, i32) {
    %c0_i32 = arith.constant 0 : i32
    %c0_i32_0 = arith.constant 0 : i32
    %c0_i32_1 = arith.constant 0 : i32
    return %c0_i32, %c0_i32_0 : i32, i32
  }
  func.func @transform_4(%arg0: i32) -> (i32, i32) {
    %c0_i32 = arith.constant 0 : i32
    %c0_i32_0 = arith.constant 0 : i32
    %c0_i32_1 = arith.constant 0 : i32
    return %c0_i32, %c0_i32_0 : i32, i32
  }
  func.func @transform_5(%arg0: i32) -> (i32, i32) {
    %c0_i32 = arith.constant 0 : i32
    %c0_i32_0 = arith.constant 0 : i32
    %c0_i32_1 = arith.constant 0 : i32
    return %c0_i32, %c0_i32_0 : i32, i32
  }
  func.func @transform_6(%arg0: i32) -> (i32, i32) {
    %c0_i32 = arith.constant 0 : i32
    %c0_i32_0 = arith.constant 0 : i32
    %c0_i32_1 = arith.constant 0 : i32
    return %c0_i32, %c0_i32_0 : i32, i32
  }
  func.func @transform_7(%arg0: i32) -> (i32, i32) {
    %c0_i32 = arith.constant 0 : i32
    %c0_i32_0 = arith.constant 0 : i32
    %c0_i32_1 = arith.constant 0 : i32
    return %c0_i32, %c0_i32_0 : i32, i32
  }
  func.func @transform_8(%arg0: i32) -> (i32, i32) {
    %c0_i32 = arith.constant 0 : i32
    %c0_i32_0 = arith.constant 0 : i32
    %c0_i32_1 = arith.constant 0 : i32
    return %c0_i32, %c0_i32_0 : i32, i32
  }
  func.func @transform_9(%arg0: i32) -> (i32, i32) {
    %c0_i32 = arith.constant 0 : i32
    %c0_i32_0 = arith.constant 0 : i32
    %c0_i32_1 = arith.constant 0 : i32
    return %c0_i32, %c0_i32_0 : i32, i32
  }
  func.func @transform_10(%arg0: i32) -> (i32, i32) {
    %c0_i32 = arith.constant 0 : i32
    %c0_i32_0 = arith.constant 0 : i32
    %c0_i32_1 = arith.constant 0 : i32
    return %c0_i32, %c0_i32_0 : i32, i32
  }
  func.func @transform_11(%arg0: i32) -> (i32, i32) {
    %c0_i32 = arith.constant 0 : i32
    %c0_i32_0 = arith.constant 0 : i32
    %c0_i32_1 = arith.constant 0 : i32
    return %c0_i32, %c0_i32_0 : i32, i32
  }
  func.func @transform_12(%arg0: i32) -> (i32, i32) {
    %c0_i32 = arith.constant 0 : i32
    %c0_i32_0 = arith.constant 0 : i32
    %c0_i32_1 = arith.constant 0 : i32
    return %c0_i32, %c0_i32_0 : i32, i32
  }
  func.func @transform_13(%arg0: i32) -> (i32, i32) {
    %c0_i32 = arith.constant 0 : i32
    %c0_i32_0 = arith.constant 0 : i32
    %c0_i32_1 = arith.constant 0 : i32
    return %c0_i32, %c0_i32_0 : i32, i32
  }
  func.func @transform_14(%arg0: i32) -> (i32, i32) {
    %c0_i32 = arith.constant 0 : i32
    %c0_i32_0 = arith.constant 0 : i32
    %c0_i32_1 = arith.constant 0 : i32
    return %c0_i32, %c0_i32_0 : i32, i32
  }
  func.func @transform_15(%arg0: i32) -> (i32, i32) {
    %c0_i32 = arith.constant 0 : i32
    %c0_i32_0 = arith.constant 0 : i32
    %c0_i32_1 = arith.constant 0 : i32
    return %c0_i32, %c0_i32_0 : i32, i32
  }
  func.func @transform_16(%arg0: i32) -> (i32, i32) {
    %c0_i32 = arith.constant 0 : i32
    %c0_i32_0 = arith.constant 0 : i32
    %c0_i32_1 = arith.constant 0 : i32
    return %c0_i32, %c0_i32_0 : i32, i32
  }
  func.func @transform_17(%arg0: i32) -> (i32, i32) {
    %c0_i32 = arith.constant 0 : i32
    %c0_i32_0 = arith.constant 0 : i32
    %c0_i32_1 = arith.constant 0 : i32
    return %c0_i32, %c0_i32_0 : i32, i32
  }
  func.func @transform_18(%arg0: i32) -> (i32, i32) {
    %c0_i32 = arith.constant 0 : i32
    %c0_i32_0 = arith.constant 0 : i32
    %c0_i32_1 = arith.constant 0 : i32
    return %c0_i32, %c0_i32_0 : i32, i32
  }
}

</mosaic_0001>

<llo_original>
// kernel: tpu_custom_call.1
$region0: #{tpu_custom_call.1}
  #allocation0 [shape = 'u32[]', space=smem, size = 0x4, offset = 0x4, fixed_abs, tag = 'smem constant byte address 0x4 - core index']
  #allocation1 [shape = 'u32[144,128]{1,0:T(1,128)}', space=vmem, size = 0x12000, scoped, tag = 'internal scratch']
  %s0 = inlined_call_operand.vmem [shape: f32[384,16], index: 0, kind: input, shape index: {}]
  %s1 = inlined_call_operand.vmem [shape: s8[384,384], index: 1, kind: input, shape index: {}]
  %s2 = inlined_call_operand.vmem [shape: f32[384,1], index: 2, kind: input, shape index: {}]
  %s3 = inlined_call_operand.vmem [shape: f32[384,1], index: 3, kind: input, shape index: {}]
  %s4 = inlined_call_operand.vmem [shape: bf16[16,128], index: 4, kind: input, shape index: {}]
  %s5 = inlined_call_operand.vmem [shape: f32[1,128], index: 5, kind: input, shape index: {}]
  %s6 = inlined_call_operand.vmem [shape: f32[1,128], index: 6, kind: input, shape index: {}]
  %s7 = inlined_call_operand.vmem [shape: f32[1,128], index: 7, kind: input, shape index: {}]
  %s8 = inlined_call_operand.vmem [shape: bf16[128,128], index: 8, kind: input, shape index: {}]
  %s9 = inlined_call_operand.vmem [shape: f32[1,128], index: 9, kind: input, shape index: {}]
  %s10 = inlined_call_operand.vmem [shape: f32[1,128], index: 10, kind: input, shape index: {}]
  %s11 = inlined_call_operand.vmem [shape: f32[1,128], index: 11, kind: input, shape index: {}]
  %s12 = inlined_call_operand.vmem [shape: bf16[128,256], index: 12, kind: input, shape index: {}]
  %s13 = inlined_call_operand.vmem [shape: f32[1,128], index: 13, kind: input, shape index: {}]
  %s14 = inlined_call_operand.vmem [shape: bf16[128,128], index: 14, kind: input, shape index: {}]
  %s15 = inlined_call_operand.vmem [shape: f32[1,128], index: 15, kind: input, shape index: {}]
  %s16 = inlined_call_operand.vmem [shape: bf16[128,128], index: 16, kind: input, shape index: {}]
  %s17 = inlined_call_operand.vmem [shape: f32[1,128], index: 17, kind: input, shape index: {}]
  %s18 = inlined_call_operand.hbm [shape: f32[384,128], index: 18, kind: output, shape index: {}]
  %s19 = sld [smem:[#allocation0]]
  $region82: #{tpu_custom_call.1} parent=0
    _
  %s21 = ssub.s32 1, %s19
  %s22 = scalar_select 0, %s21, %s19
  $region1: #{tpu_custom_call.1} parent=0
    #allocation2 [shape = 'u8[196608]{0}', space=vmem, size = 0x30000, scoped, tag = 'output window, operand 0, single buffered']
    #allocation3 [shape = 's32[1]{0}', space=sflag, size = 0x4, scoped, tag = 'scoped memory for tpu_custom_call.1']
    %23 = vsyncpa [#allocation3], 0
    // Predicated region
    $region2: #{tpu_custom_call.1} parent=1 // pred_check
      _
    $region3: #{tpu_custom_call.1} parent=1 // pred_check_branch
      %25 = sbr.rel (0) target = $region5
    $region4: #{tpu_custom_call.1} parent=1 // pred_region
      _
    $region5: #{tpu_custom_call.1} parent=1 // pred_fallthru
      _
    // Predicated region
    $region6: #{tpu_custom_call.1} parent=1 // pred_check
      _
    $region7: #{tpu_custom_call.1} parent=1 // pred_check_branch
      %27 = sbr.rel (0) target = $region9
    $region8: #{tpu_custom_call.1} parent=1 // pred_region
      _
    $region9: #{tpu_custom_call.1} parent=1 // pred_fallthru
      _
    // Predicated region
    $region10: #{tpu_custom_call.1} parent=1 // pred_check
      _
    $region11: #{tpu_custom_call.1} parent=1 // pred_check_branch
      %29 = sbr.rel (0) target = $region13
    $region12: #{tpu_custom_call.1} parent=1 // pred_region
      _
    $region13: #{tpu_custom_call.1} parent=1 // pred_fallthru
      _
    // Predicated region
    $region14: #{tpu_custom_call.1} parent=1 // pred_check
      _
    $region15: #{tpu_custom_call.1} parent=1 // pred_check_branch
      %31 = sbr.rel (0) target = $region17
    $region16: #{tpu_custom_call.1} parent=1 // pred_region
      _
    $region17: #{tpu_custom_call.1} parent=1 // pred_fallthru
      _
    // Predicated region
    $region18: #{tpu_custom_call.1} parent=1 // pred_check
      _
    $region19: #{tpu_custom_call.1} parent=1 // pred_check_branch
      %33 = sbr.rel (0) target = $region21
    $region20: #{tpu_custom_call.1} parent=1 // pred_region
      _
    $region21: #{tpu_custom_call.1} parent=1 // pred_fallthru
      _
    // Predicated region
    $region22: #{tpu_custom_call.1} parent=1 // pred_check
      _
    $region23: #{tpu_custom_call.1} parent=1 // pred_check_branch
      %35 = sbr.rel (0) target = $region25
    $region24: #{tpu_custom_call.1} parent=1 // pred_region
      _
    $region25: #{tpu_custom_call.1} parent=1 // pred_fallthru
      _
    // Predicated region
    $region26: #{tpu_custom_call.1} parent=1 // pred_check
      _
    $region27: #{tpu_custom_call.1} parent=1 // pred_check_branch
      %37 = sbr.rel (0) target = $region29
    $region28: #{tpu_custom_call.1} parent=1 // pred_region
      _
    $region29: #{tpu_custom_call.1} parent=1 // pred_fallthru
      _
    // Predicated region
    $region30: #{tpu_custom_call.1} parent=1 // pred_check
      _
    $region31: #{tpu_custom_call.1} parent=1 // pred_check_branch
      %39 = sbr.rel (0) target = $region33
    $region32: #{tpu_custom_call.1} parent=1 // pred_region
      _
    $region33: #{tpu_custom_call.1} parent=1 // pred_fallthru
      _
    // Predicated region
    $region34: #{tpu_custom_call.1} parent=1 // pred_check
      _
    $region35: #{tpu_custom_call.1} parent=1 // pred_check_branch
      %41 = sbr.rel (0) target = $region37
    $region36: #{tpu_custom_call.1} parent=1 // pred_region
      _
    $region37: #{tpu_custom_call.1} parent=1 // pred_fallthru
      _
    // Predicated region
    $region38: #{tpu_custom_call.1} parent=1 // pred_check
      _
    $region39: #{tpu_custom_call.1} parent=1 // pred_check_branch
      %43 = sbr.rel (0) target = $region41
    $region40: #{tpu_custom_call.1} parent=1 // pred_region
      _
    $region41: #{tpu_custom_call.1} parent=1 // pred_fallthru
      _
    // Predicated region
    $region42: #{tpu_custom_call.1} parent=1 // pred_check
      _
    $region43: #{tpu_custom_call.1} parent=1 // pred_check_branch
      %45 = sbr.rel (0) target = $region45
    $region44: #{tpu_custom_call.1} parent=1 // pred_region
      _
    $region45: #{tpu_custom_call.1} parent=1 // pred_fallthru
      _
    // Predicated region
    $region46: #{tpu_custom_call.1} parent=1 // pred_check
      _
    $region47: #{tpu_custom_call.1} parent=1 // pred_check_branch
      %47 = sbr.rel (0) target = $region49
    $region48: #{tpu_custom_call.1} parent=1 // pred_region
      _
    $region49: #{tpu_custom_call.1} parent=1 // pred_fallthru
      _
    // Predicated region
    $region50: #{tpu_custom_call.1} parent=1 // pred_check
      _
    $region51: #{tpu_custom_call.1} parent=1 // pred_check_branch
      %49 = sbr.rel (0) target = $region53
    $region52: #{tpu_custom_call.1} parent=1 // pred_region
      _
    $region53: #{tpu_custom_call.1} parent=1 // pred_fallthru
      _
    // Predicated region
    $region54: #{tpu_custom_call.1} parent=1 // pred_check
      _
    $region55: #{tpu_custom_call.1} parent=1 // pred_check_branch
      %51 = sbr.rel (0) target = $region57
    $region56: #{tpu_custom_call.1} parent=1 // pred_region
      _
    $region57: #{tpu_custom_call.1} parent=1 // pred_fallthru
      _
    // Predicated region
    $region58: #{tpu_custom_call.1} parent=1 // pred_check
      _
    $region59: #{tpu_custom_call.1} parent=1 // pred_check_branch
      %53 = sbr.rel (0) target = $region61
    $region60: #{tpu_custom_call.1} parent=1 // pred_region
      _
    $region61: #{tpu_custom_call.1} parent=1 // pred_fallthru
      _
    // Predicated region
    $region62: #{tpu_custom_call.1} parent=1 // pred_check
      _
    $region63: #{tpu_custom_call.1} parent=1 // pred_check_branch
      %55 = sbr.rel (0) target = $region65
    $region64: #{tpu_custom_call.1} parent=1 // pred_region
      _
    $region65: #{tpu_custom_call.1} parent=1 // pred_fallthru
      _
    // Predicated region
    $region66: #{tpu_custom_call.1} parent=1 // pred_check
      _
    $region67: #{tpu_custom_call.1} parent=1 // pred_check_branch
      %57 = sbr.rel (0) target = $region69
    $region68: #{tpu_custom_call.1} parent=1 // pred_region
      _
    $region69: #{tpu_custom_call.1} parent=1 // pred_fallthru
      _
    // Predicated region
    $region70: #{tpu_custom_call.1} parent=1 // pred_check
      _
    $region71: #{tpu_custom_call.1} parent=1 // pred_check_branch
      %59 = sbr.rel (0) target = $region73
    $region72: #{tpu_custom_call.1} parent=1 // pred_region
      _
    $region73: #{tpu_custom_call.1} parent=1 // pred_fallthru
      _
    %v61 = vld [vmem:[%s0] sm:$0xff]
    %v62 = vld [vmem:[%s0 + $0x8] sm:$0xff]
    %v63 = vld [vmem:[%s0 + $0x10] sm:$0xff]
    %v64 = vld [vmem:[%s0 + $0x18] sm:$0xff]
    %v65 = vld [vmem:[%s0 + $0x20] sm:$0xff]
    %v66 = vld [vmem:[%s0 + $0x28] sm:$0xff]
    %v67 = vld [vmem:[%s0 + $0x30] sm:$0xff]
    %v68 = vld [vmem:[%s0 + $0x38] sm:$0xff]
    %v69 = vld [vmem:[%s0 + $0x40] sm:$0xff]
    %v70 = vld [vmem:[%s0 + $0x48] sm:$0xff]
    %v71 = vld [vmem:[%s0 + $0x50] sm:$0xff]
    %v72 = vld [vmem:[%s0 + $0x58] sm:$0xff]
    %v73 = vld [vmem:[%s0 + $0x60] sm:$0xff]
    %v74 = vld [vmem:[%s0 + $0x68] sm:$0xff]
    %v75 = vld [vmem:[%s0 + $0x70] sm:$0xff]
    %v76 = vld [vmem:[%s0 + $0x78] sm:$0xff]
    %v77 = vld [vmem:[%s0 + $0x80] sm:$0xff]
    %v78 = vld [vmem:[%s0 + $0x88] sm:$0xff]
    %v79 = vld [vmem:[%s0 + $0x90] sm:$0xff]
    %v80 = vld [vmem:[%s0 + $0x98] sm:$0xff]
    %v81 = vld [vmem:[%s0 + $0xa0] sm:$0xff]
    %v82 = vld [vmem:[%s0 + $0xa8] sm:$0xff]
    %v83 = vld [vmem:[%s0 + $0xb0] sm:$0xff]
    %v84 = vld [vmem:[%s0 + $0xb8] sm:$0xff]
    %v85 = vld [vmem:[%s0 + $0xc0] sm:$0xff]
    %v86 = vld [vmem:[%s0 + $0xc8] sm:$0xff]
    %v87 = vld [vmem:[%s0 + $0xd0] sm:$0xff]
    %v88 = vld [vmem:[%s0 + $0xd8] sm:$0xff]
    %v89 = vld [vmem:[%s0 + $0xe0] sm:$0xff]
    %v90 = vld [vmem:[%s0 + $0xe8] sm:$0xff]
    %v91 = vld [vmem:[%s0 + $0xf0] sm:$0xff]
    %v92 = vld [vmem:[%s0 + $0xf8] sm:$0xff]
    %v93 = vld [vmem:[%s0 + $0x100] sm:$0xff]
    %v94 = vld [vmem:[%s0 + $0x108] sm:$0xff]
    %v95 = vld [vmem:[%s0 + $0x110] sm:$0xff]
    %v96 = vld [vmem:[%s0 + $0x118] sm:$0xff]
    %v97 = vld [vmem:[%s0 + $0x120] sm:$0xff]
    %v98 = vld [vmem:[%s0 + $0x128] sm:$0xff]
    %v99 = vld [vmem:[%s0 + $0x130] sm:$0xff]
    %v100 = vld [vmem:[%s0 + $0x138] sm:$0xff]
    %v101 = vld [vmem:[%s0 + $0x140] sm:$0xff]
    %v102 = vld [vmem:[%s0 + $0x148] sm:$0xff]
    %v103 = vld [vmem:[%s0 + $0x150] sm:$0xff]
    %v104 = vld [vmem:[%s0 + $0x158] sm:$0xff]
    %v105 = vld [vmem:[%s0 + $0x160] sm:$0xff]
    %v106 = vld [vmem:[%s0 + $0x168] sm:$0xff]
    %v107 = vld [vmem:[%s0 + $0x170] sm:$0xff]
    %v108 = vld [vmem:[%s0 + $0x178] sm:$0xff]
    %v109 = vlaneseq
    %v110 = vand.u32 %v109, 127
    %vm111 = vcmp.lt.s32.totalorder %v110, 100
    %v112 = vsel %vm111, 1, 0
    %v113 = vcvt.s32.f32 %v112
    %v114 = vpack.c.bf16 %v62, %v61
    %v115 = vpack.c.bf16 %v64, %v63
    %v116 = vpack.c.bf16 %v66, %v65
    %v117 = vpack.c.bf16 %v68, %v67
    %v118 = vpack.c.bf16 %v70, %v69
    %v119 = vpack.c.bf16 %v72, %v71
    %v120 = vpack.c.bf16 %v74, %v73
    %v121 = vpack.c.bf16 %v76, %v75
    %v122 = vpack.c.bf16 %v78, %v77
    %v123 = vpack.c.bf16 %v80, %v79
    %v124 = vpack.c.bf16 %v82, %v81
    %v125 = vpack.c.bf16 %v84, %v83
    %v126 = vpack.c.bf16 %v86, %v85
    %v127 = vpack.c.bf16 %v88, %v87
    %v128 = vpack.c.bf16 %v90, %v89
    %v129 = vpack.c.bf16 %v92, %v91
    %v130 = vpack.c.bf16 %v94, %v93
    %v131 = vpack.c.bf16 %v96, %v95
    %v132 = vpack.c.bf16 %v98, %v97
    %v133 = vpack.c.bf16 %v100, %v99
    %v134 = vpack.c.bf16 %v102, %v101
    %v135 = vpack.c.bf16 %v104, %v103
    %v136 = vpack.c.bf16 %v106, %v105
    %v137 = vpack.c.bf16 %v108, %v107
    %v138 = vld [vmem:[%s4] sm:$0xf]
    %v139 = vld [vmem:[%s4 + $0x4] sm:$0xf]
    %v140 = vld [vmem:[%s5] sm:$0x1]
    %v142 = vlaneseq
    %v143 = vshrl.u32 %v142, 7
    %v144 = vsub.s32 0, %v143
    %v145 = vrot.slane %v140, %v144
    %v149 = vunpack.c.l.b16 %v138
    %v150 = vunpack.c.l.b16 %v139
    %v151 = vpack.c.b16 %v150, %v149
    %vm153 = vcmask 130048
    %v155 = vsel %vm153, %v114, 0
    %v158 = vsel %vm153, %v115, 0
    %v161 = vsel %vm153, %v116, 0
    %v164 = vsel %vm153, %v117, 0
    %v167 = vsel %vm153, %v118, 0
    %v170 = vsel %vm153, %v119, 0
    %v173 = vsel %vm153, %v120, 0
    %v176 = vsel %vm153, %v121, 0
    %v179 = vsel %vm153, %v122, 0
    %v182 = vsel %vm153, %v123, 0
    %v185 = vsel %vm153, %v124, 0
    %v188 = vsel %vm153, %v125, 0
    %v191 = vsel %vm153, %v126, 0
    %v194 = vsel %vm153, %v127, 0
    %v197 = vsel %vm153, %v128, 0
    %v200 = vsel %vm153, %v129, 0
    %v203 = vsel %vm153, %v130, 0
    %v206 = vsel %vm153, %v131, 0
    %v209 = vsel %vm153, %v132, 0
    %v212 = vsel %vm153, %v133, 0
    %v215 = vsel %vm153, %v134, 0
    %v218 = vsel %vm153, %v135, 0
    %v221 = vsel %vm153, %v136, 0
    %v224 = vsel %vm153, %v137, 0
    %226 = vmatprep.subr.bf16.mxu0 0
    %227 = vmatpush1.bf16.msra.mxu0 0
    %228 = vmatprep.subr.bf16.mxu0 0
    %229 = vmatpush1.bf16.msra.mxu0 0
    %230 = vmatprep.subr.bf16.mxu0 0
    %231 = vmatpush1.bf16.msra.mxu0 0
    %232 = vmatprep.subr.bf16.mxu0 0
    %233 = vmatpush1.bf16.msra.mxu0 0
    %234 = vmatprep.subr.bf16.mxu0 0
    %235 = vmatpush1.bf16.msra.mxu0 0
    %236 = vmatprep.subr.bf16.mxu0 0
    %237 = vmatpush1.bf16.msra.mxu0 0
    %238 = vmatprep.subr.bf16.mxu0 0
    %239 = vmatpush1.bf16.msra.mxu0 0
    %240 = vmatprep.subr.bf16.mxu0 0
    %241 = vmatpush1.bf16.msra.mxu0 %v151
    %242 = vmatprep.subr.bf16.mxu0 0
    %243 = vmatpush2.bf16.msra.mxu0 0
    %244 = vmatprep.subr.bf16.mxu0 0
    %245 = vmatpush2.bf16.msra.mxu0 0
    %246 = vmatprep.subr.bf16.mxu0 0
    %247 = vmatpush2.bf16.msra.mxu0 0
    %248 = vmatprep.subr.bf16.mxu0 0
    %249 = vmatpush2.bf16.msra.mxu0 0
    %250 = vmatprep.subr.bf16.mxu0 0
    %251 = vmatpush2.bf16.msra.mxu0 0
    %252 = vmatprep.subr.bf16.mxu0 0
    %253 = vmatpush2.bf16.msra.mxu0 0
    %254 = vmatprep.subr.bf16.mxu0 0
    %255 = vmatpush2.bf16.msra.mxu0 0
    %256 = vmatprep.subr.bf16.mxu0 0
    %257 = vmatpush2.bf16.msra.mxu0 0
    %258 = vmatprep.mubr.bf16.mxu0 0
    %259 = vmatmul.mubr.bf16.gmra.mxu0 %v155
    %v260 = vpop.f32.mrf.mxu0
    %v261 = vadd.f32 %v145, %v260
    %v262 = vpop.f32.mrf.mxu0
    %v263 = vpop.f32.mrf.mxu0
    %v264 = vadd.f32 %v145, %v263
    %v265 = vpop.f32.mrf.mxu0
    %266 = vmatprep.mubr.bf16.mxu0 0
    %267 = vmatmul.mubr.bf16.gmra.mxu0 %v158
    %v268 = vpop.f32.mrf.mxu0
    %v269 = vadd.f32 %v145, %v268
    %v270 = vpop.f32.mrf.mxu0
    %v271 = vpop.f32.mrf.mxu0
    %v272 = vadd.f32 %v145, %v271
    %v273 = vpop.f32.mrf.mxu0
    %274 = vmatprep.mubr.bf16.mxu0 0
    %275 = vmatmul.mubr.bf16.gmra.mxu0 %v161
    %v276 = vpop.f32.mrf.mxu0
    %v277 = vadd.f32 %v145, %v276
    %v278 = vpop.f32.mrf.mxu0
    %v279 = vpop.f32.mrf.mxu0
    %v280 = vadd.f32 %v145, %v279
    %v281 = vpop.f32.mrf.mxu0
    %282 = vmatprep.mubr.bf16.mxu0 0
    %283 = vmatmul.mubr.bf16.gmra.mxu0 %v164
    %v284 = vpop.f32.mrf.mxu0
    %v285 = vadd.f32 %v145, %v284
    %v286 = vpop.f32.mrf.mxu0
    %v287 = vpop.f32.mrf.mxu0
    %v288 = vadd.f32 %v145, %v287
    %v289 = vpop.f32.mrf.mxu0
    %290 = vmatprep.mubr.bf16.mxu0 0
    %291 = vmatmul.mubr.bf16.gmra.mxu0 %v167
    %v292 = vpop.f32.mrf.mxu0
    %v293 = vadd.f32 %v145, %v292
    %v294 = vpop.f32.mrf.mxu0
    %v295 = vpop.f32.mrf.mxu0
    %v296 = vadd.f32 %v145, %v295
    %v297 = vpop.f32.mrf.mxu0
    %298 = vmatprep.mubr.bf16.mxu0 0
    %299 = vmatmul.mubr.bf16.gmra.mxu0 %v170
    %v300 = vpop.f32.mrf.mxu0
    %v301 = vadd.f32 %v145, %v300
    %v302 = vpop.f32.mrf.mxu0
    %v303 = vpop.f32.mrf.mxu0
    %v304 = vadd.f32 %v145, %v303
    %v305 = vpop.f32.mrf.mxu0
    %306 = vmatprep.mubr.bf16.mxu0 0
    %307 = vmatmul.mubr.bf16.gmra.mxu0 %v173
    %v308 = vpop.f32.mrf.mxu0
    %v309 = vadd.f32 %v145, %v308
    %v310 = vpop.f32.mrf.mxu0
    %v311 = vpop.f32.mrf.mxu0
    %v312 = vadd.f32 %v145, %v311
    %v313 = vpop.f32.mrf.mxu0
    %314 = vmatprep.mubr.bf16.mxu0 0
    %315 = vmatmul.mubr.bf16.gmra.mxu0 %v176
    %v316 = vpop.f32.mrf.mxu0
    %v317 = vadd.f32 %v145, %v316
    %v318 = vpop.f32.mrf.mxu0
    %v319 = vpop.f32.mrf.mxu0
    %v320 = vadd.f32 %v145, %v319
    %v321 = vpop.f32.mrf.mxu0
    %322 = vmatprep.mubr.bf16.mxu0 0
    %323 = vmatmul.mubr.bf16.gmra.mxu0 %v179
    %v324 = vpop.f32.mrf.mxu0
    %v325 = vadd.f32 %v145, %v324
    %v326 = vpop.f32.mrf.mxu0
    %v327 = vpop.f32.mrf.mxu0
    %v328 = vadd.f32 %v145, %v327
    %v329 = vpop.f32.mrf.mxu0
    %330 = vmatprep.mubr.bf16.mxu0 0
    %331 = vmatmul.mubr.bf16.gmra.mxu0 %v182
    %v332 = vpop.f32.mrf.mxu0
    %v333 = vadd.f32 %v145, %v332
    %v334 = vpop.f32.mrf.mxu0
    %v335 = vpop.f32.mrf.mxu0
    %v336 = vadd.f32 %v145, %v335
    %v337 = vpop.f32.mrf.mxu0
    %338 = vmatprep.mubr.bf16.mxu0 0
    %339 = vmatmul.mubr.bf16.gmra.mxu0 %v185
    %v340 = vpop.f32.mrf.mxu0
    %v341 = vadd.f32 %v145, %v340
    %v342 = vpop.f32.mrf.mxu0
    %v343 = vpop.f32.mrf.mxu0
    %v344 = vadd.f32 %v145, %v343
    %v345 = vpop.f32.mrf.mxu0
    %346 = vmatprep.mubr.bf16.mxu0 0
    %347 = vmatmul.mubr.bf16.gmra.mxu0 %v188
    %v348 = vpop.f32.mrf.mxu0
    %v349 = vadd.f32 %v145, %v348
    %v350 = vpop.f32.mrf.mxu0
    %v351 = vpop.f32.mrf.mxu0
    %v352 = vadd.f32 %v145, %v351
    %v353 = vpop.f32.mrf.mxu0
    %354 = vmatprep.mubr.bf16.mxu0 0
    %355 = vmatmul.mubr.bf16.gmra.mxu0 %v191
    %v356 = vpop.f32.mrf.mxu0
    %v357 = vadd.f32 %v145, %v356
    %v358 = vpop.f32.mrf.mxu0
    %v359 = vpop.f32.mrf.mxu0
    %v360 = vadd.f32 %v145, %v359
    %v361 = vpop.f32.mrf.mxu0
    %362 = vmatprep.mubr.bf16.mxu0 0
    %363 = vmatmul.mubr.bf16.gmra.mxu0 %v194
    %v364 = vpop.f32.mrf.mxu0
    %v365 = vadd.f32 %v145, %v364
    %v366 = vpop.f32.mrf.mxu0
    %v367 = vpop.f32.mrf.mxu0
    %v368 = vadd.f32 %v145, %v367
    %v369 = vpop.f32.mrf.mxu0
    %370 = vmatprep.mubr.bf16.mxu0 0
    %371 = vmatmul.mubr.bf16.gmra.mxu0 %v197
    %v372 = vpop.f32.mrf.mxu0
    %v373 = vadd.f32 %v145, %v372
    %v374 = vpop.f32.mrf.mxu0
    %v375 = vpop.f32.mrf.mxu0
    %v376 = vadd.f32 %v145, %v375
    %v377 = vpop.f32.mrf.mxu0
    %378 = vmatprep.mubr.bf16.mxu0 0
    %379 = vmatmul.mubr.bf16.gmra.mxu0 %v200
    %v380 = vpop.f32.mrf.mxu0
    %v381 = vadd.f32 %v145, %v380
    %v382 = vpop.f32.mrf.mxu0
    %v383 = vpop.f32.mrf.mxu0
    %v384 = vadd.f32 %v145, %v383
    %v385 = vpop.f32.mrf.mxu0
    %386 = vmatprep.mubr.bf16.mxu0 0
    %387 = vmatmul.mubr.bf16.gmra.mxu0 %v203
    %v388 = vpop.f32.mrf.mxu0
    %v389 = vadd.f32 %v145, %v388
    %v390 = vpop.f32.mrf.mxu0
    %v391 = vpop.f32.mrf.mxu0
    %v392 = vadd.f32 %v145, %v391
    %v393 = vpop.f32.mrf.mxu0
    %394 = vmatprep.mubr.bf16.mxu0 0
    %395 = vmatmul.mubr.bf16.gmra.mxu0 %v206
    %v396 = vpop.f32.mrf.mxu0
    %v397 = vadd.f32 %v145, %v396
    %v398 = vpop.f32.mrf.mxu0
    %v399 = vpop.f32.mrf.mxu0
    %v400 = vadd.f32 %v145, %v399
    %v401 = vpop.f32.mrf.mxu0
    %402 = vmatprep.mubr.bf16.mxu0 0
    %403 = vmatmul.mubr.bf16.gmra.mxu0 %v209
    %v404 = vpop.f32.mrf.mxu0
    %v405 = vadd.f32 %v145, %v404
    %v406 = vpop.f32.mrf.mxu0
    %v407 = vpop.f32.mrf.mxu0
    %v408 = vadd.f32 %v145, %v407
    %v409 = vpop.f32.mrf.mxu0
    %410 = vmatprep.mubr.bf16.mxu0 0
    %411 = vmatmul.mubr.bf16.gmra.mxu0 %v212
    %v412 = vpop.f32.mrf.mxu0
    %v413 = vadd.f32 %v145, %v412
    %v414 = vpop.f32.mrf.mxu0
    %v415 = vpop.f32.mrf.mxu0
    %v416 = vadd.f32 %v145, %v415
    %v417 = vpop.f32.mrf.mxu0
    %418 = vmatprep.mubr.bf16.mxu0 0
    %419 = vmatmul.mubr.bf16.gmra.mxu0 %v215
    %v420 = vpop.f32.mrf.mxu0
    %v421 = vadd.f32 %v145, %v420
    %v422 = vpop.f32.mrf.mxu0
    %v423 = vpop.f32.mrf.mxu0
    %v424 = vadd.f32 %v145, %v423
    %v425 = vpop.f32.mrf.mxu0
    %426 = vmatprep.mubr.bf16.mxu0 0
    %427 = vmatmul.mubr.bf16.gmra.mxu0 %v218
    %v428 = vpop.f32.mrf.mxu0
    %v429 = vadd.f32 %v145, %v428
    %v430 = vpop.f32.mrf.mxu0
    %v431 = vpop.f32.mrf.mxu0
    %v432 = vadd.f32 %v145, %v431
    %v433 = vpop.f32.mrf.mxu0
    %434 = vmatprep.mubr.bf16.mxu0 0
    %435 = vmatmul.mubr.bf16.gmra.mxu0 %v221
    %v436 = vpop.f32.mrf.mxu0
    %v437 = vadd.f32 %v145, %v436
    %v438 = vpop.f32.mrf.mxu0
    %v439 = vpop.f32.mrf.mxu0
    %v440 = vadd.f32 %v145, %v439
    %v441 = vpop.f32.mrf.mxu0
    %442 = vmatprep.mubr.bf16.mxu0 0
    %443 = vmatmul.mubr.bf16.gmra.mxu0 %v224
    %v444 = vpop.f32.mrf.mxu0
    %v445 = vadd.f32 %v145, %v444
    %v446 = vpop.f32.mrf.mxu0
    %v447 = vpop.f32.mrf.mxu0
    %v448 = vadd.f32 %v145, %v447
    %v449 = vpop.f32.mrf.mxu0
    %450 = vdwg.mxu0
    %v451 = vld [vmem:[%s6] sm:$0x1]
    %v452 = vld [vmem:[%s7] sm:$0x1]
    %453 = vadd.xlane.f32.xlu0 %v261
    %v454 = vpop.xlane.xlu0 %453
    %455 = vadd.xlane.f32.xlu0 %v264
    %v456 = vpop.xlane.xlu0 %455
    %457 = vadd.xlane.f32.xlu0 %v269
    %v458 = vpop.xlane.xlu0 %457
    %459 = vadd.xlane.f32.xlu0 %v272
    %v460 = vpop.xlane.xlu0 %459
    %461 = vadd.xlane.f32.xlu0 %v277
    %v462 = vpop.xlane.xlu0 %461
    %463 = vadd.xlane.f32.xlu0 %v280
    %v464 = vpop.xlane.xlu0 %463
    %465 = vadd.xlane.f32.xlu0 %v285
    %v466 = vpop.xlane.xlu0 %465
    %467 = vadd.xlane.f32.xlu0 %v288
    %v468 = vpop.xlane.xlu0 %467
    %469 = vadd.xlane.f32.xlu0 %v293
    %v470 = vpop.xlane.xlu0 %469
    %471 = vadd.xlane.f32.xlu0 %v296
    %v472 = vpop.xlane.xlu0 %471
    %473 = vadd.xlane.f32.xlu0 %v301
    %v474 = vpop.xlane.xlu0 %473
    %475 = vadd.xlane.f32.xlu0 %v304
    %v476 = vpop.xlane.xlu0 %475
    %477 = vadd.xlane.f32.xlu0 %v309
    %v478 = vpop.xlane.xlu0 %477
    %479 = vadd.xlane.f32.xlu0 %v312
    %v480 = vpop.xlane.xlu0 %479
    %481 = vadd.xlane.f32.xlu0 %v317
    %v482 = vpop.xlane.xlu0 %481
    %483 = vadd.xlane.f32.xlu0 %v320
    %v484 = vpop.xlane.xlu0 %483
    %485 = vadd.xlane.f32.xlu0 %v325
    %v486 = vpop.xlane.xlu0 %485
    %487 = vadd.xlane.f32.xlu0 %v328
    %v488 = vpop.xlane.xlu0 %487
    %489 = vadd.xlane.f32.xlu0 %v333
    %v490 = vpop.xlane.xlu0 %489
    %491 = vadd.xlane.f32.xlu0 %v336
    %v492 = vpop.xlane.xlu0 %491
    %493 = vadd.xlane.f32.xlu0 %v341
    %v494 = vpop.xlane.xlu0 %493
    %495 = vadd.xlane.f32.xlu0 %v344
    %v496 = vpop.xlane.xlu0 %495
    %497 = vadd.xlane.f32.xlu0 %v349
    %v498 = vpop.xlane.xlu0 %497
    %499 = vadd.xlane.f32.xlu0 %v352
    %v500 = vpop.xlane.xlu0 %499
    %501 = vadd.xlane.f32.xlu0 %v357
    %v502 = vpop.xlane.xlu0 %501
    %503 = vadd.xlane.f32.xlu0 %v360
    %v504 = vpop.xlane.xlu0 %503
    %505 = vadd.xlane.f32.xlu0 %v365
    %v506 = vpop.xlane.xlu0 %505
    %507 = vadd.xlane.f32.xlu0 %v368
    %v508 = vpop.xlane.xlu0 %507
    %509 = vadd.xlane.f32.xlu0 %v373
    %v510 = vpop.xlane.xlu0 %509
    %511 = vadd.xlane.f32.xlu0 %v376
    %v512 = vpop.xlane.xlu0 %511
    %513 = vadd.xlane.f32.xlu0 %v381
    %v514 = vpop.xlane.xlu0 %513
    %515 = vadd.xlane.f32.xlu0 %v384
    %v516 = vpop.xlane.xlu0 %515
    %517 = vadd.xlane.f32.xlu0 %v389
    %v518 = vpop.xlane.xlu0 %517
    %519 = vadd.xlane.f32.xlu0 %v392
    %v520 = vpop.xlane.xlu0 %519
    %521 = vadd.xlane.f32.xlu0 %v397
    %v522 = vpop.xlane.xlu0 %521
    %523 = vadd.xlane.f32.xlu0 %v400
    %v524 = vpop.xlane.xlu0 %523
    %525 = vadd.xlane.f32.xlu0 %v405
    %v526 = vpop.xlane.xlu0 %525
    %527 = vadd.xlane.f32.xlu0 %v408
    %v528 = vpop.xlane.xlu0 %527
    %529 = vadd.xlane.f32.xlu0 %v413
    %v530 = vpop.xlane.xlu0 %529
    %531 = vadd.xlane.f32.xlu0 %v416
    %v532 = vpop.xlane.xlu0 %531
    %533 = vadd.xlane.f32.xlu0 %v421
    %v534 = vpop.xlane.xlu0 %533
    %535 = vadd.xlane.f32.xlu0 %v424
    %v536 = vpop.xlane.xlu0 %535
    %537 = vadd.xlane.f32.xlu0 %v429
    %v538 = vpop.xlane.xlu0 %537
    %539 = vadd.xlane.f32.xlu0 %v432
    %v540 = vpop.xlane.xlu0 %539
    %541 = vadd.xlane.f32.xlu0 %v437
    %v542 = vpop.xlane.xlu0 %541
    %543 = vadd.xlane.f32.xlu0 %v440
    %v544 = vpop.xlane.xlu0 %543
    %545 = vadd.xlane.f32.xlu0 %v445
    %v546 = vpop.xlane.xlu0 %545
    %547 = vadd.xlane.f32.xlu0 %v448
    %v548 = vpop.xlane.xlu0 %547
    %v549 = vmul.f32 %v454, 0.01
    %v550 = vmul.f32 %v456, 0.01
    %v551 = vmul.f32 %v458, 0.01
    %v552 = vmul.f32 %v460, 0.01
    %v553 = vmul.f32 %v462, 0.01
    %v554 = vmul.f32 %v464, 0.01
    %v555 = vmul.f32 %v466, 0.01
    %v556 = vmul.f32 %v468, 0.01
    %v557 = vmul.f32 %v470, 0.01
    %v558 = vmul.f32 %v472, 0.01
    %v559 = vmul.f32 %v474, 0.01
    %v560 = vmul.f32 %v476, 0.01
    %v561 = vmul.f32 %v478, 0.01
    %v562 = vmul.f32 %v480, 0.01
    %v563 = vmul.f32 %v482, 0.01
    %v564 = vmul.f32 %v484, 0.01
    %v565 = vmul.f32 %v486, 0.01
    %v566 = vmul.f32 %v488, 0.01
    %v567 = vmul.f32 %v490, 0.01
    %v568 = vmul.f32 %v492, 0.01
    %v569 = vmul.f32 %v494, 0.01
    %v570 = vmul.f32 %v496, 0.01
    %v571 = vmul.f32 %v498, 0.01
    %v572 = vmul.f32 %v500, 0.01
    %v573 = vmul.f32 %v502, 0.01
    %v574 = vmul.f32 %v504, 0.01
    %v575 = vmul.f32 %v506, 0.01
    %v576 = vmul.f32 %v508, 0.01
    %v577 = vmul.f32 %v510, 0.01
    %v578 = vmul.f32 %v512, 0.01
    %v579 = vmul.f32 %v514, 0.01
    %v580 = vmul.f32 %v516, 0.01
    %v581 = vmul.f32 %v518, 0.01
    %v582 = vmul.f32 %v520, 0.01
    %v583 = vmul.f32 %v522, 0.01
    %v584 = vmul.f32 %v524, 0.01
    %v585 = vmul.f32 %v526, 0.01
    %v586 = vmul.f32 %v528, 0.01
    %v587 = vmul.f32 %v530, 0.01
    %v588 = vmul.f32 %v532, 0.01
    %v589 = vmul.f32 %v534, 0.01
    %v590 = vmul.f32 %v536, 0.01
    %v591 = vmul.f32 %v538, 0.01
    %v592 = vmul.f32 %v540, 0.01
    %v593 = vmul.f32 %v542, 0.01
    %v594 = vmul.f32 %v544, 0.01
    %v595 = vmul.f32 %v546, 0.01
    %v596 = vmul.f32 %v548, 0.01
    %v597 = vsub.f32 %v261, %v549
    %v598 = vsub.f32 %v264, %v550
    %v599 = vsub.f32 %v269, %v551
    %v600 = vsub.f32 %v272, %v552
    %v601 = vsub.f32 %v277, %v553
    %v602 = vsub.f32 %v280, %v554
    %v603 = vsub.f32 %v285, %v555
    %v604 = vsub.f32 %v288, %v556
    %v605 = vsub.f32 %v293, %v557
    %v606 = vsub.f32 %v296, %v558
    %v607 = vsub.f32 %v301, %v559
    %v608 = vsub.f32 %v304, %v560
    %v609 = vsub.f32 %v309, %v561
    %v610 = vsub.f32 %v312, %v562
    %v611 = vsub.f32 %v317, %v563
    %v612 = vsub.f32 %v320, %v564
    %v613 = vsub.f32 %v325, %v565
    %v614 = vsub.f32 %v328, %v566
    %v615 = vsub.f32 %v333, %v567
    %v616 = vsub.f32 %v336, %v568
    %v617 = vsub.f32 %v341, %v569
    %v618 = vsub.f32 %v344, %v570
    %v619 = vsub.f32 %v349, %v571
    %v620 = vsub.f32 %v352, %v572
    %v621 = vsub.f32 %v357, %v573
    %v622 = vsub.f32 %v360, %v574
    %v623 = vsub.f32 %v365, %v575
    %v624 = vsub.f32 %v368, %v576
    %v625 = vsub.f32 %v373, %v577
    %v626 = vsub.f32 %v376, %v578
    %v627 = vsub.f32 %v381, %v579
    %v628 = vsub.f32 %v384, %v580
    %v629 = vsub.f32 %v389, %v581
    %v630 = vsub.f32 %v392, %v582
    %v631 = vsub.f32 %v397, %v583
    %v632 = vsub.f32 %v400, %v584
    %v633 = vsub.f32 %v405, %v585
    %v634 = vsub.f32 %v408, %v586
    %v635 = vsub.f32 %v413, %v587
    %v636 = vsub.f32 %v416, %v588
    %v637 = vsub.f32 %v421, %v589
    %v638 = vsub.f32 %v424, %v590
    %v639 = vsub.f32 %v429, %v591
    %v640 = vsub.f32 %v432, %v592
    %v641 = vsub.f32 %v437, %v593
    %v642 = vsub.f32 %v440, %v594
    %v643 = vsub.f32 %v445, %v595
    %v644 = vsub.f32 %v448, %v596
    %v645 = vmul.f32 %v597, %v113
    %v646 = vmul.f32 %v598, %v113
    %v647 = vmul.f32 %v599, %v113
    %v648 = vmul.f32 %v600, %v113
    %v649 = vmul.f32 %v601, %v113
    %v650 = vmul.f32 %v602, %v113
    %v651 = vmul.f32 %v603, %v113
    %v652 = vmul.f32 %v604, %v113
    %v653 = vmul.f32 %v605, %v113
    %v654 = vmul.f32 %v606, %v113
    %v655 = vmul.f32 %v607, %v113
    %v656 = vmul.f32 %v608, %v113
    %v657 = vmul.f32 %v609, %v113
    %v658 = vmul.f32 %v610, %v113
    %v659 = vmul.f32 %v611, %v113
    %v660 = vmul.f32 %v612, %v113
    %v661 = vmul.f32 %v613, %v113
    %v662 = vmul.f32 %v614, %v113
    %v663 = vmul.f32 %v615, %v113
    %v664 = vmul.f32 %v616, %v113
    %v665 = vmul.f32 %v617, %v113
    %v666 = vmul.f32 %v618, %v113
    %v667 = vmul.f32 %v619, %v113
    %v668 = vmul.f32 %v620, %v113
    %v669 = vmul.f32 %v621, %v113
    %v670 = vmul.f32 %v622, %v113
    %v671 = vmul.f32 %v623, %v113
    %v672 = vmul.f32 %v624, %v113
    %v673 = vmul.f32 %v625, %v113
    %v674 = vmul.f32 %v626, %v113
    %v675 = vmul.f32 %v627, %v113
    %v676 = vmul.f32 %v628, %v113
    %v677 = vmul.f32 %v629, %v113
    %v678 = vmul.f32 %v630, %v113
    %v679 = vmul.f32 %v631, %v113
    %v680 = vmul.f32 %v632, %v113
    %v681 = vmul.f32 %v633, %v113
    %v682 = vmul.f32 %v634, %v113
    %v683 = vmul.f32 %v635, %v113
    %v684 = vmul.f32 %v636, %v113
    %v685 = vmul.f32 %v637, %v113
    %v686 = vmul.f32 %v638, %v113
    %v687 = vmul.f32 %v639, %v113
    %v688 = vmul.f32 %v640, %v113
    %v689 = vmul.f32 %v641, %v113
    %v690 = vmul.f32 %v642, %v113
    %v691 = vmul.f32 %v643, %v113
    %v692 = vmul.f32 %v644, %v113
    %v693 = vmul.f32 %v645, %v645
    %v694 = vmul.f32 %v646, %v646
    %v695 = vmul.f32 %v647, %v647
    %v696 = vmul.f32 %v648, %v648
    %v697 = vmul.f32 %v649, %v649
    %v698 = vmul.f32 %v650, %v650
    %v699 = vmul.f32 %v651, %v651
    %v700 = vmul.f32 %v652, %v652
    %v701 = vmul.f32 %v653, %v653
    %v702 = vmul.f32 %v654, %v654
    %v703 = vmul.f32 %v655, %v655
    %v704 = vmul.f32 %v656, %v656
    %v705 = vmul.f32 %v657, %v657
    %v706 = vmul.f32 %v658, %v658
    %v707 = vmul.f32 %v659, %v659
    %v708 = vmul.f32 %v660, %v660
    %v709 = vmul.f32 %v661, %v661
    %v710 = vmul.f32 %v662, %v662
    %v711 = vmul.f32 %v663, %v663
    %v712 = vmul.f32 %v664, %v664
    %v713 = vmul.f32 %v665, %v665
    %v714 = vmul.f32 %v666, %v666
    %v715 = vmul.f32 %v667, %v667
    %v716 = vmul.f32 %v668, %v668
    %v717 = vmul.f32 %v669, %v669
    %v718 = vmul.f32 %v670, %v670
    %v719 = vmul.f32 %v671, %v671
    %v720 = vmul.f32 %v672, %v672
    %v721 = vmul.f32 %v673, %v673
    %v722 = vmul.f32 %v674, %v674
    %v723 = vmul.f32 %v675, %v675
    %v724 = vmul.f32 %v676, %v676
    %v725 = vmul.f32 %v677, %v677
    %v726 = vmul.f32 %v678, %v678
    %v727 = vmul.f32 %v679, %v679
    %v728 = vmul.f32 %v680, %v680
    %v729 = vmul.f32 %v681, %v681
    %v730 = vmul.f32 %v682, %v682
    %v731 = vmul.f32 %v683, %v683
    %v732 = vmul.f32 %v684, %v684
    %v733 = vmul.f32 %v685, %v685
    %v734 = vmul.f32 %v686, %v686
    %v735 = vmul.f32 %v687, %v687
    %v736 = vmul.f32 %v688, %v688
    %v737 = vmul.f32 %v689, %v689
    %v738 = vmul.f32 %v690, %v690
    %v739 = vmul.f32 %v691, %v691
    %v740 = vmul.f32 %v692, %v692
    %741 = vadd.xlane.f32.xlu0 %v693
    %v742 = vpop.xlane.xlu0 %741
    %743 = vadd.xlane.f32.xlu0 %v694
    %v744 = vpop.xlane.xlu0 %743
    %745 = vadd.xlane.f32.xlu0 %v695
    %v746 = vpop.xlane.xlu0 %745
    %747 = vadd.xlane.f32.xlu0 %v696
    %v748 = vpop.xlane.xlu0 %747
    %749 = vadd.xlane.f32.xlu0 %v697
    %v750 = vpop.xlane.xlu0 %749
    %751 = vadd.xlane.f32.xlu0 %v698
    %v752 = vpop.xlane.xlu0 %751
    %753 = vadd.xlane.f32.xlu0 %v699
    %v754 = vpop.xlane.xlu0 %753
    %755 = vadd.xlane.f32.xlu0 %v700
    %v756 = vpop.xlane.xlu0 %755
    %757 = vadd.xlane.f32.xlu0 %v701
    %v758 = vpop.xlane.xlu0 %757
    %759 = vadd.xlane.f32.xlu0 %v702
    %v760 = vpop.xlane.xlu0 %759
    %761 = vadd.xlane.f32.xlu0 %v703
    %v762 = vpop.xlane.xlu0 %761
    %763 = vadd.xlane.f32.xlu0 %v704
    %v764 = vpop.xlane.xlu0 %763
    %765 = vadd.xlane.f32.xlu0 %v705
    %v766 = vpop.xlane.xlu0 %765
    %767 = vadd.xlane.f32.xlu0 %v706
    %v768 = vpop.xlane.xlu0 %767
    %769 = vadd.xlane.f32.xlu0 %v707
    %v770 = vpop.xlane.xlu0 %769
    %771 = vadd.xlane.f32.xlu0 %v708
    %v772 = vpop.xlane.xlu0 %771
    %773 = vadd.xlane.f32.xlu0 %v709
    %v774 = vpop.xlane.xlu0 %773
    %775 = vadd.xlane.f32.xlu0 %v710
    %v776 = vpop.xlane.xlu0 %775
    %777 = vadd.xlane.f32.xlu0 %v711
    %v778 = vpop.xlane.xlu0 %777
    %779 = vadd.xlane.f32.xlu0 %v712
    %v780 = vpop.xlane.xlu0 %779
    %781 = vadd.xlane.f32.xlu0 %v713
    %v782 = vpop.xlane.xlu0 %781
    %783 = vadd.xlane.f32.xlu0 %v714
    %v784 = vpop.xlane.xlu0 %783
    %785 = vadd.xlane.f32.xlu0 %v715
    %v786 = vpop.xlane.xlu0 %785
    %787 = vadd.xlane.f32.xlu0 %v716
    %v788 = vpop.xlane.xlu0 %787
    %789 = vadd.xlane.f32.xlu0 %v717
    %v790 = vpop.xlane.xlu0 %789
    %791 = vadd.xlane.f32.xlu0 %v718
    %v792 = vpop.xlane.xlu0 %791
    %793 = vadd.xlane.f32.xlu0 %v719
    %v794 = vpop.xlane.xlu0 %793
    %795 = vadd.xlane.f32.xlu0 %v720
    %v796 = vpop.xlane.xlu0 %795
    %797 = vadd.xlane.f32.xlu0 %v721
    %v798 = vpop.xlane.xlu0 %797
    %799 = vadd.xlane.f32.xlu0 %v722
    %v800 = vpop.xlane.xlu0 %799
    %801 = vadd.xlane.f32.xlu0 %v723
    %v802 = vpop.xlane.xlu0 %801
    %803 = vadd.xlane.f32.xlu0 %v724
    %v804 = vpop.xlane.xlu0 %803
    %805 = vadd.xlane.f32.xlu0 %v725
    %v806 = vpop.xlane.xlu0 %805
    %807 = vadd.xlane.f32.xlu0 %v726
    %v808 = vpop.xlane.xlu0 %807
    %809 = vadd.xlane.f32.xlu0 %v727
    %v810 = vpop.xlane.xlu0 %809
    %811 = vadd.xlane.f32.xlu0 %v728
    %v812 = vpop.xlane.xlu0 %811
    %813 = vadd.xlane.f32.xlu0 %v729
    %v814 = vpop.xlane.xlu0 %813
    %815 = vadd.xlane.f32.xlu0 %v730
    %v816 = vpop.xlane.xlu0 %815
    %817 = vadd.xlane.f32.xlu0 %v731
    %v818 = vpop.xlane.xlu0 %817
    %819 = vadd.xlane.f32.xlu0 %v732
    %v820 = vpop.xlane.xlu0 %819
    %821 = vadd.xlane.f32.xlu0 %v733
    %v822 = vpop.xlane.xlu0 %821
    %823 = vadd.xlane.f32.xlu0 %v734
    %v824 = vpop.xlane.xlu0 %823
    %825 = vadd.xlane.f32.xlu0 %v735
    %v826 = vpop.xlane.xlu0 %825
    %827 = vadd.xlane.f32.xlu0 %v736
    %v828 = vpop.xlane.xlu0 %827
    %829 = vadd.xlane.f32.xlu0 %v737
    %v830 = vpop.xlane.xlu0 %829
    %831 = vadd.xlane.f32.xlu0 %v738
    %v832 = vpop.xlane.xlu0 %831
    %833 = vadd.xlane.f32.xlu0 %v739
    %v834 = vpop.xlane.xlu0 %833
    %835 = vadd.xlane.f32.xlu0 %v740
    %v836 = vpop.xlane.xlu0 %835
    %v837 = vmul.f32 %v742, 0.01
    %v838 = vmul.f32 %v744, 0.01
    %v839 = vmul.f32 %v746, 0.01
    %v840 = vmul.f32 %v748, 0.01
    %v841 = vmul.f32 %v750, 0.01
    %v842 = vmul.f32 %v752, 0.01
    %v843 = vmul.f32 %v754, 0.01
    %v844 = vmul.f32 %v756, 0.01
    %v845 = vmul.f32 %v758, 0.01
    %v846 = vmul.f32 %v760, 0.01
    %v847 = vmul.f32 %v762, 0.01
    %v848 = vmul.f32 %v764, 0.01
    %v849 = vmul.f32 %v766, 0.01
    %v850 = vmul.f32 %v768, 0.01
    %v851 = vmul.f32 %v770, 0.01
    %v852 = vmul.f32 %v772, 0.01
    %v853 = vmul.f32 %v774, 0.01
    %v854 = vmul.f32 %v776, 0.01
    %v855 = vmul.f32 %v778, 0.01
    %v856 = vmul.f32 %v780, 0.01
    %v857 = vmul.f32 %v782, 0.01
    %v858 = vmul.f32 %v784, 0.01
    %v859 = vmul.f32 %v786, 0.01
    %v860 = vmul.f32 %v788, 0.01
    %v861 = vmul.f32 %v790, 0.01
    %v862 = vmul.f32 %v792, 0.01
    %v863 = vmul.f32 %v794, 0.01
    %v864 = vmul.f32 %v796, 0.01
    %v865 = vmul.f32 %v798, 0.01
    %v866 = vmul.f32 %v800, 0.01
    %v867 = vmul.f32 %v802, 0.01
    %v868 = vmul.f32 %v804, 0.01
    %v869 = vmul.f32 %v806, 0.01
    %v870 = vmul.f32 %v808, 0.01
    %v871 = vmul.f32 %v810, 0.01
    %v872 = vmul.f32 %v812, 0.01
    %v873 = vmul.f32 %v814, 0.01
    %v874 = vmul.f32 %v816, 0.01
    %v875 = vmul.f32 %v818, 0.01
    %v876 = vmul.f32 %v820, 0.01
    %v877 = vmul.f32 %v822, 0.01
    %v878 = vmul.f32 %v824, 0.01
    %v879 = vmul.f32 %v826, 0.01
    %v880 = vmul.f32 %v828, 0.01
    %v881 = vmul.f32 %v830, 0.01
    %v882 = vmul.f32 %v832, 0.01
    %v883 = vmul.f32 %v834, 0.01
    %v884 = vmul.f32 %v836, 0.01
    %v885 = vadd.f32 %v837, 1e-05
    %v886 = vadd.f32 %v838, 1e-05
    %v887 = vadd.f32 %v839, 1e-05
    %v888 = vadd.f32 %v840, 1e-05
    %v889 = vadd.f32 %v841, 1e-05
    %v890 = vadd.f32 %v842, 1e-05
    %v891 = vadd.f32 %v843, 1e-05
    %v892 = vadd.f32 %v844, 1e-05
    %v893 = vadd.f32 %v845, 1e-05
    %v894 = vadd.f32 %v846, 1e-05
    %v895 = vadd.f32 %v847, 1e-05
    %v896 = vadd.f32 %v848, 1e-05
    %v897 = vadd.f32 %v849, 1e-05
    %v898 = vadd.f32 %v850, 1e-05
    %v899 = vadd.f32 %v851, 1e-05
    %v900 = vadd.f32 %v852, 1e-05
    %v901 = vadd.f32 %v853, 1e-05
    %v902 = vadd.f32 %v854, 1e-05
    %v903 = vadd.f32 %v855, 1e-05
    %v904 = vadd.f32 %v856, 1e-05
    %v905 = vadd.f32 %v857, 1e-05
    %v906 = vadd.f32 %v858, 1e-05
    %v907 = vadd.f32 %v859, 1e-05
    %v908 = vadd.f32 %v860, 1e-05
    %v909 = vadd.f32 %v861, 1e-05
    %v910 = vadd.f32 %v862, 1e-05
    %v911 = vadd.f32 %v863, 1e-05
    %v912 = vadd.f32 %v864, 1e-05
    %v913 = vadd.f32 %v865, 1e-05
    %v914 = vadd.f32 %v866, 1e-05
    %v915 = vadd.f32 %v867, 1e-05
    %v916 = vadd.f32 %v868, 1e-05
    %v917 = vadd.f32 %v869, 1e-05
    %v918 = vadd.f32 %v870, 1e-05
    %v919 = vadd.f32 %v871, 1e-05
    %v920 = vadd.f32 %v872, 1e-05
    %v921 = vadd.f32 %v873, 1e-05
    %v922 = vadd.f32 %v874, 1e-05
    %v923 = vadd.f32 %v875, 1e-05
    %v924 = vadd.f32 %v876, 1e-05
    %v925 = vadd.f32 %v877, 1e-05
    %v926 = vadd.f32 %v878, 1e-05
    %v927 = vadd.f32 %v879, 1e-05
    %v928 = vadd.f32 %v880, 1e-05
    %v929 = vadd.f32 %v881, 1e-05
    %v930 = vadd.f32 %v882, 1e-05
    %v931 = vadd.f32 %v883, 1e-05
    %v932 = vadd.f32 %v884, 1e-05
    %v933 = vrsqrt.pop %v885
    %v934 = vrsqrt.pop %v886
    %v935 = vrsqrt.pop %v887
    %v936 = vrsqrt.pop %v888
    %v937 = vrsqrt.pop %v889
    %v938 = vrsqrt.pop %v890
    %v939 = vrsqrt.pop %v891
    %v940 = vrsqrt.pop %v892
    %v941 = vrsqrt.pop %v893
    %v942 = vrsqrt.pop %v894
    %v943 = vrsqrt.pop %v895
    %v944 = vrsqrt.pop %v896
    %v945 = vrsqrt.pop %v897
    %v946 = vrsqrt.pop %v898
    %v947 = vrsqrt.pop %v899
    %v948 = vrsqrt.pop %v900
    %v949 = vrsqrt.pop %v901
    %v950 = vrsqrt.pop %v902
    %v951 = vrsqrt.pop %v903
    %v952 = vrsqrt.pop %v904
    %v953 = vrsqrt.pop %v905
    %v954 = vrsqrt.pop %v906
    %v955 = vrsqrt.pop %v907
    %v956 = vrsqrt.pop %v908
    %v957 = vrsqrt.pop %v909
    %v958 = vrsqrt.pop %v910
    %v959 = vrsqrt.pop %v911
    %v960 = vrsqrt.pop %v912
    %v961 = vrsqrt.pop %v913
    %v962 = vrsqrt.pop %v914
    %v963 = vrsqrt.pop %v915
    %v964 = vrsqrt.pop %v916
    %v965 = vrsqrt.pop %v917
    %v966 = vrsqrt.pop %v918
    %v967 = vrsqrt.pop %v919
    %v968 = vrsqrt.pop %v920
    %v969 = vrsqrt.pop %v921
    %v970 = vrsqrt.pop %v922
    %v971 = vrsqrt.pop %v923
    %v972 = vrsqrt.pop %v924
    %v973 = vrsqrt.pop %v925
    %v974 = vrsqrt.pop %v926
    %v975 = vrsqrt.pop %v927
    %v976 = vrsqrt.pop %v928
    %v977 = vrsqrt.pop %v929
    %v978 = vrsqrt.pop %v930
    %v979 = vrsqrt.pop %v931
    %v980 = vrsqrt.pop %v932
    %v981 = vmul.f32 %v645, %v933
    %v982 = vmul.f32 %v646, %v934
    %v983 = vmul.f32 %v647, %v935
    %v984 = vmul.f32 %v648, %v936
    %v985 = vmul.f32 %v649, %v937
    %v986 = vmul.f32 %v650, %v938
    %v987 = vmul.f32 %v651, %v939
    %v988 = vmul.f32 %v652, %v940
    %v989 = vmul.f32 %v653, %v941
    %v990 = vmul.f32 %v654, %v942
    %v991 = vmul.f32 %v655, %v943
    %v992 = vmul.f32 %v656, %v944
    %v993 = vmul.f32 %v657, %v945
    %v994 = vmul.f32 %v658, %v946
    %v995 = vmul.f32 %v659, %v947
    %v996 = vmul.f32 %v660, %v948
    %v997 = vmul.f32 %v661, %v949
    %v998 = vmul.f32 %v662, %v950
    %v999 = vmul.f32 %v663, %v951
    %v1000 = vmul.f32 %v664, %v952
    %v1001 = vmul.f32 %v665, %v953
    %v1002 = vmul.f32 %v666, %v954
    %v1003 = vmul.f32 %v667, %v955
    %v1004 = vmul.f32 %v668, %v956
    %v1005 = vmul.f32 %v669, %v957
    %v1006 = vmul.f32 %v670, %v958
    %v1007 = vmul.f32 %v671, %v959
    %v1008 = vmul.f32 %v672, %v960
    %v1009 = vmul.f32 %v673, %v961
    %v1010 = vmul.f32 %v674, %v962
    %v1011 = vmul.f32 %v675, %v963
    %v1012 = vmul.f32 %v676, %v964
    %v1013 = vmul.f32 %v677, %v965
    %v1014 = vmul.f32 %v678, %v966
    %v1015 = vmul.f32 %v679, %v967
    %v1016 = vmul.f32 %v680, %v968
    %v1017 = vmul.f32 %v681, %v969
    %v1018 = vmul.f32 %v682, %v970
    %v1019 = vmul.f32 %v683, %v971
    %v1020 = vmul.f32 %v684, %v972
    %v1021 = vmul.f32 %v685, %v973
    %v1022 = vmul.f32 %v686, %v974
    %v1023 = vmul.f32 %v687, %v975
    %v1024 = vmul.f32 %v688, %v976
    %v1025 = vmul.f32 %v689, %v977
    %v1026 = vmul.f32 %v690, %v978
    %v1027 = vmul.f32 %v691, %v979
    %v1028 = vmul.f32 %v692, %v980
    %v1030 = vlaneseq
    %v1031 = vshrl.u32 %v1030, 7
    %v1032 = vsub.s32 0, %v1031
    %v1033 = vrot.slane %v451, %v1032
    %v1035 = vmul.f32 %v981, %v1033
    %v1036 = vmul.f32 %v982, %v1033
    %v1037 = vmul.f32 %v983, %v1033
    %v1038 = vmul.f32 %v984, %v1033
    %v1039 = vmul.f32 %v985, %v1033
    %v1040 = vmul.f32 %v986, %v1033
    %v1041 = vmul.f32 %v987, %v1033
    %v1042 = vmul.f32 %v988, %v1033
    %v1043 = vmul.f32 %v989, %v1033
    %v1044 = vmul.f32 %v990, %v1033
    %v1045 = vmul.f32 %v991, %v1033
    %v1046 = vmul.f32 %v992, %v1033
    %v1047 = vmul.f32 %v993, %v1033
    %v1048 = vmul.f32 %v994, %v1033
    %v1049 = vmul.f32 %v995, %v1033
    %v1050 = vmul.f32 %v996, %v1033
    %v1051 = vmul.f32 %v997, %v1033
    %v1052 = vmul.f32 %v998, %v1033
    %v1053 = vmul.f32 %v999, %v1033
    %v1054 = vmul.f32 %v1000, %v1033
    %v1055 = vmul.f32 %v1001, %v1033
    %v1056 = vmul.f32 %v1002, %v1033
    %v1057 = vmul.f32 %v1003, %v1033
    %v1058 = vmul.f32 %v1004, %v1033
    %v1059 = vmul.f32 %v1005, %v1033
    %v1060 = vmul.f32 %v1006, %v1033
    %v1061 = vmul.f32 %v1007, %v1033
    %v1062 = vmul.f32 %v1008, %v1033
    %v1063 = vmul.f32 %v1009, %v1033
    %v1064 = vmul.f32 %v1010, %v1033
    %v1065 = vmul.f32 %v1011, %v1033
    %v1066 = vmul.f32 %v1012, %v1033
    %v1067 = vmul.f32 %v1013, %v1033
    %v1068 = vmul.f32 %v1014, %v1033
    %v1069 = vmul.f32 %v1015, %v1033
    %v1070 = vmul.f32 %v1016, %v1033
    %v1071 = vmul.f32 %v1017, %v1033
    %v1072 = vmul.f32 %v1018, %v1033
    %v1073 = vmul.f32 %v1019, %v1033
    %v1074 = vmul.f32 %v1020, %v1033
    %v1075 = vmul.f32 %v1021, %v1033
    %v1076 = vmul.f32 %v1022, %v1033
    %v1077 = vmul.f32 %v1023, %v1033
    %v1078 = vmul.f32 %v1024, %v1033
    %v1079 = vmul.f32 %v1025, %v1033
    %v1080 = vmul.f32 %v1026, %v1033
    %v1081 = vmul.f32 %v1027, %v1033
    %v1082 = vmul.f32 %v1028, %v1033
    %v1084 = vlaneseq
    %v1085 = vshrl.u32 %v1084, 7
    %v1086 = vsub.s32 0, %v1085
    %v1087 = vrot.slane %v452, %v1086
    %v1089 = vadd.f32 %v1035, %v1087
    %v1090 = vadd.f32 %v1036, %v1087
    %v1091 = vadd.f32 %v1037, %v1087
    %v1092 = vadd.f32 %v1038, %v1087
    %v1093 = vadd.f32 %v1039, %v1087
    %v1094 = vadd.f32 %v1040, %v1087
    %v1095 = vadd.f32 %v1041, %v1087
    %v1096 = vadd.f32 %v1042, %v1087
    %v1097 = vadd.f32 %v1043, %v1087
    %v1098 = vadd.f32 %v1044, %v1087
    %v1099 = vadd.f32 %v1045, %v1087
    %v1100 = vadd.f32 %v1046, %v1087
    %v1101 = vadd.f32 %v1047, %v1087
    %v1102 = vadd.f32 %v1048, %v1087
    %v1103 = vadd.f32 %v1049, %v1087
    %v1104 = vadd.f32 %v1050, %v1087
    %v1105 = vadd.f32 %v1051, %v1087
    %v1106 = vadd.f32 %v1052, %v1087
    %v1107 = vadd.f32 %v1053, %v1087
    %v1108 = vadd.f32 %v1054, %v1087
    %v1109 = vadd.f32 %v1055, %v1087
    %v1110 = vadd.f32 %v1056, %v1087
    %v1111 = vadd.f32 %v1057, %v1087
    %v1112 = vadd.f32 %v1058, %v1087
    %v1113 = vadd.f32 %v1059, %v1087
    %v1114 = vadd.f32 %v1060, %v1087
    %v1115 = vadd.f32 %v1061, %v1087
    %v1116 = vadd.f32 %v1062, %v1087
    %v1117 = vadd.f32 %v1063, %v1087
    %v1118 = vadd.f32 %v1064, %v1087
    %v1119 = vadd.f32 %v1065, %v1087
    %v1120 = vadd.f32 %v1066, %v1087
    %v1121 = vadd.f32 %v1067, %v1087
    %v1122 = vadd.f32 %v1068, %v1087
    %v1123 = vadd.f32 %v1069, %v1087
    %v1124 = vadd.f32 %v1070, %v1087
    %v1125 = vadd.f32 %v1071, %v1087
    %v1126 = vadd.f32 %v1072, %v1087
    %v1127 = vadd.f32 %v1073, %v1087
    %v1128 = vadd.f32 %v1074, %v1087
    %v1129 = vadd.f32 %v1075, %v1087
    %v1130 = vadd.f32 %v1076, %v1087
    %v1131 = vadd.f32 %v1077, %v1087
    %v1132 = vadd.f32 %v1078, %v1087
    %v1133 = vadd.f32 %v1079, %v1087
    %v1134 = vadd.f32 %v1080, %v1087
    %v1135 = vadd.f32 %v1081, %v1087
    %v1136 = vadd.f32 %v1082, %v1087
    %v1137 = vmax.f32 %v1089, 0.0
    %v1138 = vmax.f32 %v1090, 0.0
    %v1139 = vmax.f32 %v1091, 0.0
    %v1140 = vmax.f32 %v1092, 0.0
    %v1141 = vmax.f32 %v1093, 0.0
    %v1142 = vmax.f32 %v1094, 0.0
    %v1143 = vmax.f32 %v1095, 0.0
    %v1144 = vmax.f32 %v1096, 0.0
    %v1145 = vmax.f32 %v1097, 0.0
    %v1146 = vmax.f32 %v1098, 0.0
    %v1147 = vmax.f32 %v1099, 0.0
    %v1148 = vmax.f32 %v1100, 0.0
    %v1149 = vmax.f32 %v1101, 0.0
    %v1150 = vmax.f32 %v1102, 0.0
    %v1151 = vmax.f32 %v1103, 0.0
    %v1152 = vmax.f32 %v1104, 0.0
    %v1153 = vmax.f32 %v1105, 0.0
    %v1154 = vmax.f32 %v1106, 0.0
    %v1155 = vmax.f32 %v1107, 0.0
    %v1156 = vmax.f32 %v1108, 0.0
    %v1157 = vmax.f32 %v1109, 0.0
    %v1158 = vmax.f32 %v1110, 0.0
    %v1159 = vmax.f32 %v1111, 0.0
    %v1160 = vmax.f32 %v1112, 0.0
    %v1161 = vmax.f32 %v1113, 0.0
    %v1162 = vmax.f32 %v1114, 0.0
    %v1163 = vmax.f32 %v1115, 0.0
    %v1164 = vmax.f32 %v1116, 0.0
    %v1165 = vmax.f32 %v1117, 0.0
    %v1166 = vmax.f32 %v1118, 0.0
    %v1167 = vmax.f32 %v1119, 0.0
    %v1168 = vmax.f32 %v1120, 0.0
    %v1169 = vmax.f32 %v1121, 0.0
    %v1170 = vmax.f32 %v1122, 0.0
    %v1171 = vmax.f32 %v1123, 0.0
    %v1172 = vmax.f32 %v1124, 0.0
    %v1173 = vmax.f32 %v1125, 0.0
    %v1174 = vmax.f32 %v1126, 0.0
    %v1175 = vmax.f32 %v1127, 0.0
    %v1176 = vmax.f32 %v1128, 0.0
    %v1177 = vmax.f32 %v1129, 0.0
    %v1178 = vmax.f32 %v1130, 0.0
    %v1179 = vmax.f32 %v1131, 0.0
    %v1180 = vmax.f32 %v1132, 0.0
    %v1181 = vmax.f32 %v1133, 0.0
    %v1182 = vmax.f32 %v1134, 0.0
    %v1183 = vmax.f32 %v1135, 0.0
    %v1184 = vmax.f32 %v1136, 0.0
    %v1185 = vpack.c.bf16 %v1138, %v1137
    %v1186 = vpack.c.bf16 %v1140, %v1139
    %v1187 = vpack.c.bf16 %v1142, %v1141
    %v1188 = vpack.c.bf16 %v1144, %v1143
    %v1189 = vpack.c.bf16 %v1146, %v1145
    %v1190 = vpack.c.bf16 %v1148, %v1147
    %v1191 = vpack.c.bf16 %v1150, %v1149
    %v1192 = vpack.c.bf16 %v1152, %v1151
    %v1193 = vpack.c.bf16 %v1154, %v1153
    %v1194 = vpack.c.bf16 %v1156, %v1155
    %v1195 = vpack.c.bf16 %v1158, %v1157
    %v1196 = vpack.c.bf16 %v1160, %v1159
    %v1197 = vpack.c.bf16 %v1162, %v1161
    %v1198 = vpack.c.bf16 %v1164, %v1163
    %v1199 = vpack.c.bf16 %v1166, %v1165
    %v1200 = vpack.c.bf16 %v1168, %v1167
    %v1201 = vpack.c.bf16 %v1170, %v1169
    %v1202 = vpack.c.bf16 %v1172, %v1171
    %v1203 = vpack.c.bf16 %v1174, %v1173
    %v1204 = vpack.c.bf16 %v1176, %v1175
    %v1205 = vpack.c.bf16 %v1178, %v1177
    %v1206 = vpack.c.bf16 %v1180, %v1179
    %v1207 = vpack.c.bf16 %v1182, %v1181
    %v1208 = vpack.c.bf16 %v1184, %v1183
    %v1209 = vld [vmem:[%s8] sm:$0xf]
    %v1210 = vld [vmem:[%s8 + $0x4] sm:$0xf]
    %v1211 = vld [vmem:[%s8 + $0x8] sm:$0xf]
    %v1212 = vld [vmem:[%s8 + $0xc] sm:$0xf]
    %v1213 = vld [vmem:[%s8 + $0x10] sm:$0xf]
    %v1214 = vld [vmem:[%s8 + $0x14] sm:$0xf]
    %v1215 = vld [vmem:[%s8 + $0x18] sm:$0xf]
    %v1216 = vld [vmem:[%s8 + $0x1c] sm:$0xf]
    %v1217 = vld [vmem:[%s8 + $0x20] sm:$0xf]
    %v1218 = vld [vmem:[%s8 + $0x24] sm:$0xf]
    %v1219 = vld [vmem:[%s8 + $0x28] sm:$0xf]
    %v1220 = vld [vmem:[%s8 + $0x2c] sm:$0xf]
    %v1221 = vld [vmem:[%s8 + $0x30] sm:$0xf]
    %v1222 = vld [vmem:[%s8 + $0x34] sm:$0xf]
    %v1223 = vld [vmem:[%s8 + $0x38] sm:$0xf]
    %v1224 = vld [vmem:[%s8 + $0x3c] sm:$0xf]
    %v1225 = vld [vmem:[%s9] sm:$0x1]
    %v1227 = vlaneseq
    %v1228 = vshrl.u32 %v1227, 7
    %v1229 = vsub.s32 0, %v1228
    %v1230 = vrot.slane %v1225, %v1229
    %v1248 = vunpack.c.l.b16 %v1209
    %v1249 = vunpack.c.l.b16 %v1210
    %v1250 = vunpack.c.l.b16 %v1211
    %v1251 = vunpack.c.l.b16 %v1212
    %v1252 = vunpack.c.l.b16 %v1213
    %v1253 = vunpack.c.l.b16 %v1214
    %v1254 = vunpack.c.l.b16 %v1215
    %v1255 = vunpack.c.l.b16 %v1216
    %v1256 = vunpack.c.l.b16 %v1217
    %v1257 = vunpack.c.l.b16 %v1218
    %v1258 = vunpack.c.l.b16 %v1219
    %v1259 = vunpack.c.l.b16 %v1220
    %v1260 = vunpack.c.l.b16 %v1221
    %v1261 = vunpack.c.l.b16 %v1222
    %v1262 = vunpack.c.l.b16 %v1223
    %v1263 = vunpack.c.l.b16 %v1224
    %v1264 = vpack.c.b16 %v1249, %v1248
    %v1265 = vpack.c.b16 %v1251, %v1250
    %v1266 = vpack.c.b16 %v1253, %v1252
    %v1267 = vpack.c.b16 %v1255, %v1254
    %v1268 = vpack.c.b16 %v1257, %v1256
    %v1269 = vpack.c.b16 %v1259, %v1258
    %v1270 = vpack.c.b16 %v1261, %v1260
    %v1271 = vpack.c.b16 %v1263, %v1262
    %1280 = vmatprep.subr.bf16.mxu0 0
    %1281 = vmatpush1.bf16.msra.mxu0 %v1271
    %1282 = vmatprep.subr.bf16.mxu0 0
    %1283 = vmatpush1.bf16.msra.mxu0 %v1270
    %1284 = vmatprep.subr.bf16.mxu0 0
    %1285 = vmatpush1.bf16.msra.mxu0 %v1269
    %1286 = vmatprep.subr.bf16.mxu0 0
    %1287 = vmatpush1.bf16.msra.mxu0 %v1268
    %1288 = vmatprep.subr.bf16.mxu0 0
    %1289 = vmatpush1.bf16.msra.mxu0 %v1267
    %1290 = vmatprep.subr.bf16.mxu0 0
    %1291 = vmatpush1.bf16.msra.mxu0 %v1266
    %1292 = vmatprep.subr.bf16.mxu0 0
    %1293 = vmatpush1.bf16.msra.mxu0 %v1265
    %1294 = vmatprep.subr.bf16.mxu0 0
    %1295 = vmatpush1.bf16.msra.mxu0 %v1264
    %1296 = vmatprep.subr.bf16.mxu0 0
    %1297 = vmatpush2.bf16.msra.mxu0 0
    %1298 = vmatprep.subr.bf16.mxu0 0
    %1299 = vmatpush2.bf16.msra.mxu0 0
    %1300 = vmatprep.subr.bf16.mxu0 0
    %1301 = vmatpush2.bf16.msra.mxu0 0
    %1302 = vmatprep.subr.bf16.mxu0 0
    %1303 = vmatpush2.bf16.msra.mxu0 0
    %1304 = vmatprep.subr.bf16.mxu0 0
    %1305 = vmatpush2.bf16.msra.mxu0 0
    %1306 = vmatprep.subr.bf16.mxu0 0
    %1307 = vmatpush2.bf16.msra.mxu0 0
    %1308 = vmatprep.subr.bf16.mxu0 0
    %1309 = vmatpush2.bf16.msra.mxu0 0
    %1310 = vmatprep.subr.bf16.mxu0 0
    %1311 = vmatpush2.bf16.msra.mxu0 0
    %1312 = vmatprep.mubr.bf16.mxu0 0
    %1313 = vmatmul.mubr.bf16.gmra.mxu0 %v1185
    %v1314 = vpop.f32.mrf.mxu0
    %v1315 = vadd.f32 %v1230, %v1314
    %v1316 = vpop.f32.mrf.mxu0
    %v1317 = vpop.f32.mrf.mxu0
    %v1318 = vadd.f32 %v1230, %v1317
    %v1319 = vpop.f32.mrf.mxu0
    %1320 = vmatprep.mubr.bf16.mxu0 0
    %1321 = vmatmul.mubr.bf16.gmra.mxu0 %v1186
    %v1322 = vpop.f32.mrf.mxu0
    %v1323 = vadd.f32 %v1230, %v1322
    %v1324 = vpop.f32.mrf.mxu0
    %v1325 = vpop.f32.mrf.mxu0
    %v1326 = vadd.f32 %v1230, %v1325
    %v1327 = vpop.f32.mrf.mxu0
    %1328 = vmatprep.mubr.bf16.mxu0 0
    %1329 = vmatmul.mubr.bf16.gmra.mxu0 %v1187
    %v1330 = vpop.f32.mrf.mxu0
    %v1331 = vadd.f32 %v1230, %v1330
    %v1332 = vpop.f32.mrf.mxu0
    %v1333 = vpop.f32.mrf.mxu0
    %v1334 = vadd.f32 %v1230, %v1333
    %v1335 = vpop.f32.mrf.mxu0
    %1336 = vmatprep.mubr.bf16.mxu0 0
    %1337 = vmatmul.mubr.bf16.gmra.mxu0 %v1188
    %v1338 = vpop.f32.mrf.mxu0
    %v1339 = vadd.f32 %v1230, %v1338
    %v1340 = vpop.f32.mrf.mxu0
    %v1341 = vpop.f32.mrf.mxu0
    %v1342 = vadd.f32 %v1230, %v1341
    %v1343 = vpop.f32.mrf.mxu0
    %1344 = vmatprep.mubr.bf16.mxu0 0
    %1345 = vmatmul.mubr.bf16.gmra.mxu0 %v1189
    %v1346 = vpop.f32.mrf.mxu0
    %v1347 = vadd.f32 %v1230, %v1346
    %v1348 = vpop.f32.mrf.mxu0
    %v1349 = vpop.f32.mrf.mxu0
    %v1350 = vadd.f32 %v1230, %v1349
    %v1351 = vpop.f32.mrf.mxu0
    %1352 = vmatprep.mubr.bf16.mxu0 0
    %1353 = vmatmul.mubr.bf16.gmra.mxu0 %v1190
    %v1354 = vpop.f32.mrf.mxu0
    %v1355 = vadd.f32 %v1230, %v1354
    %v1356 = vpop.f32.mrf.mxu0
    %v1357 = vpop.f32.mrf.mxu0
    %v1358 = vadd.f32 %v1230, %v1357
    %v1359 = vpop.f32.mrf.mxu0
    %1360 = vmatprep.mubr.bf16.mxu0 0
    %1361 = vmatmul.mubr.bf16.gmra.mxu0 %v1191
    %v1362 = vpop.f32.mrf.mxu0
    %v1363 = vadd.f32 %v1230, %v1362
    %v1364 = vpop.f32.mrf.mxu0
    %v1365 = vpop.f32.mrf.mxu0
    %v1366 = vadd.f32 %v1230, %v1365
    %v1367 = vpop.f32.mrf.mxu0
    %1368 = vmatprep.mubr.bf16.mxu0 0
    %1369 = vmatmul.mubr.bf16.gmra.mxu0 %v1192
    %v1370 = vpop.f32.mrf.mxu0
    %v1371 = vadd.f32 %v1230, %v1370
    %v1372 = vpop.f32.mrf.mxu0
    %v1373 = vpop.f32.mrf.mxu0
    %v1374 = vadd.f32 %v1230, %v1373
    %v1375 = vpop.f32.mrf.mxu0
    %1376 = vmatprep.mubr.bf16.mxu0 0
    %1377 = vmatmul.mubr.bf16.gmra.mxu0 %v1193
    %v1378 = vpop.f32.mrf.mxu0
    %v1379 = vadd.f32 %v1230, %v1378
    %v1380 = vpop.f32.mrf.mxu0
    %v1381 = vpop.f32.mrf.mxu0
    %v1382 = vadd.f32 %v1230, %v1381
    %v1383 = vpop.f32.mrf.mxu0
    %1384 = vmatprep.mubr.bf16.mxu0 0
    %1385 = vmatmul.mubr.bf16.gmra.mxu0 %v1194
    %v1386 = vpop.f32.mrf.mxu0
    %v1387 = vadd.f32 %v1230, %v1386
    %v1388 = vpop.f32.mrf.mxu0
    %v1389 = vpop.f32.mrf.mxu0
    %v1390 = vadd.f32 %v1230, %v1389
    %v1391 = vpop.f32.mrf.mxu0
    %1392 = vmatprep.mubr.bf16.mxu0 0
    %1393 = vmatmul.mubr.bf16.gmra.mxu0 %v1195
    %v1394 = vpop.f32.mrf.mxu0
    %v1395 = vadd.f32 %v1230, %v1394
    %v1396 = vpop.f32.mrf.mxu0
    %v1397 = vpop.f32.mrf.mxu0
    %v1398 = vadd.f32 %v1230, %v1397
    %v1399 = vpop.f32.mrf.mxu0
    %1400 = vmatprep.mubr.bf16.mxu0 0
    %1401 = vmatmul.mubr.bf16.gmra.mxu0 %v1196
    %v1402 = vpop.f32.mrf.mxu0
    %v1403 = vadd.f32 %v1230, %v1402
    %v1404 = vpop.f32.mrf.mxu0
    %v1405 = vpop.f32.mrf.mxu0
    %v1406 = vadd.f32 %v1230, %v1405
    %v1407 = vpop.f32.mrf.mxu0
    %1408 = vmatprep.mubr.bf16.mxu0 0
    %1409 = vmatmul.mubr.bf16.gmra.mxu0 %v1197
    %v1410 = vpop.f32.mrf.mxu0
    %v1411 = vadd.f32 %v1230, %v1410
    %v1412 = vpop.f32.mrf.mxu0
    %v1413 = vpop.f32.mrf.mxu0
    %v1414 = vadd.f32 %v1230, %v1413
    %v1415 = vpop.f32.mrf.mxu0
    %1416 = vmatprep.mubr.bf16.mxu0 0
    %1417 = vmatmul.mubr.bf16.gmra.mxu0 %v1198
    %v1418 = vpop.f32.mrf.mxu0
    %v1419 = vadd.f32 %v1230, %v1418
    %v1420 = vpop.f32.mrf.mxu0
    %v1421 = vpop.f32.mrf.mxu0
    %v1422 = vadd.f32 %v1230, %v1421
    %v1423 = vpop.f32.mrf.mxu0
    %1424 = vmatprep.mubr.bf16.mxu0 0
    %1425 = vmatmul.mubr.bf16.gmra.mxu0 %v1199
    %v1426 = vpop.f32.mrf.mxu0
    %v1427 = vadd.f32 %v1230, %v1426
    %v1428 = vpop.f32.mrf.mxu0
    %v1429 = vpop.f32.mrf.mxu0
    %v1430 = vadd.f32 %v1230, %v1429
    %v1431 = vpop.f32.mrf.mxu0
    %1432 = vmatprep.mubr.bf16.mxu0 0
    %1433 = vmatmul.mubr.bf16.gmra.mxu0 %v1200
    %v1434 = vpop.f32.mrf.mxu0
    %v1435 = vadd.f32 %v1230, %v1434
    %v1436 = vpop.f32.mrf.mxu0
    %v1437 = vpop.f32.mrf.mxu0
    %v1438 = vadd.f32 %v1230, %v1437
    %v1439 = vpop.f32.mrf.mxu0
    %1440 = vmatprep.mubr.bf16.mxu0 0
    %1441 = vmatmul.mubr.bf16.gmra.mxu0 %v1201
    %v1442 = vpop.f32.mrf.mxu0
    %v1443 = vadd.f32 %v1230, %v1442
    %v1444 = vpop.f32.mrf.mxu0
    %v1445 = vpop.f32.mrf.mxu0
    %v1446 = vadd.f32 %v1230, %v1445
    %v1447 = vpop.f32.mrf.mxu0
    %1448 = vmatprep.mubr.bf16.mxu0 0
    %1449 = vmatmul.mubr.bf16.gmra.mxu0 %v1202
    %v1450 = vpop.f32.mrf.mxu0
    %v1451 = vadd.f32 %v1230, %v1450
    %v1452 = vpop.f32.mrf.mxu0
    %v1453 = vpop.f32.mrf.mxu0
    %v1454 = vadd.f32 %v1230, %v1453
    %v1455 = vpop.f32.mrf.mxu0
    %1456 = vmatprep.mubr.bf16.mxu0 0
    %1457 = vmatmul.mubr.bf16.gmra.mxu0 %v1203
    %v1458 = vpop.f32.mrf.mxu0
    %v1459 = vadd.f32 %v1230, %v1458
    %v1460 = vpop.f32.mrf.mxu0
    %v1461 = vpop.f32.mrf.mxu0
    %v1462 = vadd.f32 %v1230, %v1461
    %v1463 = vpop.f32.mrf.mxu0
    %1464 = vmatprep.mubr.bf16.mxu0 0
    %1465 = vmatmul.mubr.bf16.gmra.mxu0 %v1204
    %v1466 = vpop.f32.mrf.mxu0
    %v1467 = vadd.f32 %v1230, %v1466
    %v1468 = vpop.f32.mrf.mxu0
    %v1469 = vpop.f32.mrf.mxu0
    %v1470 = vadd.f32 %v1230, %v1469
    %v1471 = vpop.f32.mrf.mxu0
    %1472 = vmatprep.mubr.bf16.mxu0 0
    %1473 = vmatmul.mubr.bf16.gmra.mxu0 %v1205
    %v1474 = vpop.f32.mrf.mxu0
    %v1475 = vadd.f32 %v1230, %v1474
    %v1476 = vpop.f32.mrf.mxu0
    %v1477 = vpop.f32.mrf.mxu0
    %v1478 = vadd.f32 %v1230, %v1477
    %v1479 = vpop.f32.mrf.mxu0
    %1480 = vmatprep.mubr.bf16.mxu0 0
    %1481 = vmatmul.mubr.bf16.gmra.mxu0 %v1206
    %v1482 = vpop.f32.mrf.mxu0
    %v1483 = vadd.f32 %v1230, %v1482
    %v1484 = vpop.f32.mrf.mxu0
    %v1485 = vpop.f32.mrf.mxu0
    %v1486 = vadd.f32 %v1230, %v1485
    %v1487 = vpop.f32.mrf.mxu0
    %1488 = vmatprep.mubr.bf16.mxu0 0
    %1489 = vmatmul.mubr.bf16.gmra.mxu0 %v1207
    %v1490 = vpop.f32.mrf.mxu0
    %v1491 = vadd.f32 %v1230, %v1490
    %v1492 = vpop.f32.mrf.mxu0
    %v1493 = vpop.f32.mrf.mxu0
    %v1494 = vadd.f32 %v1230, %v1493
    %v1495 = vpop.f32.mrf.mxu0
    %1496 = vmatprep.mubr.bf16.mxu0 0
    %1497 = vmatmul.mubr.bf16.gmra.mxu0 %v1208
    %v1498 = vpop.f32.mrf.mxu0
    %v1499 = vadd.f32 %v1230, %v1498
    %v1500 = vpop.f32.mrf.mxu0
    %v1501 = vpop.f32.mrf.mxu0
    %v1502 = vadd.f32 %v1230, %v1501
    %v1503 = vpop.f32.mrf.mxu0
    %1504 = vdwg.mxu0
    %v1505 = vld [vmem:[%s10] sm:$0x1]
    %v1506 = vld [vmem:[%s11] sm:$0x1]
    %1507 = vadd.xlane.f32.xlu0 %v1315
    %v1508 = vpop.xlane.xlu0 %1507
    %1509 = vadd.xlane.f32.xlu0 %v1318
    %v1510 = vpop.xlane.xlu0 %1509
    %1511 = vadd.xlane.f32.xlu0 %v1323
    %v1512 = vpop.xlane.xlu0 %1511
    %1513 = vadd.xlane.f32.xlu0 %v1326
    %v1514 = vpop.xlane.xlu0 %1513
    %1515 = vadd.xlane.f32.xlu0 %v1331
    %v1516 = vpop.xlane.xlu0 %1515
    %1517 = vadd.xlane.f32.xlu0 %v1334
    %v1518 = vpop.xlane.xlu0 %1517
    %1519 = vadd.xlane.f32.xlu0 %v1339
    %v1520 = vpop.xlane.xlu0 %1519
    %1521 = vadd.xlane.f32.xlu0 %v1342
    %v1522 = vpop.xlane.xlu0 %1521
    %1523 = vadd.xlane.f32.xlu0 %v1347
    %v1524 = vpop.xlane.xlu0 %1523
    %1525 = vadd.xlane.f32.xlu0 %v1350
    %v1526 = vpop.xlane.xlu0 %1525
    %1527 = vadd.xlane.f32.xlu0 %v1355
    %v1528 = vpop.xlane.xlu0 %1527
    %1529 = vadd.xlane.f32.xlu0 %v1358
    %v1530 = vpop.xlane.xlu0 %1529
    %1531 = vadd.xlane.f32.xlu0 %v1363
    %v1532 = vpop.xlane.xlu0 %1531
    %1533 = vadd.xlane.f32.xlu0 %v1366
    %v1534 = vpop.xlane.xlu0 %1533
    %1535 = vadd.xlane.f32.xlu0 %v1371
    %v1536 = vpop.xlane.xlu0 %1535
    %1537 = vadd.xlane.f32.xlu0 %v1374
    %v1538 = vpop.xlane.xlu0 %1537
    %1539 = vadd.xlane.f32.xlu0 %v1379
    %v1540 = vpop.xlane.xlu0 %1539
    %1541 = vadd.xlane.f32.xlu0 %v1382
    %v1542 = vpop.xlane.xlu0 %1541
    %1543 = vadd.xlane.f32.xlu0 %v1387
    %v1544 = vpop.xlane.xlu0 %1543
    %1545 = vadd.xlane.f32.xlu0 %v1390
    %v1546 = vpop.xlane.xlu0 %1545
    %1547 = vadd.xlane.f32.xlu0 %v1395
    %v1548 = vpop.xlane.xlu0 %1547
    %1549 = vadd.xlane.f32.xlu0 %v1398
    %v1550 = vpop.xlane.xlu0 %1549
    %1551 = vadd.xlane.f32.xlu0 %v1403
    %v1552 = vpop.xlane.xlu0 %1551
    %1553 = vadd.xlane.f32.xlu0 %v1406
    %v1554 = vpop.xlane.xlu0 %1553
    %1555 = vadd.xlane.f32.xlu0 %v1411
    %v1556 = vpop.xlane.xlu0 %1555
    %1557 = vadd.xlane.f32.xlu0 %v1414
    %v1558 = vpop.xlane.xlu0 %1557
    %1559 = vadd.xlane.f32.xlu0 %v1419
    %v1560 = vpop.xlane.xlu0 %1559
    %1561 = vadd.xlane.f32.xlu0 %v1422
    %v1562 = vpop.xlane.xlu0 %1561
    %1563 = vadd.xlane.f32.xlu0 %v1427
    %v1564 = vpop.xlane.xlu0 %1563
    %1565 = vadd.xlane.f32.xlu0 %v1430
    %v1566 = vpop.xlane.xlu0 %1565
    %1567 = vadd.xlane.f32.xlu0 %v1435
    %v1568 = vpop.xlane.xlu0 %1567
    %1569 = vadd.xlane.f32.xlu0 %v1438
    %v1570 = vpop.xlane.xlu0 %1569
    %1571 = vadd.xlane.f32.xlu0 %v1443
    %v1572 = vpop.xlane.xlu0 %1571
    %1573 = vadd.xlane.f32.xlu0 %v1446
    %v1574 = vpop.xlane.xlu0 %1573
    %1575 = vadd.xlane.f32.xlu0 %v1451
    %v1576 = vpop.xlane.xlu0 %1575
    %1577 = vadd.xlane.f32.xlu0 %v1454
    %v1578 = vpop.xlane.xlu0 %1577
    %1579 = vadd.xlane.f32.xlu0 %v1459
    %v1580 = vpop.xlane.xlu0 %1579
    %1581 = vadd.xlane.f32.xlu0 %v1462
    %v1582 = vpop.xlane.xlu0 %1581
    %1583 = vadd.xlane.f32.xlu0 %v1467
    %v1584 = vpop.xlane.xlu0 %1583
    %1585 = vadd.xlane.f32.xlu0 %v1470
    %v1586 = vpop.xlane.xlu0 %1585
    %1587 = vadd.xlane.f32.xlu0 %v1475
    %v1588 = vpop.xlane.xlu0 %1587
    %1589 = vadd.xlane.f32.xlu0 %v1478
    %v1590 = vpop.xlane.xlu0 %1589
    %1591 = vadd.xlane.f32.xlu0 %v1483
    %v1592 = vpop.xlane.xlu0 %1591
    %1593 = vadd.xlane.f32.xlu0 %v1486
    %v1594 = vpop.xlane.xlu0 %1593
    %1595 = vadd.xlane.f32.xlu0 %v1491
    %v1596 = vpop.xlane.xlu0 %1595
    %1597 = vadd.xlane.f32.xlu0 %v1494
    %v1598 = vpop.xlane.xlu0 %1597
    %1599 = vadd.xlane.f32.xlu0 %v1499
    %v1600 = vpop.xlane.xlu0 %1599
    %1601 = vadd.xlane.f32.xlu0 %v1502
    %v1602 = vpop.xlane.xlu0 %1601
    %v1603 = vmul.f32 %v1508, 0.01
    %v1604 = vmul.f32 %v1510, 0.01
    %v1605 = vmul.f32 %v1512, 0.01
    %v1606 = vmul.f32 %v1514, 0.01
    %v1607 = vmul.f32 %v1516, 0.01
    %v1608 = vmul.f32 %v1518, 0.01
    %v1609 = vmul.f32 %v1520, 0.01
    %v1610 = vmul.f32 %v1522, 0.01
    %v1611 = vmul.f32 %v1524, 0.01
    %v1612 = vmul.f32 %v1526, 0.01
    %v1613 = vmul.f32 %v1528, 0.01
    %v1614 = vmul.f32 %v1530, 0.01
    %v1615 = vmul.f32 %v1532, 0.01
    %v1616 = vmul.f32 %v1534, 0.01
    %v1617 = vmul.f32 %v1536, 0.01
    %v1618 = vmul.f32 %v1538, 0.01
    %v1619 = vmul.f32 %v1540, 0.01
    %v1620 = vmul.f32 %v1542, 0.01
    %v1621 = vmul.f32 %v1544, 0.01
    %v1622 = vmul.f32 %v1546, 0.01
    %v1623 = vmul.f32 %v1548, 0.01
    %v1624 = vmul.f32 %v1550, 0.01
    %v1625 = vmul.f32 %v1552, 0.01
    %v1626 = vmul.f32 %v1554, 0.01
    %v1627 = vmul.f32 %v1556, 0.01
    %v1628 = vmul.f32 %v1558, 0.01
    %v1629 = vmul.f32 %v1560, 0.01
    %v1630 = vmul.f32 %v1562, 0.01
    %v1631 = vmul.f32 %v1564, 0.01
    %v1632 = vmul.f32 %v1566, 0.01
    %v1633 = vmul.f32 %v1568, 0.01
    %v1634 = vmul.f32 %v1570, 0.01
    %v1635 = vmul.f32 %v1572, 0.01
    %v1636 = vmul.f32 %v1574, 0.01
    %v1637 = vmul.f32 %v1576, 0.01
    %v1638 = vmul.f32 %v1578, 0.01
    %v1639 = vmul.f32 %v1580, 0.01
    %v1640 = vmul.f32 %v1582, 0.01
    %v1641 = vmul.f32 %v1584, 0.01
    %v1642 = vmul.f32 %v1586, 0.01
    %v1643 = vmul.f32 %v1588, 0.01
    %v1644 = vmul.f32 %v1590, 0.01
    %v1645 = vmul.f32 %v1592, 0.01
    %v1646 = vmul.f32 %v1594, 0.01
    %v1647 = vmul.f32 %v1596, 0.01
    %v1648 = vmul.f32 %v1598, 0.01
    %v1649 = vmul.f32 %v1600, 0.01
    %v1650 = vmul.f32 %v1602, 0.01
    %v1651 = vsub.f32 %v1315, %v1603
    %v1652 = vsub.f32 %v1318, %v1604
    %v1653 = vsub.f32 %v1323, %v1605
    %v1654 = vsub.f32 %v1326, %v1606
    %v1655 = vsub.f32 %v1331, %v1607
    %v1656 = vsub.f32 %v1334, %v1608
    %v1657 = vsub.f32 %v1339, %v1609
    %v1658 = vsub.f32 %v1342, %v1610
    %v1659 = vsub.f32 %v1347, %v1611
    %v1660 = vsub.f32 %v1350, %v1612
    %v1661 = vsub.f32 %v1355, %v1613
    %v1662 = vsub.f32 %v1358, %v1614
    %v1663 = vsub.f32 %v1363, %v1615
    %v1664 = vsub.f32 %v1366, %v1616
    %v1665 = vsub.f32 %v1371, %v1617
    %v1666 = vsub.f32 %v1374, %v1618
    %v1667 = vsub.f32 %v1379, %v1619
    %v1668 = vsub.f32 %v1382, %v1620
    %v1669 = vsub.f32 %v1387, %v1621
    %v1670 = vsub.f32 %v1390, %v1622
    %v1671 = vsub.f32 %v1395, %v1623
    %v1672 = vsub.f32 %v1398, %v1624
    %v1673 = vsub.f32 %v1403, %v1625
    %v1674 = vsub.f32 %v1406, %v1626
    %v1675 = vsub.f32 %v1411, %v1627
    %v1676 = vsub.f32 %v1414, %v1628
    %v1677 = vsub.f32 %v1419, %v1629
    %v1678 = vsub.f32 %v1422, %v1630
    %v1679 = vsub.f32 %v1427, %v1631
    %v1680 = vsub.f32 %v1430, %v1632
    %v1681 = vsub.f32 %v1435, %v1633
    %v1682 = vsub.f32 %v1438, %v1634
    %v1683 = vsub.f32 %v1443, %v1635
    %v1684 = vsub.f32 %v1446, %v1636
    %v1685 = vsub.f32 %v1451, %v1637
    %v1686 = vsub.f32 %v1454, %v1638
    %v1687 = vsub.f32 %v1459, %v1639
    %v1688 = vsub.f32 %v1462, %v1640
    %v1689 = vsub.f32 %v1467, %v1641
    %v1690 = vsub.f32 %v1470, %v1642
    %v1691 = vsub.f32 %v1475, %v1643
    %v1692 = vsub.f32 %v1478, %v1644
    %v1693 = vsub.f32 %v1483, %v1645
    %v1694 = vsub.f32 %v1486, %v1646
    %v1695 = vsub.f32 %v1491, %v1647
    %v1696 = vsub.f32 %v1494, %v1648
    %v1697 = vsub.f32 %v1499, %v1649
    %v1698 = vsub.f32 %v1502, %v1650
    %v1699 = vmul.f32 %v1651, %v113
    %v1700 = vmul.f32 %v1652, %v113
    %v1701 = vmul.f32 %v1653, %v113
    %v1702 = vmul.f32 %v1654, %v113
    %v1703 = vmul.f32 %v1655, %v113
    %v1704 = vmul.f32 %v1656, %v113
    %v1705 = vmul.f32 %v1657, %v113
    %v1706 = vmul.f32 %v1658, %v113
    %v1707 = vmul.f32 %v1659, %v113
    %v1708 = vmul.f32 %v1660, %v113
    %v1709 = vmul.f32 %v1661, %v113
    %v1710 = vmul.f32 %v1662, %v113
    %v1711 = vmul.f32 %v1663, %v113
    %v1712 = vmul.f32 %v1664, %v113
    %v1713 = vmul.f32 %v1665, %v113
    %v1714 = vmul.f32 %v1666, %v113
    %v1715 = vmul.f32 %v1667, %v113
    %v1716 = vmul.f32 %v1668, %v113
    %v1717 = vmul.f32 %v1669, %v113
    %v1718 = vmul.f32 %v1670, %v113
    %v1719 = vmul.f32 %v1671, %v113
    %v1720 = vmul.f32 %v1672, %v113
    %v1721 = vmul.f32 %v1673, %v113
    %v1722 = vmul.f32 %v1674, %v113
    %v1723 = vmul.f32 %v1675, %v113
    %v1724 = vmul.f32 %v1676, %v113
    %v1725 = vmul.f32 %v1677, %v113
    %v1726 = vmul.f32 %v1678, %v113
    %v1727 = vmul.f32 %v1679, %v113
    %v1728 = vmul.f32 %v1680, %v113
    %v1729 = vmul.f32 %v1681, %v113
    %v1730 = vmul.f32 %v1682, %v113
    %v1731 = vmul.f32 %v1683, %v113
    %v1732 = vmul.f32 %v1684, %v113
    %v1733 = vmul.f32 %v1685, %v113
    %v1734 = vmul.f32 %v1686, %v113
    %v1735 = vmul.f32 %v1687, %v113
    %v1736 = vmul.f32 %v1688, %v113
    %v1737 = vmul.f32 %v1689, %v113
    %v1738 = vmul.f32 %v1690, %v113
    %v1739 = vmul.f32 %v1691, %v113
    %v1740 = vmul.f32 %v1692, %v113
    %v1741 = vmul.f32 %v1693, %v113
    %v1742 = vmul.f32 %v1694, %v113
    %v1743 = vmul.f32 %v1695, %v113
    %v1744 = vmul.f32 %v1696, %v113
    %v1745 = vmul.f32 %v1697, %v113
    %v1746 = vmul.f32 %v1698, %v113
    %v1747 = vmul.f32 %v1699, %v1699
    %v1748 = vmul.f32 %v1700, %v1700
    %v1749 = vmul.f32 %v1701, %v1701
    %v1750 = vmul.f32 %v1702, %v1702
    %v1751 = vmul.f32 %v1703, %v1703
    %v1752 = vmul.f32 %v1704, %v1704
    %v1753 = vmul.f32 %v1705, %v1705
    %v1754 = vmul.f32 %v1706, %v1706
    %v1755 = vmul.f32 %v1707, %v1707
    %v1756 = vmul.f32 %v1708, %v1708
    %v1757 = vmul.f32 %v1709, %v1709
    %v1758 = vmul.f32 %v1710, %v1710
    %v1759 = vmul.f32 %v1711, %v1711
    %v1760 = vmul.f32 %v1712, %v1712
    %v1761 = vmul.f32 %v1713, %v1713
    %v1762 = vmul.f32 %v1714, %v1714
    %v1763 = vmul.f32 %v1715, %v1715
    %v1764 = vmul.f32 %v1716, %v1716
    %v1765 = vmul.f32 %v1717, %v1717
    %v1766 = vmul.f32 %v1718, %v1718
    %v1767 = vmul.f32 %v1719, %v1719
    %v1768 = vmul.f32 %v1720, %v1720
    %v1769 = vmul.f32 %v1721, %v1721
    %v1770 = vmul.f32 %v1722, %v1722
    %v1771 = vmul.f32 %v1723, %v1723
    %v1772 = vmul.f32 %v1724, %v1724
    %v1773 = vmul.f32 %v1725, %v1725
    %v1774 = vmul.f32 %v1726, %v1726
    %v1775 = vmul.f32 %v1727, %v1727
    %v1776 = vmul.f32 %v1728, %v1728
    %v1777 = vmul.f32 %v1729, %v1729
    %v1778 = vmul.f32 %v1730, %v1730
    %v1779 = vmul.f32 %v1731, %v1731
    %v1780 = vmul.f32 %v1732, %v1732
    %v1781 = vmul.f32 %v1733, %v1733
    %v1782 = vmul.f32 %v1734, %v1734
    %v1783 = vmul.f32 %v1735, %v1735
    %v1784 = vmul.f32 %v1736, %v1736
    %v1785 = vmul.f32 %v1737, %v1737
    %v1786 = vmul.f32 %v1738, %v1738
    %v1787 = vmul.f32 %v1739, %v1739
    %v1788 = vmul.f32 %v1740, %v1740
    %v1789 = vmul.f32 %v1741, %v1741
    %v1790 = vmul.f32 %v1742, %v1742
    %v1791 = vmul.f32 %v1743, %v1743
    %v1792 = vmul.f32 %v1744, %v1744
    %v1793 = vmul.f32 %v1745, %v1745
    %v1794 = vmul.f32 %v1746, %v1746
    %1795 = vadd.xlane.f32.xlu0 %v1747
    %v1796 = vpop.xlane.xlu0 %1795
    %1797 = vadd.xlane.f32.xlu0 %v1748
    %v1798 = vpop.xlane.xlu0 %1797
    %1799 = vadd.xlane.f32.xlu0 %v1749
    %v1800 = vpop.xlane.xlu0 %1799
    %1801 = vadd.xlane.f32.xlu0 %v1750
    %v1802 = vpop.xlane.xlu0 %1801
    %1803 = vadd.xlane.f32.xlu0 %v1751
    %v1804 = vpop.xlane.xlu0 %1803
    %1805 = vadd.xlane.f32.xlu0 %v1752
    %v1806 = vpop.xlane.xlu0 %1805
    %1807 = vadd.xlane.f32.xlu0 %v1753
    %v1808 = vpop.xlane.xlu0 %1807
    %1809 = vadd.xlane.f32.xlu0 %v1754
    %v1810 = vpop.xlane.xlu0 %1809
    %1811 = vadd.xlane.f32.xlu0 %v1755
    %v1812 = vpop.xlane.xlu0 %1811
    %1813 = vadd.xlane.f32.xlu0 %v1756
    %v1814 = vpop.xlane.xlu0 %1813
    %1815 = vadd.xlane.f32.xlu0 %v1757
    %v1816 = vpop.xlane.xlu0 %1815
    %1817 = vadd.xlane.f32.xlu0 %v1758
    %v1818 = vpop.xlane.xlu0 %1817
    %1819 = vadd.xlane.f32.xlu0 %v1759
    %v1820 = vpop.xlane.xlu0 %1819
    %1821 = vadd.xlane.f32.xlu0 %v1760
    %v1822 = vpop.xlane.xlu0 %1821
    %1823 = vadd.xlane.f32.xlu0 %v1761
    %v1824 = vpop.xlane.xlu0 %1823
    %1825 = vadd.xlane.f32.xlu0 %v1762
    %v1826 = vpop.xlane.xlu0 %1825
    %1827 = vadd.xlane.f32.xlu0 %v1763
    %v1828 = vpop.xlane.xlu0 %1827
    %1829 = vadd.xlane.f32.xlu0 %v1764
    %v1830 = vpop.xlane.xlu0 %1829
    %1831 = vadd.xlane.f32.xlu0 %v1765
    %v1832 = vpop.xlane.xlu0 %1831
    %1833 = vadd.xlane.f32.xlu0 %v1766
    %v1834 = vpop.xlane.xlu0 %1833
    %1835 = vadd.xlane.f32.xlu0 %v1767
    %v1836 = vpop.xlane.xlu0 %1835
    %1837 = vadd.xlane.f32.xlu0 %v1768
    %v1838 = vpop.xlane.xlu0 %1837
    %1839 = vadd.xlane.f32.xlu0 %v1769
    %v1840 = vpop.xlane.xlu0 %1839
    %1841 = vadd.xlane.f32.xlu0 %v1770
    %v1842 = vpop.xlane.xlu0 %1841
    %1843 = vadd.xlane.f32.xlu0 %v1771
    %v1844 = vpop.xlane.xlu0 %1843
    %1845 = vadd.xlane.f32.xlu0 %v1772
    %v1846 = vpop.xlane.xlu0 %1845
    %1847 = vadd.xlane.f32.xlu0 %v1773
    %v1848 = vpop.xlane.xlu0 %1847
    %1849 = vadd.xlane.f32.xlu0 %v1774
    %v1850 = vpop.xlane.xlu0 %1849
    %1851 = vadd.xlane.f32.xlu0 %v1775
    %v1852 = vpop.xlane.xlu0 %1851
    %1853 = vadd.xlane.f32.xlu0 %v1776
    %v1854 = vpop.xlane.xlu0 %1853
    %1855 = vadd.xlane.f32.xlu0 %v1777
    %v1856 = vpop.xlane.xlu0 %1855
    %1857 = vadd.xlane.f32.xlu0 %v1778
    %v1858 = vpop.xlane.xlu0 %1857
    %1859 = vadd.xlane.f32.xlu0 %v1779
    %v1860 = vpop.xlane.xlu0 %1859
    %1861 = vadd.xlane.f32.xlu0 %v1780
    %v1862 = vpop.xlane.xlu0 %1861
    %1863 = vadd.xlane.f32.xlu0 %v1781
    %v1864 = vpop.xlane.xlu0 %1863
    %1865 = vadd.xlane.f32.xlu0 %v1782
    %v1866 = vpop.xlane.xlu0 %1865
    %1867 = vadd.xlane.f32.xlu0 %v1783
    %v1868 = vpop.xlane.xlu0 %1867
    %1869 = vadd.xlane.f32.xlu0 %v1784
    %v1870 = vpop.xlane.xlu0 %1869
    %1871 = vadd.xlane.f32.xlu0 %v1785
    %v1872 = vpop.xlane.xlu0 %1871
    %1873 = vadd.xlane.f32.xlu0 %v1786
    %v1874 = vpop.xlane.xlu0 %1873
    %1875 = vadd.xlane.f32.xlu0 %v1787
    %v1876 = vpop.xlane.xlu0 %1875
    %1877 = vadd.xlane.f32.xlu0 %v1788
    %v1878 = vpop.xlane.xlu0 %1877
    %1879 = vadd.xlane.f32.xlu0 %v1789
    %v1880 = vpop.xlane.xlu0 %1879
    %1881 = vadd.xlane.f32.xlu0 %v1790
    %v1882 = vpop.xlane.xlu0 %1881
    %1883 = vadd.xlane.f32.xlu0 %v1791
    %v1884 = vpop.xlane.xlu0 %1883
    %1885 = vadd.xlane.f32.xlu0 %v1792
    %v1886 = vpop.xlane.xlu0 %1885
    %1887 = vadd.xlane.f32.xlu0 %v1793
    %v1888 = vpop.xlane.xlu0 %1887
    %1889 = vadd.xlane.f32.xlu0 %v1794
    %v1890 = vpop.xlane.xlu0 %1889
    %v1891 = vmul.f32 %v1796, 0.01
    %v1892 = vmul.f32 %v1798, 0.01
    %v1893 = vmul.f32 %v1800, 0.01
    %v1894 = vmul.f32 %v1802, 0.01
    %v1895 = vmul.f32 %v1804, 0.01
    %v1896 = vmul.f32 %v1806, 0.01
    %v1897 = vmul.f32 %v1808, 0.01
    %v1898 = vmul.f32 %v1810, 0.01
    %v1899 = vmul.f32 %v1812, 0.01
    %v1900 = vmul.f32 %v1814, 0.01
    %v1901 = vmul.f32 %v1816, 0.01
    %v1902 = vmul.f32 %v1818, 0.01
    %v1903 = vmul.f32 %v1820, 0.01
    %v1904 = vmul.f32 %v1822, 0.01
    %v1905 = vmul.f32 %v1824, 0.01
    %v1906 = vmul.f32 %v1826, 0.01
    %v1907 = vmul.f32 %v1828, 0.01
    %v1908 = vmul.f32 %v1830, 0.01
    %v1909 = vmul.f32 %v1832, 0.01
    %v1910 = vmul.f32 %v1834, 0.01
    %v1911 = vmul.f32 %v1836, 0.01
    %v1912 = vmul.f32 %v1838, 0.01
    %v1913 = vmul.f32 %v1840, 0.01
    %v1914 = vmul.f32 %v1842, 0.01
    %v1915 = vmul.f32 %v1844, 0.01
    %v1916 = vmul.f32 %v1846, 0.01
    %v1917 = vmul.f32 %v1848, 0.01
    %v1918 = vmul.f32 %v1850, 0.01
    %v1919 = vmul.f32 %v1852, 0.01
    %v1920 = vmul.f32 %v1854, 0.01
    %v1921 = vmul.f32 %v1856, 0.01
    %v1922 = vmul.f32 %v1858, 0.01
    %v1923 = vmul.f32 %v1860, 0.01
    %v1924 = vmul.f32 %v1862, 0.01
    %v1925 = vmul.f32 %v1864, 0.01
    %v1926 = vmul.f32 %v1866, 0.01
    %v1927 = vmul.f32 %v1868, 0.01
    %v1928 = vmul.f32 %v1870, 0.01
    %v1929 = vmul.f32 %v1872, 0.01
    %v1930 = vmul.f32 %v1874, 0.01
    %v1931 = vmul.f32 %v1876, 0.01
    %v1932 = vmul.f32 %v1878, 0.01
    %v1933 = vmul.f32 %v1880, 0.01
    %v1934 = vmul.f32 %v1882, 0.01
    %v1935 = vmul.f32 %v1884, 0.01
    %v1936 = vmul.f32 %v1886, 0.01
    %v1937 = vmul.f32 %v1888, 0.01
    %v1938 = vmul.f32 %v1890, 0.01
    %v1939 = vadd.f32 %v1891, 1e-05
    %v1940 = vadd.f32 %v1892, 1e-05
    %v1941 = vadd.f32 %v1893, 1e-05
    %v1942 = vadd.f32 %v1894, 1e-05
    %v1943 = vadd.f32 %v1895, 1e-05
    %v1944 = vadd.f32 %v1896, 1e-05
    %v1945 = vadd.f32 %v1897, 1e-05
    %v1946 = vadd.f32 %v1898, 1e-05
    %v1947 = vadd.f32 %v1899, 1e-05
    %v1948 = vadd.f32 %v1900, 1e-05
    %v1949 = vadd.f32 %v1901, 1e-05
    %v1950 = vadd.f32 %v1902, 1e-05
    %v1951 = vadd.f32 %v1903, 1e-05
    %v1952 = vadd.f32 %v1904, 1e-05
    %v1953 = vadd.f32 %v1905, 1e-05
    %v1954 = vadd.f32 %v1906, 1e-05
    %v1955 = vadd.f32 %v1907, 1e-05
    %v1956 = vadd.f32 %v1908, 1e-05
    %v1957 = vadd.f32 %v1909, 1e-05
    %v1958 = vadd.f32 %v1910, 1e-05
    %v1959 = vadd.f32 %v1911, 1e-05
    %v1960 = vadd.f32 %v1912, 1e-05
    %v1961 = vadd.f32 %v1913, 1e-05
    %v1962 = vadd.f32 %v1914, 1e-05
    %v1963 = vadd.f32 %v1915, 1e-05
    %v1964 = vadd.f32 %v1916, 1e-05
    %v1965 = vadd.f32 %v1917, 1e-05
    %v1966 = vadd.f32 %v1918, 1e-05
    %v1967 = vadd.f32 %v1919, 1e-05
    %v1968 = vadd.f32 %v1920, 1e-05
    %v1969 = vadd.f32 %v1921, 1e-05
    %v1970 = vadd.f32 %v1922, 1e-05
    %v1971 = vadd.f32 %v1923, 1e-05
    %v1972 = vadd.f32 %v1924, 1e-05
    %v1973 = vadd.f32 %v1925, 1e-05
    %v1974 = vadd.f32 %v1926, 1e-05
    %v1975 = vadd.f32 %v1927, 1e-05
    %v1976 = vadd.f32 %v1928, 1e-05
    %v1977 = vadd.f32 %v1929, 1e-05
    %v1978 = vadd.f32 %v1930, 1e-05
    %v1979 = vadd.f32 %v1931, 1e-05
    %v1980 = vadd.f32 %v1932, 1e-05
    %v1981 = vadd.f32 %v1933, 1e-05
    %v1982 = vadd.f32 %v1934, 1e-05
    %v1983 = vadd.f32 %v1935, 1e-05
    %v1984 = vadd.f32 %v1936, 1e-05
    %v1985 = vadd.f32 %v1937, 1e-05
    %v1986 = vadd.f32 %v1938, 1e-05
    %v1987 = vrsqrt.pop %v1939
    %v1988 = vrsqrt.pop %v1940
    %v1989 = vrsqrt.pop %v1941
    %v1990 = vrsqrt.pop %v1942
    %v1991 = vrsqrt.pop %v1943
    %v1992 = vrsqrt.pop %v1944
    %v1993 = vrsqrt.pop %v1945
    %v1994 = vrsqrt.pop %v1946
    %v1995 = vrsqrt.pop %v1947
    %v1996 = vrsqrt.pop %v1948
    %v1997 = vrsqrt.pop %v1949
    %v1998 = vrsqrt.pop %v1950
    %v1999 = vrsqrt.pop %v1951
    %v2000 = vrsqrt.pop %v1952
    %v2001 = vrsqrt.pop %v1953
    %v2002 = vrsqrt.pop %v1954
    %v2003 = vrsqrt.pop %v1955
    %v2004 = vrsqrt.pop %v1956
    %v2005 = vrsqrt.pop %v1957
    %v2006 = vrsqrt.pop %v1958
    %v2007 = vrsqrt.pop %v1959
    %v2008 = vrsqrt.pop %v1960
    %v2009 = vrsqrt.pop %v1961
    %v2010 = vrsqrt.pop %v1962
    %v2011 = vrsqrt.pop %v1963
    %v2012 = vrsqrt.pop %v1964
    %v2013 = vrsqrt.pop %v1965
    %v2014 = vrsqrt.pop %v1966
    %v2015 = vrsqrt.pop %v1967
    %v2016 = vrsqrt.pop %v1968
    %v2017 = vrsqrt.pop %v1969
    %v2018 = vrsqrt.pop %v1970
    %v2019 = vrsqrt.pop %v1971
    %v2020 = vrsqrt.pop %v1972
    %v2021 = vrsqrt.pop %v1973
    %v2022 = vrsqrt.pop %v1974
    %v2023 = vrsqrt.pop %v1975
    %v2024 = vrsqrt.pop %v1976
    %v2025 = vrsqrt.pop %v1977
    %v2026 = vrsqrt.pop %v1978
    %v2027 = vrsqrt.pop %v1979
    %v2028 = vrsqrt.pop %v1980
    %v2029 = vrsqrt.pop %v1981
    %v2030 = vrsqrt.pop %v1982
    %v2031 = vrsqrt.pop %v1983
    %v2032 = vrsqrt.pop %v1984
    %v2033 = vrsqrt.pop %v1985
    %v2034 = vrsqrt.pop %v1986
    %v2035 = vmul.f32 %v1699, %v1987
    %v2036 = vmul.f32 %v1700, %v1988
    %v2037 = vmul.f32 %v1701, %v1989
    %v2038 = vmul.f32 %v1702, %v1990
    %v2039 = vmul.f32 %v1703, %v1991
    %v2040 = vmul.f32 %v1704, %v1992
    %v2041 = vmul.f32 %v1705, %v1993
    %v2042 = vmul.f32 %v1706, %v1994
    %v2043 = vmul.f32 %v1707, %v1995
    %v2044 = vmul.f32 %v1708, %v1996
    %v2045 = vmul.f32 %v1709, %v1997
    %v2046 = vmul.f32 %v1710, %v1998
    %v2047 = vmul.f32 %v1711, %v1999
    %v2048 = vmul.f32 %v1712, %v2000
    %v2049 = vmul.f32 %v1713, %v2001
    %v2050 = vmul.f32 %v1714, %v2002
    %v2051 = vmul.f32 %v1715, %v2003
    %v2052 = vmul.f32 %v1716, %v2004
    %v2053 = vmul.f32 %v1717, %v2005
    %v2054 = vmul.f32 %v1718, %v2006
    %v2055 = vmul.f32 %v1719, %v2007
    %v2056 = vmul.f32 %v1720, %v2008
    %v2057 = vmul.f32 %v1721, %v2009
    %v2058 = vmul.f32 %v1722, %v2010
    %v2059 = vmul.f32 %v1723, %v2011
    %v2060 = vmul.f32 %v1724, %v2012
    %v2061 = vmul.f32 %v1725, %v2013
    %v2062 = vmul.f32 %v1726, %v2014
    %v2063 = vmul.f32 %v1727, %v2015
    %v2064 = vmul.f32 %v1728, %v2016
    %v2065 = vmul.f32 %v1729, %v2017
    %v2066 = vmul.f32 %v1730, %v2018
    %v2067 = vmul.f32 %v1731, %v2019
    %v2068 = vmul.f32 %v1732, %v2020
    %v2069 = vmul.f32 %v1733, %v2021
    %v2070 = vmul.f32 %v1734, %v2022
    %v2071 = vmul.f32 %v1735, %v2023
    %v2072 = vmul.f32 %v1736, %v2024
    %v2073 = vmul.f32 %v1737, %v2025
    %v2074 = vmul.f32 %v1738, %v2026
    %v2075 = vmul.f32 %v1739, %v2027
    %v2076 = vmul.f32 %v1740, %v2028
    %v2077 = vmul.f32 %v1741, %v2029
    %v2078 = vmul.f32 %v1742, %v2030
    %v2079 = vmul.f32 %v1743, %v2031
    %v2080 = vmul.f32 %v1744, %v2032
    %v2081 = vmul.f32 %v1745, %v2033
    %v2082 = vmul.f32 %v1746, %v2034
    %v2084 = vlaneseq
    %v2085 = vshrl.u32 %v2084, 7
    %v2086 = vsub.s32 0, %v2085
    %v2087 = vrot.slane %v1505, %v2086
    %v2089 = vmul.f32 %v2035, %v2087
    %v2090 = vmul.f32 %v2036, %v2087
    %v2091 = vmul.f32 %v2037, %v2087
    %v2092 = vmul.f32 %v2038, %v2087
    %v2093 = vmul.f32 %v2039, %v2087
    %v2094 = vmul.f32 %v2040, %v2087
    %v2095 = vmul.f32 %v2041, %v2087
    %v2096 = vmul.f32 %v2042, %v2087
    %v2097 = vmul.f32 %v2043, %v2087
    %v2098 = vmul.f32 %v2044, %v2087
    %v2099 = vmul.f32 %v2045, %v2087
    %v2100 = vmul.f32 %v2046, %v2087
    %v2101 = vmul.f32 %v2047, %v2087
    %v2102 = vmul.f32 %v2048, %v2087
    %v2103 = vmul.f32 %v2049, %v2087
    %v2104 = vmul.f32 %v2050, %v2087
    %v2105 = vmul.f32 %v2051, %v2087
    %v2106 = vmul.f32 %v2052, %v2087
    %v2107 = vmul.f32 %v2053, %v2087
    %v2108 = vmul.f32 %v2054, %v2087
    %v2109 = vmul.f32 %v2055, %v2087
    %v2110 = vmul.f32 %v2056, %v2087
    %v2111 = vmul.f32 %v2057, %v2087
    %v2112 = vmul.f32 %v2058, %v2087
    %v2113 = vmul.f32 %v2059, %v2087
    %v2114 = vmul.f32 %v2060, %v2087
    %v2115 = vmul.f32 %v2061, %v2087
    %v2116 = vmul.f32 %v2062, %v2087
    %v2117 = vmul.f32 %v2063, %v2087
    %v2118 = vmul.f32 %v2064, %v2087
    %v2119 = vmul.f32 %v2065, %v2087
    %v2120 = vmul.f32 %v2066, %v2087
    %v2121 = vmul.f32 %v2067, %v2087
    %v2122 = vmul.f32 %v2068, %v2087
    %v2123 = vmul.f32 %v2069, %v2087
    %v2124 = vmul.f32 %v2070, %v2087
    %v2125 = vmul.f32 %v2071, %v2087
    %v2126 = vmul.f32 %v2072, %v2087
    %v2127 = vmul.f32 %v2073, %v2087
    %v2128 = vmul.f32 %v2074, %v2087
    %v2129 = vmul.f32 %v2075, %v2087
    %v2130 = vmul.f32 %v2076, %v2087
    %v2131 = vmul.f32 %v2077, %v2087
    %v2132 = vmul.f32 %v2078, %v2087
    %v2133 = vmul.f32 %v2079, %v2087
    %v2134 = vmul.f32 %v2080, %v2087
    %v2135 = vmul.f32 %v2081, %v2087
    %v2136 = vmul.f32 %v2082, %v2087
    %v2138 = vlaneseq
    %v2139 = vshrl.u32 %v2138, 7
    %v2140 = vsub.s32 0, %v2139
    %v2141 = vrot.slane %v1506, %v2140
    %v2143 = vadd.f32 %v2089, %v2141
    %v2144 = vadd.f32 %v2090, %v2141
    %v2145 = vadd.f32 %v2091, %v2141
    %v2146 = vadd.f32 %v2092, %v2141
    %v2147 = vadd.f32 %v2093, %v2141
    %v2148 = vadd.f32 %v2094, %v2141
    %v2149 = vadd.f32 %v2095, %v2141
    %v2150 = vadd.f32 %v2096, %v2141
    %v2151 = vadd.f32 %v2097, %v2141
    %v2152 = vadd.f32 %v2098, %v2141
    %v2153 = vadd.f32 %v2099, %v2141
    %v2154 = vadd.f32 %v2100, %v2141
    %v2155 = vadd.f32 %v2101, %v2141
    %v2156 = vadd.f32 %v2102, %v2141
    %v2157 = vadd.f32 %v2103, %v2141
    %v2158 = vadd.f32 %v2104, %v2141
    %v2159 = vadd.f32 %v2105, %v2141
    %v2160 = vadd.f32 %v2106, %v2141
    %v2161 = vadd.f32 %v2107, %v2141
    %v2162 = vadd.f32 %v2108, %v2141
    %v2163 = vadd.f32 %v2109, %v2141
    %v2164 = vadd.f32 %v2110, %v2141
    %v2165 = vadd.f32 %v2111, %v2141
    %v2166 = vadd.f32 %v2112, %v2141
    %v2167 = vadd.f32 %v2113, %v2141
    %v2168 = vadd.f32 %v2114, %v2141
    %v2169 = vadd.f32 %v2115, %v2141
    %v2170 = vadd.f32 %v2116, %v2141
    %v2171 = vadd.f32 %v2117, %v2141
    %v2172 = vadd.f32 %v2118, %v2141
    %v2173 = vadd.f32 %v2119, %v2141
    %v2174 = vadd.f32 %v2120, %v2141
    %v2175 = vadd.f32 %v2121, %v2141
    %v2176 = vadd.f32 %v2122, %v2141
    %v2177 = vadd.f32 %v2123, %v2141
    %v2178 = vadd.f32 %v2124, %v2141
    %v2179 = vadd.f32 %v2125, %v2141
    %v2180 = vadd.f32 %v2126, %v2141
    %v2181 = vadd.f32 %v2127, %v2141
    %v2182 = vadd.f32 %v2128, %v2141
    %v2183 = vadd.f32 %v2129, %v2141
    %v2184 = vadd.f32 %v2130, %v2141
    %v2185 = vadd.f32 %v2131, %v2141
    %v2186 = vadd.f32 %v2132, %v2141
    %v2187 = vadd.f32 %v2133, %v2141
    %v2188 = vadd.f32 %v2134, %v2141
    %v2189 = vadd.f32 %v2135, %v2141
    %v2190 = vadd.f32 %v2136, %v2141
    %v2191 = vmax.f32 %v2143, 0.0
    %v2192 = vmax.f32 %v2144, 0.0
    %v2193 = vmax.f32 %v2145, 0.0
    %v2194 = vmax.f32 %v2146, 0.0
    %v2195 = vmax.f32 %v2147, 0.0
    %v2196 = vmax.f32 %v2148, 0.0
    %v2197 = vmax.f32 %v2149, 0.0
    %v2198 = vmax.f32 %v2150, 0.0
    %v2199 = vmax.f32 %v2151, 0.0
    %v2200 = vmax.f32 %v2152, 0.0
    %v2201 = vmax.f32 %v2153, 0.0
    %v2202 = vmax.f32 %v2154, 0.0
    %v2203 = vmax.f32 %v2155, 0.0
    %v2204 = vmax.f32 %v2156, 0.0
    %v2205 = vmax.f32 %v2157, 0.0
    %v2206 = vmax.f32 %v2158, 0.0
    %v2207 = vmax.f32 %v2159, 0.0
    %v2208 = vmax.f32 %v2160, 0.0
    %v2209 = vmax.f32 %v2161, 0.0
    %v2210 = vmax.f32 %v2162, 0.0
    %v2211 = vmax.f32 %v2163, 0.0
    %v2212 = vmax.f32 %v2164, 0.0
    %v2213 = vmax.f32 %v2165, 0.0
    %v2214 = vmax.f32 %v2166, 0.0
    %v2215 = vmax.f32 %v2167, 0.0
    %v2216 = vmax.f32 %v2168, 0.0
    %v2217 = vmax.f32 %v2169, 0.0
    %v2218 = vmax.f32 %v2170, 0.0
    %v2219 = vmax.f32 %v2171, 0.0
    %v2220 = vmax.f32 %v2172, 0.0
    %v2221 = vmax.f32 %v2173, 0.0
    %v2222 = vmax.f32 %v2174, 0.0
    %v2223 = vmax.f32 %v2175, 0.0
    %v2224 = vmax.f32 %v2176, 0.0
    %v2225 = vmax.f32 %v2177, 0.0
    %v2226 = vmax.f32 %v2178, 0.0
    %v2227 = vmax.f32 %v2179, 0.0
    %v2228 = vmax.f32 %v2180, 0.0
    %v2229 = vmax.f32 %v2181, 0.0
    %v2230 = vmax.f32 %v2182, 0.0
    %v2231 = vmax.f32 %v2183, 0.0
    %v2232 = vmax.f32 %v2184, 0.0
    %v2233 = vmax.f32 %v2185, 0.0
    %v2234 = vmax.f32 %v2186, 0.0
    %v2235 = vmax.f32 %v2187, 0.0
    %v2236 = vmax.f32 %v2188, 0.0
    %v2237 = vmax.f32 %v2189, 0.0
    %v2238 = vmax.f32 %v2190, 0.0
    %v2239 = vpack.c.bf16 %v2192, %v2191
    %v2240 = vpack.c.bf16 %v2194, %v2193
    %v2241 = vpack.c.bf16 %v2196, %v2195
    %v2242 = vpack.c.bf16 %v2198, %v2197
    %v2243 = vpack.c.bf16 %v2200, %v2199
    %v2244 = vpack.c.bf16 %v2202, %v2201
    %v2245 = vpack.c.bf16 %v2204, %v2203
    %v2246 = vpack.c.bf16 %v2206, %v2205
    %v2247 = vpack.c.bf16 %v2208, %v2207
    %v2248 = vpack.c.bf16 %v2210, %v2209
    %v2249 = vpack.c.bf16 %v2212, %v2211
    %v2250 = vpack.c.bf16 %v2214, %v2213
    %v2251 = vpack.c.bf16 %v2216, %v2215
    %v2252 = vpack.c.bf16 %v2218, %v2217
    %v2253 = vpack.c.bf16 %v2220, %v2219
    %v2254 = vpack.c.bf16 %v2222, %v2221
    %v2255 = vpack.c.bf16 %v2224, %v2223
    %v2256 = vpack.c.bf16 %v2226, %v2225
    %v2257 = vpack.c.bf16 %v2228, %v2227
    %v2258 = vpack.c.bf16 %v2230, %v2229
    %v2259 = vpack.c.bf16 %v2232, %v2231
    %v2260 = vpack.c.bf16 %v2234, %v2233
    %v2261 = vpack.c.bf16 %v2236, %v2235
    %v2262 = vpack.c.bf16 %v2238, %v2237
    %v2263 = vld [vmem:[%s12] sm:$0xff]
    %v2264 = vld [vmem:[%s12 + $0x8] sm:$0xff]
    %v2265 = vld [vmem:[%s12 + $0x10] sm:$0xff]
    %v2266 = vld [vmem:[%s12 + $0x18] sm:$0xff]
    %v2267 = vld [vmem:[%s12 + $0x20] sm:$0xff]
    %v2268 = vld [vmem:[%s12 + $0x28] sm:$0xff]
    %v2269 = vld [vmem:[%s12 + $0x30] sm:$0xff]
    %v2270 = vld [vmem:[%s12 + $0x38] sm:$0xff]
    %v2271 = vld [vmem:[%s12 + $0x40] sm:$0xff]
    %v2272 = vld [vmem:[%s12 + $0x48] sm:$0xff]
    %v2273 = vld [vmem:[%s12 + $0x50] sm:$0xff]
    %v2274 = vld [vmem:[%s12 + $0x58] sm:$0xff]
    %v2275 = vld [vmem:[%s12 + $0x60] sm:$0xff]
    %v2276 = vld [vmem:[%s12 + $0x68] sm:$0xff]
    %v2277 = vld [vmem:[%s12 + $0x70] sm:$0xff]
    %v2278 = vld [vmem:[%s12 + $0x78] sm:$0xff]
    %v2295 = vunpack.c.l.b16 %v2263
    %v2296 = vunpack.c.h.b16 %v2263
    %v2297 = vunpack.c.l.b16 %v2264
    %v2298 = vunpack.c.h.b16 %v2264
    %v2299 = vunpack.c.l.b16 %v2265
    %v2300 = vunpack.c.h.b16 %v2265
    %v2301 = vunpack.c.l.b16 %v2266
    %v2302 = vunpack.c.h.b16 %v2266
    %v2303 = vunpack.c.l.b16 %v2267
    %v2304 = vunpack.c.h.b16 %v2267
    %v2305 = vunpack.c.l.b16 %v2268
    %v2306 = vunpack.c.h.b16 %v2268
    %v2307 = vunpack.c.l.b16 %v2269
    %v2308 = vunpack.c.h.b16 %v2269
    %v2309 = vunpack.c.l.b16 %v2270
    %v2310 = vunpack.c.h.b16 %v2270
    %v2311 = vunpack.c.l.b16 %v2271
    %v2312 = vunpack.c.h.b16 %v2271
    %v2313 = vunpack.c.l.b16 %v2272
    %v2314 = vunpack.c.h.b16 %v2272
    %v2315 = vunpack.c.l.b16 %v2273
    %v2316 = vunpack.c.h.b16 %v2273
    %v2317 = vunpack.c.l.b16 %v2274
    %v2318 = vunpack.c.h.b16 %v2274
    %v2319 = vunpack.c.l.b16 %v2275
    %v2320 = vunpack.c.h.b16 %v2275
    %v2321 = vunpack.c.l.b16 %v2276
    %v2322 = vunpack.c.h.b16 %v2276
    %v2323 = vunpack.c.l.b16 %v2277
    %v2324 = vunpack.c.h.b16 %v2277
    %v2325 = vunpack.c.l.b16 %v2278
    %v2326 = vunpack.c.h.b16 %v2278
    %v2327 = vpack.c.b16 %v2297, %v2295
    %v2328 = vpack.c.b16 %v2298, %v2296
    %v2329 = vpack.c.b16 %v2301, %v2299
    %v2330 = vpack.c.b16 %v2302, %v2300
    %v2331 = vpack.c.b16 %v2305, %v2303
    %v2332 = vpack.c.b16 %v2306, %v2304
    %v2333 = vpack.c.b16 %v2309, %v2307
    %v2334 = vpack.c.b16 %v2310, %v2308
    %v2335 = vpack.c.b16 %v2313, %v2311
    %v2336 = vpack.c.b16 %v2314, %v2312
    %v2337 = vpack.c.b16 %v2317, %v2315
    %v2338 = vpack.c.b16 %v2318, %v2316
    %v2339 = vpack.c.b16 %v2321, %v2319
    %v2340 = vpack.c.b16 %v2322, %v2320
    %v2341 = vpack.c.b16 %v2325, %v2323
    %v2342 = vpack.c.b16 %v2326, %v2324
    %2359 = vmatprep.subr.bf16.mxu0 %v2342
    %2360 = vmatpush1.bf16.msra.mxu0 %v2341
    %2361 = vmatprep.subr.bf16.mxu0 %v2340
    %2362 = vmatpush1.bf16.msra.mxu0 %v2339
    %2363 = vmatprep.subr.bf16.mxu0 %v2338
    %2364 = vmatpush1.bf16.msra.mxu0 %v2337
    %2365 = vmatprep.subr.bf16.mxu0 %v2336
    %2366 = vmatpush1.bf16.msra.mxu0 %v2335
    %2367 = vmatprep.subr.bf16.mxu0 %v2334
    %2368 = vmatpush1.bf16.msra.mxu0 %v2333
    %2369 = vmatprep.subr.bf16.mxu0 %v2332
    %2370 = vmatpush1.bf16.msra.mxu0 %v2331
    %2371 = vmatprep.subr.bf16.mxu0 %v2330
    %2372 = vmatpush1.bf16.msra.mxu0 %v2329
    %2373 = vmatprep.subr.bf16.mxu0 %v2328
    %2374 = vmatpush1.bf16.msra.mxu0 %v2327
    %2375 = vmatprep.subr.bf16.mxu0 0
    %2376 = vmatpush2.bf16.msra.mxu0 0
    %2377 = vmatprep.subr.bf16.mxu0 0
    %2378 = vmatpush2.bf16.msra.mxu0 0
    %2379 = vmatprep.subr.bf16.mxu0 0
    %2380 = vmatpush2.bf16.msra.mxu0 0
    %2381 = vmatprep.subr.bf16.mxu0 0
    %2382 = vmatpush2.bf16.msra.mxu0 0
    %2383 = vmatprep.subr.bf16.mxu0 0
    %2384 = vmatpush2.bf16.msra.mxu0 0
    %2385 = vmatprep.subr.bf16.mxu0 0
    %2386 = vmatpush2.bf16.msra.mxu0 0
    %2387 = vmatprep.subr.bf16.mxu0 0
    %2388 = vmatpush2.bf16.msra.mxu0 0
    %2389 = vmatprep.subr.bf16.mxu0 0
    %2390 = vmatpush2.bf16.msra.mxu0 0
    %2391 = vmatprep.mubr.bf16.mxu0 0
    %2392 = vmatmul.mubr.bf16.gmra.mxu0 %v2239
    %v2393 = vpop.f32.mrf.mxu0
    %v2394 = vadd.f32 0.0, %v2393
    %v2395 = vpop.f32.mrf.mxu0
    %v2396 = vadd.f32 0.0, %v2395
    %v2397 = vpop.f32.mrf.mxu0
    %v2398 = vadd.f32 0.0, %v2397
    %v2399 = vpop.f32.mrf.mxu0
    %v2400 = vadd.f32 0.0, %v2399
    %2401 = vmatprep.mubr.bf16.mxu0 0
    %2402 = vmatmul.mubr.bf16.gmra.mxu0 %v2240
    %v2403 = vpop.f32.mrf.mxu0
    %v2404 = vadd.f32 0.0, %v2403
    %v2405 = vpop.f32.mrf.mxu0
    %v2406 = vadd.f32 0.0, %v2405
    %v2407 = vpop.f32.mrf.mxu0
    %v2408 = vadd.f32 0.0, %v2407
    %v2409 = vpop.f32.mrf.mxu0
    %v2410 = vadd.f32 0.0, %v2409
    %2411 = vmatprep.mubr.bf16.mxu0 0
    %2412 = vmatmul.mubr.bf16.gmra.mxu0 %v2241
    %v2413 = vpop.f32.mrf.mxu0
    %v2414 = vadd.f32 0.0, %v2413
    %v2415 = vpop.f32.mrf.mxu0
    %v2416 = vadd.f32 0.0, %v2415
    %v2417 = vpop.f32.mrf.mxu0
    %v2418 = vadd.f32 0.0, %v2417
    %v2419 = vpop.f32.mrf.mxu0
    %v2420 = vadd.f32 0.0, %v2419
    %2421 = vmatprep.mubr.bf16.mxu0 0
    %2422 = vmatmul.mubr.bf16.gmra.mxu0 %v2242
    %v2423 = vpop.f32.mrf.mxu0
    %v2424 = vadd.f32 0.0, %v2423
    %v2425 = vpop.f32.mrf.mxu0
    %v2426 = vadd.f32 0.0, %v2425
    %v2427 = vpop.f32.mrf.mxu0
    %v2428 = vadd.f32 0.0, %v2427
    %v2429 = vpop.f32.mrf.mxu0
    %v2430 = vadd.f32 0.0, %v2429
    %2431 = vmatprep.mubr.bf16.mxu0 0
    %2432 = vmatmul.mubr.bf16.gmra.mxu0 %v2243
    %v2433 = vpop.f32.mrf.mxu0
    %v2434 = vadd.f32 0.0, %v2433
    %v2435 = vpop.f32.mrf.mxu0
    %v2436 = vadd.f32 0.0, %v2435
    %v2437 = vpop.f32.mrf.mxu0
    %v2438 = vadd.f32 0.0, %v2437
    %v2439 = vpop.f32.mrf.mxu0
    %v2440 = vadd.f32 0.0, %v2439
    %2441 = vmatprep.mubr.bf16.mxu0 0
    %2442 = vmatmul.mubr.bf16.gmra.mxu0 %v2244
    %v2443 = vpop.f32.mrf.mxu0
    %v2444 = vadd.f32 0.0, %v2443
    %v2445 = vpop.f32.mrf.mxu0
    %v2446 = vadd.f32 0.0, %v2445
    %v2447 = vpop.f32.mrf.mxu0
    %v2448 = vadd.f32 0.0, %v2447
    %v2449 = vpop.f32.mrf.mxu0
    %v2450 = vadd.f32 0.0, %v2449
    %2451 = vmatprep.mubr.bf16.mxu0 0
    %2452 = vmatmul.mubr.bf16.gmra.mxu0 %v2245
    %v2453 = vpop.f32.mrf.mxu0
    %v2454 = vadd.f32 0.0, %v2453
    %v2455 = vpop.f32.mrf.mxu0
    %v2456 = vadd.f32 0.0, %v2455
    %v2457 = vpop.f32.mrf.mxu0
    %v2458 = vadd.f32 0.0, %v2457
    %v2459 = vpop.f32.mrf.mxu0
    %v2460 = vadd.f32 0.0, %v2459
    %2461 = vmatprep.mubr.bf16.mxu0 0
    %2462 = vmatmul.mubr.bf16.gmra.mxu0 %v2246
    %v2463 = vpop.f32.mrf.mxu0
    %v2464 = vadd.f32 0.0, %v2463
    %v2465 = vpop.f32.mrf.mxu0
    %v2466 = vadd.f32 0.0, %v2465
    %v2467 = vpop.f32.mrf.mxu0
    %v2468 = vadd.f32 0.0, %v2467
    %v2469 = vpop.f32.mrf.mxu0
    %v2470 = vadd.f32 0.0, %v2469
    %2471 = vmatprep.mubr.bf16.mxu0 0
    %2472 = vmatmul.mubr.bf16.gmra.mxu0 %v2247
    %v2473 = vpop.f32.mrf.mxu0
    %v2474 = vadd.f32 0.0, %v2473
    %v2475 = vpop.f32.mrf.mxu0
    %v2476 = vadd.f32 0.0, %v2475
    %v2477 = vpop.f32.mrf.mxu0
    %v2478 = vadd.f32 0.0, %v2477
    %v2479 = vpop.f32.mrf.mxu0
    %v2480 = vadd.f32 0.0, %v2479
    %2481 = vmatprep.mubr.bf16.mxu0 0
    %2482 = vmatmul.mubr.bf16.gmra.mxu0 %v2248
    %v2483 = vpop.f32.mrf.mxu0
    %v2484 = vadd.f32 0.0, %v2483
    %v2485 = vpop.f32.mrf.mxu0
    %v2486 = vadd.f32 0.0, %v2485
    %v2487 = vpop.f32.mrf.mxu0
    %v2488 = vadd.f32 0.0, %v2487
    %v2489 = vpop.f32.mrf.mxu0
    %v2490 = vadd.f32 0.0, %v2489
    %2491 = vmatprep.mubr.bf16.mxu0 0
    %2492 = vmatmul.mubr.bf16.gmra.mxu0 %v2249
    %v2493 = vpop.f32.mrf.mxu0
    %v2494 = vadd.f32 0.0, %v2493
    %v2495 = vpop.f32.mrf.mxu0
    %v2496 = vadd.f32 0.0, %v2495
    %v2497 = vpop.f32.mrf.mxu0
    %v2498 = vadd.f32 0.0, %v2497
    %v2499 = vpop.f32.mrf.mxu0
    %v2500 = vadd.f32 0.0, %v2499
    %2501 = vmatprep.mubr.bf16.mxu0 0
    %2502 = vmatmul.mubr.bf16.gmra.mxu0 %v2250
    %v2503 = vpop.f32.mrf.mxu0
    %v2504 = vadd.f32 0.0, %v2503
    %v2505 = vpop.f32.mrf.mxu0
    %v2506 = vadd.f32 0.0, %v2505
    %v2507 = vpop.f32.mrf.mxu0
    %v2508 = vadd.f32 0.0, %v2507
    %v2509 = vpop.f32.mrf.mxu0
    %v2510 = vadd.f32 0.0, %v2509
    %2511 = vmatprep.mubr.bf16.mxu0 0
    %2512 = vmatmul.mubr.bf16.gmra.mxu0 %v2251
    %v2513 = vpop.f32.mrf.mxu0
    %v2514 = vadd.f32 0.0, %v2513
    %v2515 = vpop.f32.mrf.mxu0
    %v2516 = vadd.f32 0.0, %v2515
    %v2517 = vpop.f32.mrf.mxu0
    %v2518 = vadd.f32 0.0, %v2517
    %v2519 = vpop.f32.mrf.mxu0
    %v2520 = vadd.f32 0.0, %v2519
    %2521 = vmatprep.mubr.bf16.mxu0 0
    %2522 = vmatmul.mubr.bf16.gmra.mxu0 %v2252
    %v2523 = vpop.f32.mrf.mxu0
    %v2524 = vadd.f32 0.0, %v2523
    %v2525 = vpop.f32.mrf.mxu0
    %v2526 = vadd.f32 0.0, %v2525
    %v2527 = vpop.f32.mrf.mxu0
    %v2528 = vadd.f32 0.0, %v2527
    %v2529 = vpop.f32.mrf.mxu0
    %v2530 = vadd.f32 0.0, %v2529
    %2531 = vmatprep.mubr.bf16.mxu0 0
    %2532 = vmatmul.mubr.bf16.gmra.mxu0 %v2253
    %v2533 = vpop.f32.mrf.mxu0
    %v2534 = vadd.f32 0.0, %v2533
    %v2535 = vpop.f32.mrf.mxu0
    %v2536 = vadd.f32 0.0, %v2535
    %v2537 = vpop.f32.mrf.mxu0
    %v2538 = vadd.f32 0.0, %v2537
    %v2539 = vpop.f32.mrf.mxu0
    %v2540 = vadd.f32 0.0, %v2539
    %2541 = vmatprep.mubr.bf16.mxu0 0
    %2542 = vmatmul.mubr.bf16.gmra.mxu0 %v2254
    %v2543 = vpop.f32.mrf.mxu0
    %v2544 = vadd.f32 0.0, %v2543
    %v2545 = vpop.f32.mrf.mxu0
    %v2546 = vadd.f32 0.0, %v2545
    %v2547 = vpop.f32.mrf.mxu0
    %v2548 = vadd.f32 0.0, %v2547
    %v2549 = vpop.f32.mrf.mxu0
    %v2550 = vadd.f32 0.0, %v2549
    %2551 = vmatprep.mubr.bf16.mxu0 0
    %2552 = vmatmul.mubr.bf16.gmra.mxu0 %v2255
    %v2553 = vpop.f32.mrf.mxu0
    %v2554 = vadd.f32 0.0, %v2553
    %v2555 = vpop.f32.mrf.mxu0
    %v2556 = vadd.f32 0.0, %v2555
    %v2557 = vpop.f32.mrf.mxu0
    %v2558 = vadd.f32 0.0, %v2557
    %v2559 = vpop.f32.mrf.mxu0
    %v2560 = vadd.f32 0.0, %v2559
    %2561 = vmatprep.mubr.bf16.mxu0 0
    %2562 = vmatmul.mubr.bf16.gmra.mxu0 %v2256
    %v2563 = vpop.f32.mrf.mxu0
    %v2564 = vadd.f32 0.0, %v2563
    %v2565 = vpop.f32.mrf.mxu0
    %v2566 = vadd.f32 0.0, %v2565
    %v2567 = vpop.f32.mrf.mxu0
    %v2568 = vadd.f32 0.0, %v2567
    %v2569 = vpop.f32.mrf.mxu0
    %v2570 = vadd.f32 0.0, %v2569
    %2571 = vmatprep.mubr.bf16.mxu0 0
    %2572 = vmatmul.mubr.bf16.gmra.mxu0 %v2257
    %v2573 = vpop.f32.mrf.mxu0
    %v2574 = vadd.f32 0.0, %v2573
    %v2575 = vpop.f32.mrf.mxu0
    %v2576 = vadd.f32 0.0, %v2575
    %v2577 = vpop.f32.mrf.mxu0
    %v2578 = vadd.f32 0.0, %v2577
    %v2579 = vpop.f32.mrf.mxu0
    %v2580 = vadd.f32 0.0, %v2579
    %2581 = vmatprep.mubr.bf16.mxu0 0
    %2582 = vmatmul.mubr.bf16.gmra.mxu0 %v2258
    %v2583 = vpop.f32.mrf.mxu0
    %v2584 = vadd.f32 0.0, %v2583
    %v2585 = vpop.f32.mrf.mxu0
    %v2586 = vadd.f32 0.0, %v2585
    %v2587 = vpop.f32.mrf.mxu0
    %v2588 = vadd.f32 0.0, %v2587
    %v2589 = vpop.f32.mrf.mxu0
    %v2590 = vadd.f32 0.0, %v2589
    %2591 = vmatprep.mubr.bf16.mxu0 0
    %2592 = vmatmul.mubr.bf16.gmra.mxu0 %v2259
    %v2593 = vpop.f32.mrf.mxu0
    %v2594 = vadd.f32 0.0, %v2593
    %v2595 = vpop.f32.mrf.mxu0
    %v2596 = vadd.f32 0.0, %v2595
    %v2597 = vpop.f32.mrf.mxu0
    %v2598 = vadd.f32 0.0, %v2597
    %v2599 = vpop.f32.mrf.mxu0
    %v2600 = vadd.f32 0.0, %v2599
    %2601 = vmatprep.mubr.bf16.mxu0 0
    %2602 = vmatmul.mubr.bf16.gmra.mxu0 %v2260
    %v2603 = vpop.f32.mrf.mxu0
    %v2604 = vadd.f32 0.0, %v2603
    %v2605 = vpop.f32.mrf.mxu0
    %v2606 = vadd.f32 0.0, %v2605
    %v2607 = vpop.f32.mrf.mxu0
    %v2608 = vadd.f32 0.0, %v2607
    %v2609 = vpop.f32.mrf.mxu0
    %v2610 = vadd.f32 0.0, %v2609
    %2611 = vmatprep.mubr.bf16.mxu0 0
    %2612 = vmatmul.mubr.bf16.gmra.mxu0 %v2261
    %v2613 = vpop.f32.mrf.mxu0
    %v2614 = vadd.f32 0.0, %v2613
    %v2615 = vpop.f32.mrf.mxu0
    %v2616 = vadd.f32 0.0, %v2615
    %v2617 = vpop.f32.mrf.mxu0
    %v2618 = vadd.f32 0.0, %v2617
    %v2619 = vpop.f32.mrf.mxu0
    %v2620 = vadd.f32 0.0, %v2619
    %2621 = vmatprep.mubr.bf16.mxu0 0
    %2622 = vmatmul.mubr.bf16.gmra.mxu0 %v2262
    %v2623 = vpop.f32.mrf.mxu0
    %v2624 = vadd.f32 0.0, %v2623
    %v2625 = vpop.f32.mrf.mxu0
    %v2626 = vadd.f32 0.0, %v2625
    %v2627 = vpop.f32.mrf.mxu0
    %v2628 = vadd.f32 0.0, %v2627
    %v2629 = vpop.f32.mrf.mxu0
    %v2630 = vadd.f32 0.0, %v2629
    %2631 = vdwg.mxu0
    %v2632 = vld [vmem:[%s1] sm:$0xff]
    %v2633 = vld [vmem:[%s1 + $0x8] sm:$0xff]
    %v2634 = vld [vmem:[%s1 + $0x10] sm:$0xff]
    %v2635 = vld [vmem:[%s1 + $0x18] sm:$0xff]
    %v2636 = vld [vmem:[%s1 + $0x20] sm:$0xff]
    %v2637 = vld [vmem:[%s1 + $0x28] sm:$0xff]
    %v2638 = vld [vmem:[%s1 + $0x30] sm:$0xff]
    %v2639 = vld [vmem:[%s1 + $0x38] sm:$0xff]
    %v2640 = vld [vmem:[%s1 + $0x40] sm:$0xff]
    %v2641 = vld [vmem:[%s1 + $0x48] sm:$0xff]
    %v2642 = vld [vmem:[%s1 + $0x50] sm:$0xff]
    %v2643 = vld [vmem:[%s1 + $0x58] sm:$0xff]
    %v2644 = vld [vmem:[%s1 + $0x60] sm:$0xff]
    %v2645 = vld [vmem:[%s1 + $0x68] sm:$0xff]
    %v2646 = vld [vmem:[%s1 + $0x70] sm:$0xff]
    %v2647 = vld [vmem:[%s1 + $0x78] sm:$0xff]
    %v2648 = vld [vmem:[%s1 + $0x80] sm:$0xff]
    %v2649 = vld [vmem:[%s1 + $0x88] sm:$0xff]
    %v2650 = vld [vmem:[%s1 + $0x90] sm:$0xff]
    %v2651 = vld [vmem:[%s1 + $0x98] sm:$0xff]
    %v2652 = vld [vmem:[%s1 + $0xa0] sm:$0xff]
    %v2653 = vld [vmem:[%s1 + $0xa8] sm:$0xff]
    %v2654 = vld [vmem:[%s1 + $0xb0] sm:$0xff]
    %v2655 = vld [vmem:[%s1 + $0xb8] sm:$0xff]
    %v2656 = vld [vmem:[%s1 + $0xc0] sm:$0xff]
    %v2657 = vld [vmem:[%s1 + $0xc8] sm:$0xff]
    %v2658 = vld [vmem:[%s1 + $0xd0] sm:$0xff]
    %v2659 = vld [vmem:[%s1 + $0xd8] sm:$0xff]
    %v2660 = vld [vmem:[%s1 + $0xe0] sm:$0xff]
    %v2661 = vld [vmem:[%s1 + $0xe8] sm:$0xff]
    %v2662 = vld [vmem:[%s1 + $0xf0] sm:$0xff]
    %v2663 = vld [vmem:[%s1 + $0xf8] sm:$0xff]
    %v2664 = vld [vmem:[%s1 + $0x100] sm:$0xff]
    %v2665 = vld [vmem:[%s1 + $0x108] sm:$0xff]
    %v2666 = vld [vmem:[%s1 + $0x110] sm:$0xff]
    %v2667 = vld [vmem:[%s1 + $0x118] sm:$0xff]
    %v2668 = vunpack.c.l.s8.bf16 %v2632
    %v2669 = vunpack.c.l.s8.bf16 %v2633
    %v2670 = vunpack.c.l.s8.bf16 %v2634
    %v2671 = vunpack.c.h.s8.bf16 %v2632
    %v2672 = vunpack.c.h.s8.bf16 %v2633
    %v2673 = vunpack.c.h.s8.bf16 %v2634
    %v2674 = vunpack.c.l.s8.bf16 %v2635
    %v2675 = vunpack.c.l.s8.bf16 %v2636
    %v2676 = vunpack.c.l.s8.bf16 %v2637
    %v2677 = vunpack.c.h.s8.bf16 %v2635
    %v2678 = vunpack.c.h.s8.bf16 %v2636
    %v2679 = vunpack.c.h.s8.bf16 %v2637
    %v2680 = vunpack.c.l.s8.bf16 %v2638
    %v2681 = vunpack.c.l.s8.bf16 %v2639
    %v2682 = vunpack.c.l.s8.bf16 %v2640
    %v2683 = vunpack.c.h.s8.bf16 %v2638
    %v2684 = vunpack.c.h.s8.bf16 %v2639
    %v2685 = vunpack.c.h.s8.bf16 %v2640
    %v2686 = vunpack.c.l.s8.bf16 %v2641
    %v2687 = vunpack.c.l.s8.bf16 %v2642
    %v2688 = vunpack.c.l.s8.bf16 %v2643
    %v2689 = vunpack.c.h.s8.bf16 %v2641
    %v2690 = vunpack.c.h.s8.bf16 %v2642
    %v2691 = vunpack.c.h.s8.bf16 %v2643
    %v2692 = vunpack.c.l.s8.bf16 %v2644
    %v2693 = vunpack.c.l.s8.bf16 %v2645
    %v2694 = vunpack.c.l.s8.bf16 %v2646
    %v2695 = vunpack.c.h.s8.bf16 %v2644
    %v2696 = vunpack.c.h.s8.bf16 %v2645
    %v2697 = vunpack.c.h.s8.bf16 %v2646
    %v2698 = vunpack.c.l.s8.bf16 %v2647
    %v2699 = vunpack.c.l.s8.bf16 %v2648
    %v2700 = vunpack.c.l.s8.bf16 %v2649
    %v2701 = vunpack.c.h.s8.bf16 %v2647
    %v2702 = vunpack.c.h.s8.bf16 %v2648
    %v2703 = vunpack.c.h.s8.bf16 %v2649
    %v2704 = vunpack.c.l.s8.bf16 %v2650
    %v2705 = vunpack.c.l.s8.bf16 %v2651
    %v2706 = vunpack.c.l.s8.bf16 %v2652
    %v2707 = vunpack.c.h.s8.bf16 %v2650
    %v2708 = vunpack.c.h.s8.bf16 %v2651
    %v2709 = vunpack.c.h.s8.bf16 %v2652
    %v2710 = vunpack.c.l.s8.bf16 %v2653
    %v2711 = vunpack.c.l.s8.bf16 %v2654
    %v2712 = vunpack.c.l.s8.bf16 %v2655
    %v2713 = vunpack.c.h.s8.bf16 %v2653
    %v2714 = vunpack.c.h.s8.bf16 %v2654
    %v2715 = vunpack.c.h.s8.bf16 %v2655
    %v2716 = vunpack.c.l.s8.bf16 %v2656
    %v2717 = vunpack.c.l.s8.bf16 %v2657
    %v2718 = vunpack.c.l.s8.bf16 %v2658
    %v2719 = vunpack.c.h.s8.bf16 %v2656
    %v2720 = vunpack.c.h.s8.bf16 %v2657
    %v2721 = vunpack.c.h.s8.bf16 %v2658
    %v2722 = vunpack.c.l.s8.bf16 %v2659
    %v2723 = vunpack.c.l.s8.bf16 %v2660
    %v2724 = vunpack.c.l.s8.bf16 %v2661
    %v2725 = vunpack.c.h.s8.bf16 %v2659
    %v2726 = vunpack.c.h.s8.bf16 %v2660
    %v2727 = vunpack.c.h.s8.bf16 %v2661
    %v2728 = vunpack.c.l.s8.bf16 %v2662
    %v2729 = vunpack.c.l.s8.bf16 %v2663
    %v2730 = vunpack.c.l.s8.bf16 %v2664
    %v2731 = vunpack.c.h.s8.bf16 %v2662
    %v2732 = vunpack.c.h.s8.bf16 %v2663
    %v2733 = vunpack.c.h.s8.bf16 %v2664
    %v2734 = vunpack.c.l.s8.bf16 %v2665
    %v2735 = vunpack.c.l.s8.bf16 %v2666
    %v2736 = vunpack.c.l.s8.bf16 %v2667
    %v2737 = vunpack.c.h.s8.bf16 %v2665
    %v2738 = vunpack.c.h.s8.bf16 %v2666
    %v2739 = vunpack.c.h.s8.bf16 %v2667
    %v2740 = vld [vmem:[%s2] sm:$0xff]
    %v2741 = vld [vmem:[%s2 + $0x8] sm:$0xff]
    %v2742 = vld [vmem:[%s2 + $0x10] sm:$0xff]
    %v2743 = vld [vmem:[%s2 + $0x18] sm:$0xff]
    %v2744 = vld [vmem:[%s2 + $0x20] sm:$0xff]
    %v2745 = vld [vmem:[%s2 + $0x28] sm:$0xff]
    %v2746 = vld [vmem:[%s2 + $0x30] sm:$0xff]
    %v2747 = vld [vmem:[%s2 + $0x38] sm:$0xff]
    %v2748 = vld [vmem:[%s2 + $0x40] sm:$0xff]
    %v2749 = vld [vmem:[%s2 + $0x48] sm:$0xff]
    %v2750 = vld [vmem:[%s2 + $0x50] sm:$0xff]
    %v2751 = vld [vmem:[%s2 + $0x58] sm:$0xff]
    %v2752 = vld [vmem:[%s2 + $0x60] sm:$0xff]
    %v2753 = vld [vmem:[%s2 + $0x68] sm:$0xff]
    %v2754 = vld [vmem:[%s2 + $0x70] sm:$0xff]
    %v2755 = vld [vmem:[%s2 + $0x78] sm:$0xff]
    %v2756 = vld [vmem:[%s2 + $0x80] sm:$0xff]
    %v2757 = vld [vmem:[%s2 + $0x88] sm:$0xff]
    %v2758 = vld [vmem:[%s2 + $0x90] sm:$0xff]
    %v2759 = vld [vmem:[%s2 + $0x98] sm:$0xff]
    %v2760 = vld [vmem:[%s2 + $0xa0] sm:$0xff]
    %v2761 = vld [vmem:[%s2 + $0xa8] sm:$0xff]
    %v2762 = vld [vmem:[%s2 + $0xb0] sm:$0xff]
    %v2763 = vld [vmem:[%s2 + $0xb8] sm:$0xff]
    %v2764 = vld [vmem:[%s2 + $0xc0] sm:$0xff]
    %v2765 = vld [vmem:[%s2 + $0xc8] sm:$0xff]
    %v2766 = vld [vmem:[%s2 + $0xd0] sm:$0xff]
    %v2767 = vld [vmem:[%s2 + $0xd8] sm:$0xff]
    %v2768 = vld [vmem:[%s2 + $0xe0] sm:$0xff]
    %v2769 = vld [vmem:[%s2 + $0xe8] sm:$0xff]
    %v2770 = vld [vmem:[%s2 + $0xf0] sm:$0xff]
    %v2771 = vld [vmem:[%s2 + $0xf8] sm:$0xff]
    %v2772 = vld [vmem:[%s2 + $0x100] sm:$0xff]
    %v2773 = vld [vmem:[%s2 + $0x108] sm:$0xff]
    %v2774 = vld [vmem:[%s2 + $0x110] sm:$0xff]
    %v2775 = vld [vmem:[%s2 + $0x118] sm:$0xff]
    %v2776 = vld [vmem:[%s2 + $0x120] sm:$0xff]
    %v2777 = vld [vmem:[%s2 + $0x128] sm:$0xff]
    %v2778 = vld [vmem:[%s2 + $0x130] sm:$0xff]
    %v2779 = vld [vmem:[%s2 + $0x138] sm:$0xff]
    %v2780 = vld [vmem:[%s2 + $0x140] sm:$0xff]
    %v2781 = vld [vmem:[%s2 + $0x148] sm:$0xff]
    %v2782 = vld [vmem:[%s2 + $0x150] sm:$0xff]
    %v2783 = vld [vmem:[%s2 + $0x158] sm:$0xff]
    %v2784 = vld [vmem:[%s2 + $0x160] sm:$0xff]
    %v2785 = vld [vmem:[%s2 + $0x168] sm:$0xff]
    %v2786 = vld [vmem:[%s2 + $0x170] sm:$0xff]
    %v2787 = vld [vmem:[%s2 + $0x178] sm:$0xff]
    %v2788 = vld [vmem:[%s3] sm:$0xff]
    %v2789 = vld [vmem:[%s3 + $0x8] sm:$0xff]
    %v2790 = vld [vmem:[%s3 + $0x10] sm:$0xff]
    %v2791 = vld [vmem:[%s3 + $0x18] sm:$0xff]
    %v2792 = vld [vmem:[%s3 + $0x20] sm:$0xff]
    %v2793 = vld [vmem:[%s3 + $0x28] sm:$0xff]
    %v2794 = vld [vmem:[%s3 + $0x30] sm:$0xff]
    %v2795 = vld [vmem:[%s3 + $0x38] sm:$0xff]
    %v2796 = vld [vmem:[%s3 + $0x40] sm:$0xff]
    %v2797 = vld [vmem:[%s3 + $0x48] sm:$0xff]
    %v2798 = vld [vmem:[%s3 + $0x50] sm:$0xff]
    %v2799 = vld [vmem:[%s3 + $0x58] sm:$0xff]
    %v2800 = vld [vmem:[%s3 + $0x60] sm:$0xff]
    %v2801 = vld [vmem:[%s3 + $0x68] sm:$0xff]
    %v2802 = vld [vmem:[%s3 + $0x70] sm:$0xff]
    %v2803 = vld [vmem:[%s3 + $0x78] sm:$0xff]
    %v2804 = vld [vmem:[%s3 + $0x80] sm:$0xff]
    %v2805 = vld [vmem:[%s3 + $0x88] sm:$0xff]
    %v2806 = vld [vmem:[%s3 + $0x90] sm:$0xff]
    %v2807 = vld [vmem:[%s3 + $0x98] sm:$0xff]
    %v2808 = vld [vmem:[%s3 + $0xa0] sm:$0xff]
    %v2809 = vld [vmem:[%s3 + $0xa8] sm:$0xff]
    %v2810 = vld [vmem:[%s3 + $0xb0] sm:$0xff]
    %v2811 = vld [vmem:[%s3 + $0xb8] sm:$0xff]
    %v2812 = vld [vmem:[%s3 + $0xc0] sm:$0xff]
    %v2813 = vld [vmem:[%s3 + $0xc8] sm:$0xff]
    %v2814 = vld [vmem:[%s3 + $0xd0] sm:$0xff]
    %v2815 = vld [vmem:[%s3 + $0xd8] sm:$0xff]
    %v2816 = vld [vmem:[%s3 + $0xe0] sm:$0xff]
    %v2817 = vld [vmem:[%s3 + $0xe8] sm:$0xff]
    %v2818 = vld [vmem:[%s3 + $0xf0] sm:$0xff]
    %v2819 = vld [vmem:[%s3 + $0xf8] sm:$0xff]
    %v2820 = vld [vmem:[%s3 + $0x100] sm:$0xff]
    %v2821 = vld [vmem:[%s3 + $0x108] sm:$0xff]
    %v2822 = vld [vmem:[%s3 + $0x110] sm:$0xff]
    %v2823 = vld [vmem:[%s3 + $0x118] sm:$0xff]
    %v2824 = vld [vmem:[%s3 + $0x120] sm:$0xff]
    %v2825 = vld [vmem:[%s3 + $0x128] sm:$0xff]
    %v2826 = vld [vmem:[%s3 + $0x130] sm:$0xff]
    %v2827 = vld [vmem:[%s3 + $0x138] sm:$0xff]
    %v2828 = vld [vmem:[%s3 + $0x140] sm:$0xff]
    %v2829 = vld [vmem:[%s3 + $0x148] sm:$0xff]
    %v2830 = vld [vmem:[%s3 + $0x150] sm:$0xff]
    %v2831 = vld [vmem:[%s3 + $0x158] sm:$0xff]
    %v2832 = vld [vmem:[%s3 + $0x160] sm:$0xff]
    %v2833 = vld [vmem:[%s3 + $0x168] sm:$0xff]
    %v2834 = vld [vmem:[%s3 + $0x170] sm:$0xff]
    %v2835 = vld [vmem:[%s3 + $0x178] sm:$0xff]
    %v2836 = vpack.c.bf16 %v2398, %v2394
    %v2837 = vpack.c.bf16 %v2408, %v2404
    %v2838 = vpack.c.bf16 %v2418, %v2414
    %v2839 = vpack.c.bf16 %v2428, %v2424
    %v2840 = vpack.c.bf16 %v2438, %v2434
    %v2841 = vpack.c.bf16 %v2448, %v2444
    %v2842 = vpack.c.bf16 %v2458, %v2454
    %v2843 = vpack.c.bf16 %v2468, %v2464
    %v2844 = vpack.c.bf16 %v2478, %v2474
    %v2845 = vpack.c.bf16 %v2488, %v2484
    %v2846 = vpack.c.bf16 %v2498, %v2494
    %v2847 = vpack.c.bf16 %v2508, %v2504
    %v2848 = vpack.c.bf16 %v2518, %v2514
    %v2849 = vpack.c.bf16 %v2528, %v2524
    %v2850 = vpack.c.bf16 %v2538, %v2534
    %v2851 = vpack.c.bf16 %v2548, %v2544
    %v2852 = vpack.c.bf16 %v2558, %v2554
    %v2853 = vpack.c.bf16 %v2568, %v2564
    %v2854 = vpack.c.bf16 %v2578, %v2574
    %v2855 = vpack.c.bf16 %v2588, %v2584
    %v2856 = vpack.c.bf16 %v2598, %v2594
    %v2857 = vpack.c.bf16 %v2608, %v2604
    %v2858 = vpack.c.bf16 %v2618, %v2614
    %v2859 = vpack.c.bf16 %v2628, %v2624
    %2860 = vmatprep.subr.bf16.mxu0 0
    %2861 = vmatpush1.bf16.msra.mxu0 %v2843
    %2862 = vmatprep.subr.bf16.mxu0 0
    %2863 = vmatpush1.bf16.msra.mxu0 %v2842
    %2864 = vmatprep.subr.bf16.mxu0 0
    %2865 = vmatpush1.bf16.msra.mxu0 %v2841
    %2866 = vmatprep.subr.bf16.mxu0 0
    %2867 = vmatpush1.bf16.msra.mxu0 %v2840
    %2868 = vmatprep.subr.bf16.mxu0 0
    %2869 = vmatpush1.bf16.msra.mxu0 %v2839
    %2870 = vmatprep.subr.bf16.mxu0 0
    %2871 = vmatpush1.bf16.msra.mxu0 %v2838
    %2872 = vmatprep.subr.bf16.mxu0 0
    %2873 = vmatpush1.bf16.msra.mxu0 %v2837
    %2874 = vmatprep.subr.bf16.mxu0 0
    %2875 = vmatpush1.bf16.msra.mxu0 %v2836
    %2876 = vmatprep.subr.bf16.mxu0 0
    %2877 = vmatpush2.bf16.msra.mxu0 %v2851
    %2878 = vmatprep.subr.bf16.mxu0 0
    %2879 = vmatpush2.bf16.msra.mxu0 %v2850
    %2880 = vmatprep.subr.bf16.mxu0 0
    %2881 = vmatpush2.bf16.msra.mxu0 %v2849
    %2882 = vmatprep.subr.bf16.mxu0 0
    %2883 = vmatpush2.bf16.msra.mxu0 %v2848
    %2884 = vmatprep.subr.bf16.mxu0 0
    %2885 = vmatpush2.bf16.msra.mxu0 %v2847
    %2886 = vmatprep.subr.bf16.mxu0 0
    %2887 = vmatpush2.bf16.msra.mxu0 %v2846
    %2888 = vmatprep.subr.bf16.mxu0 0
    %2889 = vmatpush2.bf16.msra.mxu0 %v2845
    %2890 = vmatprep.subr.bf16.mxu0 0
    %2891 = vmatpush2.bf16.msra.mxu0 %v2844
    %2892 = vmatprep.mubr.bf16.mxu0 %v2669
    %2893 = vmatmul.mubr.bf16.gmra.mxu0 %v2668
    %v2894 = vpop.f32.mrf.mxu0
    %v2895 = vadd.f32 0.0, %v2894
    %v2896 = vpop.f32.mrf.mxu0
    %v2897 = vpop.f32.mrf.mxu0
    %v2898 = vadd.f32 0.0, %v2897
    %v2899 = vpop.f32.mrf.mxu0
    %2900 = vmatprep.mubr.bf16.mxu0 %v2672
    %2901 = vmatmul.mubr.bf16.gmra.mxu0 %v2671
    %v2902 = vpop.f32.mrf.mxu0
    %v2903 = vadd.f32 0.0, %v2902
    %v2904 = vpop.f32.mrf.mxu0
    %v2905 = vpop.f32.mrf.mxu0
    %v2906 = vadd.f32 0.0, %v2905
    %v2907 = vpop.f32.mrf.mxu0
    %2908 = vmatprep.mubr.bf16.mxu0 %v2675
    %2909 = vmatmul.mubr.bf16.gmra.mxu0 %v2674
    %v2910 = vpop.f32.mrf.mxu0
    %v2911 = vadd.f32 0.0, %v2910
    %v2912 = vpop.f32.mrf.mxu0
    %v2913 = vpop.f32.mrf.mxu0
    %v2914 = vadd.f32 0.0, %v2913
    %v2915 = vpop.f32.mrf.mxu0
    %2916 = vmatprep.mubr.bf16.mxu0 %v2678
    %2917 = vmatmul.mubr.bf16.gmra.mxu0 %v2677
    %v2918 = vpop.f32.mrf.mxu0
    %v2919 = vadd.f32 0.0, %v2918
    %v2920 = vpop.f32.mrf.mxu0
    %v2921 = vpop.f32.mrf.mxu0
    %v2922 = vadd.f32 0.0, %v2921
    %v2923 = vpop.f32.mrf.mxu0
    %2924 = vmatprep.mubr.bf16.mxu0 %v2681
    %2925 = vmatmul.mubr.bf16.gmra.mxu0 %v2680
    %v2926 = vpop.f32.mrf.mxu0
    %v2927 = vadd.f32 0.0, %v2926
    %v2928 = vpop.f32.mrf.mxu0
    %v2929 = vpop.f32.mrf.mxu0
    %v2930 = vadd.f32 0.0, %v2929
    %v2931 = vpop.f32.mrf.mxu0
    %2932 = vmatprep.mubr.bf16.mxu0 %v2684
    %2933 = vmatmul.mubr.bf16.gmra.mxu0 %v2683
    %v2934 = vpop.f32.mrf.mxu0
    %v2935 = vadd.f32 0.0, %v2934
    %v2936 = vpop.f32.mrf.mxu0
    %v2937 = vpop.f32.mrf.mxu0
    %v2938 = vadd.f32 0.0, %v2937
    %v2939 = vpop.f32.mrf.mxu0
    %2940 = vmatprep.mubr.bf16.mxu0 %v2687
    %2941 = vmatmul.mubr.bf16.gmra.mxu0 %v2686
    %v2942 = vpop.f32.mrf.mxu0
    %v2943 = vadd.f32 0.0, %v2942
    %v2944 = vpop.f32.mrf.mxu0
    %v2945 = vpop.f32.mrf.mxu0
    %v2946 = vadd.f32 0.0, %v2945
    %v2947 = vpop.f32.mrf.mxu0
    %2948 = vmatprep.mubr.bf16.mxu0 %v2690
    %2949 = vmatmul.mubr.bf16.gmra.mxu0 %v2689
    %v2950 = vpop.f32.mrf.mxu0
    %v2951 = vadd.f32 0.0, %v2950
    %v2952 = vpop.f32.mrf.mxu0
    %v2953 = vpop.f32.mrf.mxu0
    %v2954 = vadd.f32 0.0, %v2953
    %v2955 = vpop.f32.mrf.mxu0
    %2956 = vmatprep.mubr.bf16.mxu0 %v2693
    %2957 = vmatmul.mubr.bf16.gmra.mxu0 %v2692
    %v2958 = vpop.f32.mrf.mxu0
    %v2959 = vadd.f32 0.0, %v2958
    %v2960 = vpop.f32.mrf.mxu0
    %v2961 = vpop.f32.mrf.mxu0
    %v2962 = vadd.f32 0.0, %v2961
    %v2963 = vpop.f32.mrf.mxu0
    %2964 = vmatprep.mubr.bf16.mxu0 %v2696
    %2965 = vmatmul.mubr.bf16.gmra.mxu0 %v2695
    %v2966 = vpop.f32.mrf.mxu0
    %v2967 = vadd.f32 0.0, %v2966
    %v2968 = vpop.f32.mrf.mxu0
    %v2969 = vpop.f32.mrf.mxu0
    %v2970 = vadd.f32 0.0, %v2969
    %v2971 = vpop.f32.mrf.mxu0
    %2972 = vmatprep.mubr.bf16.mxu0 %v2699
    %2973 = vmatmul.mubr.bf16.gmra.mxu0 %v2698
    %v2974 = vpop.f32.mrf.mxu0
    %v2975 = vadd.f32 0.0, %v2974
    %v2976 = vpop.f32.mrf.mxu0
    %v2977 = vpop.f32.mrf.mxu0
    %v2978 = vadd.f32 0.0, %v2977
    %v2979 = vpop.f32.mrf.mxu0
    %2980 = vmatprep.mubr.bf16.mxu0 %v2702
    %2981 = vmatmul.mubr.bf16.gmra.mxu0 %v2701
    %v2982 = vpop.f32.mrf.mxu0
    %v2983 = vadd.f32 0.0, %v2982
    %v2984 = vpop.f32.mrf.mxu0
    %v2985 = vpop.f32.mrf.mxu0
    %v2986 = vadd.f32 0.0, %v2985
    %v2987 = vpop.f32.mrf.mxu0
    %2988 = vmatprep.mubr.bf16.mxu0 %v2705
    %2989 = vmatmul.mubr.bf16.gmra.mxu0 %v2704
    %v2990 = vpop.f32.mrf.mxu0
    %v2991 = vadd.f32 0.0, %v2990
    %v2992 = vpop.f32.mrf.mxu0
    %v2993 = vpop.f32.mrf.mxu0
    %v2994 = vadd.f32 0.0, %v2993
    %v2995 = vpop.f32.mrf.mxu0
    %2996 = vmatprep.mubr.bf16.mxu0 %v2708
    %2997 = vmatmul.mubr.bf16.gmra.mxu0 %v2707
    %v2998 = vpop.f32.mrf.mxu0
    %v2999 = vadd.f32 0.0, %v2998
    %v3000 = vpop.f32.mrf.mxu0
    %v3001 = vpop.f32.mrf.mxu0
    %v3002 = vadd.f32 0.0, %v3001
    %v3003 = vpop.f32.mrf.mxu0
    %3004 = vmatprep.mubr.bf16.mxu0 %v2711
    %3005 = vmatmul.mubr.bf16.gmra.mxu0 %v2710
    %v3006 = vpop.f32.mrf.mxu0
    %v3007 = vadd.f32 0.0, %v3006
    %v3008 = vpop.f32.mrf.mxu0
    %v3009 = vpop.f32.mrf.mxu0
    %v3010 = vadd.f32 0.0, %v3009
    %v3011 = vpop.f32.mrf.mxu0
    %3012 = vmatprep.mubr.bf16.mxu0 %v2714
    %3013 = vmatmul.mubr.bf16.gmra.mxu0 %v2713
    %v3014 = vpop.f32.mrf.mxu0
    %v3015 = vadd.f32 0.0, %v3014
    %v3016 = vpop.f32.mrf.mxu0
    %v3017 = vpop.f32.mrf.mxu0
    %v3018 = vadd.f32 0.0, %v3017
    %v3019 = vpop.f32.mrf.mxu0
    %3020 = vmatprep.mubr.bf16.mxu0 %v2717
    %3021 = vmatmul.mubr.bf16.gmra.mxu0 %v2716
    %v3022 = vpop.f32.mrf.mxu0
    %v3023 = vadd.f32 0.0, %v3022
    %v3024 = vpop.f32.mrf.mxu0
    %v3025 = vpop.f32.mrf.mxu0
    %v3026 = vadd.f32 0.0, %v3025
    %v3027 = vpop.f32.mrf.mxu0
    %3028 = vmatprep.mubr.bf16.mxu0 %v2720
    %3029 = vmatmul.mubr.bf16.gmra.mxu0 %v2719
    %v3030 = vpop.f32.mrf.mxu0
    %v3031 = vadd.f32 0.0, %v3030
    %v3032 = vpop.f32.mrf.mxu0
    %v3033 = vpop.f32.mrf.mxu0
    %v3034 = vadd.f32 0.0, %v3033
    %v3035 = vpop.f32.mrf.mxu0
    %3036 = vmatprep.mubr.bf16.mxu0 %v2723
    %3037 = vmatmul.mubr.bf16.gmra.mxu0 %v2722
    %v3038 = vpop.f32.mrf.mxu0
    %v3039 = vadd.f32 0.0, %v3038
    %v3040 = vpop.f32.mrf.mxu0
    %v3041 = vpop.f32.mrf.mxu0
    %v3042 = vadd.f32 0.0, %v3041
    %v3043 = vpop.f32.mrf.mxu0
    %3044 = vmatprep.mubr.bf16.mxu0 %v2726
    %3045 = vmatmul.mubr.bf16.gmra.mxu0 %v2725
    %v3046 = vpop.f32.mrf.mxu0
    %v3047 = vadd.f32 0.0, %v3046
    %v3048 = vpop.f32.mrf.mxu0
    %v3049 = vpop.f32.mrf.mxu0
    %v3050 = vadd.f32 0.0, %v3049
    %v3051 = vpop.f32.mrf.mxu0
    %3052 = vmatprep.mubr.bf16.mxu0 %v2729
    %3053 = vmatmul.mubr.bf16.gmra.mxu0 %v2728
    %v3054 = vpop.f32.mrf.mxu0
    %v3055 = vadd.f32 0.0, %v3054
    %v3056 = vpop.f32.mrf.mxu0
    %v3057 = vpop.f32.mrf.mxu0
    %v3058 = vadd.f32 0.0, %v3057
    %v3059 = vpop.f32.mrf.mxu0
    %3060 = vmatprep.mubr.bf16.mxu0 %v2732
    %3061 = vmatmul.mubr.bf16.gmra.mxu0 %v2731
    %v3062 = vpop.f32.mrf.mxu0
    %v3063 = vadd.f32 0.0, %v3062
    %v3064 = vpop.f32.mrf.mxu0
    %v3065 = vpop.f32.mrf.mxu0
    %v3066 = vadd.f32 0.0, %v3065
    %v3067 = vpop.f32.mrf.mxu0
    %3068 = vmatprep.mubr.bf16.mxu0 %v2735
    %3069 = vmatmul.mubr.bf16.gmra.mxu0 %v2734
    %v3070 = vpop.f32.mrf.mxu0
    %v3071 = vadd.f32 0.0, %v3070
    %v3072 = vpop.f32.mrf.mxu0
    %v3073 = vpop.f32.mrf.mxu0
    %v3074 = vadd.f32 0.0, %v3073
    %v3075 = vpop.f32.mrf.mxu0
    %3076 = vmatprep.mubr.bf16.mxu0 %v2738
    %3077 = vmatmul.mubr.bf16.gmra.mxu0 %v2737
    %v3078 = vpop.f32.mrf.mxu0
    %v3079 = vadd.f32 0.0, %v3078
    %v3080 = vpop.f32.mrf.mxu0
    %v3081 = vpop.f32.mrf.mxu0
    %v3082 = vadd.f32 0.0, %v3081
    %v3083 = vpop.f32.mrf.mxu0
    %3084 = vdwg.mxu0
    %3085 = vmatprep.subr.bf16.mxu0 0
    %3086 = vmatpush1.bf16.msra.mxu0 %v2859
    %3087 = vmatprep.subr.bf16.mxu0 0
    %3088 = vmatpush1.bf16.msra.mxu0 %v2858
    %3089 = vmatprep.subr.bf16.mxu0 0
    %3090 = vmatpush1.bf16.msra.mxu0 %v2857
    %3091 = vmatprep.subr.bf16.mxu0 0
    %3092 = vmatpush1.bf16.msra.mxu0 %v2856
    %3093 = vmatprep.subr.bf16.mxu0 0
    %3094 = vmatpush1.bf16.msra.mxu0 %v2855
    %3095 = vmatprep.subr.bf16.mxu0 0
    %3096 = vmatpush1.bf16.msra.mxu0 %v2854
    %3097 = vmatprep.subr.bf16.mxu0 0
    %3098 = vmatpush1.bf16.msra.mxu0 %v2853
    %3099 = vmatprep.subr.bf16.mxu0 0
    %3100 = vmatpush1.bf16.msra.mxu0 %v2852
    %3101 = vmatprep.subr.bf16.mxu0 0
    %3102 = vmatpush2.bf16.msra.mxu0 0
    %3103 = vmatprep.subr.bf16.mxu0 0
    %3104 = vmatpush2.bf16.msra.mxu0 0
    %3105 = vmatprep.subr.bf16.mxu0 0
    %3106 = vmatpush2.bf16.msra.mxu0 0
    %3107 = vmatprep.subr.bf16.mxu0 0
    %3108 = vmatpush2.bf16.msra.mxu0 0
    %3109 = vmatprep.subr.bf16.mxu0 0
    %3110 = vmatpush2.bf16.msra.mxu0 0
    %3111 = vmatprep.subr.bf16.mxu0 0
    %3112 = vmatpush2.bf16.msra.mxu0 0
    %3113 = vmatprep.subr.bf16.mxu0 0
    %3114 = vmatpush2.bf16.msra.mxu0 0
    %3115 = vmatprep.subr.bf16.mxu0 0
    %3116 = vmatpush2.bf16.msra.mxu0 0
    %3117 = vmatprep.mubr.bf16.mxu0 0
    %3118 = vmatmul.mubr.bf16.gmra.mxu0 %v2670
    %v3119 = vpop.f32.mrf.mxu0
    %v3120 = vadd.f32 %v2895, %v3119
    %v3121 = vpop.f32.mrf.mxu0
    %v3122 = vpop.f32.mrf.mxu0
    %v3123 = vadd.f32 %v2898, %v3122
    %v3124 = vpop.f32.mrf.mxu0
    %3125 = vmatprep.mubr.bf16.mxu0 0
    %3126 = vmatmul.mubr.bf16.gmra.mxu0 %v2673
    %v3127 = vpop.f32.mrf.mxu0
    %v3128 = vadd.f32 %v2903, %v3127
    %v3129 = vpop.f32.mrf.mxu0
    %v3130 = vpop.f32.mrf.mxu0
    %v3131 = vadd.f32 %v2906, %v3130
    %v3132 = vpop.f32.mrf.mxu0
    %3133 = vmatprep.mubr.bf16.mxu0 0
    %3134 = vmatmul.mubr.bf16.gmra.mxu0 %v2676
    %v3135 = vpop.f32.mrf.mxu0
    %v3136 = vadd.f32 %v2911, %v3135
    %v3137 = vpop.f32.mrf.mxu0
    %v3138 = vpop.f32.mrf.mxu0
    %v3139 = vadd.f32 %v2914, %v3138
    %v3140 = vpop.f32.mrf.mxu0
    %3141 = vmatprep.mubr.bf16.mxu0 0
    %3142 = vmatmul.mubr.bf16.gmra.mxu0 %v2679
    %v3143 = vpop.f32.mrf.mxu0
    %v3144 = vadd.f32 %v2919, %v3143
    %v3145 = vpop.f32.mrf.mxu0
    %v3146 = vpop.f32.mrf.mxu0
    %v3147 = vadd.f32 %v2922, %v3146
    %v3148 = vpop.f32.mrf.mxu0
    %3149 = vmatprep.mubr.bf16.mxu0 0
    %3150 = vmatmul.mubr.bf16.gmra.mxu0 %v2682
    %v3151 = vpop.f32.mrf.mxu0
    %v3152 = vadd.f32 %v2927, %v3151
    %v3153 = vpop.f32.mrf.mxu0
    %v3154 = vpop.f32.mrf.mxu0
    %v3155 = vadd.f32 %v2930, %v3154
    %v3156 = vpop.f32.mrf.mxu0
    %3157 = vmatprep.mubr.bf16.mxu0 0
    %3158 = vmatmul.mubr.bf16.gmra.mxu0 %v2685
    %v3159 = vpop.f32.mrf.mxu0
    %v3160 = vadd.f32 %v2935, %v3159
    %v3161 = vpop.f32.mrf.mxu0
    %v3162 = vpop.f32.mrf.mxu0
    %v3163 = vadd.f32 %v2938, %v3162
    %v3164 = vpop.f32.mrf.mxu0
    %3165 = vmatprep.mubr.bf16.mxu0 0
    %3166 = vmatmul.mubr.bf16.gmra.mxu0 %v2688
    %v3167 = vpop.f32.mrf.mxu0
    %v3168 = vadd.f32 %v2943, %v3167
    %v3169 = vpop.f32.mrf.mxu0
    %v3170 = vpop.f32.mrf.mxu0
    %v3171 = vadd.f32 %v2946, %v3170
    %v3172 = vpop.f32.mrf.mxu0
    %3173 = vmatprep.mubr.bf16.mxu0 0
    %3174 = vmatmul.mubr.bf16.gmra.mxu0 %v2691
    %v3175 = vpop.f32.mrf.mxu0
    %v3176 = vadd.f32 %v2951, %v3175
    %v3177 = vpop.f32.mrf.mxu0
    %v3178 = vpop.f32.mrf.mxu0
    %v3179 = vadd.f32 %v2954, %v3178
    %v3180 = vpop.f32.mrf.mxu0
    %3181 = vmatprep.mubr.bf16.mxu0 0
    %3182 = vmatmul.mubr.bf16.gmra.mxu0 %v2694
    %v3183 = vpop.f32.mrf.mxu0
    %v3184 = vadd.f32 %v2959, %v3183
    %v3185 = vpop.f32.mrf.mxu0
    %v3186 = vpop.f32.mrf.mxu0
    %v3187 = vadd.f32 %v2962, %v3186
    %v3188 = vpop.f32.mrf.mxu0
    %3189 = vmatprep.mubr.bf16.mxu0 0
    %3190 = vmatmul.mubr.bf16.gmra.mxu0 %v2697
    %v3191 = vpop.f32.mrf.mxu0
    %v3192 = vadd.f32 %v2967, %v3191
    %v3193 = vpop.f32.mrf.mxu0
    %v3194 = vpop.f32.mrf.mxu0
    %v3195 = vadd.f32 %v2970, %v3194
    %v3196 = vpop.f32.mrf.mxu0
    %3197 = vmatprep.mubr.bf16.mxu0 0
    %3198 = vmatmul.mubr.bf16.gmra.mxu0 %v2700
    %v3199 = vpop.f32.mrf.mxu0
    %v3200 = vadd.f32 %v2975, %v3199
    %v3201 = vpop.f32.mrf.mxu0
    %v3202 = vpop.f32.mrf.mxu0
    %v3203 = vadd.f32 %v2978, %v3202
    %v3204 = vpop.f32.mrf.mxu0
    %3205 = vmatprep.mubr.bf16.mxu0 0
    %3206 = vmatmul.mubr.bf16.gmra.mxu0 %v2703
    %v3207 = vpop.f32.mrf.mxu0
    %v3208 = vadd.f32 %v2983, %v3207
    %v3209 = vpop.f32.mrf.mxu0
    %v3210 = vpop.f32.mrf.mxu0
    %v3211 = vadd.f32 %v2986, %v3210
    %v3212 = vpop.f32.mrf.mxu0
    %3213 = vmatprep.mubr.bf16.mxu0 0
    %3214 = vmatmul.mubr.bf16.gmra.mxu0 %v2706
    %v3215 = vpop.f32.mrf.mxu0
    %v3216 = vadd.f32 %v2991, %v3215
    %v3217 = vpop.f32.mrf.mxu0
    %v3218 = vpop.f32.mrf.mxu0
    %v3219 = vadd.f32 %v2994, %v3218
    %v3220 = vpop.f32.mrf.mxu0
    %3221 = vmatprep.mubr.bf16.mxu0 0
    %3222 = vmatmul.mubr.bf16.gmra.mxu0 %v2709
    %v3223 = vpop.f32.mrf.mxu0
    %v3224 = vadd.f32 %v2999, %v3223
    %v3225 = vpop.f32.mrf.mxu0
    %v3226 = vpop.f32.mrf.mxu0
    %v3227 = vadd.f32 %v3002, %v3226
    %v3228 = vpop.f32.mrf.mxu0
    %3229 = vmatprep.mubr.bf16.mxu0 0
    %3230 = vmatmul.mubr.bf16.gmra.mxu0 %v2712
    %v3231 = vpop.f32.mrf.mxu0
    %v3232 = vadd.f32 %v3007, %v3231
    %v3233 = vpop.f32.mrf.mxu0
    %v3234 = vpop.f32.mrf.mxu0
    %v3235 = vadd.f32 %v3010, %v3234
    %v3236 = vpop.f32.mrf.mxu0
    %3237 = vmatprep.mubr.bf16.mxu0 0
    %3238 = vmatmul.mubr.bf16.gmra.mxu0 %v2715
    %v3239 = vpop.f32.mrf.mxu0
    %v3240 = vadd.f32 %v3015, %v3239
    %v3241 = vpop.f32.mrf.mxu0
    %v3242 = vpop.f32.mrf.mxu0
    %v3243 = vadd.f32 %v3018, %v3242
    %v3244 = vpop.f32.mrf.mxu0
    %3245 = vmatprep.mubr.bf16.mxu0 0
    %3246 = vmatmul.mubr.bf16.gmra.mxu0 %v2718
    %v3247 = vpop.f32.mrf.mxu0
    %v3248 = vadd.f32 %v3023, %v3247
    %v3249 = vpop.f32.mrf.mxu0
    %v3250 = vpop.f32.mrf.mxu0
    %v3251 = vadd.f32 %v3026, %v3250
    %v3252 = vpop.f32.mrf.mxu0
    %3253 = vmatprep.mubr.bf16.mxu0 0
    %3254 = vmatmul.mubr.bf16.gmra.mxu0 %v2721
    %v3255 = vpop.f32.mrf.mxu0
    %v3256 = vadd.f32 %v3031, %v3255
    %v3257 = vpop.f32.mrf.mxu0
    %v3258 = vpop.f32.mrf.mxu0
    %v3259 = vadd.f32 %v3034, %v3258
    %v3260 = vpop.f32.mrf.mxu0
    %3261 = vmatprep.mubr.bf16.mxu0 0
    %3262 = vmatmul.mubr.bf16.gmra.mxu0 %v2724
    %v3263 = vpop.f32.mrf.mxu0
    %v3264 = vadd.f32 %v3039, %v3263
    %v3265 = vpop.f32.mrf.mxu0
    %v3266 = vpop.f32.mrf.mxu0
    %v3267 = vadd.f32 %v3042, %v3266
    %v3268 = vpop.f32.mrf.mxu0
    %3269 = vmatprep.mubr.bf16.mxu0 0
    %3270 = vmatmul.mubr.bf16.gmra.mxu0 %v2727
    %v3271 = vpop.f32.mrf.mxu0
    %v3272 = vadd.f32 %v3047, %v3271
    %v3273 = vpop.f32.mrf.mxu0
    %v3274 = vpop.f32.mrf.mxu0
    %v3275 = vadd.f32 %v3050, %v3274
    %v3276 = vpop.f32.mrf.mxu0
    %3277 = vmatprep.mubr.bf16.mxu0 0
    %3278 = vmatmul.mubr.bf16.gmra.mxu0 %v2730
    %v3279 = vpop.f32.mrf.mxu0
    %v3280 = vadd.f32 %v3055, %v3279
    %v3281 = vpop.f32.mrf.mxu0
    %v3282 = vpop.f32.mrf.mxu0
    %v3283 = vadd.f32 %v3058, %v3282
    %v3284 = vpop.f32.mrf.mxu0
    %3285 = vmatprep.mubr.bf16.mxu0 0
    %3286 = vmatmul.mubr.bf16.gmra.mxu0 %v2733
    %v3287 = vpop.f32.mrf.mxu0
    %v3288 = vadd.f32 %v3063, %v3287
    %v3289 = vpop.f32.mrf.mxu0
    %v3290 = vpop.f32.mrf.mxu0
    %v3291 = vadd.f32 %v3066, %v3290
    %v3292 = vpop.f32.mrf.mxu0
    %3293 = vmatprep.mubr.bf16.mxu0 0
    %3294 = vmatmul.mubr.bf16.gmra.mxu0 %v2736
    %v3295 = vpop.f32.mrf.mxu0
    %v3296 = vadd.f32 %v3071, %v3295
    %v3297 = vpop.f32.mrf.mxu0
    %v3298 = vpop.f32.mrf.mxu0
    %v3299 = vadd.f32 %v3074, %v3298
    %v3300 = vpop.f32.mrf.mxu0
    %3301 = vmatprep.mubr.bf16.mxu0 0
    %3302 = vmatmul.mubr.bf16.gmra.mxu0 %v2739
    %v3303 = vpop.f32.mrf.mxu0
    %v3304 = vadd.f32 %v3079, %v3303
    %v3305 = vpop.f32.mrf.mxu0
    %v3306 = vpop.f32.mrf.mxu0
    %v3307 = vadd.f32 %v3082, %v3306
    %v3308 = vpop.f32.mrf.mxu0
    %3309 = vdwg.mxu0
    %3311 = vset.pattern.permute.xlu0 0
    %3312 = vperm.xlu0 %3311, %v2740
    %v3313 = vpop.permute.xlu0 %3312
    %3316 = vset.pattern.permute.xlu0 0
    %3317 = vperm.xlu0 %3316, %v2741
    %v3318 = vpop.permute.xlu0 %3317
    %3321 = vset.pattern.permute.xlu0 0
    %3322 = vperm.xlu0 %3321, %v2742
    %v3323 = vpop.permute.xlu0 %3322
    %3326 = vset.pattern.permute.xlu0 0
    %3327 = vperm.xlu0 %3326, %v2743
    %v3328 = vpop.permute.xlu0 %3327
    %3331 = vset.pattern.permute.xlu0 0
    %3332 = vperm.xlu0 %3331, %v2744
    %v3333 = vpop.permute.xlu0 %3332
    %3336 = vset.pattern.permute.xlu0 0
    %3337 = vperm.xlu0 %3336, %v2745
    %v3338 = vpop.permute.xlu0 %3337
    %3341 = vset.pattern.permute.xlu0 0
    %3342 = vperm.xlu0 %3341, %v2746
    %v3343 = vpop.permute.xlu0 %3342
    %3346 = vset.pattern.permute.xlu0 0
    %3347 = vperm.xlu0 %3346, %v2747
    %v3348 = vpop.permute.xlu0 %3347
    %3351 = vset.pattern.permute.xlu0 0
    %3352 = vperm.xlu0 %3351, %v2748
    %v3353 = vpop.permute.xlu0 %3352
    %3356 = vset.pattern.permute.xlu0 0
    %3357 = vperm.xlu0 %3356, %v2749
    %v3358 = vpop.permute.xlu0 %3357
    %3361 = vset.pattern.permute.xlu0 0
    %3362 = vperm.xlu0 %3361, %v2750
    %v3363 = vpop.permute.xlu0 %3362
    %3366 = vset.pattern.permute.xlu0 0
    %3367 = vperm.xlu0 %3366, %v2751
    %v3368 = vpop.permute.xlu0 %3367
    %3371 = vset.pattern.permute.xlu0 0
    %3372 = vperm.xlu0 %3371, %v2752
    %v3373 = vpop.permute.xlu0 %3372
    %3376 = vset.pattern.permute.xlu0 0
    %3377 = vperm.xlu0 %3376, %v2753
    %v3378 = vpop.permute.xlu0 %3377
    %3381 = vset.pattern.permute.xlu0 0
    %3382 = vperm.xlu0 %3381, %v2754
    %v3383 = vpop.permute.xlu0 %3382
    %3386 = vset.pattern.permute.xlu0 0
    %3387 = vperm.xlu0 %3386, %v2755
    %v3388 = vpop.permute.xlu0 %3387
    %3391 = vset.pattern.permute.xlu0 0
    %3392 = vperm.xlu0 %3391, %v2756
    %v3393 = vpop.permute.xlu0 %3392
    %3396 = vset.pattern.permute.xlu0 0
    %3397 = vperm.xlu0 %3396, %v2757
    %v3398 = vpop.permute.xlu0 %3397
    %3401 = vset.pattern.permute.xlu0 0
    %3402 = vperm.xlu0 %3401, %v2758
    %v3403 = vpop.permute.xlu0 %3402
    %3406 = vset.pattern.permute.xlu0 0
    %3407 = vperm.xlu0 %3406, %v2759
    %v3408 = vpop.permute.xlu0 %3407
    %3411 = vset.pattern.permute.xlu0 0
    %3412 = vperm.xlu0 %3411, %v2760
    %v3413 = vpop.permute.xlu0 %3412
    %3416 = vset.pattern.permute.xlu0 0
    %3417 = vperm.xlu0 %3416, %v2761
    %v3418 = vpop.permute.xlu0 %3417
    %3421 = vset.pattern.permute.xlu0 0
    %3422 = vperm.xlu0 %3421, %v2762
    %v3423 = vpop.permute.xlu0 %3422
    %3426 = vset.pattern.permute.xlu0 0
    %3427 = vperm.xlu0 %3426, %v2763
    %v3428 = vpop.permute.xlu0 %3427
    %3431 = vset.pattern.permute.xlu0 0
    %3432 = vperm.xlu0 %3431, %v2764
    %v3433 = vpop.permute.xlu0 %3432
    %3436 = vset.pattern.permute.xlu0 0
    %3437 = vperm.xlu0 %3436, %v2765
    %v3438 = vpop.permute.xlu0 %3437
    %3441 = vset.pattern.permute.xlu0 0
    %3442 = vperm.xlu0 %3441, %v2766
    %v3443 = vpop.permute.xlu0 %3442
    %3446 = vset.pattern.permute.xlu0 0
    %3447 = vperm.xlu0 %3446, %v2767
    %v3448 = vpop.permute.xlu0 %3447
    %3451 = vset.pattern.permute.xlu0 0
    %3452 = vperm.xlu0 %3451, %v2768
    %v3453 = vpop.permute.xlu0 %3452
    %3456 = vset.pattern.permute.xlu0 0
    %3457 = vperm.xlu0 %3456, %v2769
    %v3458 = vpop.permute.xlu0 %3457
    %3461 = vset.pattern.permute.xlu0 0
    %3462 = vperm.xlu0 %3461, %v2770
    %v3463 = vpop.permute.xlu0 %3462
    %3466 = vset.pattern.permute.xlu0 0
    %3467 = vperm.xlu0 %3466, %v2771
    %v3468 = vpop.permute.xlu0 %3467
    %3471 = vset.pattern.permute.xlu0 0
    %3472 = vperm.xlu0 %3471, %v2772
    %v3473 = vpop.permute.xlu0 %3472
    %3476 = vset.pattern.permute.xlu0 0
    %3477 = vperm.xlu0 %3476, %v2773
    %v3478 = vpop.permute.xlu0 %3477
    %3481 = vset.pattern.permute.xlu0 0
    %3482 = vperm.xlu0 %3481, %v2774
    %v3483 = vpop.permute.xlu0 %3482
    %3486 = vset.pattern.permute.xlu0 0
    %3487 = vperm.xlu0 %3486, %v2775
    %v3488 = vpop.permute.xlu0 %3487
    %3491 = vset.pattern.permute.xlu0 0
    %3492 = vperm.xlu0 %3491, %v2776
    %v3493 = vpop.permute.xlu0 %3492
    %3496 = vset.pattern.permute.xlu0 0
    %3497 = vperm.xlu0 %3496, %v2777
    %v3498 = vpop.permute.xlu0 %3497
    %3501 = vset.pattern.permute.xlu0 0
    %3502 = vperm.xlu0 %3501, %v2778
    %v3503 = vpop.permute.xlu0 %3502
    %3506 = vset.pattern.permute.xlu0 0
    %3507 = vperm.xlu0 %3506, %v2779
    %v3508 = vpop.permute.xlu0 %3507
    %3511 = vset.pattern.permute.xlu0 0
    %3512 = vperm.xlu0 %3511, %v2780
    %v3513 = vpop.permute.xlu0 %3512
    %3516 = vset.pattern.permute.xlu0 0
    %3517 = vperm.xlu0 %3516, %v2781
    %v3518 = vpop.permute.xlu0 %3517
    %3521 = vset.pattern.permute.xlu0 0
    %3522 = vperm.xlu0 %3521, %v2782
    %v3523 = vpop.permute.xlu0 %3522
    %3526 = vset.pattern.permute.xlu0 0
    %3527 = vperm.xlu0 %3526, %v2783
    %v3528 = vpop.permute.xlu0 %3527
    %3531 = vset.pattern.permute.xlu0 0
    %3532 = vperm.xlu0 %3531, %v2784
    %v3533 = vpop.permute.xlu0 %3532
    %3536 = vset.pattern.permute.xlu0 0
    %3537 = vperm.xlu0 %3536, %v2785
    %v3538 = vpop.permute.xlu0 %3537
    %3541 = vset.pattern.permute.xlu0 0
    %3542 = vperm.xlu0 %3541, %v2786
    %v3543 = vpop.permute.xlu0 %3542
    %3546 = vset.pattern.permute.xlu0 0
    %3547 = vperm.xlu0 %3546, %v2787
    %v3548 = vpop.permute.xlu0 %3547
    %v3550 = vmul.f32 %v3313, %v3120
    %v3551 = vmul.f32 %v3318, %v3123
    %v3552 = vmul.f32 %v3323, %v3128
    %v3553 = vmul.f32 %v3328, %v3131
    %v3554 = vmul.f32 %v3333, %v3136
    %v3555 = vmul.f32 %v3338, %v3139
    %v3556 = vmul.f32 %v3343, %v3144
    %v3557 = vmul.f32 %v3348, %v3147
    %v3558 = vmul.f32 %v3353, %v3152
    %v3559 = vmul.f32 %v3358, %v3155
    %v3560 = vmul.f32 %v3363, %v3160
    %v3561 = vmul.f32 %v3368, %v3163
    %v3562 = vmul.f32 %v3373, %v3168
    %v3563 = vmul.f32 %v3378, %v3171
    %v3564 = vmul.f32 %v3383, %v3176
    %v3565 = vmul.f32 %v3388, %v3179
    %v3566 = vmul.f32 %v3393, %v3184
    %v3567 = vmul.f32 %v3398, %v3187
    %v3568 = vmul.f32 %v3403, %v3192
    %v3569 = vmul.f32 %v3408, %v3195
    %v3570 = vmul.f32 %v3413, %v3200
    %v3571 = vmul.f32 %v3418, %v3203
    %v3572 = vmul.f32 %v3423, %v3208
    %v3573 = vmul.f32 %v3428, %v3211
    %v3574 = vmul.f32 %v3433, %v3216
    %v3575 = vmul.f32 %v3438, %v3219
    %v3576 = vmul.f32 %v3443, %v3224
    %v3577 = vmul.f32 %v3448, %v3227
    %v3578 = vmul.f32 %v3453, %v3232
    %v3579 = vmul.f32 %v3458, %v3235
    %v3580 = vmul.f32 %v3463, %v3240
    %v3581 = vmul.f32 %v3468, %v3243
    %v3582 = vmul.f32 %v3473, %v3248
    %v3583 = vmul.f32 %v3478, %v3251
    %v3584 = vmul.f32 %v3483, %v3256
    %v3585 = vmul.f32 %v3488, %v3259
    %v3586 = vmul.f32 %v3493, %v3264
    %v3587 = vmul.f32 %v3498, %v3267
    %v3588 = vmul.f32 %v3503, %v3272
    %v3589 = vmul.f32 %v3508, %v3275
    %v3590 = vmul.f32 %v3513, %v3280
    %v3591 = vmul.f32 %v3518, %v3283
    %v3592 = vmul.f32 %v3523, %v3288
    %v3593 = vmul.f32 %v3528, %v3291
    %v3594 = vmul.f32 %v3533, %v3296
    %v3595 = vmul.f32 %v3538, %v3299
    %v3596 = vmul.f32 %v3543, %v3304
    %v3597 = vmul.f32 %v3548, %v3307
    %v3598 = vadd.f32 %v3550, %v2396
    %v3599 = vadd.f32 %v3551, %v2400
    %v3600 = vadd.f32 %v3552, %v2406
    %v3601 = vadd.f32 %v3553, %v2410
    %v3602 = vadd.f32 %v3554, %v2416
    %v3603 = vadd.f32 %v3555, %v2420
    %v3604 = vadd.f32 %v3556, %v2426
    %v3605 = vadd.f32 %v3557, %v2430
    %v3606 = vadd.f32 %v3558, %v2436
    %v3607 = vadd.f32 %v3559, %v2440
    %v3608 = vadd.f32 %v3560, %v2446
    %v3609 = vadd.f32 %v3561, %v2450
    %v3610 = vadd.f32 %v3562, %v2456
    %v3611 = vadd.f32 %v3563, %v2460
    %v3612 = vadd.f32 %v3564, %v2466
    %v3613 = vadd.f32 %v3565, %v2470
    %v3614 = vadd.f32 %v3566, %v2476
    %v3615 = vadd.f32 %v3567, %v2480
    %v3616 = vadd.f32 %v3568, %v2486
    %v3617 = vadd.f32 %v3569, %v2490
    %v3618 = vadd.f32 %v3570, %v2496
    %v3619 = vadd.f32 %v3571, %v2500
    %v3620 = vadd.f32 %v3572, %v2506
    %v3621 = vadd.f32 %v3573, %v2510
    %v3622 = vadd.f32 %v3574, %v2516
    %v3623 = vadd.f32 %v3575, %v2520
    %v3624 = vadd.f32 %v3576, %v2526
    %v3625 = vadd.f32 %v3577, %v2530
    %v3626 = vadd.f32 %v3578, %v2536
    %v3627 = vadd.f32 %v3579, %v2540
    %v3628 = vadd.f32 %v3580, %v2546
    %v3629 = vadd.f32 %v3581, %v2550
    %v3630 = vadd.f32 %v3582, %v2556
    %v3631 = vadd.f32 %v3583, %v2560
    %v3632 = vadd.f32 %v3584, %v2566
    %v3633 = vadd.f32 %v3585, %v2570
    %v3634 = vadd.f32 %v3586, %v2576
    %v3635 = vadd.f32 %v3587, %v2580
    %v3636 = vadd.f32 %v3588, %v2586
    %v3637 = vadd.f32 %v3589, %v2590
    %v3638 = vadd.f32 %v3590, %v2596
    %v3639 = vadd.f32 %v3591, %v2600
    %v3640 = vadd.f32 %v3592, %v2606
    %v3641 = vadd.f32 %v3593, %v2610
    %v3642 = vadd.f32 %v3594, %v2616
    %v3643 = vadd.f32 %v3595, %v2620
    %v3644 = vadd.f32 %v3596, %v2626
    %v3645 = vadd.f32 %v3597, %v2630
    %v3646 = vld [vmem:[%s13] sm:$0x1]
    %v3648 = vlaneseq
    %v3649 = vshrl.u32 %v3648, 7
    %v3650 = vsub.s32 0, %v3649
    %v3651 = vrot.slane %v3646, %v3650
    %v3653 = vadd.f32 %v3598, %v3651
    %v3654 = vadd.f32 %v3599, %v3651
    %v3655 = vadd.f32 %v3600, %v3651
    %v3656 = vadd.f32 %v3601, %v3651
    %v3657 = vadd.f32 %v3602, %v3651
    %v3658 = vadd.f32 %v3603, %v3651
    %v3659 = vadd.f32 %v3604, %v3651
    %v3660 = vadd.f32 %v3605, %v3651
    %v3661 = vadd.f32 %v3606, %v3651
    %v3662 = vadd.f32 %v3607, %v3651
    %v3663 = vadd.f32 %v3608, %v3651
    %v3664 = vadd.f32 %v3609, %v3651
    %v3665 = vadd.f32 %v3610, %v3651
    %v3666 = vadd.f32 %v3611, %v3651
    %v3667 = vadd.f32 %v3612, %v3651
    %v3668 = vadd.f32 %v3613, %v3651
    %v3669 = vadd.f32 %v3614, %v3651
    %v3670 = vadd.f32 %v3615, %v3651
    %v3671 = vadd.f32 %v3616, %v3651
    %v3672 = vadd.f32 %v3617, %v3651
    %v3673 = vadd.f32 %v3618, %v3651
    %v3674 = vadd.f32 %v3619, %v3651
    %v3675 = vadd.f32 %v3620, %v3651
    %v3676 = vadd.f32 %v3621, %v3651
    %v3677 = vadd.f32 %v3622, %v3651
    %v3678 = vadd.f32 %v3623, %v3651
    %v3679 = vadd.f32 %v3624, %v3651
    %v3680 = vadd.f32 %v3625, %v3651
    %v3681 = vadd.f32 %v3626, %v3651
    %v3682 = vadd.f32 %v3627, %v3651
    %v3683 = vadd.f32 %v3628, %v3651
    %v3684 = vadd.f32 %v3629, %v3651
    %v3685 = vadd.f32 %v3630, %v3651
    %v3686 = vadd.f32 %v3631, %v3651
    %v3687 = vadd.f32 %v3632, %v3651
    %v3688 = vadd.f32 %v3633, %v3651
    %v3689 = vadd.f32 %v3634, %v3651
    %v3690 = vadd.f32 %v3635, %v3651
    %v3691 = vadd.f32 %v3636, %v3651
    %v3692 = vadd.f32 %v3637, %v3651
    %v3693 = vadd.f32 %v3638, %v3651
    %v3694 = vadd.f32 %v3639, %v3651
    %v3695 = vadd.f32 %v3640, %v3651
    %v3696 = vadd.f32 %v3641, %v3651
    %v3697 = vadd.f32 %v3642, %v3651
    %v3698 = vadd.f32 %v3643, %v3651
    %v3699 = vadd.f32 %v3644, %v3651
    %v3700 = vadd.f32 %v3645, %v3651
    %v3701 = vmax.f32 %v3653, 0.0
    %v3702 = vmax.f32 %v3654, 0.0
    %v3703 = vmax.f32 %v3655, 0.0
    %v3704 = vmax.f32 %v3656, 0.0
    %v3705 = vmax.f32 %v3657, 0.0
    %v3706 = vmax.f32 %v3658, 0.0
    %v3707 = vmax.f32 %v3659, 0.0
    %v3708 = vmax.f32 %v3660, 0.0
    %v3709 = vmax.f32 %v3661, 0.0
    %v3710 = vmax.f32 %v3662, 0.0
    %v3711 = vmax.f32 %v3663, 0.0
    %v3712 = vmax.f32 %v3664, 0.0
    %v3713 = vmax.f32 %v3665, 0.0
    %v3714 = vmax.f32 %v3666, 0.0
    %v3715 = vmax.f32 %v3667, 0.0
    %v3716 = vmax.f32 %v3668, 0.0
    %v3717 = vmax.f32 %v3669, 0.0
    %v3718 = vmax.f32 %v3670, 0.0
    %v3719 = vmax.f32 %v3671, 0.0
    %v3720 = vmax.f32 %v3672, 0.0
    %v3721 = vmax.f32 %v3673, 0.0
    %v3722 = vmax.f32 %v3674, 0.0
    %v3723 = vmax.f32 %v3675, 0.0
    %v3724 = vmax.f32 %v3676, 0.0
    %v3725 = vmax.f32 %v3677, 0.0
    %v3726 = vmax.f32 %v3678, 0.0
    %v3727 = vmax.f32 %v3679, 0.0
    %v3728 = vmax.f32 %v3680, 0.0
    %v3729 = vmax.f32 %v3681, 0.0
    %v3730 = vmax.f32 %v3682, 0.0
    %v3731 = vmax.f32 %v3683, 0.0
    %v3732 = vmax.f32 %v3684, 0.0
    %v3733 = vmax.f32 %v3685, 0.0
    %v3734 = vmax.f32 %v3686, 0.0
    %v3735 = vmax.f32 %v3687, 0.0
    %v3736 = vmax.f32 %v3688, 0.0
    %v3737 = vmax.f32 %v3689, 0.0
    %v3738 = vmax.f32 %v3690, 0.0
    %v3739 = vmax.f32 %v3691, 0.0
    %v3740 = vmax.f32 %v3692, 0.0
    %v3741 = vmax.f32 %v3693, 0.0
    %v3742 = vmax.f32 %v3694, 0.0
    %v3743 = vmax.f32 %v3695, 0.0
    %v3744 = vmax.f32 %v3696, 0.0
    %v3745 = vmax.f32 %v3697, 0.0
    %v3746 = vmax.f32 %v3698, 0.0
    %v3747 = vmax.f32 %v3699, 0.0
    %v3748 = vmax.f32 %v3700, 0.0
    %v3749 = vpack.c.bf16 %v3702, %v3701
    %v3750 = vpack.c.bf16 %v3704, %v3703
    %v3751 = vpack.c.bf16 %v3706, %v3705
    %v3752 = vpack.c.bf16 %v3708, %v3707
    %v3753 = vpack.c.bf16 %v3710, %v3709
    %v3754 = vpack.c.bf16 %v3712, %v3711
    %v3755 = vpack.c.bf16 %v3714, %v3713
    %v3756 = vpack.c.bf16 %v3716, %v3715
    %v3757 = vpack.c.bf16 %v3718, %v3717
    %v3758 = vpack.c.bf16 %v3720, %v3719
    %v3759 = vpack.c.bf16 %v3722, %v3721
    %v3760 = vpack.c.bf16 %v3724, %v3723
    %v3761 = vpack.c.bf16 %v3726, %v3725
    %v3762 = vpack.c.bf16 %v3728, %v3727
    %v3763 = vpack.c.bf16 %v3730, %v3729
    %v3764 = vpack.c.bf16 %v3732, %v3731
    %v3765 = vpack.c.bf16 %v3734, %v3733
    %v3766 = vpack.c.bf16 %v3736, %v3735
    %v3767 = vpack.c.bf16 %v3738, %v3737
    %v3768 = vpack.c.bf16 %v3740, %v3739
    %v3769 = vpack.c.bf16 %v3742, %v3741
    %v3770 = vpack.c.bf16 %v3744, %v3743
    %v3771 = vpack.c.bf16 %v3746, %v3745
    %v3772 = vpack.c.bf16 %v3748, %v3747
    %v3773 = vld [vmem:[%s14] sm:$0xf]
    %v3774 = vld [vmem:[%s14 + $0x4] sm:$0xf]
    %v3775 = vld [vmem:[%s14 + $0x8] sm:$0xf]
    %v3776 = vld [vmem:[%s14 + $0xc] sm:$0xf]
    %v3777 = vld [vmem:[%s14 + $0x10] sm:$0xf]
    %v3778 = vld [vmem:[%s14 + $0x14] sm:$0xf]
    %v3779 = vld [vmem:[%s14 + $0x18] sm:$0xf]
    %v3780 = vld [vmem:[%s14 + $0x1c] sm:$0xf]
    %v3781 = vld [vmem:[%s14 + $0x20] sm:$0xf]
    %v3782 = vld [vmem:[%s14 + $0x24] sm:$0xf]
    %v3783 = vld [vmem:[%s14 + $0x28] sm:$0xf]
    %v3784 = vld [vmem:[%s14 + $0x2c] sm:$0xf]
    %v3785 = vld [vmem:[%s14 + $0x30] sm:$0xf]
    %v3786 = vld [vmem:[%s14 + $0x34] sm:$0xf]
    %v3787 = vld [vmem:[%s14 + $0x38] sm:$0xf]
    %v3788 = vld [vmem:[%s14 + $0x3c] sm:$0xf]
    %v3805 = vunpack.c.l.b16 %v3773
    %v3806 = vunpack.c.l.b16 %v3774
    %v3807 = vunpack.c.l.b16 %v3775
    %v3808 = vunpack.c.l.b16 %v3776
    %v3809 = vunpack.c.l.b16 %v3777
    %v3810 = vunpack.c.l.b16 %v3778
    %v3811 = vunpack.c.l.b16 %v3779
    %v3812 = vunpack.c.l.b16 %v3780
    %v3813 = vunpack.c.l.b16 %v3781
    %v3814 = vunpack.c.l.b16 %v3782
    %v3815 = vunpack.c.l.b16 %v3783
    %v3816 = vunpack.c.l.b16 %v3784
    %v3817 = vunpack.c.l.b16 %v3785
    %v3818 = vunpack.c.l.b16 %v3786
    %v3819 = vunpack.c.l.b16 %v3787
    %v3820 = vunpack.c.l.b16 %v3788
    %v3821 = vpack.c.b16 %v3806, %v3805
    %v3822 = vpack.c.b16 %v3808, %v3807
    %v3823 = vpack.c.b16 %v3810, %v3809
    %v3824 = vpack.c.b16 %v3812, %v3811
    %v3825 = vpack.c.b16 %v3814, %v3813
    %v3826 = vpack.c.b16 %v3816, %v3815
    %v3827 = vpack.c.b16 %v3818, %v3817
    %v3828 = vpack.c.b16 %v3820, %v3819
    %3837 = vmatprep.subr.bf16.mxu0 0
    %3838 = vmatpush1.bf16.msra.mxu0 %v3828
    %3839 = vmatprep.subr.bf16.mxu0 0
    %3840 = vmatpush1.bf16.msra.mxu0 %v3827
    %3841 = vmatprep.subr.bf16.mxu0 0
    %3842 = vmatpush1.bf16.msra.mxu0 %v3826
    %3843 = vmatprep.subr.bf16.mxu0 0
    %3844 = vmatpush1.bf16.msra.mxu0 %v3825
    %3845 = vmatprep.subr.bf16.mxu0 0
    %3846 = vmatpush1.bf16.msra.mxu0 %v3824
    %3847 = vmatprep.subr.bf16.mxu0 0
    %3848 = vmatpush1.bf16.msra.mxu0 %v3823
    %3849 = vmatprep.subr.bf16.mxu0 0
    %3850 = vmatpush1.bf16.msra.mxu0 %v3822
    %3851 = vmatprep.subr.bf16.mxu0 0
    %3852 = vmatpush1.bf16.msra.mxu0 %v3821
    %3853 = vmatprep.subr.bf16.mxu0 0
    %3854 = vmatpush2.bf16.msra.mxu0 0
    %3855 = vmatprep.subr.bf16.mxu0 0
    %3856 = vmatpush2.bf16.msra.mxu0 0
    %3857 = vmatprep.subr.bf16.mxu0 0
    %3858 = vmatpush2.bf16.msra.mxu0 0
    %3859 = vmatprep.subr.bf16.mxu0 0
    %3860 = vmatpush2.bf16.msra.mxu0 0
    %3861 = vmatprep.subr.bf16.mxu0 0
    %3862 = vmatpush2.bf16.msra.mxu0 0
    %3863 = vmatprep.subr.bf16.mxu0 0
    %3864 = vmatpush2.bf16.msra.mxu0 0
    %3865 = vmatprep.subr.bf16.mxu0 0
    %3866 = vmatpush2.bf16.msra.mxu0 0
    %3867 = vmatprep.subr.bf16.mxu0 0
    %3868 = vmatpush2.bf16.msra.mxu0 0
    %3869 = vmatprep.mubr.bf16.mxu0 0
    %3870 = vmatmul.mubr.bf16.gmra.mxu0 %v3749
    %v3871 = vpop.f32.mrf.mxu0
    %v3872 = vadd.f32 0.0, %v3871
    %v3873 = vpop.f32.mrf.mxu0
    %v3874 = vpop.f32.mrf.mxu0
    %v3875 = vadd.f32 0.0, %v3874
    %v3876 = vpop.f32.mrf.mxu0
    %3877 = vmatprep.mubr.bf16.mxu0 0
    %3878 = vmatmul.mubr.bf16.gmra.mxu0 %v3750
    %v3879 = vpop.f32.mrf.mxu0
    %v3880 = vadd.f32 0.0, %v3879
    %v3881 = vpop.f32.mrf.mxu0
    %v3882 = vpop.f32.mrf.mxu0
    %v3883 = vadd.f32 0.0, %v3882
    %v3884 = vpop.f32.mrf.mxu0
    %3885 = vmatprep.mubr.bf16.mxu0 0
    %3886 = vmatmul.mubr.bf16.gmra.mxu0 %v3751
    %v3887 = vpop.f32.mrf.mxu0
    %v3888 = vadd.f32 0.0, %v3887
    %v3889 = vpop.f32.mrf.mxu0
    %v3890 = vpop.f32.mrf.mxu0
    %v3891 = vadd.f32 0.0, %v3890
    %v3892 = vpop.f32.mrf.mxu0
    %3893 = vmatprep.mubr.bf16.mxu0 0
    %3894 = vmatmul.mubr.bf16.gmra.mxu0 %v3752
    %v3895 = vpop.f32.mrf.mxu0
    %v3896 = vadd.f32 0.0, %v3895
    %v3897 = vpop.f32.mrf.mxu0
    %v3898 = vpop.f32.mrf.mxu0
    %v3899 = vadd.f32 0.0, %v3898
    %v3900 = vpop.f32.mrf.mxu0
    %3901 = vmatprep.mubr.bf16.mxu0 0
    %3902 = vmatmul.mubr.bf16.gmra.mxu0 %v3753
    %v3903 = vpop.f32.mrf.mxu0
    %v3904 = vadd.f32 0.0, %v3903
    %v3905 = vpop.f32.mrf.mxu0
    %v3906 = vpop.f32.mrf.mxu0
    %v3907 = vadd.f32 0.0, %v3906
    %v3908 = vpop.f32.mrf.mxu0
    %3909 = vmatprep.mubr.bf16.mxu0 0
    %3910 = vmatmul.mubr.bf16.gmra.mxu0 %v3754
    %v3911 = vpop.f32.mrf.mxu0
    %v3912 = vadd.f32 0.0, %v3911
    %v3913 = vpop.f32.mrf.mxu0
    %v3914 = vpop.f32.mrf.mxu0
    %v3915 = vadd.f32 0.0, %v3914
    %v3916 = vpop.f32.mrf.mxu0
    %3917 = vmatprep.mubr.bf16.mxu0 0
    %3918 = vmatmul.mubr.bf16.gmra.mxu0 %v3755
    %v3919 = vpop.f32.mrf.mxu0
    %v3920 = vadd.f32 0.0, %v3919
    %v3921 = vpop.f32.mrf.mxu0
    %v3922 = vpop.f32.mrf.mxu0
    %v3923 = vadd.f32 0.0, %v3922
    %v3924 = vpop.f32.mrf.mxu0
    %3925 = vmatprep.mubr.bf16.mxu0 0
    %3926 = vmatmul.mubr.bf16.gmra.mxu0 %v3756
    %v3927 = vpop.f32.mrf.mxu0
    %v3928 = vadd.f32 0.0, %v3927
    %v3929 = vpop.f32.mrf.mxu0
    %v3930 = vpop.f32.mrf.mxu0
    %v3931 = vadd.f32 0.0, %v3930
    %v3932 = vpop.f32.mrf.mxu0
    %3933 = vmatprep.mubr.bf16.mxu0 0
    %3934 = vmatmul.mubr.bf16.gmra.mxu0 %v3757
    %v3935 = vpop.f32.mrf.mxu0
    %v3936 = vadd.f32 0.0, %v3935
    %v3937 = vpop.f32.mrf.mxu0
    %v3938 = vpop.f32.mrf.mxu0
    %v3939 = vadd.f32 0.0, %v3938
    %v3940 = vpop.f32.mrf.mxu0
    %3941 = vmatprep.mubr.bf16.mxu0 0
    %3942 = vmatmul.mubr.bf16.gmra.mxu0 %v3758
    %v3943 = vpop.f32.mrf.mxu0
    %v3944 = vadd.f32 0.0, %v3943
    %v3945 = vpop.f32.mrf.mxu0
    %v3946 = vpop.f32.mrf.mxu0
    %v3947 = vadd.f32 0.0, %v3946
    %v3948 = vpop.f32.mrf.mxu0
    %3949 = vmatprep.mubr.bf16.mxu0 0
    %3950 = vmatmul.mubr.bf16.gmra.mxu0 %v3759
    %v3951 = vpop.f32.mrf.mxu0
    %v3952 = vadd.f32 0.0, %v3951
    %v3953 = vpop.f32.mrf.mxu0
    %v3954 = vpop.f32.mrf.mxu0
    %v3955 = vadd.f32 0.0, %v3954
    %v3956 = vpop.f32.mrf.mxu0
    %3957 = vmatprep.mubr.bf16.mxu0 0
    %3958 = vmatmul.mubr.bf16.gmra.mxu0 %v3760
    %v3959 = vpop.f32.mrf.mxu0
    %v3960 = vadd.f32 0.0, %v3959
    %v3961 = vpop.f32.mrf.mxu0
    %v3962 = vpop.f32.mrf.mxu0
    %v3963 = vadd.f32 0.0, %v3962
    %v3964 = vpop.f32.mrf.mxu0
    %3965 = vmatprep.mubr.bf16.mxu0 0
    %3966 = vmatmul.mubr.bf16.gmra.mxu0 %v3761
    %v3967 = vpop.f32.mrf.mxu0
    %v3968 = vadd.f32 0.0, %v3967
    %v3969 = vpop.f32.mrf.mxu0
    %v3970 = vpop.f32.mrf.mxu0
    %v3971 = vadd.f32 0.0, %v3970
    %v3972 = vpop.f32.mrf.mxu0
    %3973 = vmatprep.mubr.bf16.mxu0 0
    %3974 = vmatmul.mubr.bf16.gmra.mxu0 %v3762
    %v3975 = vpop.f32.mrf.mxu0
    %v3976 = vadd.f32 0.0, %v3975
    %v3977 = vpop.f32.mrf.mxu0
    %v3978 = vpop.f32.mrf.mxu0
    %v3979 = vadd.f32 0.0, %v3978
    %v3980 = vpop.f32.mrf.mxu0
    %3981 = vmatprep.mubr.bf16.mxu0 0
    %3982 = vmatmul.mubr.bf16.gmra.mxu0 %v3763
    %v3983 = vpop.f32.mrf.mxu0
    %v3984 = vadd.f32 0.0, %v3983
    %v3985 = vpop.f32.mrf.mxu0
    %v3986 = vpop.f32.mrf.mxu0
    %v3987 = vadd.f32 0.0, %v3986
    %v3988 = vpop.f32.mrf.mxu0
    %3989 = vmatprep.mubr.bf16.mxu0 0
    %3990 = vmatmul.mubr.bf16.gmra.mxu0 %v3764
    %v3991 = vpop.f32.mrf.mxu0
    %v3992 = vadd.f32 0.0, %v3991
    %v3993 = vpop.f32.mrf.mxu0
    %v3994 = vpop.f32.mrf.mxu0
    %v3995 = vadd.f32 0.0, %v3994
    %v3996 = vpop.f32.mrf.mxu0
    %3997 = vmatprep.mubr.bf16.mxu0 0
    %3998 = vmatmul.mubr.bf16.gmra.mxu0 %v3765
    %v3999 = vpop.f32.mrf.mxu0
    %v4000 = vadd.f32 0.0, %v3999
    %v4001 = vpop.f32.mrf.mxu0
    %v4002 = vpop.f32.mrf.mxu0
    %v4003 = vadd.f32 0.0, %v4002
    %v4004 = vpop.f32.mrf.mxu0
    %4005 = vmatprep.mubr.bf16.mxu0 0
    %4006 = vmatmul.mubr.bf16.gmra.mxu0 %v3766
    %v4007 = vpop.f32.mrf.mxu0
    %v4008 = vadd.f32 0.0, %v4007
    %v4009 = vpop.f32.mrf.mxu0
    %v4010 = vpop.f32.mrf.mxu0
    %v4011 = vadd.f32 0.0, %v4010
    %v4012 = vpop.f32.mrf.mxu0
    %4013 = vmatprep.mubr.bf16.mxu0 0
    %4014 = vmatmul.mubr.bf16.gmra.mxu0 %v3767
    %v4015 = vpop.f32.mrf.mxu0
    %v4016 = vadd.f32 0.0, %v4015
    %v4017 = vpop.f32.mrf.mxu0
    %v4018 = vpop.f32.mrf.mxu0
    %v4019 = vadd.f32 0.0, %v4018
    %v4020 = vpop.f32.mrf.mxu0
    %4021 = vmatprep.mubr.bf16.mxu0 0
    %4022 = vmatmul.mubr.bf16.gmra.mxu0 %v3768
    %v4023 = vpop.f32.mrf.mxu0
    %v4024 = vadd.f32 0.0, %v4023
    %v4025 = vpop.f32.mrf.mxu0
    %v4026 = vpop.f32.mrf.mxu0
    %v4027 = vadd.f32 0.0, %v4026
    %v4028 = vpop.f32.mrf.mxu0
    %4029 = vmatprep.mubr.bf16.mxu0 0
    %4030 = vmatmul.mubr.bf16.gmra.mxu0 %v3769
    %v4031 = vpop.f32.mrf.mxu0
    %v4032 = vadd.f32 0.0, %v4031
    %v4033 = vpop.f32.mrf.mxu0
    %v4034 = vpop.f32.mrf.mxu0
    %v4035 = vadd.f32 0.0, %v4034
    %v4036 = vpop.f32.mrf.mxu0
    %4037 = vmatprep.mubr.bf16.mxu0 0
    %4038 = vmatmul.mubr.bf16.gmra.mxu0 %v3770
    %v4039 = vpop.f32.mrf.mxu0
    %v4040 = vadd.f32 0.0, %v4039
    %v4041 = vpop.f32.mrf.mxu0
    %v4042 = vpop.f32.mrf.mxu0
    %v4043 = vadd.f32 0.0, %v4042
    %v4044 = vpop.f32.mrf.mxu0
    %4045 = vmatprep.mubr.bf16.mxu0 0
    %4046 = vmatmul.mubr.bf16.gmra.mxu0 %v3771
    %v4047 = vpop.f32.mrf.mxu0
    %v4048 = vadd.f32 0.0, %v4047
    %v4049 = vpop.f32.mrf.mxu0
    %v4050 = vpop.f32.mrf.mxu0
    %v4051 = vadd.f32 0.0, %v4050
    %v4052 = vpop.f32.mrf.mxu0
    %4053 = vmatprep.mubr.bf16.mxu0 0
    %4054 = vmatmul.mubr.bf16.gmra.mxu0 %v3772
    %v4055 = vpop.f32.mrf.mxu0
    %v4056 = vadd.f32 0.0, %v4055
    %v4057 = vpop.f32.mrf.mxu0
    %v4058 = vpop.f32.mrf.mxu0
    %v4059 = vadd.f32 0.0, %v4058
    %v4060 = vpop.f32.mrf.mxu0
    %4061 = vdwg.mxu0
    %4063 = vset.pattern.permute.xlu0 0
    %4064 = vperm.xlu0 %4063, %v2788
    %v4065 = vpop.permute.xlu0 %4064
    %4068 = vset.pattern.permute.xlu0 0
    %4069 = vperm.xlu0 %4068, %v2789
    %v4070 = vpop.permute.xlu0 %4069
    %4073 = vset.pattern.permute.xlu0 0
    %4074 = vperm.xlu0 %4073, %v2790
    %v4075 = vpop.permute.xlu0 %4074
    %4078 = vset.pattern.permute.xlu0 0
    %4079 = vperm.xlu0 %4078, %v2791
    %v4080 = vpop.permute.xlu0 %4079
    %4083 = vset.pattern.permute.xlu0 0
    %4084 = vperm.xlu0 %4083, %v2792
    %v4085 = vpop.permute.xlu0 %4084
    %4088 = vset.pattern.permute.xlu0 0
    %4089 = vperm.xlu0 %4088, %v2793
    %v4090 = vpop.permute.xlu0 %4089
    %4093 = vset.pattern.permute.xlu0 0
    %4094 = vperm.xlu0 %4093, %v2794
    %v4095 = vpop.permute.xlu0 %4094
    %4098 = vset.pattern.permute.xlu0 0
    %4099 = vperm.xlu0 %4098, %v2795
    %v4100 = vpop.permute.xlu0 %4099
    %4103 = vset.pattern.permute.xlu0 0
    %4104 = vperm.xlu0 %4103, %v2796
    %v4105 = vpop.permute.xlu0 %4104
    %4108 = vset.pattern.permute.xlu0 0
    %4109 = vperm.xlu0 %4108, %v2797
    %v4110 = vpop.permute.xlu0 %4109
    %4113 = vset.pattern.permute.xlu0 0
    %4114 = vperm.xlu0 %4113, %v2798
    %v4115 = vpop.permute.xlu0 %4114
    %4118 = vset.pattern.permute.xlu0 0
    %4119 = vperm.xlu0 %4118, %v2799
    %v4120 = vpop.permute.xlu0 %4119
    %4123 = vset.pattern.permute.xlu0 0
    %4124 = vperm.xlu0 %4123, %v2800
    %v4125 = vpop.permute.xlu0 %4124
    %4128 = vset.pattern.permute.xlu0 0
    %4129 = vperm.xlu0 %4128, %v2801
    %v4130 = vpop.permute.xlu0 %4129
    %4133 = vset.pattern.permute.xlu0 0
    %4134 = vperm.xlu0 %4133, %v2802
    %v4135 = vpop.permute.xlu0 %4134
    %4138 = vset.pattern.permute.xlu0 0
    %4139 = vperm.xlu0 %4138, %v2803
    %v4140 = vpop.permute.xlu0 %4139
    %4143 = vset.pattern.permute.xlu0 0
    %4144 = vperm.xlu0 %4143, %v2804
    %v4145 = vpop.permute.xlu0 %4144
    %4148 = vset.pattern.permute.xlu0 0
    %4149 = vperm.xlu0 %4148, %v2805
    %v4150 = vpop.permute.xlu0 %4149
    %4153 = vset.pattern.permute.xlu0 0
    %4154 = vperm.xlu0 %4153, %v2806
    %v4155 = vpop.permute.xlu0 %4154
    %4158 = vset.pattern.permute.xlu0 0
    %4159 = vperm.xlu0 %4158, %v2807
    %v4160 = vpop.permute.xlu0 %4159
    %4163 = vset.pattern.permute.xlu0 0
    %4164 = vperm.xlu0 %4163, %v2808
    %v4165 = vpop.permute.xlu0 %4164
    %4168 = vset.pattern.permute.xlu0 0
    %4169 = vperm.xlu0 %4168, %v2809
    %v4170 = vpop.permute.xlu0 %4169
    %4173 = vset.pattern.permute.xlu0 0
    %4174 = vperm.xlu0 %4173, %v2810
    %v4175 = vpop.permute.xlu0 %4174
    %4178 = vset.pattern.permute.xlu0 0
    %4179 = vperm.xlu0 %4178, %v2811
    %v4180 = vpop.permute.xlu0 %4179
    %4183 = vset.pattern.permute.xlu0 0
    %4184 = vperm.xlu0 %4183, %v2812
    %v4185 = vpop.permute.xlu0 %4184
    %4188 = vset.pattern.permute.xlu0 0
    %4189 = vperm.xlu0 %4188, %v2813
    %v4190 = vpop.permute.xlu0 %4189
    %4193 = vset.pattern.permute.xlu0 0
    %4194 = vperm.xlu0 %4193, %v2814
    %v4195 = vpop.permute.xlu0 %4194
    %4198 = vset.pattern.permute.xlu0 0
    %4199 = vperm.xlu0 %4198, %v2815
    %v4200 = vpop.permute.xlu0 %4199
    %4203 = vset.pattern.permute.xlu0 0
    %4204 = vperm.xlu0 %4203, %v2816
    %v4205 = vpop.permute.xlu0 %4204
    %4208 = vset.pattern.permute.xlu0 0
    %4209 = vperm.xlu0 %4208, %v2817
    %v4210 = vpop.permute.xlu0 %4209
    %4213 = vset.pattern.permute.xlu0 0
    %4214 = vperm.xlu0 %4213, %v2818
    %v4215 = vpop.permute.xlu0 %4214
    %4218 = vset.pattern.permute.xlu0 0
    %4219 = vperm.xlu0 %4218, %v2819
    %v4220 = vpop.permute.xlu0 %4219
    %4223 = vset.pattern.permute.xlu0 0
    %4224 = vperm.xlu0 %4223, %v2820
    %v4225 = vpop.permute.xlu0 %4224
    %4228 = vset.pattern.permute.xlu0 0
    %4229 = vperm.xlu0 %4228, %v2821
    %v4230 = vpop.permute.xlu0 %4229
    %4233 = vset.pattern.permute.xlu0 0
    %4234 = vperm.xlu0 %4233, %v2822
    %v4235 = vpop.permute.xlu0 %4234
    %4238 = vset.pattern.permute.xlu0 0
    %4239 = vperm.xlu0 %4238, %v2823
    %v4240 = vpop.permute.xlu0 %4239
    %4243 = vset.pattern.permute.xlu0 0
    %4244 = vperm.xlu0 %4243, %v2824
    %v4245 = vpop.permute.xlu0 %4244
    %4248 = vset.pattern.permute.xlu0 0
    %4249 = vperm.xlu0 %4248, %v2825
    %v4250 = vpop.permute.xlu0 %4249
    %4253 = vset.pattern.permute.xlu0 0
    %4254 = vperm.xlu0 %4253, %v2826
    %v4255 = vpop.permute.xlu0 %4254
    %4258 = vset.pattern.permute.xlu0 0
    %4259 = vperm.xlu0 %4258, %v2827
    %v4260 = vpop.permute.xlu0 %4259
    %4263 = vset.pattern.permute.xlu0 0
    %4264 = vperm.xlu0 %4263, %v2828
    %v4265 = vpop.permute.xlu0 %4264
    %4268 = vset.pattern.permute.xlu0 0
    %4269 = vperm.xlu0 %4268, %v2829
    %v4270 = vpop.permute.xlu0 %4269
    %4273 = vset.pattern.permute.xlu0 0
    %4274 = vperm.xlu0 %4273, %v2830
    %v4275 = vpop.permute.xlu0 %4274
    %4278 = vset.pattern.permute.xlu0 0
    %4279 = vperm.xlu0 %4278, %v2831
    %v4280 = vpop.permute.xlu0 %4279
    %4283 = vset.pattern.permute.xlu0 0
    %4284 = vperm.xlu0 %4283, %v2832
    %v4285 = vpop.permute.xlu0 %4284
    %4288 = vset.pattern.permute.xlu0 0
    %4289 = vperm.xlu0 %4288, %v2833
    %v4290 = vpop.permute.xlu0 %4289
    %4293 = vset.pattern.permute.xlu0 0
    %4294 = vperm.xlu0 %4293, %v2834
    %v4295 = vpop.permute.xlu0 %4294
    %4298 = vset.pattern.permute.xlu0 0
    %4299 = vperm.xlu0 %4298, %v2835
    %v4300 = vpop.permute.xlu0 %4299
    %v4302 = vmul.f32 %v4065, %v3872
    %v4303 = vmul.f32 %v4070, %v3875
    %v4304 = vmul.f32 %v4075, %v3880
    %v4305 = vmul.f32 %v4080, %v3883
    %v4306 = vmul.f32 %v4085, %v3888
    %v4307 = vmul.f32 %v4090, %v3891
    %v4308 = vmul.f32 %v4095, %v3896
    %v4309 = vmul.f32 %v4100, %v3899
    %v4310 = vmul.f32 %v4105, %v3904
    %v4311 = vmul.f32 %v4110, %v3907
    %v4312 = vmul.f32 %v4115, %v3912
    %v4313 = vmul.f32 %v4120, %v3915
    %v4314 = vmul.f32 %v4125, %v3920
    %v4315 = vmul.f32 %v4130, %v3923
    %v4316 = vmul.f32 %v4135, %v3928
    %v4317 = vmul.f32 %v4140, %v3931
    %v4318 = vmul.f32 %v4145, %v3936
    %v4319 = vmul.f32 %v4150, %v3939
    %v4320 = vmul.f32 %v4155, %v3944
    %v4321 = vmul.f32 %v4160, %v3947
    %v4322 = vmul.f32 %v4165, %v3952
    %v4323 = vmul.f32 %v4170, %v3955
    %v4324 = vmul.f32 %v4175, %v3960
    %v4325 = vmul.f32 %v4180, %v3963
    %v4326 = vmul.f32 %v4185, %v3968
    %v4327 = vmul.f32 %v4190, %v3971
    %v4328 = vmul.f32 %v4195, %v3976
    %v4329 = vmul.f32 %v4200, %v3979
    %v4330 = vmul.f32 %v4205, %v3984
    %v4331 = vmul.f32 %v4210, %v3987
    %v4332 = vmul.f32 %v4215, %v3992
    %v4333 = vmul.f32 %v4220, %v3995
    %v4334 = vmul.f32 %v4225, %v4000
    %v4335 = vmul.f32 %v4230, %v4003
    %v4336 = vmul.f32 %v4235, %v4008
    %v4337 = vmul.f32 %v4240, %v4011
    %v4338 = vmul.f32 %v4245, %v4016
    %v4339 = vmul.f32 %v4250, %v4019
    %v4340 = vmul.f32 %v4255, %v4024
    %v4341 = vmul.f32 %v4260, %v4027
    %v4342 = vmul.f32 %v4265, %v4032
    %v4343 = vmul.f32 %v4270, %v4035
    %v4344 = vmul.f32 %v4275, %v4040
    %v4345 = vmul.f32 %v4280, %v4043
    %v4346 = vmul.f32 %v4285, %v4048
    %v4347 = vmul.f32 %v4290, %v4051
    %v4348 = vmul.f32 %v4295, %v4056
    %v4349 = vmul.f32 %v4300, %v4059
    %v4350 = vpack.c.bf16 %v4303, %v4302
    %v4351 = vpack.c.bf16 %v4305, %v4304
    %v4352 = vpack.c.bf16 %v4307, %v4306
    %v4353 = vpack.c.bf16 %v4309, %v4308
    %v4354 = vpack.c.bf16 %v4311, %v4310
    %v4355 = vpack.c.bf16 %v4313, %v4312
    %v4356 = vpack.c.bf16 %v4315, %v4314
    %v4357 = vpack.c.bf16 %v4317, %v4316
    %v4358 = vpack.c.bf16 %v4319, %v4318
    %v4359 = vpack.c.bf16 %v4321, %v4320
    %v4360 = vpack.c.bf16 %v4323, %v4322
    %v4361 = vpack.c.bf16 %v4325, %v4324
    %v4362 = vpack.c.bf16 %v4327, %v4326
    %v4363 = vpack.c.bf16 %v4329, %v4328
    %v4364 = vpack.c.bf16 %v4331, %v4330
    %v4365 = vpack.c.bf16 %v4333, %v4332
    %v4366 = vpack.c.bf16 %v4335, %v4334
    %v4367 = vpack.c.bf16 %v4337, %v4336
    %v4368 = vpack.c.bf16 %v4339, %v4338
    %v4369 = vpack.c.bf16 %v4341, %v4340
    %v4370 = vpack.c.bf16 %v4343, %v4342
    %v4371 = vpack.c.bf16 %v4345, %v4344
    %v4372 = vpack.c.bf16 %v4347, %v4346
    %v4373 = vpack.c.bf16 %v4349, %v4348
    %4374 = vmatprep.subr.bf16.mxu0 0
    %4375 = vmatpush1.bf16.msra.mxu0 %v4357
    %4376 = vmatprep.subr.bf16.mxu0 0
    %4377 = vmatpush1.bf16.msra.mxu0 %v4356
    %4378 = vmatprep.subr.bf16.mxu0 0
    %4379 = vmatpush1.bf16.msra.mxu0 %v4355
    %4380 = vmatprep.subr.bf16.mxu0 0
    %4381 = vmatpush1.bf16.msra.mxu0 %v4354
    %4382 = vmatprep.subr.bf16.mxu0 0
    %4383 = vmatpush1.bf16.msra.mxu0 %v4353
    %4384 = vmatprep.subr.bf16.mxu0 0
    %4385 = vmatpush1.bf16.msra.mxu0 %v4352
    %4386 = vmatprep.subr.bf16.mxu0 0
    %4387 = vmatpush1.bf16.msra.mxu0 %v4351
    %4388 = vmatprep.subr.bf16.mxu0 0
    %4389 = vmatpush1.bf16.msra.mxu0 %v4350
    %4390 = vmatprep.subr.bf16.mxu0 0
    %4391 = vmatpush2.bf16.msra.mxu0 %v4365
    %4392 = vmatprep.subr.bf16.mxu0 0
    %4393 = vmatpush2.bf16.msra.mxu0 %v4364
    %4394 = vmatprep.subr.bf16.mxu0 0
    %4395 = vmatpush2.bf16.msra.mxu0 %v4363
    %4396 = vmatprep.subr.bf16.mxu0 0
    %4397 = vmatpush2.bf16.msra.mxu0 %v4362
    %4398 = vmatprep.subr.bf16.mxu0 0
    %4399 = vmatpush2.bf16.msra.mxu0 %v4361
    %4400 = vmatprep.subr.bf16.mxu0 0
    %4401 = vmatpush2.bf16.msra.mxu0 %v4360
    %4402 = vmatprep.subr.bf16.mxu0 0
    %4403 = vmatpush2.bf16.msra.mxu0 %v4359
    %4404 = vmatprep.subr.bf16.mxu0 0
    %4405 = vmatpush2.bf16.msra.mxu0 %v4358
    %4406 = vmatprep.mubr.bf16.mxu0 %v2669
    %4407 = vmatmul.mubr.bf16.gmra.mxu0 %v2668
    %v4408 = vpop.f32.mrf.mxu0
    %v4409 = vadd.f32 0.0, %v4408
    %v4410 = vpop.f32.mrf.mxu0
    %v4411 = vpop.f32.mrf.mxu0
    %v4412 = vadd.f32 0.0, %v4411
    %v4413 = vpop.f32.mrf.mxu0
    %4414 = vmatprep.mubr.bf16.mxu0 %v2672
    %4415 = vmatmul.mubr.bf16.gmra.mxu0 %v2671
    %v4416 = vpop.f32.mrf.mxu0
    %v4417 = vadd.f32 0.0, %v4416
    %v4418 = vpop.f32.mrf.mxu0
    %v4419 = vpop.f32.mrf.mxu0
    %v4420 = vadd.f32 0.0, %v4419
    %v4421 = vpop.f32.mrf.mxu0
    %4422 = vmatprep.mubr.bf16.mxu0 %v2675
    %4423 = vmatmul.mubr.bf16.gmra.mxu0 %v2674
    %v4424 = vpop.f32.mrf.mxu0
    %v4425 = vadd.f32 0.0, %v4424
    %v4426 = vpop.f32.mrf.mxu0
    %v4427 = vpop.f32.mrf.mxu0
    %v4428 = vadd.f32 0.0, %v4427
    %v4429 = vpop.f32.mrf.mxu0
    %4430 = vmatprep.mubr.bf16.mxu0 %v2678
    %4431 = vmatmul.mubr.bf16.gmra.mxu0 %v2677
    %v4432 = vpop.f32.mrf.mxu0
    %v4433 = vadd.f32 0.0, %v4432
    %v4434 = vpop.f32.mrf.mxu0
    %v4435 = vpop.f32.mrf.mxu0
    %v4436 = vadd.f32 0.0, %v4435
    %v4437 = vpop.f32.mrf.mxu0
    %4438 = vmatprep.mubr.bf16.mxu0 %v2681
    %4439 = vmatmul.mubr.bf16.gmra.mxu0 %v2680
    %v4440 = vpop.f32.mrf.mxu0
    %v4441 = vadd.f32 0.0, %v4440
    %v4442 = vpop.f32.mrf.mxu0
    %v4443 = vpop.f32.mrf.mxu0
    %v4444 = vadd.f32 0.0, %v4443
    %v4445 = vpop.f32.mrf.mxu0
    %4446 = vmatprep.mubr.bf16.mxu0 %v2684
    %4447 = vmatmul.mubr.bf16.gmra.mxu0 %v2683
    %v4448 = vpop.f32.mrf.mxu0
    %v4449 = vadd.f32 0.0, %v4448
    %v4450 = vpop.f32.mrf.mxu0
    %v4451 = vpop.f32.mrf.mxu0
    %v4452 = vadd.f32 0.0, %v4451
    %v4453 = vpop.f32.mrf.mxu0
    %4454 = vmatprep.mubr.bf16.mxu0 %v2687
    %4455 = vmatmul.mubr.bf16.gmra.mxu0 %v2686
    %v4456 = vpop.f32.mrf.mxu0
    %v4457 = vadd.f32 0.0, %v4456
    %v4458 = vpop.f32.mrf.mxu0
    %v4459 = vpop.f32.mrf.mxu0
    %v4460 = vadd.f32 0.0, %v4459
    %v4461 = vpop.f32.mrf.mxu0
    %4462 = vmatprep.mubr.bf16.mxu0 %v2690
    %4463 = vmatmul.mubr.bf16.gmra.mxu0 %v2689
    %v4464 = vpop.f32.mrf.mxu0
    %v4465 = vadd.f32 0.0, %v4464
    %v4466 = vpop.f32.mrf.mxu0
    %v4467 = vpop.f32.mrf.mxu0
    %v4468 = vadd.f32 0.0, %v4467
    %v4469 = vpop.f32.mrf.mxu0
    %4470 = vmatprep.mubr.bf16.mxu0 %v2693
    %4471 = vmatmul.mubr.bf16.gmra.mxu0 %v2692
    %v4472 = vpop.f32.mrf.mxu0
    %v4473 = vadd.f32 0.0, %v4472
    %v4474 = vpop.f32.mrf.mxu0
    %v4475 = vpop.f32.mrf.mxu0
    %v4476 = vadd.f32 0.0, %v4475
    %v4477 = vpop.f32.mrf.mxu0
    %4478 = vmatprep.mubr.bf16.mxu0 %v2696
    %4479 = vmatmul.mubr.bf16.gmra.mxu0 %v2695
    %v4480 = vpop.f32.mrf.mxu0
    %v4481 = vadd.f32 0.0, %v4480
    %v4482 = vpop.f32.mrf.mxu0
    %v4483 = vpop.f32.mrf.mxu0
    %v4484 = vadd.f32 0.0, %v4483
    %v4485 = vpop.f32.mrf.mxu0
    %4486 = vmatprep.mubr.bf16.mxu0 %v2699
    %4487 = vmatmul.mubr.bf16.gmra.mxu0 %v2698
    %v4488 = vpop.f32.mrf.mxu0
    %v4489 = vadd.f32 0.0, %v4488
    %v4490 = vpop.f32.mrf.mxu0
    %v4491 = vpop.f32.mrf.mxu0
    %v4492 = vadd.f32 0.0, %v4491
    %v4493 = vpop.f32.mrf.mxu0
    %4494 = vmatprep.mubr.bf16.mxu0 %v2702
    %4495 = vmatmul.mubr.bf16.gmra.mxu0 %v2701
    %v4496 = vpop.f32.mrf.mxu0
    %v4497 = vadd.f32 0.0, %v4496
    %v4498 = vpop.f32.mrf.mxu0
    %v4499 = vpop.f32.mrf.mxu0
    %v4500 = vadd.f32 0.0, %v4499
    %v4501 = vpop.f32.mrf.mxu0
    %4502 = vmatprep.mubr.bf16.mxu0 %v2705
    %4503 = vmatmul.mubr.bf16.gmra.mxu0 %v2704
    %v4504 = vpop.f32.mrf.mxu0
    %v4505 = vadd.f32 0.0, %v4504
    %v4506 = vpop.f32.mrf.mxu0
    %v4507 = vpop.f32.mrf.mxu0
    %v4508 = vadd.f32 0.0, %v4507
    %v4509 = vpop.f32.mrf.mxu0
    %4510 = vmatprep.mubr.bf16.mxu0 %v2708
    %4511 = vmatmul.mubr.bf16.gmra.mxu0 %v2707
    %v4512 = vpop.f32.mrf.mxu0
    %v4513 = vadd.f32 0.0, %v4512
    %v4514 = vpop.f32.mrf.mxu0
    %v4515 = vpop.f32.mrf.mxu0
    %v4516 = vadd.f32 0.0, %v4515
    %v4517 = vpop.f32.mrf.mxu0
    %4518 = vmatprep.mubr.bf16.mxu0 %v2711
    %4519 = vmatmul.mubr.bf16.gmra.mxu0 %v2710
    %v4520 = vpop.f32.mrf.mxu0
    %v4521 = vadd.f32 0.0, %v4520
    %v4522 = vpop.f32.mrf.mxu0
    %v4523 = vpop.f32.mrf.mxu0
    %v4524 = vadd.f32 0.0, %v4523
    %v4525 = vpop.f32.mrf.mxu0
    %4526 = vmatprep.mubr.bf16.mxu0 %v2714
    %4527 = vmatmul.mubr.bf16.gmra.mxu0 %v2713
    %v4528 = vpop.f32.mrf.mxu0
    %v4529 = vadd.f32 0.0, %v4528
    %v4530 = vpop.f32.mrf.mxu0
    %v4531 = vpop.f32.mrf.mxu0
    %v4532 = vadd.f32 0.0, %v4531
    %v4533 = vpop.f32.mrf.mxu0
    %4534 = vmatprep.mubr.bf16.mxu0 %v2717
    %4535 = vmatmul.mubr.bf16.gmra.mxu0 %v2716
    %v4536 = vpop.f32.mrf.mxu0
    %v4537 = vadd.f32 0.0, %v4536
    %v4538 = vpop.f32.mrf.mxu0
    %v4539 = vpop.f32.mrf.mxu0
    %v4540 = vadd.f32 0.0, %v4539
    %v4541 = vpop.f32.mrf.mxu0
    %4542 = vmatprep.mubr.bf16.mxu0 %v2720
    %4543 = vmatmul.mubr.bf16.gmra.mxu0 %v2719
    %v4544 = vpop.f32.mrf.mxu0
    %v4545 = vadd.f32 0.0, %v4544
    %v4546 = vpop.f32.mrf.mxu0
    %v4547 = vpop.f32.mrf.mxu0
    %v4548 = vadd.f32 0.0, %v4547
    %v4549 = vpop.f32.mrf.mxu0
    %4550 = vmatprep.mubr.bf16.mxu0 %v2723
    %4551 = vmatmul.mubr.bf16.gmra.mxu0 %v2722
    %v4552 = vpop.f32.mrf.mxu0
    %v4553 = vadd.f32 0.0, %v4552
    %v4554 = vpop.f32.mrf.mxu0
    %v4555 = vpop.f32.mrf.mxu0
    %v4556 = vadd.f32 0.0, %v4555
    %v4557 = vpop.f32.mrf.mxu0
    %4558 = vmatprep.mubr.bf16.mxu0 %v2726
    %4559 = vmatmul.mubr.bf16.gmra.mxu0 %v2725
    %v4560 = vpop.f32.mrf.mxu0
    %v4561 = vadd.f32 0.0, %v4560
    %v4562 = vpop.f32.mrf.mxu0
    %v4563 = vpop.f32.mrf.mxu0
    %v4564 = vadd.f32 0.0, %v4563
    %v4565 = vpop.f32.mrf.mxu0
    %4566 = vmatprep.mubr.bf16.mxu0 %v2729
    %4567 = vmatmul.mubr.bf16.gmra.mxu0 %v2728
    %v4568 = vpop.f32.mrf.mxu0
    %v4569 = vadd.f32 0.0, %v4568
    %v4570 = vpop.f32.mrf.mxu0
    %v4571 = vpop.f32.mrf.mxu0
    %v4572 = vadd.f32 0.0, %v4571
    %v4573 = vpop.f32.mrf.mxu0
    %4574 = vmatprep.mubr.bf16.mxu0 %v2732
    %4575 = vmatmul.mubr.bf16.gmra.mxu0 %v2731
    %v4576 = vpop.f32.mrf.mxu0
    %v4577 = vadd.f32 0.0, %v4576
    %v4578 = vpop.f32.mrf.mxu0
    %v4579 = vpop.f32.mrf.mxu0
    %v4580 = vadd.f32 0.0, %v4579
    %v4581 = vpop.f32.mrf.mxu0
    %4582 = vmatprep.mubr.bf16.mxu0 %v2735
    %4583 = vmatmul.mubr.bf16.gmra.mxu0 %v2734
    %v4584 = vpop.f32.mrf.mxu0
    %v4585 = vadd.f32 0.0, %v4584
    %v4586 = vpop.f32.mrf.mxu0
    %v4587 = vpop.f32.mrf.mxu0
    %v4588 = vadd.f32 0.0, %v4587
    %v4589 = vpop.f32.mrf.mxu0
    %4590 = vmatprep.mubr.bf16.mxu0 %v2738
    %4591 = vmatmul.mubr.bf16.gmra.mxu0 %v2737
    %v4592 = vpop.f32.mrf.mxu0
    %v4593 = vadd.f32 0.0, %v4592
    %v4594 = vpop.f32.mrf.mxu0
    %v4595 = vpop.f32.mrf.mxu0
    %v4596 = vadd.f32 0.0, %v4595
    %v4597 = vpop.f32.mrf.mxu0
    %4598 = vdwg.mxu0
    %4599 = vmatprep.subr.bf16.mxu0 0
    %4600 = vmatpush1.bf16.msra.mxu0 %v4373
    %4601 = vmatprep.subr.bf16.mxu0 0
    %4602 = vmatpush1.bf16.msra.mxu0 %v4372
    %4603 = vmatprep.subr.bf16.mxu0 0
    %4604 = vmatpush1.bf16.msra.mxu0 %v4371
    %4605 = vmatprep.subr.bf16.mxu0 0
    %4606 = vmatpush1.bf16.msra.mxu0 %v4370
    %4607 = vmatprep.subr.bf16.mxu0 0
    %4608 = vmatpush1.bf16.msra.mxu0 %v4369
    %4609 = vmatprep.subr.bf16.mxu0 0
    %4610 = vmatpush1.bf16.msra.mxu0 %v4368
    %4611 = vmatprep.subr.bf16.mxu0 0
    %4612 = vmatpush1.bf16.msra.mxu0 %v4367
    %4613 = vmatprep.subr.bf16.mxu0 0
    %4614 = vmatpush1.bf16.msra.mxu0 %v4366
    %4615 = vmatprep.subr.bf16.mxu0 0
    %4616 = vmatpush2.bf16.msra.mxu0 0
    %4617 = vmatprep.subr.bf16.mxu0 0
    %4618 = vmatpush2.bf16.msra.mxu0 0
    %4619 = vmatprep.subr.bf16.mxu0 0
    %4620 = vmatpush2.bf16.msra.mxu0 0
    %4621 = vmatprep.subr.bf16.mxu0 0
    %4622 = vmatpush2.bf16.msra.mxu0 0
    %4623 = vmatprep.subr.bf16.mxu0 0
    %4624 = vmatpush2.bf16.msra.mxu0 0
    %4625 = vmatprep.subr.bf16.mxu0 0
    %4626 = vmatpush2.bf16.msra.mxu0 0
    %4627 = vmatprep.subr.bf16.mxu0 0
    %4628 = vmatpush2.bf16.msra.mxu0 0
    %4629 = vmatprep.subr.bf16.mxu0 0
    %4630 = vmatpush2.bf16.msra.mxu0 0
    %4631 = vmatprep.mubr.bf16.mxu0 0
    %4632 = vmatmul.mubr.bf16.gmra.mxu0 %v2670
    %v4633 = vpop.f32.mrf.mxu0
    %v4634 = vadd.f32 %v4409, %v4633
    %v4635 = vpop.f32.mrf.mxu0
    %v4636 = vpop.f32.mrf.mxu0
    %v4637 = vadd.f32 %v4412, %v4636
    %v4638 = vpop.f32.mrf.mxu0
    %4639 = vmatprep.mubr.bf16.mxu0 0
    %4640 = vmatmul.mubr.bf16.gmra.mxu0 %v2673
    %v4641 = vpop.f32.mrf.mxu0
    %v4642 = vadd.f32 %v4417, %v4641
    %v4643 = vpop.f32.mrf.mxu0
    %v4644 = vpop.f32.mrf.mxu0
    %v4645 = vadd.f32 %v4420, %v4644
    %v4646 = vpop.f32.mrf.mxu0
    %4647 = vmatprep.mubr.bf16.mxu0 0
    %4648 = vmatmul.mubr.bf16.gmra.mxu0 %v2676
    %v4649 = vpop.f32.mrf.mxu0
    %v4650 = vadd.f32 %v4425, %v4649
    %v4651 = vpop.f32.mrf.mxu0
    %v4652 = vpop.f32.mrf.mxu0
    %v4653 = vadd.f32 %v4428, %v4652
    %v4654 = vpop.f32.mrf.mxu0
    %4655 = vmatprep.mubr.bf16.mxu0 0
    %4656 = vmatmul.mubr.bf16.gmra.mxu0 %v2679
    %v4657 = vpop.f32.mrf.mxu0
    %v4658 = vadd.f32 %v4433, %v4657
    %v4659 = vpop.f32.mrf.mxu0
    %v4660 = vpop.f32.mrf.mxu0
    %v4661 = vadd.f32 %v4436, %v4660
    %v4662 = vpop.f32.mrf.mxu0
    %4663 = vmatprep.mubr.bf16.mxu0 0
    %4664 = vmatmul.mubr.bf16.gmra.mxu0 %v2682
    %v4665 = vpop.f32.mrf.mxu0
    %v4666 = vadd.f32 %v4441, %v4665
    %v4667 = vpop.f32.mrf.mxu0
    %v4668 = vpop.f32.mrf.mxu0
    %v4669 = vadd.f32 %v4444, %v4668
    %v4670 = vpop.f32.mrf.mxu0
    %4671 = vmatprep.mubr.bf16.mxu0 0
    %4672 = vmatmul.mubr.bf16.gmra.mxu0 %v2685
    %v4673 = vpop.f32.mrf.mxu0
    %v4674 = vadd.f32 %v4449, %v4673
    %v4675 = vpop.f32.mrf.mxu0
    %v4676 = vpop.f32.mrf.mxu0
    %v4677 = vadd.f32 %v4452, %v4676
    %v4678 = vpop.f32.mrf.mxu0
    %4679 = vmatprep.mubr.bf16.mxu0 0
    %4680 = vmatmul.mubr.bf16.gmra.mxu0 %v2688
    %v4681 = vpop.f32.mrf.mxu0
    %v4682 = vadd.f32 %v4457, %v4681
    %v4683 = vpop.f32.mrf.mxu0
    %v4684 = vpop.f32.mrf.mxu0
    %v4685 = vadd.f32 %v4460, %v4684
    %v4686 = vpop.f32.mrf.mxu0
    %4687 = vmatprep.mubr.bf16.mxu0 0
    %4688 = vmatmul.mubr.bf16.gmra.mxu0 %v2691
    %v4689 = vpop.f32.mrf.mxu0
    %v4690 = vadd.f32 %v4465, %v4689
    %v4691 = vpop.f32.mrf.mxu0
    %v4692 = vpop.f32.mrf.mxu0
    %v4693 = vadd.f32 %v4468, %v4692
    %v4694 = vpop.f32.mrf.mxu0
    %4695 = vmatprep.mubr.bf16.mxu0 0
    %4696 = vmatmul.mubr.bf16.gmra.mxu0 %v2694
    %v4697 = vpop.f32.mrf.mxu0
    %v4698 = vadd.f32 %v4473, %v4697
    %v4699 = vpop.f32.mrf.mxu0
    %v4700 = vpop.f32.mrf.mxu0
    %v4701 = vadd.f32 %v4476, %v4700
    %v4702 = vpop.f32.mrf.mxu0
    %4703 = vmatprep.mubr.bf16.mxu0 0
    %4704 = vmatmul.mubr.bf16.gmra.mxu0 %v2697
    %v4705 = vpop.f32.mrf.mxu0
    %v4706 = vadd.f32 %v4481, %v4705
    %v4707 = vpop.f32.mrf.mxu0
    %v4708 = vpop.f32.mrf.mxu0
    %v4709 = vadd.f32 %v4484, %v4708
    %v4710 = vpop.f32.mrf.mxu0
    %4711 = vmatprep.mubr.bf16.mxu0 0
    %4712 = vmatmul.mubr.bf16.gmra.mxu0 %v2700
    %v4713 = vpop.f32.mrf.mxu0
    %v4714 = vadd.f32 %v4489, %v4713
    %v4715 = vpop.f32.mrf.mxu0
    %v4716 = vpop.f32.mrf.mxu0
    %v4717 = vadd.f32 %v4492, %v4716
    %v4718 = vpop.f32.mrf.mxu0
    %4719 = vmatprep.mubr.bf16.mxu0 0
    %4720 = vmatmul.mubr.bf16.gmra.mxu0 %v2703
    %v4721 = vpop.f32.mrf.mxu0
    %v4722 = vadd.f32 %v4497, %v4721
    %v4723 = vpop.f32.mrf.mxu0
    %v4724 = vpop.f32.mrf.mxu0
    %v4725 = vadd.f32 %v4500, %v4724
    %v4726 = vpop.f32.mrf.mxu0
    %4727 = vmatprep.mubr.bf16.mxu0 0
    %4728 = vmatmul.mubr.bf16.gmra.mxu0 %v2706
    %v4729 = vpop.f32.mrf.mxu0
    %v4730 = vadd.f32 %v4505, %v4729
    %v4731 = vpop.f32.mrf.mxu0
    %v4732 = vpop.f32.mrf.mxu0
    %v4733 = vadd.f32 %v4508, %v4732
    %v4734 = vpop.f32.mrf.mxu0
    %4735 = vmatprep.mubr.bf16.mxu0 0
    %4736 = vmatmul.mubr.bf16.gmra.mxu0 %v2709
    %v4737 = vpop.f32.mrf.mxu0
    %v4738 = vadd.f32 %v4513, %v4737
    %v4739 = vpop.f32.mrf.mxu0
    %v4740 = vpop.f32.mrf.mxu0
    %v4741 = vadd.f32 %v4516, %v4740
    %v4742 = vpop.f32.mrf.mxu0
    %4743 = vmatprep.mubr.bf16.mxu0 0
    %4744 = vmatmul.mubr.bf16.gmra.mxu0 %v2712
    %v4745 = vpop.f32.mrf.mxu0
    %v4746 = vadd.f32 %v4521, %v4745
    %v4747 = vpop.f32.mrf.mxu0
    %v4748 = vpop.f32.mrf.mxu0
    %v4749 = vadd.f32 %v4524, %v4748
    %v4750 = vpop.f32.mrf.mxu0
    %4751 = vmatprep.mubr.bf16.mxu0 0
    %4752 = vmatmul.mubr.bf16.gmra.mxu0 %v2715
    %v4753 = vpop.f32.mrf.mxu0
    %v4754 = vadd.f32 %v4529, %v4753
    %v4755 = vpop.f32.mrf.mxu0
    %v4756 = vpop.f32.mrf.mxu0
    %v4757 = vadd.f32 %v4532, %v4756
    %v4758 = vpop.f32.mrf.mxu0
    %4759 = vmatprep.mubr.bf16.mxu0 0
    %4760 = vmatmul.mubr.bf16.gmra.mxu0 %v2718
    %v4761 = vpop.f32.mrf.mxu0
    %v4762 = vadd.f32 %v4537, %v4761
    %v4763 = vpop.f32.mrf.mxu0
    %v4764 = vpop.f32.mrf.mxu0
    %v4765 = vadd.f32 %v4540, %v4764
    %v4766 = vpop.f32.mrf.mxu0
    %4767 = vmatprep.mubr.bf16.mxu0 0
    %4768 = vmatmul.mubr.bf16.gmra.mxu0 %v2721
    %v4769 = vpop.f32.mrf.mxu0
    %v4770 = vadd.f32 %v4545, %v4769
    %v4771 = vpop.f32.mrf.mxu0
    %v4772 = vpop.f32.mrf.mxu0
    %v4773 = vadd.f32 %v4548, %v4772
    %v4774 = vpop.f32.mrf.mxu0
    %4775 = vmatprep.mubr.bf16.mxu0 0
    %4776 = vmatmul.mubr.bf16.gmra.mxu0 %v2724
    %v4777 = vpop.f32.mrf.mxu0
    %v4778 = vadd.f32 %v4553, %v4777
    %v4779 = vpop.f32.mrf.mxu0
    %v4780 = vpop.f32.mrf.mxu0
    %v4781 = vadd.f32 %v4556, %v4780
    %v4782 = vpop.f32.mrf.mxu0
    %4783 = vmatprep.mubr.bf16.mxu0 0
    %4784 = vmatmul.mubr.bf16.gmra.mxu0 %v2727
    %v4785 = vpop.f32.mrf.mxu0
    %v4786 = vadd.f32 %v4561, %v4785
    %v4787 = vpop.f32.mrf.mxu0
    %v4788 = vpop.f32.mrf.mxu0
    %v4789 = vadd.f32 %v4564, %v4788
    %v4790 = vpop.f32.mrf.mxu0
    %4791 = vmatprep.mubr.bf16.mxu0 0
    %4792 = vmatmul.mubr.bf16.gmra.mxu0 %v2730
    %v4793 = vpop.f32.mrf.mxu0
    %v4794 = vadd.f32 %v4569, %v4793
    %v4795 = vpop.f32.mrf.mxu0
    %v4796 = vpop.f32.mrf.mxu0
    %v4797 = vadd.f32 %v4572, %v4796
    %v4798 = vpop.f32.mrf.mxu0
    %4799 = vmatprep.mubr.bf16.mxu0 0
    %4800 = vmatmul.mubr.bf16.gmra.mxu0 %v2733
    %v4801 = vpop.f32.mrf.mxu0
    %v4802 = vadd.f32 %v4577, %v4801
    %v4803 = vpop.f32.mrf.mxu0
    %v4804 = vpop.f32.mrf.mxu0
    %v4805 = vadd.f32 %v4580, %v4804
    %v4806 = vpop.f32.mrf.mxu0
    %4807 = vmatprep.mubr.bf16.mxu0 0
    %4808 = vmatmul.mubr.bf16.gmra.mxu0 %v2736
    %v4809 = vpop.f32.mrf.mxu0
    %v4810 = vadd.f32 %v4585, %v4809
    %v4811 = vpop.f32.mrf.mxu0
    %v4812 = vpop.f32.mrf.mxu0
    %v4813 = vadd.f32 %v4588, %v4812
    %v4814 = vpop.f32.mrf.mxu0
    %4815 = vmatprep.mubr.bf16.mxu0 0
    %4816 = vmatmul.mubr.bf16.gmra.mxu0 %v2739
    %v4817 = vpop.f32.mrf.mxu0
    %v4818 = vadd.f32 %v4593, %v4817
    %v4819 = vpop.f32.mrf.mxu0
    %v4820 = vpop.f32.mrf.mxu0
    %v4821 = vadd.f32 %v4596, %v4820
    %v4822 = vpop.f32.mrf.mxu0
    %4823 = vdwg.mxu0
    %v4824 = vmul.f32 %v4065, %v4634
    %v4825 = vmul.f32 %v4070, %v4637
    %v4826 = vmul.f32 %v4075, %v4642
    %v4827 = vmul.f32 %v4080, %v4645
    %v4828 = vmul.f32 %v4085, %v4650
    %v4829 = vmul.f32 %v4090, %v4653
    %v4830 = vmul.f32 %v4095, %v4658
    %v4831 = vmul.f32 %v4100, %v4661
    %v4832 = vmul.f32 %v4105, %v4666
    %v4833 = vmul.f32 %v4110, %v4669
    %v4834 = vmul.f32 %v4115, %v4674
    %v4835 = vmul.f32 %v4120, %v4677
    %v4836 = vmul.f32 %v4125, %v4682
    %v4837 = vmul.f32 %v4130, %v4685
    %v4838 = vmul.f32 %v4135, %v4690
    %v4839 = vmul.f32 %v4140, %v4693
    %v4840 = vmul.f32 %v4145, %v4698
    %v4841 = vmul.f32 %v4150, %v4701
    %v4842 = vmul.f32 %v4155, %v4706
    %v4843 = vmul.f32 %v4160, %v4709
    %v4844 = vmul.f32 %v4165, %v4714
    %v4845 = vmul.f32 %v4170, %v4717
    %v4846 = vmul.f32 %v4175, %v4722
    %v4847 = vmul.f32 %v4180, %v4725
    %v4848 = vmul.f32 %v4185, %v4730
    %v4849 = vmul.f32 %v4190, %v4733
    %v4850 = vmul.f32 %v4195, %v4738
    %v4851 = vmul.f32 %v4200, %v4741
    %v4852 = vmul.f32 %v4205, %v4746
    %v4853 = vmul.f32 %v4210, %v4749
    %v4854 = vmul.f32 %v4215, %v4754
    %v4855 = vmul.f32 %v4220, %v4757
    %v4856 = vmul.f32 %v4225, %v4762
    %v4857 = vmul.f32 %v4230, %v4765
    %v4858 = vmul.f32 %v4235, %v4770
    %v4859 = vmul.f32 %v4240, %v4773
    %v4860 = vmul.f32 %v4245, %v4778
    %v4861 = vmul.f32 %v4250, %v4781
    %v4862 = vmul.f32 %v4255, %v4786
    %v4863 = vmul.f32 %v4260, %v4789
    %v4864 = vmul.f32 %v4265, %v4794
    %v4865 = vmul.f32 %v4270, %v4797
    %v4866 = vmul.f32 %v4275, %v4802
    %v4867 = vmul.f32 %v4280, %v4805
    %v4868 = vmul.f32 %v4285, %v4810
    %v4869 = vmul.f32 %v4290, %v4813
    %v4870 = vmul.f32 %v4295, %v4818
    %v4871 = vmul.f32 %v4300, %v4821
    %v4872 = vmul.f32 %v4065, %v4302
    %v4873 = vmul.f32 %v4070, %v4303
    %v4874 = vmul.f32 %v4075, %v4304
    %v4875 = vmul.f32 %v4080, %v4305
    %v4876 = vmul.f32 %v4085, %v4306
    %v4877 = vmul.f32 %v4090, %v4307
    %v4878 = vmul.f32 %v4095, %v4308
    %v4879 = vmul.f32 %v4100, %v4309
    %v4880 = vmul.f32 %v4105, %v4310
    %v4881 = vmul.f32 %v4110, %v4311
    %v4882 = vmul.f32 %v4115, %v4312
    %v4883 = vmul.f32 %v4120, %v4313
    %v4884 = vmul.f32 %v4125, %v4314
    %v4885 = vmul.f32 %v4130, %v4315
    %v4886 = vmul.f32 %v4135, %v4316
    %v4887 = vmul.f32 %v4140, %v4317
    %v4888 = vmul.f32 %v4145, %v4318
    %v4889 = vmul.f32 %v4150, %v4319
    %v4890 = vmul.f32 %v4155, %v4320
    %v4891 = vmul.f32 %v4160, %v4321
    %v4892 = vmul.f32 %v4165, %v4322
    %v4893 = vmul.f32 %v4170, %v4323
    %v4894 = vmul.f32 %v4175, %v4324
    %v4895 = vmul.f32 %v4180, %v4325
    %v4896 = vmul.f32 %v4185, %v4326
    %v4897 = vmul.f32 %v4190, %v4327
    %v4898 = vmul.f32 %v4195, %v4328
    %v4899 = vmul.f32 %v4200, %v4329
    %v4900 = vmul.f32 %v4205, %v4330
    %v4901 = vmul.f32 %v4210, %v4331
    %v4902 = vmul.f32 %v4215, %v4332
    %v4903 = vmul.f32 %v4220, %v4333
    %v4904 = vmul.f32 %v4225, %v4334
    %v4905 = vmul.f32 %v4230, %v4335
    %v4906 = vmul.f32 %v4235, %v4336
    %v4907 = vmul.f32 %v4240, %v4337
    %v4908 = vmul.f32 %v4245, %v4338
    %v4909 = vmul.f32 %v4250, %v4339
    %v4910 = vmul.f32 %v4255, %v4340
    %v4911 = vmul.f32 %v4260, %v4341
    %v4912 = vmul.f32 %v4265, %v4342
    %v4913 = vmul.f32 %v4270, %v4343
    %v4914 = vmul.f32 %v4275, %v4344
    %v4915 = vmul.f32 %v4280, %v4345
    %v4916 = vmul.f32 %v4285, %v4346
    %v4917 = vmul.f32 %v4290, %v4347
    %v4918 = vmul.f32 %v4295, %v4348
    %v4919 = vmul.f32 %v4300, %v4349
    %v4920 = vadd.f32 %v4824, %v4872
    %v4921 = vadd.f32 %v4825, %v4873
    %v4922 = vadd.f32 %v4826, %v4874
    %v4923 = vadd.f32 %v4827, %v4875
    %v4924 = vadd.f32 %v4828, %v4876
    %v4925 = vadd.f32 %v4829, %v4877
    %v4926 = vadd.f32 %v4830, %v4878
    %v4927 = vadd.f32 %v4831, %v4879
    %v4928 = vadd.f32 %v4832, %v4880
    %v4929 = vadd.f32 %v4833, %v4881
    %v4930 = vadd.f32 %v4834, %v4882
    %v4931 = vadd.f32 %v4835, %v4883
    %v4932 = vadd.f32 %v4836, %v4884
    %v4933 = vadd.f32 %v4837, %v4885
    %v4934 = vadd.f32 %v4838, %v4886
    %v4935 = vadd.f32 %v4839, %v4887
    %v4936 = vadd.f32 %v4840, %v4888
    %v4937 = vadd.f32 %v4841, %v4889
    %v4938 = vadd.f32 %v4842, %v4890
    %v4939 = vadd.f32 %v4843, %v4891
    %v4940 = vadd.f32 %v4844, %v4892
    %v4941 = vadd.f32 %v4845, %v4893
    %v4942 = vadd.f32 %v4846, %v4894
    %v4943 = vadd.f32 %v4847, %v4895
    %v4944 = vadd.f32 %v4848, %v4896
    %v4945 = vadd.f32 %v4849, %v4897
    %v4946 = vadd.f32 %v4850, %v4898
    %v4947 = vadd.f32 %v4851, %v4899
    %v4948 = vadd.f32 %v4852, %v4900
    %v4949 = vadd.f32 %v4853, %v4901
    %v4950 = vadd.f32 %v4854, %v4902
    %v4951 = vadd.f32 %v4855, %v4903
    %v4952 = vadd.f32 %v4856, %v4904
    %v4953 = vadd.f32 %v4857, %v4905
    %v4954 = vadd.f32 %v4858, %v4906
    %v4955 = vadd.f32 %v4859, %v4907
    %v4956 = vadd.f32 %v4860, %v4908
    %v4957 = vadd.f32 %v4861, %v4909
    %v4958 = vadd.f32 %v4862, %v4910
    %v4959 = vadd.f32 %v4863, %v4911
    %v4960 = vadd.f32 %v4864, %v4912
    %v4961 = vadd.f32 %v4865, %v4913
    %v4962 = vadd.f32 %v4866, %v4914
    %v4963 = vadd.f32 %v4867, %v4915
    %v4964 = vadd.f32 %v4868, %v4916
    %v4965 = vadd.f32 %v4869, %v4917
    %v4966 = vadd.f32 %v4870, %v4918
    %v4967 = vadd.f32 %v4871, %v4919
    %v4968 = vld [vmem:[%s15] sm:$0x1]
    %v4970 = vlaneseq
    %v4971 = vshrl.u32 %v4970, 7
    %v4972 = vsub.s32 0, %v4971
    %v4973 = vrot.slane %v4968, %v4972
    %v4975 = vadd.f32 %v4920, %v4973
    %v4976 = vadd.f32 %v4921, %v4973
    %v4977 = vadd.f32 %v4922, %v4973
    %v4978 = vadd.f32 %v4923, %v4973
    %v4979 = vadd.f32 %v4924, %v4973
    %v4980 = vadd.f32 %v4925, %v4973
    %v4981 = vadd.f32 %v4926, %v4973
    %v4982 = vadd.f32 %v4927, %v4973
    %v4983 = vadd.f32 %v4928, %v4973
    %v4984 = vadd.f32 %v4929, %v4973
    %v4985 = vadd.f32 %v4930, %v4973
    %v4986 = vadd.f32 %v4931, %v4973
    %v4987 = vadd.f32 %v4932, %v4973
    %v4988 = vadd.f32 %v4933, %v4973
    %v4989 = vadd.f32 %v4934, %v4973
    %v4990 = vadd.f32 %v4935, %v4973
    %v4991 = vadd.f32 %v4936, %v4973
    %v4992 = vadd.f32 %v4937, %v4973
    %v4993 = vadd.f32 %v4938, %v4973
    %v4994 = vadd.f32 %v4939, %v4973
    %v4995 = vadd.f32 %v4940, %v4973
    %v4996 = vadd.f32 %v4941, %v4973
    %v4997 = vadd.f32 %v4942, %v4973
    %v4998 = vadd.f32 %v4943, %v4973
    %v4999 = vadd.f32 %v4944, %v4973
    %v5000 = vadd.f32 %v4945, %v4973
    %v5001 = vadd.f32 %v4946, %v4973
    %v5002 = vadd.f32 %v4947, %v4973
    %v5003 = vadd.f32 %v4948, %v4973
    %v5004 = vadd.f32 %v4949, %v4973
    %v5005 = vadd.f32 %v4950, %v4973
    %v5006 = vadd.f32 %v4951, %v4973
    %v5007 = vadd.f32 %v4952, %v4973
    %v5008 = vadd.f32 %v4953, %v4973
    %v5009 = vadd.f32 %v4954, %v4973
    %v5010 = vadd.f32 %v4955, %v4973
    %v5011 = vadd.f32 %v4956, %v4973
    %v5012 = vadd.f32 %v4957, %v4973
    %v5013 = vadd.f32 %v4958, %v4973
    %v5014 = vadd.f32 %v4959, %v4973
    %v5015 = vadd.f32 %v4960, %v4973
    %v5016 = vadd.f32 %v4961, %v4973
    %v5017 = vadd.f32 %v4962, %v4973
    %v5018 = vadd.f32 %v4963, %v4973
    %v5019 = vadd.f32 %v4964, %v4973
    %v5020 = vadd.f32 %v4965, %v4973
    %v5021 = vadd.f32 %v4966, %v4973
    %v5022 = vadd.f32 %v4967, %v4973
    %v5023 = vmax.f32 %v4975, 0.0
    %v5024 = vmax.f32 %v4976, 0.0
    %v5025 = vmax.f32 %v4977, 0.0
    %v5026 = vmax.f32 %v4978, 0.0
    %v5027 = vmax.f32 %v4979, 0.0
    %v5028 = vmax.f32 %v4980, 0.0
    %v5029 = vmax.f32 %v4981, 0.0
    %v5030 = vmax.f32 %v4982, 0.0
    %v5031 = vmax.f32 %v4983, 0.0
    %v5032 = vmax.f32 %v4984, 0.0
    %v5033 = vmax.f32 %v4985, 0.0
    %v5034 = vmax.f32 %v4986, 0.0
    %v5035 = vmax.f32 %v4987, 0.0
    %v5036 = vmax.f32 %v4988, 0.0
    %v5037 = vmax.f32 %v4989, 0.0
    %v5038 = vmax.f32 %v4990, 0.0
    %v5039 = vmax.f32 %v4991, 0.0
    %v5040 = vmax.f32 %v4992, 0.0
    %v5041 = vmax.f32 %v4993, 0.0
    %v5042 = vmax.f32 %v4994, 0.0
    %v5043 = vmax.f32 %v4995, 0.0
    %v5044 = vmax.f32 %v4996, 0.0
    %v5045 = vmax.f32 %v4997, 0.0
    %v5046 = vmax.f32 %v4998, 0.0
    %v5047 = vmax.f32 %v4999, 0.0
    %v5048 = vmax.f32 %v5000, 0.0
    %v5049 = vmax.f32 %v5001, 0.0
    %v5050 = vmax.f32 %v5002, 0.0
    %v5051 = vmax.f32 %v5003, 0.0
    %v5052 = vmax.f32 %v5004, 0.0
    %v5053 = vmax.f32 %v5005, 0.0
    %v5054 = vmax.f32 %v5006, 0.0
    %v5055 = vmax.f32 %v5007, 0.0
    %v5056 = vmax.f32 %v5008, 0.0
    %v5057 = vmax.f32 %v5009, 0.0
    %v5058 = vmax.f32 %v5010, 0.0
    %v5059 = vmax.f32 %v5011, 0.0
    %v5060 = vmax.f32 %v5012, 0.0
    %v5061 = vmax.f32 %v5013, 0.0
    %v5062 = vmax.f32 %v5014, 0.0
    %v5063 = vmax.f32 %v5015, 0.0
    %v5064 = vmax.f32 %v5016, 0.0
    %v5065 = vmax.f32 %v5017, 0.0
    %v5066 = vmax.f32 %v5018, 0.0
    %v5067 = vmax.f32 %v5019, 0.0
    %v5068 = vmax.f32 %v5020, 0.0
    %v5069 = vmax.f32 %v5021, 0.0
    %v5070 = vmax.f32 %v5022, 0.0
    %v5071 = vpack.c.bf16 %v5024, %v5023
    %v5072 = vpack.c.bf16 %v5026, %v5025
    %v5073 = vpack.c.bf16 %v5028, %v5027
    %v5074 = vpack.c.bf16 %v5030, %v5029
    %v5075 = vpack.c.bf16 %v5032, %v5031
    %v5076 = vpack.c.bf16 %v5034, %v5033
    %v5077 = vpack.c.bf16 %v5036, %v5035
    %v5078 = vpack.c.bf16 %v5038, %v5037
    %v5079 = vpack.c.bf16 %v5040, %v5039
    %v5080 = vpack.c.bf16 %v5042, %v5041
    %v5081 = vpack.c.bf16 %v5044, %v5043
    %v5082 = vpack.c.bf16 %v5046, %v5045
    %v5083 = vpack.c.bf16 %v5048, %v5047
    %v5084 = vpack.c.bf16 %v5050, %v5049
    %v5085 = vpack.c.bf16 %v5052, %v5051
    %v5086 = vpack.c.bf16 %v5054, %v5053
    %v5087 = vpack.c.bf16 %v5056, %v5055
    %v5088 = vpack.c.bf16 %v5058, %v5057
    %v5089 = vpack.c.bf16 %v5060, %v5059
    %v5090 = vpack.c.bf16 %v5062, %v5061
    %v5091 = vpack.c.bf16 %v5064, %v5063
    %v5092 = vpack.c.bf16 %v5066, %v5065
    %v5093 = vpack.c.bf16 %v5068, %v5067
    %v5094 = vpack.c.bf16 %v5070, %v5069
    %v5095 = vld [vmem:[%s16] sm:$0xf]
    %v5096 = vld [vmem:[%s16 + $0x4] sm:$0xf]
    %v5097 = vld [vmem:[%s16 + $0x8] sm:$0xf]
    %v5098 = vld [vmem:[%s16 + $0xc] sm:$0xf]
    %v5099 = vld [vmem:[%s16 + $0x10] sm:$0xf]
    %v5100 = vld [vmem:[%s16 + $0x14] sm:$0xf]
    %v5101 = vld [vmem:[%s16 + $0x18] sm:$0xf]
    %v5102 = vld [vmem:[%s16 + $0x1c] sm:$0xf]
    %v5103 = vld [vmem:[%s16 + $0x20] sm:$0xf]
    %v5104 = vld [vmem:[%s16 + $0x24] sm:$0xf]
    %v5105 = vld [vmem:[%s16 + $0x28] sm:$0xf]
    %v5106 = vld [vmem:[%s16 + $0x2c] sm:$0xf]
    %v5107 = vld [vmem:[%s16 + $0x30] sm:$0xf]
    %v5108 = vld [vmem:[%s16 + $0x34] sm:$0xf]
    %v5109 = vld [vmem:[%s16 + $0x38] sm:$0xf]
    %v5110 = vld [vmem:[%s16 + $0x3c] sm:$0xf]
    %v5127 = vunpack.c.l.b16 %v5095
    %v5128 = vunpack.c.l.b16 %v5096
    %v5129 = vunpack.c.l.b16 %v5097
    %v5130 = vunpack.c.l.b16 %v5098
    %v5131 = vunpack.c.l.b16 %v5099
    %v5132 = vunpack.c.l.b16 %v5100
    %v5133 = vunpack.c.l.b16 %v5101
    %v5134 = vunpack.c.l.b16 %v5102
    %v5135 = vunpack.c.l.b16 %v5103
    %v5136 = vunpack.c.l.b16 %v5104
    %v5137 = vunpack.c.l.b16 %v5105
    %v5138 = vunpack.c.l.b16 %v5106
    %v5139 = vunpack.c.l.b16 %v5107
    %v5140 = vunpack.c.l.b16 %v5108
    %v5141 = vunpack.c.l.b16 %v5109
    %v5142 = vunpack.c.l.b16 %v5110
    %v5143 = vpack.c.b16 %v5128, %v5127
    %v5144 = vpack.c.b16 %v5130, %v5129
    %v5145 = vpack.c.b16 %v5132, %v5131
    %v5146 = vpack.c.b16 %v5134, %v5133
    %v5147 = vpack.c.b16 %v5136, %v5135
    %v5148 = vpack.c.b16 %v5138, %v5137
    %v5149 = vpack.c.b16 %v5140, %v5139
    %v5150 = vpack.c.b16 %v5142, %v5141
    %5159 = vmatprep.subr.bf16.mxu0 0
    %5160 = vmatpush1.bf16.msra.mxu0 %v5150
    %5161 = vmatprep.subr.bf16.mxu0 0
    %5162 = vmatpush1.bf16.msra.mxu0 %v5149
    %5163 = vmatprep.subr.bf16.mxu0 0
    %5164 = vmatpush1.bf16.msra.mxu0 %v5148
    %5165 = vmatprep.subr.bf16.mxu0 0
    %5166 = vmatpush1.bf16.msra.mxu0 %v5147
    %5167 = vmatprep.subr.bf16.mxu0 0
    %5168 = vmatpush1.bf16.msra.mxu0 %v5146
    %5169 = vmatprep.subr.bf16.mxu0 0
    %5170 = vmatpush1.bf16.msra.mxu0 %v5145
    %5171 = vmatprep.subr.bf16.mxu0 0
    %5172 = vmatpush1.bf16.msra.mxu0 %v5144
    %5173 = vmatprep.subr.bf16.mxu0 0
    %5174 = vmatpush1.bf16.msra.mxu0 %v5143
    %5175 = vmatprep.subr.bf16.mxu0 0
    %5176 = vmatpush2.bf16.msra.mxu0 0
    %5177 = vmatprep.subr.bf16.mxu0 0
    %5178 = vmatpush2.bf16.msra.mxu0 0
    %5179 = vmatprep.subr.bf16.mxu0 0
    %5180 = vmatpush2.bf16.msra.mxu0 0
    %5181 = vmatprep.subr.bf16.mxu0 0
    %5182 = vmatpush2.bf16.msra.mxu0 0
    %5183 = vmatprep.subr.bf16.mxu0 0
    %5184 = vmatpush2.bf16.msra.mxu0 0
    %5185 = vmatprep.subr.bf16.mxu0 0
    %5186 = vmatpush2.bf16.msra.mxu0 0
    %5187 = vmatprep.subr.bf16.mxu0 0
    %5188 = vmatpush2.bf16.msra.mxu0 0
    %5189 = vmatprep.subr.bf16.mxu0 0
    %5190 = vmatpush2.bf16.msra.mxu0 0
    %5191 = vmatprep.mubr.bf16.mxu0 0
    %5192 = vmatmul.mubr.bf16.gmra.mxu0 %v5071
    %v5193 = vpop.f32.mrf.mxu0
    %v5194 = vadd.f32 0.0, %v5193
    %v5195 = vpop.f32.mrf.mxu0
    %v5196 = vpop.f32.mrf.mxu0
    %v5197 = vadd.f32 0.0, %v5196
    %v5198 = vpop.f32.mrf.mxu0
    %5199 = vmatprep.mubr.bf16.mxu0 0
    %5200 = vmatmul.mubr.bf16.gmra.mxu0 %v5072
    %v5201 = vpop.f32.mrf.mxu0
    %v5202 = vadd.f32 0.0, %v5201
    %v5203 = vpop.f32.mrf.mxu0
    %v5204 = vpop.f32.mrf.mxu0
    %v5205 = vadd.f32 0.0, %v5204
    %v5206 = vpop.f32.mrf.mxu0
    %5207 = vmatprep.mubr.bf16.mxu0 0
    %5208 = vmatmul.mubr.bf16.gmra.mxu0 %v5073
    %v5209 = vpop.f32.mrf.mxu0
    %v5210 = vadd.f32 0.0, %v5209
    %v5211 = vpop.f32.mrf.mxu0
    %v5212 = vpop.f32.mrf.mxu0
    %v5213 = vadd.f32 0.0, %v5212
    %v5214 = vpop.f32.mrf.mxu0
    %5215 = vmatprep.mubr.bf16.mxu0 0
    %5216 = vmatmul.mubr.bf16.gmra.mxu0 %v5074
    %v5217 = vpop.f32.mrf.mxu0
    %v5218 = vadd.f32 0.0, %v5217
    %v5219 = vpop.f32.mrf.mxu0
    %v5220 = vpop.f32.mrf.mxu0
    %v5221 = vadd.f32 0.0, %v5220
    %v5222 = vpop.f32.mrf.mxu0
    %5223 = vmatprep.mubr.bf16.mxu0 0
    %5224 = vmatmul.mubr.bf16.gmra.mxu0 %v5075
    %v5225 = vpop.f32.mrf.mxu0
    %v5226 = vadd.f32 0.0, %v5225
    %v5227 = vpop.f32.mrf.mxu0
    %v5228 = vpop.f32.mrf.mxu0
    %v5229 = vadd.f32 0.0, %v5228
    %v5230 = vpop.f32.mrf.mxu0
    %5231 = vmatprep.mubr.bf16.mxu0 0
    %5232 = vmatmul.mubr.bf16.gmra.mxu0 %v5076
    %v5233 = vpop.f32.mrf.mxu0
    %v5234 = vadd.f32 0.0, %v5233
    %v5235 = vpop.f32.mrf.mxu0
    %v5236 = vpop.f32.mrf.mxu0
    %v5237 = vadd.f32 0.0, %v5236
    %v5238 = vpop.f32.mrf.mxu0
    %5239 = vmatprep.mubr.bf16.mxu0 0
    %5240 = vmatmul.mubr.bf16.gmra.mxu0 %v5077
    %v5241 = vpop.f32.mrf.mxu0
    %v5242 = vadd.f32 0.0, %v5241
    %v5243 = vpop.f32.mrf.mxu0
    %v5244 = vpop.f32.mrf.mxu0
    %v5245 = vadd.f32 0.0, %v5244
    %v5246 = vpop.f32.mrf.mxu0
    %5247 = vmatprep.mubr.bf16.mxu0 0
    %5248 = vmatmul.mubr.bf16.gmra.mxu0 %v5078
    %v5249 = vpop.f32.mrf.mxu0
    %v5250 = vadd.f32 0.0, %v5249
    %v5251 = vpop.f32.mrf.mxu0
    %v5252 = vpop.f32.mrf.mxu0
    %v5253 = vadd.f32 0.0, %v5252
    %v5254 = vpop.f32.mrf.mxu0
    %5255 = vmatprep.mubr.bf16.mxu0 0
    %5256 = vmatmul.mubr.bf16.gmra.mxu0 %v5079
    %v5257 = vpop.f32.mrf.mxu0
    %v5258 = vadd.f32 0.0, %v5257
    %v5259 = vpop.f32.mrf.mxu0
    %v5260 = vpop.f32.mrf.mxu0
    %v5261 = vadd.f32 0.0, %v5260
    %v5262 = vpop.f32.mrf.mxu0
    %5263 = vmatprep.mubr.bf16.mxu0 0
    %5264 = vmatmul.mubr.bf16.gmra.mxu0 %v5080
    %v5265 = vpop.f32.mrf.mxu0
    %v5266 = vadd.f32 0.0, %v5265
    %v5267 = vpop.f32.mrf.mxu0
    %v5268 = vpop.f32.mrf.mxu0
    %v5269 = vadd.f32 0.0, %v5268
    %v5270 = vpop.f32.mrf.mxu0
    %5271 = vmatprep.mubr.bf16.mxu0 0
    %5272 = vmatmul.mubr.bf16.gmra.mxu0 %v5081
    %v5273 = vpop.f32.mrf.mxu0
    %v5274 = vadd.f32 0.0, %v5273
    %v5275 = vpop.f32.mrf.mxu0
    %v5276 = vpop.f32.mrf.mxu0
    %v5277 = vadd.f32 0.0, %v5276
    %v5278 = vpop.f32.mrf.mxu0
    %5279 = vmatprep.mubr.bf16.mxu0 0
    %5280 = vmatmul.mubr.bf16.gmra.mxu0 %v5082
    %v5281 = vpop.f32.mrf.mxu0
    %v5282 = vadd.f32 0.0, %v5281
    %v5283 = vpop.f32.mrf.mxu0
    %v5284 = vpop.f32.mrf.mxu0
    %v5285 = vadd.f32 0.0, %v5284
    %v5286 = vpop.f32.mrf.mxu0
    %5287 = vmatprep.mubr.bf16.mxu0 0
    %5288 = vmatmul.mubr.bf16.gmra.mxu0 %v5083
    %v5289 = vpop.f32.mrf.mxu0
    %v5290 = vadd.f32 0.0, %v5289
    %v5291 = vpop.f32.mrf.mxu0
    %v5292 = vpop.f32.mrf.mxu0
    %v5293 = vadd.f32 0.0, %v5292
    %v5294 = vpop.f32.mrf.mxu0
    %5295 = vmatprep.mubr.bf16.mxu0 0
    %5296 = vmatmul.mubr.bf16.gmra.mxu0 %v5084
    %v5297 = vpop.f32.mrf.mxu0
    %v5298 = vadd.f32 0.0, %v5297
    %v5299 = vpop.f32.mrf.mxu0
    %v5300 = vpop.f32.mrf.mxu0
    %v5301 = vadd.f32 0.0, %v5300
    %v5302 = vpop.f32.mrf.mxu0
    %5303 = vmatprep.mubr.bf16.mxu0 0
    %5304 = vmatmul.mubr.bf16.gmra.mxu0 %v5085
    %v5305 = vpop.f32.mrf.mxu0
    %v5306 = vadd.f32 0.0, %v5305
    %v5307 = vpop.f32.mrf.mxu0
    %v5308 = vpop.f32.mrf.mxu0
    %v5309 = vadd.f32 0.0, %v5308
    %v5310 = vpop.f32.mrf.mxu0
    %5311 = vmatprep.mubr.bf16.mxu0 0
    %5312 = vmatmul.mubr.bf16.gmra.mxu0 %v5086
    %v5313 = vpop.f32.mrf.mxu0
    %v5314 = vadd.f32 0.0, %v5313
    %v5315 = vpop.f32.mrf.mxu0
    %v5316 = vpop.f32.mrf.mxu0
    %v5317 = vadd.f32 0.0, %v5316
    %v5318 = vpop.f32.mrf.mxu0
    %5319 = vmatprep.mubr.bf16.mxu0 0
    %5320 = vmatmul.mubr.bf16.gmra.mxu0 %v5087
    %v5321 = vpop.f32.mrf.mxu0
    %v5322 = vadd.f32 0.0, %v5321
    %v5323 = vpop.f32.mrf.mxu0
    %v5324 = vpop.f32.mrf.mxu0
    %v5325 = vadd.f32 0.0, %v5324
    %v5326 = vpop.f32.mrf.mxu0
    %5327 = vmatprep.mubr.bf16.mxu0 0
    %5328 = vmatmul.mubr.bf16.gmra.mxu0 %v5088
    %v5329 = vpop.f32.mrf.mxu0
    %v5330 = vadd.f32 0.0, %v5329
    %v5331 = vpop.f32.mrf.mxu0
    %v5332 = vpop.f32.mrf.mxu0
    %v5333 = vadd.f32 0.0, %v5332
    %v5334 = vpop.f32.mrf.mxu0
    %5335 = vmatprep.mubr.bf16.mxu0 0
    %5336 = vmatmul.mubr.bf16.gmra.mxu0 %v5089
    %v5337 = vpop.f32.mrf.mxu0
    %v5338 = vadd.f32 0.0, %v5337
    %v5339 = vpop.f32.mrf.mxu0
    %v5340 = vpop.f32.mrf.mxu0
    %v5341 = vadd.f32 0.0, %v5340
    %v5342 = vpop.f32.mrf.mxu0
    %5343 = vmatprep.mubr.bf16.mxu0 0
    %5344 = vmatmul.mubr.bf16.gmra.mxu0 %v5090
    %v5345 = vpop.f32.mrf.mxu0
    %v5346 = vadd.f32 0.0, %v5345
    %v5347 = vpop.f32.mrf.mxu0
    %v5348 = vpop.f32.mrf.mxu0
    %v5349 = vadd.f32 0.0, %v5348
    %v5350 = vpop.f32.mrf.mxu0
    %5351 = vmatprep.mubr.bf16.mxu0 0
    %5352 = vmatmul.mubr.bf16.gmra.mxu0 %v5091
    %v5353 = vpop.f32.mrf.mxu0
    %v5354 = vadd.f32 0.0, %v5353
    %v5355 = vpop.f32.mrf.mxu0
    %v5356 = vpop.f32.mrf.mxu0
    %v5357 = vadd.f32 0.0, %v5356
    %v5358 = vpop.f32.mrf.mxu0
    %5359 = vmatprep.mubr.bf16.mxu0 0
    %5360 = vmatmul.mubr.bf16.gmra.mxu0 %v5092
    %v5361 = vpop.f32.mrf.mxu0
    %v5362 = vadd.f32 0.0, %v5361
    %v5363 = vpop.f32.mrf.mxu0
    %v5364 = vpop.f32.mrf.mxu0
    %v5365 = vadd.f32 0.0, %v5364
    %v5366 = vpop.f32.mrf.mxu0
    %5367 = vmatprep.mubr.bf16.mxu0 0
    %5368 = vmatmul.mubr.bf16.gmra.mxu0 %v5093
    %v5369 = vpop.f32.mrf.mxu0
    %v5370 = vadd.f32 0.0, %v5369
    %v5371 = vpop.f32.mrf.mxu0
    %v5372 = vpop.f32.mrf.mxu0
    %v5373 = vadd.f32 0.0, %v5372
    %v5374 = vpop.f32.mrf.mxu0
    %5375 = vmatprep.mubr.bf16.mxu0 0
    %5376 = vmatmul.mubr.bf16.gmra.mxu0 %v5094
    %v5377 = vpop.f32.mrf.mxu0
    %v5378 = vadd.f32 0.0, %v5377
    %v5379 = vpop.f32.mrf.mxu0
    %v5380 = vpop.f32.mrf.mxu0
    %v5381 = vadd.f32 0.0, %v5380
    %v5382 = vpop.f32.mrf.mxu0
    %5383 = vdwg.mxu0
    %v5384 = vmul.f32 %v4065, %v5194
    %v5385 = vmul.f32 %v4070, %v5197
    %v5386 = vmul.f32 %v4075, %v5202
    %v5387 = vmul.f32 %v4080, %v5205
    %v5388 = vmul.f32 %v4085, %v5210
    %v5389 = vmul.f32 %v4090, %v5213
    %v5390 = vmul.f32 %v4095, %v5218
    %v5391 = vmul.f32 %v4100, %v5221
    %v5392 = vmul.f32 %v4105, %v5226
    %v5393 = vmul.f32 %v4110, %v5229
    %v5394 = vmul.f32 %v4115, %v5234
    %v5395 = vmul.f32 %v4120, %v5237
    %v5396 = vmul.f32 %v4125, %v5242
    %v5397 = vmul.f32 %v4130, %v5245
    %v5398 = vmul.f32 %v4135, %v5250
    %v5399 = vmul.f32 %v4140, %v5253
    %v5400 = vmul.f32 %v4145, %v5258
    %v5401 = vmul.f32 %v4150, %v5261
    %v5402 = vmul.f32 %v4155, %v5266
    %v5403 = vmul.f32 %v4160, %v5269
    %v5404 = vmul.f32 %v4165, %v5274
    %v5405 = vmul.f32 %v4170, %v5277
    %v5406 = vmul.f32 %v4175, %v5282
    %v5407 = vmul.f32 %v4180, %v5285
    %v5408 = vmul.f32 %v4185, %v5290
    %v5409 = vmul.f32 %v4190, %v5293
    %v5410 = vmul.f32 %v4195, %v5298
    %v5411 = vmul.f32 %v4200, %v5301
    %v5412 = vmul.f32 %v4205, %v5306
    %v5413 = vmul.f32 %v4210, %v5309
    %v5414 = vmul.f32 %v4215, %v5314
    %v5415 = vmul.f32 %v4220, %v5317
    %v5416 = vmul.f32 %v4225, %v5322
    %v5417 = vmul.f32 %v4230, %v5325
    %v5418 = vmul.f32 %v4235, %v5330
    %v5419 = vmul.f32 %v4240, %v5333
    %v5420 = vmul.f32 %v4245, %v5338
    %v5421 = vmul.f32 %v4250, %v5341
    %v5422 = vmul.f32 %v4255, %v5346
    %v5423 = vmul.f32 %v4260, %v5349
    %v5424 = vmul.f32 %v4265, %v5354
    %v5425 = vmul.f32 %v4270, %v5357
    %v5426 = vmul.f32 %v4275, %v5362
    %v5427 = vmul.f32 %v4280, %v5365
    %v5428 = vmul.f32 %v4285, %v5370
    %v5429 = vmul.f32 %v4290, %v5373
    %v5430 = vmul.f32 %v4295, %v5378
    %v5431 = vmul.f32 %v4300, %v5381
    %v5432 = vpack.c.bf16 %v5385, %v5384
    %v5433 = vpack.c.bf16 %v5387, %v5386
    %v5434 = vpack.c.bf16 %v5389, %v5388
    %v5435 = vpack.c.bf16 %v5391, %v5390
    %v5436 = vpack.c.bf16 %v5393, %v5392
    %v5437 = vpack.c.bf16 %v5395, %v5394
    %v5438 = vpack.c.bf16 %v5397, %v5396
    %v5439 = vpack.c.bf16 %v5399, %v5398
    %v5440 = vpack.c.bf16 %v5401, %v5400
    %v5441 = vpack.c.bf16 %v5403, %v5402
    %v5442 = vpack.c.bf16 %v5405, %v5404
    %v5443 = vpack.c.bf16 %v5407, %v5406
    %v5444 = vpack.c.bf16 %v5409, %v5408
    %v5445 = vpack.c.bf16 %v5411, %v5410
    %v5446 = vpack.c.bf16 %v5413, %v5412
    %v5447 = vpack.c.bf16 %v5415, %v5414
    %v5448 = vpack.c.bf16 %v5417, %v5416
    %v5449 = vpack.c.bf16 %v5419, %v5418
    %v5450 = vpack.c.bf16 %v5421, %v5420
    %v5451 = vpack.c.bf16 %v5423, %v5422
    %v5452 = vpack.c.bf16 %v5425, %v5424
    %v5453 = vpack.c.bf16 %v5427, %v5426
    %v5454 = vpack.c.bf16 %v5429, %v5428
    %v5455 = vpack.c.bf16 %v5431, %v5430
    %5456 = vmatprep.subr.bf16.mxu0 0
    %5457 = vmatpush1.bf16.msra.mxu0 %v5439
    %5458 = vmatprep.subr.bf16.mxu0 0
    %5459 = vmatpush1.bf16.msra.mxu0 %v5438
    %5460 = vmatprep.subr.bf16.mxu0 0
    %5461 = vmatpush1.bf16.msra.mxu0 %v5437
    %5462 = vmatprep.subr.bf16.mxu0 0
    %5463 = vmatpush1.bf16.msra.mxu0 %v5436
    %5464 = vmatprep.subr.bf16.mxu0 0
    %5465 = vmatpush1.bf16.msra.mxu0 %v5435
    %5466 = vmatprep.subr.bf16.mxu0 0
    %5467 = vmatpush1.bf16.msra.mxu0 %v5434
    %5468 = vmatprep.subr.bf16.mxu0 0
    %5469 = vmatpush1.bf16.msra.mxu0 %v5433
    %5470 = vmatprep.subr.bf16.mxu0 0
    %5471 = vmatpush1.bf16.msra.mxu0 %v5432
    %5472 = vmatprep.subr.bf16.mxu0 0
    %5473 = vmatpush2.bf16.msra.mxu0 %v5447
    %5474 = vmatprep.subr.bf16.mxu0 0
    %5475 = vmatpush2.bf16.msra.mxu0 %v5446
    %5476 = vmatprep.subr.bf16.mxu0 0
    %5477 = vmatpush2.bf16.msra.mxu0 %v5445
    %5478 = vmatprep.subr.bf16.mxu0 0
    %5479 = vmatpush2.bf16.msra.mxu0 %v5444
    %5480 = vmatprep.subr.bf16.mxu0 0
    %5481 = vmatpush2.bf16.msra.mxu0 %v5443
    %5482 = vmatprep.subr.bf16.mxu0 0
    %5483 = vmatpush2.bf16.msra.mxu0 %v5442
    %5484 = vmatprep.subr.bf16.mxu0 0
    %5485 = vmatpush2.bf16.msra.mxu0 %v5441
    %5486 = vmatprep.subr.bf16.mxu0 0
    %5487 = vmatpush2.bf16.msra.mxu0 %v5440
    %5488 = vmatprep.mubr.bf16.mxu0 %v2669
    %5489 = vmatmul.mubr.bf16.gmra.mxu0 %v2668
    %v5490 = vpop.f32.mrf.mxu0
    %v5491 = vadd.f32 0.0, %v5490
    %v5492 = vpop.f32.mrf.mxu0
    %v5493 = vpop.f32.mrf.mxu0
    %v5494 = vadd.f32 0.0, %v5493
    %v5495 = vpop.f32.mrf.mxu0
    %5496 = vmatprep.mubr.bf16.mxu0 %v2672
    %5497 = vmatmul.mubr.bf16.gmra.mxu0 %v2671
    %v5498 = vpop.f32.mrf.mxu0
    %v5499 = vadd.f32 0.0, %v5498
    %v5500 = vpop.f32.mrf.mxu0
    %v5501 = vpop.f32.mrf.mxu0
    %v5502 = vadd.f32 0.0, %v5501
    %v5503 = vpop.f32.mrf.mxu0
    %5504 = vmatprep.mubr.bf16.mxu0 %v2675
    %5505 = vmatmul.mubr.bf16.gmra.mxu0 %v2674
    %v5506 = vpop.f32.mrf.mxu0
    %v5507 = vadd.f32 0.0, %v5506
    %v5508 = vpop.f32.mrf.mxu0
    %v5509 = vpop.f32.mrf.mxu0
    %v5510 = vadd.f32 0.0, %v5509
    %v5511 = vpop.f32.mrf.mxu0
    %5512 = vmatprep.mubr.bf16.mxu0 %v2678
    %5513 = vmatmul.mubr.bf16.gmra.mxu0 %v2677
    %v5514 = vpop.f32.mrf.mxu0
    %v5515 = vadd.f32 0.0, %v5514
    %v5516 = vpop.f32.mrf.mxu0
    %v5517 = vpop.f32.mrf.mxu0
    %v5518 = vadd.f32 0.0, %v5517
    %v5519 = vpop.f32.mrf.mxu0
    %5520 = vmatprep.mubr.bf16.mxu0 %v2681
    %5521 = vmatmul.mubr.bf16.gmra.mxu0 %v2680
    %v5522 = vpop.f32.mrf.mxu0
    %v5523 = vadd.f32 0.0, %v5522
    %v5524 = vpop.f32.mrf.mxu0
    %v5525 = vpop.f32.mrf.mxu0
    %v5526 = vadd.f32 0.0, %v5525
    %v5527 = vpop.f32.mrf.mxu0
    %5528 = vmatprep.mubr.bf16.mxu0 %v2684
    %5529 = vmatmul.mubr.bf16.gmra.mxu0 %v2683
    %v5530 = vpop.f32.mrf.mxu0
    %v5531 = vadd.f32 0.0, %v5530
    %v5532 = vpop.f32.mrf.mxu0
    %v5533 = vpop.f32.mrf.mxu0
    %v5534 = vadd.f32 0.0, %v5533
    %v5535 = vpop.f32.mrf.mxu0
    %5536 = vmatprep.mubr.bf16.mxu0 %v2687
    %5537 = vmatmul.mubr.bf16.gmra.mxu0 %v2686
    %v5538 = vpop.f32.mrf.mxu0
    %v5539 = vadd.f32 0.0, %v5538
    %v5540 = vpop.f32.mrf.mxu0
    %v5541 = vpop.f32.mrf.mxu0
    %v5542 = vadd.f32 0.0, %v5541
    %v5543 = vpop.f32.mrf.mxu0
    %5544 = vmatprep.mubr.bf16.mxu0 %v2690
    %5545 = vmatmul.mubr.bf16.gmra.mxu0 %v2689
    %v5546 = vpop.f32.mrf.mxu0
    %v5547 = vadd.f32 0.0, %v5546
    %v5548 = vpop.f32.mrf.mxu0
    %v5549 = vpop.f32.mrf.mxu0
    %v5550 = vadd.f32 0.0, %v5549
    %v5551 = vpop.f32.mrf.mxu0
    %5552 = vmatprep.mubr.bf16.mxu0 %v2693
    %5553 = vmatmul.mubr.bf16.gmra.mxu0 %v2692
    %v5554 = vpop.f32.mrf.mxu0
    %v5555 = vadd.f32 0.0, %v5554
    %v5556 = vpop.f32.mrf.mxu0
    %v5557 = vpop.f32.mrf.mxu0
    %v5558 = vadd.f32 0.0, %v5557
    %v5559 = vpop.f32.mrf.mxu0
    %5560 = vmatprep.mubr.bf16.mxu0 %v2696
    %5561 = vmatmul.mubr.bf16.gmra.mxu0 %v2695
    %v5562 = vpop.f32.mrf.mxu0
    %v5563 = vadd.f32 0.0, %v5562
    %v5564 = vpop.f32.mrf.mxu0
    %v5565 = vpop.f32.mrf.mxu0
    %v5566 = vadd.f32 0.0, %v5565
    %v5567 = vpop.f32.mrf.mxu0
    %5568 = vmatprep.mubr.bf16.mxu0 %v2699
    %5569 = vmatmul.mubr.bf16.gmra.mxu0 %v2698
    %v5570 = vpop.f32.mrf.mxu0
    %v5571 = vadd.f32 0.0, %v5570
    %v5572 = vpop.f32.mrf.mxu0
    %v5573 = vpop.f32.mrf.mxu0
    %v5574 = vadd.f32 0.0, %v5573
    %v5575 = vpop.f32.mrf.mxu0
    %5576 = vmatprep.mubr.bf16.mxu0 %v2702
    %5577 = vmatmul.mubr.bf16.gmra.mxu0 %v2701
    %v5578 = vpop.f32.mrf.mxu0
    %v5579 = vadd.f32 0.0, %v5578
    %v5580 = vpop.f32.mrf.mxu0
    %v5581 = vpop.f32.mrf.mxu0
    %v5582 = vadd.f32 0.0, %v5581
    %v5583 = vpop.f32.mrf.mxu0
    %5584 = vmatprep.mubr.bf16.mxu0 %v2705
    %5585 = vmatmul.mubr.bf16.gmra.mxu0 %v2704
    %v5586 = vpop.f32.mrf.mxu0
    %v5587 = vadd.f32 0.0, %v5586
    %v5588 = vpop.f32.mrf.mxu0
    %v5589 = vpop.f32.mrf.mxu0
    %v5590 = vadd.f32 0.0, %v5589
    %v5591 = vpop.f32.mrf.mxu0
    %5592 = vmatprep.mubr.bf16.mxu0 %v2708
    %5593 = vmatmul.mubr.bf16.gmra.mxu0 %v2707
    %v5594 = vpop.f32.mrf.mxu0
    %v5595 = vadd.f32 0.0, %v5594
    %v5596 = vpop.f32.mrf.mxu0
    %v5597 = vpop.f32.mrf.mxu0
    %v5598 = vadd.f32 0.0, %v5597
    %v5599 = vpop.f32.mrf.mxu0
    %5600 = vmatprep.mubr.bf16.mxu0 %v2711
    %5601 = vmatmul.mubr.bf16.gmra.mxu0 %v2710
    %v5602 = vpop.f32.mrf.mxu0
    %v5603 = vadd.f32 0.0, %v5602
    %v5604 = vpop.f32.mrf.mxu0
    %v5605 = vpop.f32.mrf.mxu0
    %v5606 = vadd.f32 0.0, %v5605
    %v5607 = vpop.f32.mrf.mxu0
    %5608 = vmatprep.mubr.bf16.mxu0 %v2714
    %5609 = vmatmul.mubr.bf16.gmra.mxu0 %v2713
    %v5610 = vpop.f32.mrf.mxu0
    %v5611 = vadd.f32 0.0, %v5610
    %v5612 = vpop.f32.mrf.mxu0
    %v5613 = vpop.f32.mrf.mxu0
    %v5614 = vadd.f32 0.0, %v5613
    %v5615 = vpop.f32.mrf.mxu0
    %5616 = vmatprep.mubr.bf16.mxu0 %v2717
    %5617 = vmatmul.mubr.bf16.gmra.mxu0 %v2716
    %v5618 = vpop.f32.mrf.mxu0
    %v5619 = vadd.f32 0.0, %v5618
    %v5620 = vpop.f32.mrf.mxu0
    %v5621 = vpop.f32.mrf.mxu0
    %v5622 = vadd.f32 0.0, %v5621
    %v5623 = vpop.f32.mrf.mxu0
    %5624 = vmatprep.mubr.bf16.mxu0 %v2720
    %5625 = vmatmul.mubr.bf16.gmra.mxu0 %v2719
    %v5626 = vpop.f32.mrf.mxu0
    %v5627 = vadd.f32 0.0, %v5626
    %v5628 = vpop.f32.mrf.mxu0
    %v5629 = vpop.f32.mrf.mxu0
    %v5630 = vadd.f32 0.0, %v5629
    %v5631 = vpop.f32.mrf.mxu0
    %5632 = vmatprep.mubr.bf16.mxu0 %v2723
    %5633 = vmatmul.mubr.bf16.gmra.mxu0 %v2722
    %v5634 = vpop.f32.mrf.mxu0
    %v5635 = vadd.f32 0.0, %v5634
    %v5636 = vpop.f32.mrf.mxu0
    %v5637 = vpop.f32.mrf.mxu0
    %v5638 = vadd.f32 0.0, %v5637
    %v5639 = vpop.f32.mrf.mxu0
    %5640 = vmatprep.mubr.bf16.mxu0 %v2726
    %5641 = vmatmul.mubr.bf16.gmra.mxu0 %v2725
    %v5642 = vpop.f32.mrf.mxu0
    %v5643 = vadd.f32 0.0, %v5642
    %v5644 = vpop.f32.mrf.mxu0
    %v5645 = vpop.f32.mrf.mxu0
    %v5646 = vadd.f32 0.0, %v5645
    %v5647 = vpop.f32.mrf.mxu0
    %5648 = vmatprep.mubr.bf16.mxu0 %v2729
    %5649 = vmatmul.mubr.bf16.gmra.mxu0 %v2728
    %v5650 = vpop.f32.mrf.mxu0
    %v5651 = vadd.f32 0.0, %v5650
    %v5652 = vpop.f32.mrf.mxu0
    %v5653 = vpop.f32.mrf.mxu0
    %v5654 = vadd.f32 0.0, %v5653
    %v5655 = vpop.f32.mrf.mxu0
    %5656 = vmatprep.mubr.bf16.mxu0 %v2732
    %5657 = vmatmul.mubr.bf16.gmra.mxu0 %v2731
    %v5658 = vpop.f32.mrf.mxu0
    %v5659 = vadd.f32 0.0, %v5658
    %v5660 = vpop.f32.mrf.mxu0
    %v5661 = vpop.f32.mrf.mxu0
    %v5662 = vadd.f32 0.0, %v5661
    %v5663 = vpop.f32.mrf.mxu0
    %5664 = vmatprep.mubr.bf16.mxu0 %v2735
    %5665 = vmatmul.mubr.bf16.gmra.mxu0 %v2734
    %v5666 = vpop.f32.mrf.mxu0
    %v5667 = vadd.f32 0.0, %v5666
    %v5668 = vpop.f32.mrf.mxu0
    %v5669 = vpop.f32.mrf.mxu0
    %v5670 = vadd.f32 0.0, %v5669
    %v5671 = vpop.f32.mrf.mxu0
    %5672 = vmatprep.mubr.bf16.mxu0 %v2738
    %5673 = vmatmul.mubr.bf16.gmra.mxu0 %v2737
    %v5674 = vpop.f32.mrf.mxu0
    %v5675 = vadd.f32 0.0, %v5674
    %v5676 = vpop.f32.mrf.mxu0
    %v5677 = vpop.f32.mrf.mxu0
    %v5678 = vadd.f32 0.0, %v5677
    %v5679 = vpop.f32.mrf.mxu0
    %5680 = vdwg.mxu0
    %5681 = vmatprep.subr.bf16.mxu0 0
    %5682 = vmatpush1.bf16.msra.mxu0 %v5455
    %5683 = vmatprep.subr.bf16.mxu0 0
    %5684 = vmatpush1.bf16.msra.mxu0 %v5454
    %5685 = vmatprep.subr.bf16.mxu0 0
    %5686 = vmatpush1.bf16.msra.mxu0 %v5453
    %5687 = vmatprep.subr.bf16.mxu0 0
    %5688 = vmatpush1.bf16.msra.mxu0 %v5452
    %5689 = vmatprep.subr.bf16.mxu0 0
    %5690 = vmatpush1.bf16.msra.mxu0 %v5451
    %5691 = vmatprep.subr.bf16.mxu0 0
    %5692 = vmatpush1.bf16.msra.mxu0 %v5450
    %5693 = vmatprep.subr.bf16.mxu0 0
    %5694 = vmatpush1.bf16.msra.mxu0 %v5449
    %5695 = vmatprep.subr.bf16.mxu0 0
    %5696 = vmatpush1.bf16.msra.mxu0 %v5448
    %5697 = vmatprep.subr.bf16.mxu0 0
    %5698 = vmatpush2.bf16.msra.mxu0 0
    %5699 = vmatprep.subr.bf16.mxu0 0
    %5700 = vmatpush2.bf16.msra.mxu0 0
    %5701 = vmatprep.subr.bf16.mxu0 0
    %5702 = vmatpush2.bf16.msra.mxu0 0
    %5703 = vmatprep.subr.bf16.mxu0 0
    %5704 = vmatpush2.bf16.msra.mxu0 0
    %5705 = vmatprep.subr.bf16.mxu0 0
    %5706 = vmatpush2.bf16.msra.mxu0 0
    %5707 = vmatprep.subr.bf16.mxu0 0
    %5708 = vmatpush2.bf16.msra.mxu0 0
    %5709 = vmatprep.subr.bf16.mxu0 0
    %5710 = vmatpush2.bf16.msra.mxu0 0
    %5711 = vmatprep.subr.bf16.mxu0 0
    %5712 = vmatpush2.bf16.msra.mxu0 0
    %5713 = vmatprep.mubr.bf16.mxu0 0
    %5714 = vmatmul.mubr.bf16.gmra.mxu0 %v2670
    %v5715 = vpop.f32.mrf.mxu0
    %v5716 = vadd.f32 %v5491, %v5715
    %v5717 = vpop.f32.mrf.mxu0
    %v5718 = vpop.f32.mrf.mxu0
    %v5719 = vadd.f32 %v5494, %v5718
    %v5720 = vpop.f32.mrf.mxu0
    %5721 = vmatprep.mubr.bf16.mxu0 0
    %5722 = vmatmul.mubr.bf16.gmra.mxu0 %v2673
    %v5723 = vpop.f32.mrf.mxu0
    %v5724 = vadd.f32 %v5499, %v5723
    %v5725 = vpop.f32.mrf.mxu0
    %v5726 = vpop.f32.mrf.mxu0
    %v5727 = vadd.f32 %v5502, %v5726
    %v5728 = vpop.f32.mrf.mxu0
    %5729 = vmatprep.mubr.bf16.mxu0 0
    %5730 = vmatmul.mubr.bf16.gmra.mxu0 %v2676
    %v5731 = vpop.f32.mrf.mxu0
    %v5732 = vadd.f32 %v5507, %v5731
    %v5733 = vpop.f32.mrf.mxu0
    %v5734 = vpop.f32.mrf.mxu0
    %v5735 = vadd.f32 %v5510, %v5734
    %v5736 = vpop.f32.mrf.mxu0
    %5737 = vmatprep.mubr.bf16.mxu0 0
    %5738 = vmatmul.mubr.bf16.gmra.mxu0 %v2679
    %v5739 = vpop.f32.mrf.mxu0
    %v5740 = vadd.f32 %v5515, %v5739
    %v5741 = vpop.f32.mrf.mxu0
    %v5742 = vpop.f32.mrf.mxu0
    %v5743 = vadd.f32 %v5518, %v5742
    %v5744 = vpop.f32.mrf.mxu0
    %5745 = vmatprep.mubr.bf16.mxu0 0
    %5746 = vmatmul.mubr.bf16.gmra.mxu0 %v2682
    %v5747 = vpop.f32.mrf.mxu0
    %v5748 = vadd.f32 %v5523, %v5747
    %v5749 = vpop.f32.mrf.mxu0
    %v5750 = vpop.f32.mrf.mxu0
    %v5751 = vadd.f32 %v5526, %v5750
    %v5752 = vpop.f32.mrf.mxu0
    %5753 = vmatprep.mubr.bf16.mxu0 0
    %5754 = vmatmul.mubr.bf16.gmra.mxu0 %v2685
    %v5755 = vpop.f32.mrf.mxu0
    %v5756 = vadd.f32 %v5531, %v5755
    %v5757 = vpop.f32.mrf.mxu0
    %v5758 = vpop.f32.mrf.mxu0
    %v5759 = vadd.f32 %v5534, %v5758
    %v5760 = vpop.f32.mrf.mxu0
    %5761 = vmatprep.mubr.bf16.mxu0 0
    %5762 = vmatmul.mubr.bf16.gmra.mxu0 %v2688
    %v5763 = vpop.f32.mrf.mxu0
    %v5764 = vadd.f32 %v5539, %v5763
    %v5765 = vpop.f32.mrf.mxu0
    %v5766 = vpop.f32.mrf.mxu0
    %v5767 = vadd.f32 %v5542, %v5766
    %v5768 = vpop.f32.mrf.mxu0
    %5769 = vmatprep.mubr.bf16.mxu0 0
    %5770 = vmatmul.mubr.bf16.gmra.mxu0 %v2691
    %v5771 = vpop.f32.mrf.mxu0
    %v5772 = vadd.f32 %v5547, %v5771
    %v5773 = vpop.f32.mrf.mxu0
    %v5774 = vpop.f32.mrf.mxu0
    %v5775 = vadd.f32 %v5550, %v5774
    %v5776 = vpop.f32.mrf.mxu0
    %5777 = vmatprep.mubr.bf16.mxu0 0
    %5778 = vmatmul.mubr.bf16.gmra.mxu0 %v2694
    %v5779 = vpop.f32.mrf.mxu0
    %v5780 = vadd.f32 %v5555, %v5779
    %v5781 = vpop.f32.mrf.mxu0
    %v5782 = vpop.f32.mrf.mxu0
    %v5783 = vadd.f32 %v5558, %v5782
    %v5784 = vpop.f32.mrf.mxu0
    %5785 = vmatprep.mubr.bf16.mxu0 0
    %5786 = vmatmul.mubr.bf16.gmra.mxu0 %v2697
    %v5787 = vpop.f32.mrf.mxu0
    %v5788 = vadd.f32 %v5563, %v5787
    %v5789 = vpop.f32.mrf.mxu0
    %v5790 = vpop.f32.mrf.mxu0
    %v5791 = vadd.f32 %v5566, %v5790
    %v5792 = vpop.f32.mrf.mxu0
    %5793 = vmatprep.mubr.bf16.mxu0 0
    %5794 = vmatmul.mubr.bf16.gmra.mxu0 %v2700
    %v5795 = vpop.f32.mrf.mxu0
    %v5796 = vadd.f32 %v5571, %v5795
    %v5797 = vpop.f32.mrf.mxu0
    %v5798 = vpop.f32.mrf.mxu0
    %v5799 = vadd.f32 %v5574, %v5798
    %v5800 = vpop.f32.mrf.mxu0
    %5801 = vmatprep.mubr.bf16.mxu0 0
    %5802 = vmatmul.mubr.bf16.gmra.mxu0 %v2703
    %v5803 = vpop.f32.mrf.mxu0
    %v5804 = vadd.f32 %v5579, %v5803
    %v5805 = vpop.f32.mrf.mxu0
    %v5806 = vpop.f32.mrf.mxu0
    %v5807 = vadd.f32 %v5582, %v5806
    %v5808 = vpop.f32.mrf.mxu0
    %5809 = vmatprep.mubr.bf16.mxu0 0
    %5810 = vmatmul.mubr.bf16.gmra.mxu0 %v2706
    %v5811 = vpop.f32.mrf.mxu0
    %v5812 = vadd.f32 %v5587, %v5811
    %v5813 = vpop.f32.mrf.mxu0
    %v5814 = vpop.f32.mrf.mxu0
    %v5815 = vadd.f32 %v5590, %v5814
    %v5816 = vpop.f32.mrf.mxu0
    %5817 = vmatprep.mubr.bf16.mxu0 0
    %5818 = vmatmul.mubr.bf16.gmra.mxu0 %v2709
    %v5819 = vpop.f32.mrf.mxu0
    %v5820 = vadd.f32 %v5595, %v5819
    %v5821 = vpop.f32.mrf.mxu0
    %v5822 = vpop.f32.mrf.mxu0
    %v5823 = vadd.f32 %v5598, %v5822
    %v5824 = vpop.f32.mrf.mxu0
    %5825 = vmatprep.mubr.bf16.mxu0 0
    %5826 = vmatmul.mubr.bf16.gmra.mxu0 %v2712
    %v5827 = vpop.f32.mrf.mxu0
    %v5828 = vadd.f32 %v5603, %v5827
    %v5829 = vpop.f32.mrf.mxu0
    %v5830 = vpop.f32.mrf.mxu0
    %v5831 = vadd.f32 %v5606, %v5830
    %v5832 = vpop.f32.mrf.mxu0
    %5833 = vmatprep.mubr.bf16.mxu0 0
    %5834 = vmatmul.mubr.bf16.gmra.mxu0 %v2715
    %v5835 = vpop.f32.mrf.mxu0
    %v5836 = vadd.f32 %v5611, %v5835
    %v5837 = vpop.f32.mrf.mxu0
    %v5838 = vpop.f32.mrf.mxu0
    %v5839 = vadd.f32 %v5614, %v5838
    %v5840 = vpop.f32.mrf.mxu0
    %5841 = vmatprep.mubr.bf16.mxu0 0
    %5842 = vmatmul.mubr.bf16.gmra.mxu0 %v2718
    %v5843 = vpop.f32.mrf.mxu0
    %v5844 = vadd.f32 %v5619, %v5843
    %v5845 = vpop.f32.mrf.mxu0
    %v5846 = vpop.f32.mrf.mxu0
    %v5847 = vadd.f32 %v5622, %v5846
    %v5848 = vpop.f32.mrf.mxu0
    %5849 = vmatprep.mubr.bf16.mxu0 0
    %5850 = vmatmul.mubr.bf16.gmra.mxu0 %v2721
    %v5851 = vpop.f32.mrf.mxu0
    %v5852 = vadd.f32 %v5627, %v5851
    %v5853 = vpop.f32.mrf.mxu0
    %v5854 = vpop.f32.mrf.mxu0
    %v5855 = vadd.f32 %v5630, %v5854
    %v5856 = vpop.f32.mrf.mxu0
    %5857 = vmatprep.mubr.bf16.mxu0 0
    %5858 = vmatmul.mubr.bf16.gmra.mxu0 %v2724
    %v5859 = vpop.f32.mrf.mxu0
    %v5860 = vadd.f32 %v5635, %v5859
    %v5861 = vpop.f32.mrf.mxu0
    %v5862 = vpop.f32.mrf.mxu0
    %v5863 = vadd.f32 %v5638, %v5862
    %v5864 = vpop.f32.mrf.mxu0
    %5865 = vmatprep.mubr.bf16.mxu0 0
    %5866 = vmatmul.mubr.bf16.gmra.mxu0 %v2727
    %v5867 = vpop.f32.mrf.mxu0
    %v5868 = vadd.f32 %v5643, %v5867
    %v5869 = vpop.f32.mrf.mxu0
    %v5870 = vpop.f32.mrf.mxu0
    %v5871 = vadd.f32 %v5646, %v5870
    %v5872 = vpop.f32.mrf.mxu0
    %5873 = vmatprep.mubr.bf16.mxu0 0
    %5874 = vmatmul.mubr.bf16.gmra.mxu0 %v2730
    %v5875 = vpop.f32.mrf.mxu0
    %v5876 = vadd.f32 %v5651, %v5875
    %v5877 = vpop.f32.mrf.mxu0
    %v5878 = vpop.f32.mrf.mxu0
    %v5879 = vadd.f32 %v5654, %v5878
    %v5880 = vpop.f32.mrf.mxu0
    %5881 = vmatprep.mubr.bf16.mxu0 0
    %5882 = vmatmul.mubr.bf16.gmra.mxu0 %v2733
    %v5883 = vpop.f32.mrf.mxu0
    %v5884 = vadd.f32 %v5659, %v5883
    %v5885 = vpop.f32.mrf.mxu0
    %v5886 = vpop.f32.mrf.mxu0
    %v5887 = vadd.f32 %v5662, %v5886
    %v5888 = vpop.f32.mrf.mxu0
    %5889 = vmatprep.mubr.bf16.mxu0 0
    %5890 = vmatmul.mubr.bf16.gmra.mxu0 %v2736
    %v5891 = vpop.f32.mrf.mxu0
    %v5892 = vadd.f32 %v5667, %v5891
    %v5893 = vpop.f32.mrf.mxu0
    %v5894 = vpop.f32.mrf.mxu0
    %v5895 = vadd.f32 %v5670, %v5894
    %v5896 = vpop.f32.mrf.mxu0
    %5897 = vmatprep.mubr.bf16.mxu0 0
    %5898 = vmatmul.mubr.bf16.gmra.mxu0 %v2739
    %v5899 = vpop.f32.mrf.mxu0
    %v5900 = vadd.f32 %v5675, %v5899
    %v5901 = vpop.f32.mrf.mxu0
    %v5902 = vpop.f32.mrf.mxu0
    %v5903 = vadd.f32 %v5678, %v5902
    %v5904 = vpop.f32.mrf.mxu0
    %5905 = vdwg.mxu0
    %v5906 = vmul.f32 %v4065, %v5716
    %v5907 = vmul.f32 %v4070, %v5719
    %v5908 = vmul.f32 %v4075, %v5724
    %v5909 = vmul.f32 %v4080, %v5727
    %v5910 = vmul.f32 %v4085, %v5732
    %v5911 = vmul.f32 %v4090, %v5735
    %v5912 = vmul.f32 %v4095, %v5740
    %v5913 = vmul.f32 %v4100, %v5743
    %v5914 = vmul.f32 %v4105, %v5748
    %v5915 = vmul.f32 %v4110, %v5751
    %v5916 = vmul.f32 %v4115, %v5756
    %v5917 = vmul.f32 %v4120, %v5759
    %v5918 = vmul.f32 %v4125, %v5764
    %v5919 = vmul.f32 %v4130, %v5767
    %v5920 = vmul.f32 %v4135, %v5772
    %v5921 = vmul.f32 %v4140, %v5775
    %v5922 = vmul.f32 %v4145, %v5780
    %v5923 = vmul.f32 %v4150, %v5783
    %v5924 = vmul.f32 %v4155, %v5788
    %v5925 = vmul.f32 %v4160, %v5791
    %v5926 = vmul.f32 %v4165, %v5796
    %v5927 = vmul.f32 %v4170, %v5799
    %v5928 = vmul.f32 %v4175, %v5804
    %v5929 = vmul.f32 %v4180, %v5807
    %v5930 = vmul.f32 %v4185, %v5812
    %v5931 = vmul.f32 %v4190, %v5815
    %v5932 = vmul.f32 %v4195, %v5820
    %v5933 = vmul.f32 %v4200, %v5823
    %v5934 = vmul.f32 %v4205, %v5828
    %v5935 = vmul.f32 %v4210, %v5831
    %v5936 = vmul.f32 %v4215, %v5836
    %v5937 = vmul.f32 %v4220, %v5839
    %v5938 = vmul.f32 %v4225, %v5844
    %v5939 = vmul.f32 %v4230, %v5847
    %v5940 = vmul.f32 %v4235, %v5852
    %v5941 = vmul.f32 %v4240, %v5855
    %v5942 = vmul.f32 %v4245, %v5860
    %v5943 = vmul.f32 %v4250, %v5863
    %v5944 = vmul.f32 %v4255, %v5868
    %v5945 = vmul.f32 %v4260, %v5871
    %v5946 = vmul.f32 %v4265, %v5876
    %v5947 = vmul.f32 %v4270, %v5879
    %v5948 = vmul.f32 %v4275, %v5884
    %v5949 = vmul.f32 %v4280, %v5887
    %v5950 = vmul.f32 %v4285, %v5892
    %v5951 = vmul.f32 %v4290, %v5895
    %v5952 = vmul.f32 %v4295, %v5900
    %v5953 = vmul.f32 %v4300, %v5903
    %v5954 = vmul.f32 %v4065, %v5384
    %v5955 = vmul.f32 %v4070, %v5385
    %v5956 = vmul.f32 %v4075, %v5386
    %v5957 = vmul.f32 %v4080, %v5387
    %v5958 = vmul.f32 %v4085, %v5388
    %v5959 = vmul.f32 %v4090, %v5389
    %v5960 = vmul.f32 %v4095, %v5390
    %v5961 = vmul.f32 %v4100, %v5391
    %v5962 = vmul.f32 %v4105, %v5392
    %v5963 = vmul.f32 %v4110, %v5393
    %v5964 = vmul.f32 %v4115, %v5394
    %v5965 = vmul.f32 %v4120, %v5395
    %v5966 = vmul.f32 %v4125, %v5396
    %v5967 = vmul.f32 %v4130, %v5397
    %v5968 = vmul.f32 %v4135, %v5398
    %v5969 = vmul.f32 %v4140, %v5399
    %v5970 = vmul.f32 %v4145, %v5400
    %v5971 = vmul.f32 %v4150, %v5401
    %v5972 = vmul.f32 %v4155, %v5402
    %v5973 = vmul.f32 %v4160, %v5403
    %v5974 = vmul.f32 %v4165, %v5404
    %v5975 = vmul.f32 %v4170, %v5405
    %v5976 = vmul.f32 %v4175, %v5406
    %v5977 = vmul.f32 %v4180, %v5407
    %v5978 = vmul.f32 %v4185, %v5408
    %v5979 = vmul.f32 %v4190, %v5409
    %v5980 = vmul.f32 %v4195, %v5410
    %v5981 = vmul.f32 %v4200, %v5411
    %v5982 = vmul.f32 %v4205, %v5412
    %v5983 = vmul.f32 %v4210, %v5413
    %v5984 = vmul.f32 %v4215, %v5414
    %v5985 = vmul.f32 %v4220, %v5415
    %v5986 = vmul.f32 %v4225, %v5416
    %v5987 = vmul.f32 %v4230, %v5417
    %v5988 = vmul.f32 %v4235, %v5418
    %v5989 = vmul.f32 %v4240, %v5419
    %v5990 = vmul.f32 %v4245, %v5420
    %v5991 = vmul.f32 %v4250, %v5421
    %v5992 = vmul.f32 %v4255, %v5422
    %v5993 = vmul.f32 %v4260, %v5423
    %v5994 = vmul.f32 %v4265, %v5424
    %v5995 = vmul.f32 %v4270, %v5425
    %v5996 = vmul.f32 %v4275, %v5426
    %v5997 = vmul.f32 %v4280, %v5427
    %v5998 = vmul.f32 %v4285, %v5428
    %v5999 = vmul.f32 %v4290, %v5429
    %v6000 = vmul.f32 %v4295, %v5430
    %v6001 = vmul.f32 %v4300, %v5431
    %v6002 = vadd.f32 %v5906, %v5954
    %v6003 = vadd.f32 %v5907, %v5955
    %v6004 = vadd.f32 %v5908, %v5956
    %v6005 = vadd.f32 %v5909, %v5957
    %v6006 = vadd.f32 %v5910, %v5958
    %v6007 = vadd.f32 %v5911, %v5959
    %v6008 = vadd.f32 %v5912, %v5960
    %v6009 = vadd.f32 %v5913, %v5961
    %v6010 = vadd.f32 %v5914, %v5962
    %v6011 = vadd.f32 %v5915, %v5963
    %v6012 = vadd.f32 %v5916, %v5964
    %v6013 = vadd.f32 %v5917, %v5965
    %v6014 = vadd.f32 %v5918, %v5966
    %v6015 = vadd.f32 %v5919, %v5967
    %v6016 = vadd.f32 %v5920, %v5968
    %v6017 = vadd.f32 %v5921, %v5969
    %v6018 = vadd.f32 %v5922, %v5970
    %v6019 = vadd.f32 %v5923, %v5971
    %v6020 = vadd.f32 %v5924, %v5972
    %v6021 = vadd.f32 %v5925, %v5973
    %v6022 = vadd.f32 %v5926, %v5974
    %v6023 = vadd.f32 %v5927, %v5975
    %v6024 = vadd.f32 %v5928, %v5976
    %v6025 = vadd.f32 %v5929, %v5977
    %v6026 = vadd.f32 %v5930, %v5978
    %v6027 = vadd.f32 %v5931, %v5979
    %v6028 = vadd.f32 %v5932, %v5980
    %v6029 = vadd.f32 %v5933, %v5981
    %v6030 = vadd.f32 %v5934, %v5982
    %v6031 = vadd.f32 %v5935, %v5983
    %v6032 = vadd.f32 %v5936, %v5984
    %v6033 = vadd.f32 %v5937, %v5985
    %v6034 = vadd.f32 %v5938, %v5986
    %v6035 = vadd.f32 %v5939, %v5987
    %v6036 = vadd.f32 %v5940, %v5988
    %v6037 = vadd.f32 %v5941, %v5989
    %v6038 = vadd.f32 %v5942, %v5990
    %v6039 = vadd.f32 %v5943, %v5991
    %v6040 = vadd.f32 %v5944, %v5992
    %v6041 = vadd.f32 %v5945, %v5993
    %v6042 = vadd.f32 %v5946, %v5994
    %v6043 = vadd.f32 %v5947, %v5995
    %v6044 = vadd.f32 %v5948, %v5996
    %v6045 = vadd.f32 %v5949, %v5997
    %v6046 = vadd.f32 %v5950, %v5998
    %v6047 = vadd.f32 %v5951, %v5999
    %v6048 = vadd.f32 %v5952, %v6000
    %v6049 = vadd.f32 %v5953, %v6001
    %v6050 = vld [vmem:[%s17] sm:$0x1]
    %v6052 = vlaneseq
    %v6053 = vshrl.u32 %v6052, 7
    %v6054 = vsub.s32 0, %v6053
    %v6055 = vrot.slane %v6050, %v6054
    %v6057 = vadd.f32 %v6002, %v6055
    %v6058 = vadd.f32 %v6003, %v6055
    %v6059 = vadd.f32 %v6004, %v6055
    %v6060 = vadd.f32 %v6005, %v6055
    %v6061 = vadd.f32 %v6006, %v6055
    %v6062 = vadd.f32 %v6007, %v6055
    %v6063 = vadd.f32 %v6008, %v6055
    %v6064 = vadd.f32 %v6009, %v6055
    %v6065 = vadd.f32 %v6010, %v6055
    %v6066 = vadd.f32 %v6011, %v6055
    %v6067 = vadd.f32 %v6012, %v6055
    %v6068 = vadd.f32 %v6013, %v6055
    %v6069 = vadd.f32 %v6014, %v6055
    %v6070 = vadd.f32 %v6015, %v6055
    %v6071 = vadd.f32 %v6016, %v6055
    %v6072 = vadd.f32 %v6017, %v6055
    %v6073 = vadd.f32 %v6018, %v6055
    %v6074 = vadd.f32 %v6019, %v6055
    %v6075 = vadd.f32 %v6020, %v6055
    %v6076 = vadd.f32 %v6021, %v6055
    %v6077 = vadd.f32 %v6022, %v6055
    %v6078 = vadd.f32 %v6023, %v6055
    %v6079 = vadd.f32 %v6024, %v6055
    %v6080 = vadd.f32 %v6025, %v6055
    %v6081 = vadd.f32 %v6026, %v6055
    %v6082 = vadd.f32 %v6027, %v6055
    %v6083 = vadd.f32 %v6028, %v6055
    %v6084 = vadd.f32 %v6029, %v6055
    %v6085 = vadd.f32 %v6030, %v6055
    %v6086 = vadd.f32 %v6031, %v6055
    %v6087 = vadd.f32 %v6032, %v6055
    %v6088 = vadd.f32 %v6033, %v6055
    %v6089 = vadd.f32 %v6034, %v6055
    %v6090 = vadd.f32 %v6035, %v6055
    %v6091 = vadd.f32 %v6036, %v6055
    %v6092 = vadd.f32 %v6037, %v6055
    %v6093 = vadd.f32 %v6038, %v6055
    %v6094 = vadd.f32 %v6039, %v6055
    %v6095 = vadd.f32 %v6040, %v6055
    %v6096 = vadd.f32 %v6041, %v6055
    %v6097 = vadd.f32 %v6042, %v6055
    %v6098 = vadd.f32 %v6043, %v6055
    %v6099 = vadd.f32 %v6044, %v6055
    %v6100 = vadd.f32 %v6045, %v6055
    %v6101 = vadd.f32 %v6046, %v6055
    %v6102 = vadd.f32 %v6047, %v6055
    %v6103 = vadd.f32 %v6048, %v6055
    %v6104 = vadd.f32 %v6049, %v6055
    %vm6105 = vcmp.lt.s32.totalorder %v110, 4
    %v6106 = vsel %vm6105, %v6057, -1e+30
    %v6107 = vsel %vm6105, %v6058, -1e+30
    %v6108 = vsel %vm6105, %v6059, -1e+30
    %v6109 = vsel %vm6105, %v6060, -1e+30
    %v6110 = vsel %vm6105, %v6061, -1e+30
    %v6111 = vsel %vm6105, %v6062, -1e+30
    %v6112 = vsel %vm6105, %v6063, -1e+30
    %v6113 = vsel %vm6105, %v6064, -1e+30
    %v6114 = vsel %vm6105, %v6065, -1e+30
    %v6115 = vsel %vm6105, %v6066, -1e+30
    %v6116 = vsel %vm6105, %v6067, -1e+30
    %v6117 = vsel %vm6105, %v6068, -1e+30
    %v6118 = vsel %vm6105, %v6069, -1e+30
    %v6119 = vsel %vm6105, %v6070, -1e+30
    %v6120 = vsel %vm6105, %v6071, -1e+30
    %v6121 = vsel %vm6105, %v6072, -1e+30
    %v6122 = vsel %vm6105, %v6073, -1e+30
    %v6123 = vsel %vm6105, %v6074, -1e+30
    %v6124 = vsel %vm6105, %v6075, -1e+30
    %v6125 = vsel %vm6105, %v6076, -1e+30
    %v6126 = vsel %vm6105, %v6077, -1e+30
    %v6127 = vsel %vm6105, %v6078, -1e+30
    %v6128 = vsel %vm6105, %v6079, -1e+30
    %v6129 = vsel %vm6105, %v6080, -1e+30
    %v6130 = vsel %vm6105, %v6081, -1e+30
    %v6131 = vsel %vm6105, %v6082, -1e+30
    %v6132 = vsel %vm6105, %v6083, -1e+30
    %v6133 = vsel %vm6105, %v6084, -1e+30
    %v6134 = vsel %vm6105, %v6085, -1e+30
    %v6135 = vsel %vm6105, %v6086, -1e+30
    %v6136 = vsel %vm6105, %v6087, -1e+30
    %v6137 = vsel %vm6105, %v6088, -1e+30
    %v6138 = vsel %vm6105, %v6089, -1e+30
    %v6139 = vsel %vm6105, %v6090, -1e+30
    %v6140 = vsel %vm6105, %v6091, -1e+30
    %v6141 = vsel %vm6105, %v6092, -1e+30
    %v6142 = vsel %vm6105, %v6093, -1e+30
    %v6143 = vsel %vm6105, %v6094, -1e+30
    %v6144 = vsel %vm6105, %v6095, -1e+30
    %v6145 = vsel %vm6105, %v6096, -1e+30
    %v6146 = vsel %vm6105, %v6097, -1e+30
    %v6147 = vsel %vm6105, %v6098, -1e+30
    %v6148 = vsel %vm6105, %v6099, -1e+30
    %v6149 = vsel %vm6105, %v6100, -1e+30
    %v6150 = vsel %vm6105, %v6101, -1e+30
    %v6151 = vsel %vm6105, %v6102, -1e+30
    %v6152 = vsel %vm6105, %v6103, -1e+30
    %v6153 = vsel %vm6105, %v6104, -1e+30
    %6154 = vmax.xlane.f32.xlu0 %v6106
    %v6155 = vpop.xlane.xlu0 %6154
    %6156 = vmax.xlane.f32.xlu0 %v6107
    %v6157 = vpop.xlane.xlu0 %6156
    %6158 = vmax.xlane.f32.xlu0 %v6108
    %v6159 = vpop.xlane.xlu0 %6158
    %6160 = vmax.xlane.f32.xlu0 %v6109
    %v6161 = vpop.xlane.xlu0 %6160
    %6162 = vmax.xlane.f32.xlu0 %v6110
    %v6163 = vpop.xlane.xlu0 %6162
    %6164 = vmax.xlane.f32.xlu0 %v6111
    %v6165 = vpop.xlane.xlu0 %6164
    %6166 = vmax.xlane.f32.xlu0 %v6112
    %v6167 = vpop.xlane.xlu0 %6166
    %6168 = vmax.xlane.f32.xlu0 %v6113
    %v6169 = vpop.xlane.xlu0 %6168
    %6170 = vmax.xlane.f32.xlu0 %v6114
    %v6171 = vpop.xlane.xlu0 %6170
    %6172 = vmax.xlane.f32.xlu0 %v6115
    %v6173 = vpop.xlane.xlu0 %6172
    %6174 = vmax.xlane.f32.xlu0 %v6116
    %v6175 = vpop.xlane.xlu0 %6174
    %6176 = vmax.xlane.f32.xlu0 %v6117
    %v6177 = vpop.xlane.xlu0 %6176
    %6178 = vmax.xlane.f32.xlu0 %v6118
    %v6179 = vpop.xlane.xlu0 %6178
    %6180 = vmax.xlane.f32.xlu0 %v6119
    %v6181 = vpop.xlane.xlu0 %6180
    %6182 = vmax.xlane.f32.xlu0 %v6120
    %v6183 = vpop.xlane.xlu0 %6182
    %6184 = vmax.xlane.f32.xlu0 %v6121
    %v6185 = vpop.xlane.xlu0 %6184
    %6186 = vmax.xlane.f32.xlu0 %v6122
    %v6187 = vpop.xlane.xlu0 %6186
    %6188 = vmax.xlane.f32.xlu0 %v6123
    %v6189 = vpop.xlane.xlu0 %6188
    %6190 = vmax.xlane.f32.xlu0 %v6124
    %v6191 = vpop.xlane.xlu0 %6190
    %6192 = vmax.xlane.f32.xlu0 %v6125
    %v6193 = vpop.xlane.xlu0 %6192
    %6194 = vmax.xlane.f32.xlu0 %v6126
    %v6195 = vpop.xlane.xlu0 %6194
    %6196 = vmax.xlane.f32.xlu0 %v6127
    %v6197 = vpop.xlane.xlu0 %6196
    %6198 = vmax.xlane.f32.xlu0 %v6128
    %v6199 = vpop.xlane.xlu0 %6198
    %6200 = vmax.xlane.f32.xlu0 %v6129
    %v6201 = vpop.xlane.xlu0 %6200
    %6202 = vmax.xlane.f32.xlu0 %v6130
    %v6203 = vpop.xlane.xlu0 %6202
    %6204 = vmax.xlane.f32.xlu0 %v6131
    %v6205 = vpop.xlane.xlu0 %6204
    %6206 = vmax.xlane.f32.xlu0 %v6132
    %v6207 = vpop.xlane.xlu0 %6206
    %6208 = vmax.xlane.f32.xlu0 %v6133
    %v6209 = vpop.xlane.xlu0 %6208
    %6210 = vmax.xlane.f32.xlu0 %v6134
    %v6211 = vpop.xlane.xlu0 %6210
    %6212 = vmax.xlane.f32.xlu0 %v6135
    %v6213 = vpop.xlane.xlu0 %6212
    %6214 = vmax.xlane.f32.xlu0 %v6136
    %v6215 = vpop.xlane.xlu0 %6214
    %6216 = vmax.xlane.f32.xlu0 %v6137
    %v6217 = vpop.xlane.xlu0 %6216
    %6218 = vmax.xlane.f32.xlu0 %v6138
    %v6219 = vpop.xlane.xlu0 %6218
    %6220 = vmax.xlane.f32.xlu0 %v6139
    %v6221 = vpop.xlane.xlu0 %6220
    %6222 = vmax.xlane.f32.xlu0 %v6140
    %v6223 = vpop.xlane.xlu0 %6222
    %6224 = vmax.xlane.f32.xlu0 %v6141
    %v6225 = vpop.xlane.xlu0 %6224
    %6226 = vmax.xlane.f32.xlu0 %v6142
    %v6227 = vpop.xlane.xlu0 %6226
    %6228 = vmax.xlane.f32.xlu0 %v6143
    %v6229 = vpop.xlane.xlu0 %6228
    %6230 = vmax.xlane.f32.xlu0 %v6144
    %v6231 = vpop.xlane.xlu0 %6230
    %6232 = vmax.xlane.f32.xlu0 %v6145
    %v6233 = vpop.xlane.xlu0 %6232
    %6234 = vmax.xlane.f32.xlu0 %v6146
    %v6235 = vpop.xlane.xlu0 %6234
    %6236 = vmax.xlane.f32.xlu0 %v6147
    %v6237 = vpop.xlane.xlu0 %6236
    %6238 = vmax.xlane.f32.xlu0 %v6148
    %v6239 = vpop.xlane.xlu0 %6238
    %6240 = vmax.xlane.f32.xlu0 %v6149
    %v6241 = vpop.xlane.xlu0 %6240
    %6242 = vmax.xlane.f32.xlu0 %v6150
    %v6243 = vpop.xlane.xlu0 %6242
    %6244 = vmax.xlane.f32.xlu0 %v6151
    %v6245 = vpop.xlane.xlu0 %6244
    %6246 = vmax.xlane.f32.xlu0 %v6152
    %v6247 = vpop.xlane.xlu0 %6246
    %6248 = vmax.xlane.f32.xlu0 %v6153
    %v6249 = vpop.xlane.xlu0 %6248
    %v6250 = vsub.f32 %v6106, %v6155
    %v6251 = vsub.f32 %v6107, %v6157
    %v6252 = vsub.f32 %v6108, %v6159
    %v6253 = vsub.f32 %v6109, %v6161
    %v6254 = vsub.f32 %v6110, %v6163
    %v6255 = vsub.f32 %v6111, %v6165
    %v6256 = vsub.f32 %v6112, %v6167
    %v6257 = vsub.f32 %v6113, %v6169
    %v6258 = vsub.f32 %v6114, %v6171
    %v6259 = vsub.f32 %v6115, %v6173
    %v6260 = vsub.f32 %v6116, %v6175
    %v6261 = vsub.f32 %v6117, %v6177
    %v6262 = vsub.f32 %v6118, %v6179
    %v6263 = vsub.f32 %v6119, %v6181
    %v6264 = vsub.f32 %v6120, %v6183
    %v6265 = vsub.f32 %v6121, %v6185
    %v6266 = vsub.f32 %v6122, %v6187
    %v6267 = vsub.f32 %v6123, %v6189
    %v6268 = vsub.f32 %v6124, %v6191
    %v6269 = vsub.f32 %v6125, %v6193
    %v6270 = vsub.f32 %v6126, %v6195
    %v6271 = vsub.f32 %v6127, %v6197
    %v6272 = vsub.f32 %v6128, %v6199
    %v6273 = vsub.f32 %v6129, %v6201
    %v6274 = vsub.f32 %v6130, %v6203
    %v6275 = vsub.f32 %v6131, %v6205
    %v6276 = vsub.f32 %v6132, %v6207
    %v6277 = vsub.f32 %v6133, %v6209
    %v6278 = vsub.f32 %v6134, %v6211
    %v6279 = vsub.f32 %v6135, %v6213
    %v6280 = vsub.f32 %v6136, %v6215
    %v6281 = vsub.f32 %v6137, %v6217
    %v6282 = vsub.f32 %v6138, %v6219
    %v6283 = vsub.f32 %v6139, %v6221
    %v6284 = vsub.f32 %v6140, %v6223
    %v6285 = vsub.f32 %v6141, %v6225
    %v6286 = vsub.f32 %v6142, %v6227
    %v6287 = vsub.f32 %v6143, %v6229
    %v6288 = vsub.f32 %v6144, %v6231
    %v6289 = vsub.f32 %v6145, %v6233
    %v6290 = vsub.f32 %v6146, %v6235
    %v6291 = vsub.f32 %v6147, %v6237
    %v6292 = vsub.f32 %v6148, %v6239
    %v6293 = vsub.f32 %v6149, %v6241
    %v6294 = vsub.f32 %v6150, %v6243
    %v6295 = vsub.f32 %v6151, %v6245
    %v6296 = vsub.f32 %v6152, %v6247
    %v6297 = vsub.f32 %v6153, %v6249
    %v6298 = vmul.f32 %v6250, 1.442695
    %v6299 = vpow.pop %v6298
    %v6300 = vmul.f32 %v6251, 1.442695
    %v6301 = vpow.pop %v6300
    %v6302 = vmul.f32 %v6252, 1.442695
    %v6303 = vpow.pop %v6302
    %v6304 = vmul.f32 %v6253, 1.442695
    %v6305 = vpow.pop %v6304
    %v6306 = vmul.f32 %v6254, 1.442695
    %v6307 = vpow.pop %v6306
    %v6308 = vmul.f32 %v6255, 1.442695
    %v6309 = vpow.pop %v6308
    %v6310 = vmul.f32 %v6256, 1.442695
    %v6311 = vpow.pop %v6310
    %v6312 = vmul.f32 %v6257, 1.442695
    %v6313 = vpow.pop %v6312
    %v6314 = vmul.f32 %v6258, 1.442695
    %v6315 = vpow.pop %v6314
    %v6316 = vmul.f32 %v6259, 1.442695
    %v6317 = vpow.pop %v6316
    %v6318 = vmul.f32 %v6260, 1.442695
    %v6319 = vpow.pop %v6318
    %v6320 = vmul.f32 %v6261, 1.442695
    %v6321 = vpow.pop %v6320
    %v6322 = vmul.f32 %v6262, 1.442695
    %v6323 = vpow.pop %v6322
    %v6324 = vmul.f32 %v6263, 1.442695
    %v6325 = vpow.pop %v6324
    %v6326 = vmul.f32 %v6264, 1.442695
    %v6327 = vpow.pop %v6326
    %v6328 = vmul.f32 %v6265, 1.442695
    %v6329 = vpow.pop %v6328
    %v6330 = vmul.f32 %v6266, 1.442695
    %v6331 = vpow.pop %v6330
    %v6332 = vmul.f32 %v6267, 1.442695
    %v6333 = vpow.pop %v6332
    %v6334 = vmul.f32 %v6268, 1.442695
    %v6335 = vpow.pop %v6334
    %v6336 = vmul.f32 %v6269, 1.442695
    %v6337 = vpow.pop %v6336
    %v6338 = vmul.f32 %v6270, 1.442695
    %v6339 = vpow.pop %v6338
    %v6340 = vmul.f32 %v6271, 1.442695
    %v6341 = vpow.pop %v6340
    %v6342 = vmul.f32 %v6272, 1.442695
    %v6343 = vpow.pop %v6342
    %v6344 = vmul.f32 %v6273, 1.442695
    %v6345 = vpow.pop %v6344
    %v6346 = vmul.f32 %v6274, 1.442695
    %v6347 = vpow.pop %v6346
    %v6348 = vmul.f32 %v6275, 1.442695
    %v6349 = vpow.pop %v6348
    %v6350 = vmul.f32 %v6276, 1.442695
    %v6351 = vpow.pop %v6350
    %v6352 = vmul.f32 %v6277, 1.442695
    %v6353 = vpow.pop %v6352
    %v6354 = vmul.f32 %v6278, 1.442695
    %v6355 = vpow.pop %v6354
    %v6356 = vmul.f32 %v6279, 1.442695
    %v6357 = vpow.pop %v6356
    %v6358 = vmul.f32 %v6280, 1.442695
    %v6359 = vpow.pop %v6358
    %v6360 = vmul.f32 %v6281, 1.442695
    %v6361 = vpow.pop %v6360
    %v6362 = vmul.f32 %v6282, 1.442695
    %v6363 = vpow.pop %v6362
    %v6364 = vmul.f32 %v6283, 1.442695
    %v6365 = vpow.pop %v6364
    %v6366 = vmul.f32 %v6284, 1.442695
    %v6367 = vpow.pop %v6366
    %v6368 = vmul.f32 %v6285, 1.442695
    %v6369 = vpow.pop %v6368
    %v6370 = vmul.f32 %v6286, 1.442695
    %v6371 = vpow.pop %v6370
    %v6372 = vmul.f32 %v6287, 1.442695
    %v6373 = vpow.pop %v6372
    %v6374 = vmul.f32 %v6288, 1.442695
    %v6375 = vpow.pop %v6374
    %v6376 = vmul.f32 %v6289, 1.442695
    %v6377 = vpow.pop %v6376
    %v6378 = vmul.f32 %v6290, 1.442695
    %v6379 = vpow.pop %v6378
    %v6380 = vmul.f32 %v6291, 1.442695
    %v6381 = vpow.pop %v6380
    %v6382 = vmul.f32 %v6292, 1.442695
    %v6383 = vpow.pop %v6382
    %v6384 = vmul.f32 %v6293, 1.442695
    %v6385 = vpow.pop %v6384
    %v6386 = vmul.f32 %v6294, 1.442695
    %v6387 = vpow.pop %v6386
    %v6388 = vmul.f32 %v6295, 1.442695
    %v6389 = vpow.pop %v6388
    %v6390 = vmul.f32 %v6296, 1.442695
    %v6391 = vpow.pop %v6390
    %v6392 = vmul.f32 %v6297, 1.442695
    %v6393 = vpow.pop %v6392
    %6394 = vadd.xlane.f32.xlu0 %v6299
    %v6395 = vpop.xlane.xlu0 %6394
    %6396 = vadd.xlane.f32.xlu0 %v6301
    %v6397 = vpop.xlane.xlu0 %6396
    %6398 = vadd.xlane.f32.xlu0 %v6303
    %v6399 = vpop.xlane.xlu0 %6398
    %6400 = vadd.xlane.f32.xlu0 %v6305
    %v6401 = vpop.xlane.xlu0 %6400
    %6402 = vadd.xlane.f32.xlu0 %v6307
    %v6403 = vpop.xlane.xlu0 %6402
    %6404 = vadd.xlane.f32.xlu0 %v6309
    %v6405 = vpop.xlane.xlu0 %6404
    %6406 = vadd.xlane.f32.xlu0 %v6311
    %v6407 = vpop.xlane.xlu0 %6406
    %6408 = vadd.xlane.f32.xlu0 %v6313
    %v6409 = vpop.xlane.xlu0 %6408
    %6410 = vadd.xlane.f32.xlu0 %v6315
    %v6411 = vpop.xlane.xlu0 %6410
    %6412 = vadd.xlane.f32.xlu0 %v6317
    %v6413 = vpop.xlane.xlu0 %6412
    %6414 = vadd.xlane.f32.xlu0 %v6319
    %v6415 = vpop.xlane.xlu0 %6414
    %6416 = vadd.xlane.f32.xlu0 %v6321
    %v6417 = vpop.xlane.xlu0 %6416
    %6418 = vadd.xlane.f32.xlu0 %v6323
    %v6419 = vpop.xlane.xlu0 %6418
    %6420 = vadd.xlane.f32.xlu0 %v6325
    %v6421 = vpop.xlane.xlu0 %6420
    %6422 = vadd.xlane.f32.xlu0 %v6327
    %v6423 = vpop.xlane.xlu0 %6422
    %6424 = vadd.xlane.f32.xlu0 %v6329
    %v6425 = vpop.xlane.xlu0 %6424
    %6426 = vadd.xlane.f32.xlu0 %v6331
    %v6427 = vpop.xlane.xlu0 %6426
    %6428 = vadd.xlane.f32.xlu0 %v6333
    %v6429 = vpop.xlane.xlu0 %6428
    %6430 = vadd.xlane.f32.xlu0 %v6335
    %v6431 = vpop.xlane.xlu0 %6430
    %6432 = vadd.xlane.f32.xlu0 %v6337
    %v6433 = vpop.xlane.xlu0 %6432
    %6434 = vadd.xlane.f32.xlu0 %v6339
    %v6435 = vpop.xlane.xlu0 %6434
    %6436 = vadd.xlane.f32.xlu0 %v6341
    %v6437 = vpop.xlane.xlu0 %6436
    %6438 = vadd.xlane.f32.xlu0 %v6343
    %v6439 = vpop.xlane.xlu0 %6438
    %6440 = vadd.xlane.f32.xlu0 %v6345
    %v6441 = vpop.xlane.xlu0 %6440
    %6442 = vadd.xlane.f32.xlu0 %v6347
    %v6443 = vpop.xlane.xlu0 %6442
    %6444 = vadd.xlane.f32.xlu0 %v6349
    %v6445 = vpop.xlane.xlu0 %6444
    %6446 = vadd.xlane.f32.xlu0 %v6351
    %v6447 = vpop.xlane.xlu0 %6446
    %6448 = vadd.xlane.f32.xlu0 %v6353
    %v6449 = vpop.xlane.xlu0 %6448
    %6450 = vadd.xlane.f32.xlu0 %v6355
    %v6451 = vpop.xlane.xlu0 %6450
    %6452 = vadd.xlane.f32.xlu0 %v6357
    %v6453 = vpop.xlane.xlu0 %6452
    %6454 = vadd.xlane.f32.xlu0 %v6359
    %v6455 = vpop.xlane.xlu0 %6454
    %6456 = vadd.xlane.f32.xlu0 %v6361
    %v6457 = vpop.xlane.xlu0 %6456
    %6458 = vadd.xlane.f32.xlu0 %v6363
    %v6459 = vpop.xlane.xlu0 %6458
    %6460 = vadd.xlane.f32.xlu0 %v6365
    %v6461 = vpop.xlane.xlu0 %6460
    %6462 = vadd.xlane.f32.xlu0 %v6367
    %v6463 = vpop.xlane.xlu0 %6462
    %6464 = vadd.xlane.f32.xlu0 %v6369
    %v6465 = vpop.xlane.xlu0 %6464
    %6466 = vadd.xlane.f32.xlu0 %v6371
    %v6467 = vpop.xlane.xlu0 %6466
    %6468 = vadd.xlane.f32.xlu0 %v6373
    %v6469 = vpop.xlane.xlu0 %6468
    %6470 = vadd.xlane.f32.xlu0 %v6375
    %v6471 = vpop.xlane.xlu0 %6470
    %6472 = vadd.xlane.f32.xlu0 %v6377
    %v6473 = vpop.xlane.xlu0 %6472
    %6474 = vadd.xlane.f32.xlu0 %v6379
    %v6475 = vpop.xlane.xlu0 %6474
    %6476 = vadd.xlane.f32.xlu0 %v6381
    %v6477 = vpop.xlane.xlu0 %6476
    %6478 = vadd.xlane.f32.xlu0 %v6383
    %v6479 = vpop.xlane.xlu0 %6478
    %6480 = vadd.xlane.f32.xlu0 %v6385
    %v6481 = vpop.xlane.xlu0 %6480
    %6482 = vadd.xlane.f32.xlu0 %v6387
    %v6483 = vpop.xlane.xlu0 %6482
    %6484 = vadd.xlane.f32.xlu0 %v6389
    %v6485 = vpop.xlane.xlu0 %6484
    %6486 = vadd.xlane.f32.xlu0 %v6391
    %v6487 = vpop.xlane.xlu0 %6486
    %6488 = vadd.xlane.f32.xlu0 %v6393
    %v6489 = vpop.xlane.xlu0 %6488
    %v6490 = vlog2.pop %v6395
    %v6491 = vmul.f32 %v6490, 0.6931472
    %v6492 = vlog2.pop %v6397
    %v6493 = vmul.f32 %v6492, 0.6931472
    %v6494 = vlog2.pop %v6399
    %v6495 = vmul.f32 %v6494, 0.6931472
    %v6496 = vlog2.pop %v6401
    %v6497 = vmul.f32 %v6496, 0.6931472
    %v6498 = vlog2.pop %v6403
    %v6499 = vmul.f32 %v6498, 0.6931472
    %v6500 = vlog2.pop %v6405
    %v6501 = vmul.f32 %v6500, 0.6931472
    %v6502 = vlog2.pop %v6407
    %v6503 = vmul.f32 %v6502, 0.6931472
    %v6504 = vlog2.pop %v6409
    %v6505 = vmul.f32 %v6504, 0.6931472
    %v6506 = vlog2.pop %v6411
    %v6507 = vmul.f32 %v6506, 0.6931472
    %v6508 = vlog2.pop %v6413
    %v6509 = vmul.f32 %v6508, 0.6931472
    %v6510 = vlog2.pop %v6415
    %v6511 = vmul.f32 %v6510, 0.6931472
    %v6512 = vlog2.pop %v6417
    %v6513 = vmul.f32 %v6512, 0.6931472
    %v6514 = vlog2.pop %v6419
    %v6515 = vmul.f32 %v6514, 0.6931472
    %v6516 = vlog2.pop %v6421
    %v6517 = vmul.f32 %v6516, 0.6931472
    %v6518 = vlog2.pop %v6423
    %v6519 = vmul.f32 %v6518, 0.6931472
    %v6520 = vlog2.pop %v6425
    %v6521 = vmul.f32 %v6520, 0.6931472
    %v6522 = vlog2.pop %v6427
    %v6523 = vmul.f32 %v6522, 0.6931472
    %v6524 = vlog2.pop %v6429
    %v6525 = vmul.f32 %v6524, 0.6931472
    %v6526 = vlog2.pop %v6431
    %v6527 = vmul.f32 %v6526, 0.6931472
    %v6528 = vlog2.pop %v6433
    %v6529 = vmul.f32 %v6528, 0.6931472
    %v6530 = vlog2.pop %v6435
    %v6531 = vmul.f32 %v6530, 0.6931472
    %v6532 = vlog2.pop %v6437
    %v6533 = vmul.f32 %v6532, 0.6931472
    %v6534 = vlog2.pop %v6439
    %v6535 = vmul.f32 %v6534, 0.6931472
    %v6536 = vlog2.pop %v6441
    %v6537 = vmul.f32 %v6536, 0.6931472
    %v6538 = vlog2.pop %v6443
    %v6539 = vmul.f32 %v6538, 0.6931472
    %v6540 = vlog2.pop %v6445
    %v6541 = vmul.f32 %v6540, 0.6931472
    %v6542 = vlog2.pop %v6447
    %v6543 = vmul.f32 %v6542, 0.6931472
    %v6544 = vlog2.pop %v6449
    %v6545 = vmul.f32 %v6544, 0.6931472
    %v6546 = vlog2.pop %v6451
    %v6547 = vmul.f32 %v6546, 0.6931472
    %v6548 = vlog2.pop %v6453
    %v6549 = vmul.f32 %v6548, 0.6931472
    %v6550 = vlog2.pop %v6455
    %v6551 = vmul.f32 %v6550, 0.6931472
    %v6552 = vlog2.pop %v6457
    %v6553 = vmul.f32 %v6552, 0.6931472
    %v6554 = vlog2.pop %v6459
    %v6555 = vmul.f32 %v6554, 0.6931472
    %v6556 = vlog2.pop %v6461
    %v6557 = vmul.f32 %v6556, 0.6931472
    %v6558 = vlog2.pop %v6463
    %v6559 = vmul.f32 %v6558, 0.6931472
    %v6560 = vlog2.pop %v6465
    %v6561 = vmul.f32 %v6560, 0.6931472
    %v6562 = vlog2.pop %v6467
    %v6563 = vmul.f32 %v6562, 0.6931472
    %v6564 = vlog2.pop %v6469
    %v6565 = vmul.f32 %v6564, 0.6931472
    %v6566 = vlog2.pop %v6471
    %v6567 = vmul.f32 %v6566, 0.6931472
    %v6568 = vlog2.pop %v6473
    %v6569 = vmul.f32 %v6568, 0.6931472
    %v6570 = vlog2.pop %v6475
    %v6571 = vmul.f32 %v6570, 0.6931472
    %v6572 = vlog2.pop %v6477
    %v6573 = vmul.f32 %v6572, 0.6931472
    %v6574 = vlog2.pop %v6479
    %v6575 = vmul.f32 %v6574, 0.6931472
    %v6576 = vlog2.pop %v6481
    %v6577 = vmul.f32 %v6576, 0.6931472
    %v6578 = vlog2.pop %v6483
    %v6579 = vmul.f32 %v6578, 0.6931472
    %v6580 = vlog2.pop %v6485
    %v6581 = vmul.f32 %v6580, 0.6931472
    %v6582 = vlog2.pop %v6487
    %v6583 = vmul.f32 %v6582, 0.6931472
    %v6584 = vlog2.pop %v6489
    %v6585 = vmul.f32 %v6584, 0.6931472
    %v6586 = vsub.f32 %v6250, %v6491
    %v6587 = vsub.f32 %v6251, %v6493
    %v6588 = vsub.f32 %v6252, %v6495
    %v6589 = vsub.f32 %v6253, %v6497
    %v6590 = vsub.f32 %v6254, %v6499
    %v6591 = vsub.f32 %v6255, %v6501
    %v6592 = vsub.f32 %v6256, %v6503
    %v6593 = vsub.f32 %v6257, %v6505
    %v6594 = vsub.f32 %v6258, %v6507
    %v6595 = vsub.f32 %v6259, %v6509
    %v6596 = vsub.f32 %v6260, %v6511
    %v6597 = vsub.f32 %v6261, %v6513
    %v6598 = vsub.f32 %v6262, %v6515
    %v6599 = vsub.f32 %v6263, %v6517
    %v6600 = vsub.f32 %v6264, %v6519
    %v6601 = vsub.f32 %v6265, %v6521
    %v6602 = vsub.f32 %v6266, %v6523
    %v6603 = vsub.f32 %v6267, %v6525
    %v6604 = vsub.f32 %v6268, %v6527
    %v6605 = vsub.f32 %v6269, %v6529
    %v6606 = vsub.f32 %v6270, %v6531
    %v6607 = vsub.f32 %v6271, %v6533
    %v6608 = vsub.f32 %v6272, %v6535
    %v6609 = vsub.f32 %v6273, %v6537
    %v6610 = vsub.f32 %v6274, %v6539
    %v6611 = vsub.f32 %v6275, %v6541
    %v6612 = vsub.f32 %v6276, %v6543
    %v6613 = vsub.f32 %v6277, %v6545
    %v6614 = vsub.f32 %v6278, %v6547
    %v6615 = vsub.f32 %v6279, %v6549
    %v6616 = vsub.f32 %v6280, %v6551
    %v6617 = vsub.f32 %v6281, %v6553
    %v6618 = vsub.f32 %v6282, %v6555
    %v6619 = vsub.f32 %v6283, %v6557
    %v6620 = vsub.f32 %v6284, %v6559
    %v6621 = vsub.f32 %v6285, %v6561
    %v6622 = vsub.f32 %v6286, %v6563
    %v6623 = vsub.f32 %v6287, %v6565
    %v6624 = vsub.f32 %v6288, %v6567
    %v6625 = vsub.f32 %v6289, %v6569
    %v6626 = vsub.f32 %v6290, %v6571
    %v6627 = vsub.f32 %v6291, %v6573
    %v6628 = vsub.f32 %v6292, %v6575
    %v6629 = vsub.f32 %v6293, %v6577
    %v6630 = vsub.f32 %v6294, %v6579
    %v6631 = vsub.f32 %v6295, %v6581
    %v6632 = vsub.f32 %v6296, %v6583
    %v6633 = vsub.f32 %v6297, %v6585
    %6634 = vst [vmem:[#allocation2] sm:$0xff] %v6586
    %6635 = vst [vmem:[#allocation2 + $0x8] sm:$0xff] %v6587
    %6636 = vst [vmem:[#allocation2 + $0x10] sm:$0xff] %v6588
    %6637 = vst [vmem:[#allocation2 + $0x18] sm:$0xff] %v6589
    %6638 = vst [vmem:[#allocation2 + $0x20] sm:$0xff] %v6590
    %6639 = vst [vmem:[#allocation2 + $0x28] sm:$0xff] %v6591
    %6640 = vst [vmem:[#allocation2 + $0x30] sm:$0xff] %v6592
    %6641 = vst [vmem:[#allocation2 + $0x38] sm:$0xff] %v6593
    %6642 = vst [vmem:[#allocation2 + $0x40] sm:$0xff] %v6594
    %6643 = vst [vmem:[#allocation2 + $0x48] sm:$0xff] %v6595
    %6644 = vst [vmem:[#allocation2 + $0x50] sm:$0xff] %v6596
    %6645 = vst [vmem:[#allocation2 + $0x58] sm:$0xff] %v6597
    %6646 = vst [vmem:[#allocation2 + $0x60] sm:$0xff] %v6598
    %6647 = vst [vmem:[#allocation2 + $0x68] sm:$0xff] %v6599
    %6648 = vst [vmem:[#allocation2 + $0x70] sm:$0xff] %v6600
    %6649 = vst [vmem:[#allocation2 + $0x78] sm:$0xff] %v6601
    %6650 = vst [vmem:[#allocation2 + $0x80] sm:$0xff] %v6602
    %6651 = vst [vmem:[#allocation2 + $0x88] sm:$0xff] %v6603
    %6652 = vst [vmem:[#allocation2 + $0x90] sm:$0xff] %v6604
    %6653 = vst [vmem:[#allocation2 + $0x98] sm:$0xff] %v6605
    %6654 = vst [vmem:[#allocation2 + $0xa0] sm:$0xff] %v6606
    %6655 = vst [vmem:[#allocation2 + $0xa8] sm:$0xff] %v6607
    %6656 = vst [vmem:[#allocation2 + $0xb0] sm:$0xff] %v6608
    %6657 = vst [vmem:[#allocation2 + $0xb8] sm:$0xff] %v6609
    %6658 = vst [vmem:[#allocation2 + $0xc0] sm:$0xff] %v6610
    %6659 = vst [vmem:[#allocation2 + $0xc8] sm:$0xff] %v6611
    %6660 = vst [vmem:[#allocation2 + $0xd0] sm:$0xff] %v6612
    %6661 = vst [vmem:[#allocation2 + $0xd8] sm:$0xff] %v6613
    %6662 = vst [vmem:[#allocation2 + $0xe0] sm:$0xff] %v6614
    %6663 = vst [vmem:[#allocation2 + $0xe8] sm:$0xff] %v6615
    %6664 = vst [vmem:[#allocation2 + $0xf0] sm:$0xff] %v6616
    %6665 = vst [vmem:[#allocation2 + $0xf8] sm:$0xff] %v6617
    %6666 = vst [vmem:[#allocation2 + $0x100] sm:$0xff] %v6618
    %6667 = vst [vmem:[#allocation2 + $0x108] sm:$0xff] %v6619
    %6668 = vst [vmem:[#allocation2 + $0x110] sm:$0xff] %v6620
    %6669 = vst [vmem:[#allocation2 + $0x118] sm:$0xff] %v6621
    %6670 = vst [vmem:[#allocation2 + $0x120] sm:$0xff] %v6622
    %6671 = vst [vmem:[#allocation2 + $0x128] sm:$0xff] %v6623
    %6672 = vst [vmem:[#allocation2 + $0x130] sm:$0xff] %v6624
    %6673 = vst [vmem:[#allocation2 + $0x138] sm:$0xff] %v6625
    %6674 = vst [vmem:[#allocation2 + $0x140] sm:$0xff] %v6626
    %6675 = vst [vmem:[#allocation2 + $0x148] sm:$0xff] %v6627
    %6676 = vst [vmem:[#allocation2 + $0x150] sm:$0xff] %v6628
    %6677 = vst [vmem:[#allocation2 + $0x158] sm:$0xff] %v6629
    %6678 = vst [vmem:[#allocation2 + $0x160] sm:$0xff] %v6630
    %6679 = vst [vmem:[#allocation2 + $0x168] sm:$0xff] %v6631
    %6680 = vst [vmem:[#allocation2 + $0x170] sm:$0xff] %v6632
    %6681 = vst [vmem:[#allocation2 + $0x178] sm:$0xff] %v6633
    // Predicated region
    $region74: #{tpu_custom_call.1} parent=1 // pred_check
      _
    $region75: #{tpu_custom_call.1} parent=1 // pred_check_branch
      %6683 = sbr.rel (0) target = $region77
    $region76: #{tpu_custom_call.1} parent=1 // pred_region
      %s6685 = ssub.s32 6144, 6144
      %6686 = vsyncadd [#allocation3], %s6685
      %s6687 = sshll.u32 [#allocation2], 4
      %s6688 = int_to_ptr.vmem [resolvable:$true] %s6687
      %6693 = dma.vmem_to_hbm [thread:$0]  %s6688, 6144, %s18, [#allocation3], 128, 128, 8
    $region77: #{tpu_custom_call.1} parent=1 // pred_fallthru
      _
    // Predicated region
    $region78: #{tpu_custom_call.1} parent=1 // pred_check
      _
    $region79: #{tpu_custom_call.1} parent=1 // pred_check_branch
      %6695 = sbr.rel (0) target = $region81
    $region80: #{tpu_custom_call.1} parent=1 // pred_region
      %6696 = dma.done [#allocation3], 6144
    $region81: #{tpu_custom_call.1} parent=1 // pred_fallthru
      _
    %6697 = vsyncpa [#allocation3], 1

</llo_original>
